<compile_context>
chip_gen: v7x
topology: tpu7x:2x2x1
jax: 0.10.0
libtpu: 0.0.40
codegen_flags: <defaults>
</compile_context>

<pallas_src>
import functools

import jax
import jax.numpy as jnp
from jax.experimental import pallas as pl
from jax.experimental.pallas import tpu as pltpu


# ---------------------------------------------------------------------------
# Kernel A: conv1 (im2col matmul) + bias + ReLU + 2x2 max-pool, fused.
# ---------------------------------------------------------------------------
def _conv1_pool_kernel(p0_ref, p1_ref, p2_ref, p3_ref, w_ref, b_ref, o_ref):
    w = w_ref[...]                                               # (20, 128) bf16
    c0 = jnp.dot(w, p0_ref[...], preferred_element_type=jnp.float32)
    c1 = jnp.dot(w, p1_ref[...], preferred_element_type=jnp.float32)
    c2 = jnp.dot(w, p2_ref[...], preferred_element_type=jnp.float32)
    c3 = jnp.dot(w, p3_ref[...], preferred_element_type=jnp.float32)
    m = jnp.maximum(jnp.maximum(c0, c1), jnp.maximum(c2, c3)) + b_ref[...]
    o_ref[...] = jnp.maximum(m, 0.0)                             # relu(max(.)+b)


def conv1_relu_pool(patches_q, w, b, *, block_cols):
    """patches_q: 4x (Kp, Rp) bf16; w: (Cout, Kp) bf16; b: (Cout, 1) f32."""
    cout, kp = w.shape
    rp = patches_q[0].shape[1]
    grid = (rp // block_cols,)
    return pl.pallas_call(
        _conv1_pool_kernel,
        out_shape=jax.ShapeDtypeStruct((cout, rp), jnp.float32),
        grid=grid,
        in_specs=[pl.BlockSpec((kp, block_cols), lambda i: (0, i))] * 4
        + [
            pl.BlockSpec((cout, kp), lambda i: (0, 0)),
            pl.BlockSpec((cout, 1), lambda i: (0, 0)),
        ],
        out_specs=pl.BlockSpec((cout, block_cols), lambda i: (0, i)),
        compiler_params=pltpu.CompilerParams(dimension_semantics=("parallel",)),
    )(*patches_q, w, b)


# ---------------------------------------------------------------------------
# Kernel B: conv2 + ReLU + pool + fc1 + dual attention + classifier (fused).
# ---------------------------------------------------------------------------
def _tail_kernel(
    p0_ref, p1_ref, p2_ref, p3_ref,            # conv2 quadrant patches (16N, 512) bf16
    w2_ref, b2_ref,                            # (512, 50) bf16, (1, 50) f32
    wfc_ref, bfc_ref,                          # (16, 50, 512) bf16, (1, 512) f32
    wa1_ref, ba1_ref,                          # concat attention L1: (512, 256), (1, 256)
    wa2a_ref, ba2a_ref, wa2b_ref, ba2b_ref,    # attention L2: (128, 2), (1, 2) each
    wc_ref, bc_ref,                            # classifier: (1, 512), (1, 1)
    yprob_ref, imcls_ref,
    *, n_inst, n_spatial,
):
    # ---- conv2 + bias + ReLU + 2x2 pool (rows = (spatial, instance), cols = channel)
    w2 = w2_ref[...]
    c0 = jnp.dot(p0_ref[...], w2, preferred_element_type=jnp.float32)
    c1 = jnp.dot(p1_ref[...], w2, preferred_element_type=jnp.float32)
    c2 = jnp.dot(p2_ref[...], w2, preferred_element_type=jnp.float32)
    c3 = jnp.dot(p3_ref[...], w2, preferred_element_type=jnp.float32)
    pooled = jnp.maximum(jnp.maximum(c0, c1), jnp.maximum(c2, c3)) + b2_ref[...]
    pooled = jnp.maximum(pooled, 0.0)                     # (16N, 50)

    # ---- fc1 (Linear(800, 500) + ReLU), contraction split over the 16 spatial
    #      positions so no in-kernel relayout of `pooled` is needed.
    lp = wfc_ref.shape[2]                                  # 512 (padded 500)
    acc = jnp.zeros((n_inst, lp), jnp.float32)
    for s in range(n_spatial):                             # 16, unrolled
        blk = pooled[s * n_inst:(s + 1) * n_inst, :].astype(jnp.bfloat16)
        acc = acc + jnp.dot(blk, wfc_ref[s], preferred_element_type=jnp.float32)
    H = jnp.maximum(acc + bfc_ref[...], 0.0)               # (N, 512), pad cols are 0

    # ---- both attention branches: one concatenated first-layer matmul.
    T = jnp.tanh(
        jnp.dot(H, wa1_ref[...], preferred_element_type=jnp.float32) + ba1_ref[...]
    )                                                      # (N, 256)
    A = jnp.dot(T[:, :128], wa2a_ref[...], preferred_element_type=jnp.float32) + ba2a_ref[...]
    B = jnp.dot(T[:, 128:], wa2b_ref[...], preferred_element_type=jnp.float32) + ba2b_ref[...]

    # softmax(A, dim=0) * softmax(B, dim=1)
    sA = jnp.exp(A - jnp.max(A, axis=0, keepdims=True))
    sA = sA * pl.reciprocal(jnp.sum(sA, axis=0, keepdims=True), approx=True)
    sB = jnp.exp(B - jnp.max(B, axis=1, keepdims=True))
    sB = sB * pl.reciprocal(jnp.sum(sB, axis=1, keepdims=True), approx=True)
    score = sA * sB                                        # (N, 2)
    im = jnp.max(score, axis=1, keepdims=True)             # (N, 1)

    # M = im_cls_score^T @ H ; classifier Linear(500,1) + sigmoid
    M = jnp.sum(im * H, axis=0, keepdims=True)             # (1, 512)
    y = jnp.sum(M * wc_ref[...], axis=1, keepdims=True) + bc_ref[...]
    yprob_ref[...] = pl.reciprocal(1.0 + jnp.exp(-y), approx=True)
    imcls_ref[...] = im


def _full_spec(shape):
    return pl.BlockSpec(shape, lambda i, _n=len(shape): (0,) * _n)


def mil_tail(p2t_q, w2, b2, wfc, bfc, wa1, ba1, wa2a, ba2a, wa2b, ba2b, wc, bc, n_inst):
    n_spatial = p2t_q[0].shape[0] // n_inst
    args = (*p2t_q, w2, b2, wfc, bfc, wa1, ba1, wa2a, ba2a, wa2b, ba2b, wc, bc)
    in_specs = [_full_spec(a.shape) for a in args]
    yprob, imcls = pl.pallas_call(
        functools.partial(_tail_kernel, n_inst=n_inst, n_spatial=n_spatial),
        out_shape=(
            jax.ShapeDtypeStruct((1, 1), jnp.float32),
            jax.ShapeDtypeStruct((n_inst, 1), jnp.float32),
        ),
        grid=(1,),
        in_specs=in_specs,
        out_specs=(_full_spec((1, 1)), _full_spec((n_inst, 1))),
        compiler_params=pltpu.CompilerParams(dimension_semantics=("arbitrary",)),
    )(*args)
    return yprob, imcls


# ---------------------------------------------------------------------------
# Wrapper-side im2col (layout plumbing only; matmuls run in Pallas).
# Quadrant (di, dj) gathers the conv outputs that the 2x2 max-pool compares.
# ---------------------------------------------------------------------------
def conv1_pool_patches(x, di, dj):
    """x: (N, 3, 28, 28) -> (75, N*144); rows (c, ki, kj); cols (n, oh, ow)."""
    n = x.shape[0]
    cols = []
    for ki in range(5):
        for kj in range(5):
            cols.append(x[:, :, di + ki:di + ki + 23:2, dj + kj:dj + kj + 23:2])
    p = jnp.stack(cols, axis=0)          # (25, N, 3, 12, 12)
    p = p.transpose(2, 0, 1, 3, 4)       # (c, kk, n, oh, ow)
    return p.reshape(3 * 25, n * 144)


def conv2_pool_patches_T(h, di, dj):
    """h: (20, N, 12, 12) -> (16*N, 500); rows (oh*4+ow, n); cols (c, ki, kj)."""
    n = h.shape[1]
    cols = []
    for ki in range(5):
        for kj in range(5):
            cols.append(h[:, :, di + ki:di + ki + 7:2, dj + kj:dj + kj + 7:2])
    p = jnp.stack(cols, axis=0)          # (25, 20, N, 4, 4)
    p = p.transpose(3, 4, 2, 1, 0)       # (oh, ow, n, c, kk)
    return p.reshape(16 * n, 20 * 25)


# ---------------------------------------------------------------------------
# Parameters (deterministic synthetic init, PyTorch-shaped).
# ---------------------------------------------------------------------------
def init_params(key):
    ks = jax.random.split(key, 16)

    def norm(k, shape, scale=0.05):
        return scale * jax.random.normal(k, shape, dtype=jnp.float32)

    return {
        "conv1_w": norm(ks[0], (20, 3, 5, 5)),
        "conv1_b": norm(ks[1], (20,)),
        "conv2_w": norm(ks[2], (50, 20, 5, 5)),
        "conv2_b": norm(ks[3], (50,)),
        "fc1_w": norm(ks[4], (500, 800)),   # nn.Linear stores (out, in)
        "fc1_b": norm(ks[5], (500,)),
        "att1_w1": norm(ks[6], (128, 500)),
        "att1_b1": norm(ks[7], (128,)),
        "att1_w2": norm(ks[8], (2, 128)),
        "att1_b2": norm(ks[9], (2,)),
        "att2_w1": norm(ks[10], (128, 500)),
        "att2_b1": norm(ks[11], (128,)),
        "att2_w2": norm(ks[12], (2, 128)),
        "att2_b2": norm(ks[13], (2,)),
        "cls_w": norm(ks[14], (1, 500)),
        "cls_b": norm(ks[15], (1,)),
    }


# ---------------------------------------------------------------------------
# Forward pass (mirrors MA_MIDN.forward).
# ---------------------------------------------------------------------------
def ma_midn_forward(x, p):
    x = x[0]                                       # (N, 3, 28, 28), bag of N instances
    nb = x.shape[0]

    # ---- weight prep: pad contractions to 128/512, bf16 for big matmul operands.
    w1 = jnp.pad(p["conv1_w"].reshape(20, 75), ((0, 0), (0, 53))).astype(jnp.bfloat16)
    b1 = p["conv1_b"].reshape(20, 1)

    w2 = jnp.pad(p["conv2_w"].reshape(50, 500).T, ((0, 12), (0, 0))).astype(jnp.bfloat16)
    b2 = p["conv2_b"].reshape(1, 50)

    # fc1 weight permuted so the channel-last conv2 layout needs no transpose:
    # wfc[s, c, o] = fc1_w[o, c*16 + s]
    wfc = p["fc1_w"].reshape(500, 50, 16).transpose(2, 1, 0)         # (16, 50, 500)
    wfc = jnp.pad(wfc, ((0, 0), (0, 0), (0, 12))).astype(jnp.bfloat16)
    bfc = jnp.pad(p["fc1_b"].reshape(1, 500), ((0, 0), (0, 12)))

    wa1 = jnp.concatenate([p["att1_w1"].T, p["att2_w1"].T], axis=1)  # (500, 256)
    wa1 = jnp.pad(wa1, ((0, 12), (0, 0)))                            # (512, 256)
    ba1 = jnp.concatenate([p["att1_b1"], p["att2_b1"]]).reshape(1, 256)
    wa2a, ba2a = p["att1_w2"].T, p["att1_b2"].reshape(1, 2)
    wa2b, ba2b = p["att2_w2"].T, p["att2_b2"].reshape(1, 2)
    wc = jnp.pad(p["cls_w"], ((0, 0), (0, 12)))                      # (1, 512)
    bc = p["cls_b"].reshape(1, 1)

    # ---- conv1 + ReLU + pool: lane-dense (20, N*144) output, 2 parallel blocks.
    r1 = nb * 144
    n_blocks = 2
    bn = 128 * (-(-r1 // (128 * n_blocks)))      # column block, multiple of 128
    rp = bn * n_blocks
    p1q = []
    for di in (0, 1):
        for dj in (0, 1):
            q = conv1_pool_patches(x, di, dj)                      # (75, r1)
            q = jnp.pad(q, ((0, 53), (0, rp - r1))).astype(jnp.bfloat16)
            p1q.append(q)
    h1 = conv1_relu_pool(p1q, w1, b1, block_cols=bn)[:, :r1]       # (20, N*144) f32
    h1 = h1.reshape(20, nb, 12, 12)

    # ---- conv2 + pool + fc1 + attention heads + classifier, single fused kernel.
    p2q = [conv2_pool_patches_T(h1, di, dj) for di in (0, 1) for dj in (0, 1)]
    p2q = [jnp.pad(q, ((0, 0), (0, 12))).astype(jnp.bfloat16) for q in p2q]  # (16N, 512)

    y_prob, im_col = mil_tail(
        p2q, w2, b2, wfc, bfc, wa1, ba1, wa2a, ba2a, wa2b, ba2b, wc, bc, nb
    )
    im_cls_score = im_col.reshape(1, nb)           # torch.transpose(im, 0, 1)
    y_hat = (y_prob >= 0.5).astype(jnp.float32)
    return y_prob, y_hat, im_cls_score


if __name__ == "__main__":
    key = jax.random.PRNGKey(0)
    pkey, xkey = jax.random.split(key)
    params = init_params(pkey)

    n_instances = 8   # bag size; each instance is a 3x28x28 image (28 -> 50*4*4 features)
    x = jax.random.normal(xkey, (1, n_instances, 3, 28, 28), dtype=jnp.float32)

    fwd = jax.jit(ma_midn_forward)
    y_prob, y_hat, im_cls_score = jax.block_until_ready(fwd(x, params))

    assert y_prob.shape == (1, 1)
    assert y_hat.shape == (1, 1)
    assert im_cls_score.shape == (1, n_instances)
    assert bool(jnp.all(jnp.isfinite(y_prob)))
    assert bool(jnp.all(jnp.isfinite(im_cls_score)))
    print("KERNEL_OK")
</pallas_src>

<mosaic_0001>
module attributes {stable_mosaic.version = 11 : i64} {
  func.func @_conv1_pool_kernel(%arg0: i32, %arg1: memref<128x640xbf16, #tpu.memory_space<vmem>>, %arg2: memref<128x640xbf16, #tpu.memory_space<vmem>>, %arg3: memref<128x640xbf16, #tpu.memory_space<vmem>>, %arg4: memref<128x640xbf16, #tpu.memory_space<vmem>>, %arg5: memref<20x128xbf16, #tpu.memory_space<vmem>>, %arg6: memref<20x1xf32, #tpu.memory_space<vmem>>, %arg7: memref<20x640xf32, #tpu.memory_space<vmem>>) attributes {dimension_semantics = [#tpu.dimension_semantics<parallel>], iteration_bounds = array<i64: 2>, scalar_prefetch = 0 : i64, scratch_operands = 0 : i64, tpu.core_type = #tpu.core_type<tc>, window_params = [{transform_indices = @transform_0, window_bounds = array<i64: 128, 640>}, {transform_indices = @transform_1, window_bounds = array<i64: 128, 640>}, {transform_indices = @transform_2, window_bounds = array<i64: 128, 640>}, {transform_indices = @transform_3, window_bounds = array<i64: 128, 640>}, {pipeline_mode = #tpu.pipeline_mode<synchronous>, transform_indices = @transform_4, window_bounds = array<i64: 20, 128>}, {pipeline_mode = #tpu.pipeline_mode<synchronous>, transform_indices = @transform_5, window_bounds = array<i64: 20, 1>}, {transform_indices = @transform_6, window_bounds = array<i64: 20, 640>}]} {
    %c0 = arith.constant 0 : index
    %c0_0 = arith.constant 0 : index
    %0 = vector.load %arg5[%c0, %c0_0] : memref<20x128xbf16, #tpu.memory_space<vmem>>, vector<20x128xbf16>
    %c0_1 = arith.constant 0 : index
    %c0_2 = arith.constant 0 : index
    %1 = vector.load %arg1[%c0_1, %c0_2] : memref<128x640xbf16, #tpu.memory_space<vmem>>, vector<128x640xbf16>
    %cst = arith.constant dense<0.000000e+00> : vector<20x640xf32>
    %2 = tpu.matmul %0, %1, %cst {dimension_numbers = #tpu.dot_dimension_numbers<[1], [0], [0], [1], [0, 0, 1, 1], [], []>} : vector<20x128xbf16>, vector<128x640xbf16>, vector<20x640xf32> -> vector<20x640xf32>
    %c0_3 = arith.constant 0 : index
    %c0_4 = arith.constant 0 : index
    %3 = vector.load %arg2[%c0_3, %c0_4] : memref<128x640xbf16, #tpu.memory_space<vmem>>, vector<128x640xbf16>
    %cst_5 = arith.constant dense<0.000000e+00> : vector<20x640xf32>
    %4 = tpu.matmul %0, %3, %cst_5 {dimension_numbers = #tpu.dot_dimension_numbers<[1], [0], [0], [1], [0, 0, 1, 1], [], []>} : vector<20x128xbf16>, vector<128x640xbf16>, vector<20x640xf32> -> vector<20x640xf32>
    %c0_6 = arith.constant 0 : index
    %c0_7 = arith.constant 0 : index
    %5 = vector.load %arg3[%c0_6, %c0_7] : memref<128x640xbf16, #tpu.memory_space<vmem>>, vector<128x640xbf16>
    %cst_8 = arith.constant dense<0.000000e+00> : vector<20x640xf32>
    %6 = tpu.matmul %0, %5, %cst_8 {dimension_numbers = #tpu.dot_dimension_numbers<[1], [0], [0], [1], [0, 0, 1, 1], [], []>} : vector<20x128xbf16>, vector<128x640xbf16>, vector<20x640xf32> -> vector<20x640xf32>
    %c0_9 = arith.constant 0 : index
    %c0_10 = arith.constant 0 : index
    %7 = vector.load %arg4[%c0_9, %c0_10] : memref<128x640xbf16, #tpu.memory_space<vmem>>, vector<128x640xbf16>
    %cst_11 = arith.constant dense<0.000000e+00> : vector<20x640xf32>
    %8 = tpu.matmul %0, %7, %cst_11 {dimension_numbers = #tpu.dot_dimension_numbers<[1], [0], [0], [1], [0, 0, 1, 1], [], []>} : vector<20x128xbf16>, vector<128x640xbf16>, vector<20x640xf32> -> vector<20x640xf32>
    %9 = arith.maximumf %2, %4 : vector<20x640xf32>
    %10 = arith.maximumf %6, %8 : vector<20x640xf32>
    %11 = arith.maximumf %9, %10 : vector<20x640xf32>
    %c0_12 = arith.constant 0 : index
    %c0_13 = arith.constant 0 : index
    %12 = vector.load %arg6[%c0_12, %c0_13] : memref<20x1xf32, #tpu.memory_space<vmem>>, vector<20x1xf32>
    %13 = vector.broadcast %12 : vector<20x1xf32> to vector<20x640xf32>
    %14 = arith.addf %11, %13 : vector<20x640xf32>
    %cst_14 = arith.constant 0.000000e+00 : f32
    %15 = vector.broadcast %cst_14 : f32 to vector<20x640xf32>
    %16 = arith.maximumf %14, %15 : vector<20x640xf32>
    %c0_15 = arith.constant 0 : index
    %c0_16 = arith.constant 0 : index
    %17 = vector.load %arg7[%c0_15, %c0_16] : memref<20x640xf32, #tpu.memory_space<vmem>>, vector<20x640xf32>
    tpu.vector_store %arg7[%c0_15, %c0_16], %16 {strides = array<i32>} : memref<20x640xf32, #tpu.memory_space<vmem>>, vector<20x640xf32>,
    return
  }
  func.func @transform_0(%arg0: i32) -> (i32, i32) {
    %c0_i32 = arith.constant 0 : i32
    %c0_i32_0 = arith.constant 0 : i32
    return %c0_i32, %arg0 : i32, i32
  }
  func.func @transform_1(%arg0: i32) -> (i32, i32) {
    %c0_i32 = arith.constant 0 : i32
    %c0_i32_0 = arith.constant 0 : i32
    return %c0_i32, %arg0 : i32, i32
  }
  func.func @transform_2(%arg0: i32) -> (i32, i32) {
    %c0_i32 = arith.constant 0 : i32
    %c0_i32_0 = arith.constant 0 : i32
    return %c0_i32, %arg0 : i32, i32
  }
  func.func @transform_3(%arg0: i32) -> (i32, i32) {
    %c0_i32 = arith.constant 0 : i32
    %c0_i32_0 = arith.constant 0 : i32
    return %c0_i32, %arg0 : i32, i32
  }
  func.func @transform_4(%arg0: i32) -> (i32, i32) {
    %c0_i32 = arith.constant 0 : i32
    %c0_i32_0 = arith.constant 0 : i32
    %c0_i32_1 = arith.constant 0 : i32
    return %c0_i32, %c0_i32_0 : i32, i32
  }
  func.func @transform_5(%arg0: i32) -> (i32, i32) {
    %c0_i32 = arith.constant 0 : i32
    %c0_i32_0 = arith.constant 0 : i32
    %c0_i32_1 = arith.constant 0 : i32
    return %c0_i32, %c0_i32_0 : i32, i32
  }
  func.func @transform_6(%arg0: i32) -> (i32, i32) {
    %c0_i32 = arith.constant 0 : i32
    %c0_i32_0 = arith.constant 0 : i32
    return %c0_i32, %arg0 : i32, i32
  }
}

module attributes {stable_mosaic.version = 11 : i64} {
  func.func @_tail_kernel(%arg0: i32, %arg1: memref<128x512xbf16, #tpu.memory_space<vmem>>, %arg2: memref<128x512xbf16, #tpu.memory_space<vmem>>, %arg3: memref<128x512xbf16, #tpu.memory_space<vmem>>, %arg4: memref<128x512xbf16, #tpu.memory_space<vmem>>, %arg5: memref<512x50xbf16, #tpu.memory_space<vmem>>, %arg6: memref<1x50xf32, #tpu.memory_space<vmem>>, %arg7: memref<16x50x512xbf16, #tpu.memory_space<vmem>>, %arg8: memref<1x512xf32, #tpu.memory_space<vmem>>, %arg9: memref<512x256xf32, #tpu.memory_space<vmem>>, %arg10: memref<1x256xf32, #tpu.memory_space<vmem>>, %arg11: memref<128x2xf32, #tpu.memory_space<vmem>>, %arg12: memref<1x2xf32, #tpu.memory_space<vmem>>, %arg13: memref<128x2xf32, #tpu.memory_space<vmem>>, %arg14: memref<1x2xf32, #tpu.memory_space<vmem>>, %arg15: memref<1x512xf32, #tpu.memory_space<vmem>>, %arg16: memref<1x1xf32, #tpu.memory_space<vmem>>, %arg17: memref<1x1xf32, #tpu.memory_space<vmem>>, %arg18: memref<8x1xf32, #tpu.memory_space<vmem>>) attributes {dimension_semantics = [#tpu.dimension_semantics<arbitrary>], iteration_bounds = array<i64: 1>, scalar_prefetch = 0 : i64, scratch_operands = 0 : i64, tpu.core_type = #tpu.core_type<tc>, window_params = [{pipeline_mode = #tpu.pipeline_mode<synchronous>, transform_indices = @transform_0, window_bounds = array<i64: 128, 512>}, {pipeline_mode = #tpu.pipeline_mode<synchronous>, transform_indices = @transform_1, window_bounds = array<i64: 128, 512>}, {pipeline_mode = #tpu.pipeline_mode<synchronous>, transform_indices = @transform_2, window_bounds = array<i64: 128, 512>}, {pipeline_mode = #tpu.pipeline_mode<synchronous>, transform_indices = @transform_3, window_bounds = array<i64: 128, 512>}, {pipeline_mode = #tpu.pipeline_mode<synchronous>, transform_indices = @transform_4, window_bounds = array<i64: 512, 50>}, {pipeline_mode = #tpu.pipeline_mode<synchronous>, transform_indices = @transform_5, window_bounds = array<i64: 1, 50>}, {pipeline_mode = #tpu.pipeline_mode<synchronous>, transform_indices = @transform_6, window_bounds = array<i64: 16, 50, 512>}, {pipeline_mode = #tpu.pipeline_mode<synchronous>, transform_indices = @transform_7, window_bounds = array<i64: 1, 512>}, {pipeline_mode = #tpu.pipeline_mode<synchronous>, transform_indices = @transform_8, window_bounds = array<i64: 512, 256>}, {pipeline_mode = #tpu.pipeline_mode<synchronous>, transform_indices = @transform_9, window_bounds = array<i64: 1, 256>}, {pipeline_mode = #tpu.pipeline_mode<synchronous>, transform_indices = @transform_10, window_bounds = array<i64: 128, 2>}, {pipeline_mode = #tpu.pipeline_mode<synchronous>, transform_indices = @transform_11, window_bounds = array<i64: 1, 2>}, {pipeline_mode = #tpu.pipeline_mode<synchronous>, transform_indices = @transform_12, window_bounds = array<i64: 128, 2>}, {pipeline_mode = #tpu.pipeline_mode<synchronous>, transform_indices = @transform_13, window_bounds = array<i64: 1, 2>}, {pipeline_mode = #tpu.pipeline_mode<synchronous>, transform_indices = @transform_14, window_bounds = array<i64: 1, 512>}, {pipeline_mode = #tpu.pipeline_mode<synchronous>, transform_indices = @transform_15, window_bounds = array<i64: 1, 1>}, {pipeline_mode = #tpu.pipeline_mode<synchronous>, transform_indices = @transform_16, window_bounds = array<i64: 1, 1>}, {pipeline_mode = #tpu.pipeline_mode<synchronous>, transform_indices = @transform_17, window_bounds = array<i64: 8, 1>}]} {
    %c0 = arith.constant 0 : index
    %c0_0 = arith.constant 0 : index
    %0 = vector.load %arg5[%c0, %c0_0] : memref<512x50xbf16, #tpu.memory_space<vmem>>, vector<512x50xbf16>
    %c0_1 = arith.constant 0 : index
    %c0_2 = arith.constant 0 : index
    %1 = vector.load %arg1[%c0_1, %c0_2] : memref<128x512xbf16, #tpu.memory_space<vmem>>, vector<128x512xbf16>
    %cst = arith.constant dense<0.000000e+00> : vector<128x50xf32>
    %2 = tpu.matmul %1, %0, %cst {dimension_numbers = #tpu.dot_dimension_numbers<[1], [0], [0], [1], [0, 0, 1, 1], [], []>} : vector<128x512xbf16>, vector<512x50xbf16>, vector<128x50xf32> -> vector<128x50xf32>
    %c0_3 = arith.constant 0 : index
    %c0_4 = arith.constant 0 : index
    %3 = vector.load %arg2[%c0_3, %c0_4] : memref<128x512xbf16, #tpu.memory_space<vmem>>, vector<128x512xbf16>
    %cst_5 = arith.constant dense<0.000000e+00> : vector<128x50xf32>
    %4 = tpu.matmul %3, %0, %cst_5 {dimension_numbers = #tpu.dot_dimension_numbers<[1], [0], [0], [1], [0, 0, 1, 1], [], []>} : vector<128x512xbf16>, vector<512x50xbf16>, vector<128x50xf32> -> vector<128x50xf32>
    %c0_6 = arith.constant 0 : index
    %c0_7 = arith.constant 0 : index
    %5 = vector.load %arg3[%c0_6, %c0_7] : memref<128x512xbf16, #tpu.memory_space<vmem>>, vector<128x512xbf16>
    %cst_8 = arith.constant dense<0.000000e+00> : vector<128x50xf32>
    %6 = tpu.matmul %5, %0, %cst_8 {dimension_numbers = #tpu.dot_dimension_numbers<[1], [0], [0], [1], [0, 0, 1, 1], [], []>} : vector<128x512xbf16>, vector<512x50xbf16>, vector<128x50xf32> -> vector<128x50xf32>
    %c0_9 = arith.constant 0 : index
    %c0_10 = arith.constant 0 : index
    %7 = vector.load %arg4[%c0_9, %c0_10] : memref<128x512xbf16, #tpu.memory_space<vmem>>, vector<128x512xbf16>
    %cst_11 = arith.constant dense<0.000000e+00> : vector<128x50xf32>
    %8 = tpu.matmul %7, %0, %cst_11 {dimension_numbers = #tpu.dot_dimension_numbers<[1], [0], [0], [1], [0, 0, 1, 1], [], []>} : vector<128x512xbf16>, vector<512x50xbf16>, vector<128x50xf32> -> vector<128x50xf32>
    %9 = arith.maximumf %2, %4 : vector<128x50xf32>
    %10 = arith.maximumf %6, %8 : vector<128x50xf32>
    %11 = arith.maximumf %9, %10 : vector<128x50xf32>
    %c0_12 = arith.constant 0 : index
    %c0_13 = arith.constant 0 : index
    %12 = vector.load %arg6[%c0_12, %c0_13] : memref<1x50xf32, #tpu.memory_space<vmem>>, vector<1x50xf32>
    %13 = vector.broadcast %12 : vector<1x50xf32> to vector<128x50xf32>
    %14 = arith.addf %11, %13 : vector<128x50xf32>
    %cst_14 = arith.constant 0.000000e+00 : f32
    %15 = vector.broadcast %cst_14 : f32 to vector<128x50xf32>
    %16 = arith.maximumf %14, %15 : vector<128x50xf32>
    %cst_15 = arith.constant 0.000000e+00 : f32
    %17 = vector.broadcast %cst_15 : f32 to vector<8x512xf32>
    %18 = vector.extract_strided_slice %16 {offsets = [0, 0], sizes = [8, 50], strides = [1, 1]} : vector<128x50xf32> to vector<8x50xf32>
    %19 = arith.truncf %18 : vector<8x50xf32> to vector<8x50xbf16>
    %c0_16 = arith.constant 0 : index
    %c0_17 = arith.constant 0 : index
    %c0_18 = arith.constant 0 : index
    %20 = vector.load %arg7[%c0_16, %c0_17, %c0_18] : memref<16x50x512xbf16, #tpu.memory_space<vmem>>, vector<1x50x512xbf16>
    %21 = vector.shape_cast %20 : vector<1x50x512xbf16> to vector<50x512xbf16>
    %cst_19 = arith.constant dense<0.000000e+00> : vector<8x512xf32>
    %22 = tpu.matmul %19, %21, %cst_19 {dimension_numbers = #tpu.dot_dimension_numbers<[1], [0], [0], [1], [0, 0, 1, 1], [], []>} : vector<8x50xbf16>, vector<50x512xbf16>, vector<8x512xf32> -> vector<8x512xf32>
    %23 = arith.addf %17, %22 : vector<8x512xf32>
    %24 = vector.extract_strided_slice %16 {offsets = [8, 0], sizes = [8, 50], strides = [1, 1]} : vector<128x50xf32> to vector<8x50xf32>
    %25 = arith.truncf %24 : vector<8x50xf32> to vector<8x50xbf16>
    %c1 = arith.constant 1 : index
    %c0_20 = arith.constant 0 : index
    %c0_21 = arith.constant 0 : index
    %26 = vector.load %arg7[%c1, %c0_20, %c0_21] : memref<16x50x512xbf16, #tpu.memory_space<vmem>>, vector<1x50x512xbf16>
    %27 = vector.shape_cast %26 : vector<1x50x512xbf16> to vector<50x512xbf16>
    %cst_22 = arith.constant dense<0.000000e+00> : vector<8x512xf32>
    %28 = tpu.matmul %25, %27, %cst_22 {dimension_numbers = #tpu.dot_dimension_numbers<[1], [0], [0], [1], [0, 0, 1, 1], [], []>} : vector<8x50xbf16>, vector<50x512xbf16>, vector<8x512xf32> -> vector<8x512xf32>
    %29 = arith.addf %23, %28 : vector<8x512xf32>
    %30 = vector.extract_strided_slice %16 {offsets = [16, 0], sizes = [8, 50], strides = [1, 1]} : vector<128x50xf32> to vector<8x50xf32>
    %31 = arith.truncf %30 : vector<8x50xf32> to vector<8x50xbf16>
    %c2 = arith.constant 2 : index
    %c0_23 = arith.constant 0 : index
    %c0_24 = arith.constant 0 : index
    %32 = vector.load %arg7[%c2, %c0_23, %c0_24] : memref<16x50x512xbf16, #tpu.memory_space<vmem>>, vector<1x50x512xbf16>
    %33 = vector.shape_cast %32 : vector<1x50x512xbf16> to vector<50x512xbf16>
    %cst_25 = arith.constant dense<0.000000e+00> : vector<8x512xf32>
    %34 = tpu.matmul %31, %33, %cst_25 {dimension_numbers = #tpu.dot_dimension_numbers<[1], [0], [0], [1], [0, 0, 1, 1], [], []>} : vector<8x50xbf16>, vector<50x512xbf16>, vector<8x512xf32> -> vector<8x512xf32>
    %35 = arith.addf %29, %34 : vector<8x512xf32>
    %36 = vector.extract_strided_slice %16 {offsets = [24, 0], sizes = [8, 50], strides = [1, 1]} : vector<128x50xf32> to vector<8x50xf32>
    %37 = arith.truncf %36 : vector<8x50xf32> to vector<8x50xbf16>
    %c3 = arith.constant 3 : index
    %c0_26 = arith.constant 0 : index
    %c0_27 = arith.constant 0 : index
    %38 = vector.load %arg7[%c3, %c0_26, %c0_27] : memref<16x50x512xbf16, #tpu.memory_space<vmem>>, vector<1x50x512xbf16>
    %39 = vector.shape_cast %38 : vector<1x50x512xbf16> to vector<50x512xbf16>
    %cst_28 = arith.constant dense<0.000000e+00> : vector<8x512xf32>
    %40 = tpu.matmul %37, %39, %cst_28 {dimension_numbers = #tpu.dot_dimension_numbers<[1], [0], [0], [1], [0, 0, 1, 1], [], []>} : vector<8x50xbf16>, vector<50x512xbf16>, vector<8x512xf32> -> vector<8x512xf32>
    %41 = arith.addf %35, %40 : vector<8x512xf32>
    %42 = vector.extract_strided_slice %16 {offsets = [32, 0], sizes = [8, 50], strides = [1, 1]} : vector<128x50xf32> to vector<8x50xf32>
    %43 = arith.truncf %42 : vector<8x50xf32> to vector<8x50xbf16>
    %c4 = arith.constant 4 : index
    %c0_29 = arith.constant 0 : index
    %c0_30 = arith.constant 0 : index
    %44 = vector.load %arg7[%c4, %c0_29, %c0_30] : memref<16x50x512xbf16, #tpu.memory_space<vmem>>, vector<1x50x512xbf16>
    %45 = vector.shape_cast %44 : vector<1x50x512xbf16> to vector<50x512xbf16>
    %cst_31 = arith.constant dense<0.000000e+00> : vector<8x512xf32>
    %46 = tpu.matmul %43, %45, %cst_31 {dimension_numbers = #tpu.dot_dimension_numbers<[1], [0], [0], [1], [0, 0, 1, 1], [], []>} : vector<8x50xbf16>, vector<50x512xbf16>, vector<8x512xf32> -> vector<8x512xf32>
    %47 = arith.addf %41, %46 : vector<8x512xf32>
    %48 = vector.extract_strided_slice %16 {offsets = [40, 0], sizes = [8, 50], strides = [1, 1]} : vector<128x50xf32> to vector<8x50xf32>
    %49 = arith.truncf %48 : vector<8x50xf32> to vector<8x50xbf16>
    %c5 = arith.constant 5 : index
    %c0_32 = arith.constant 0 : index
    %c0_33 = arith.constant 0 : index
    %50 = vector.load %arg7[%c5, %c0_32, %c0_33] : memref<16x50x512xbf16, #tpu.memory_space<vmem>>, vector<1x50x512xbf16>
    %51 = vector.shape_cast %50 : vector<1x50x512xbf16> to vector<50x512xbf16>
    %cst_34 = arith.constant dense<0.000000e+00> : vector<8x512xf32>
    %52 = tpu.matmul %49, %51, %cst_34 {dimension_numbers = #tpu.dot_dimension_numbers<[1], [0], [0], [1], [0, 0, 1, 1], [], []>} : vector<8x50xbf16>, vector<50x512xbf16>, vector<8x512xf32> -> vector<8x512xf32>
    %53 = arith.addf %47, %52 : vector<8x512xf32>
    %54 = vector.extract_strided_slice %16 {offsets = [48, 0], sizes = [8, 50], strides = [1, 1]} : vector<128x50xf32> to vector<8x50xf32>
    %55 = arith.truncf %54 : vector<8x50xf32> to vector<8x50xbf16>
    %c6 = arith.constant 6 : index
    %c0_35 = arith.constant 0 : index
    %c0_36 = arith.constant 0 : index
    %56 = vector.load %arg7[%c6, %c0_35, %c0_36] : memref<16x50x512xbf16, #tpu.memory_space<vmem>>, vector<1x50x512xbf16>
    %57 = vector.shape_cast %56 : vector<1x50x512xbf16> to vector<50x512xbf16>
    %cst_37 = arith.constant dense<0.000000e+00> : vector<8x512xf32>
    %58 = tpu.matmul %55, %57, %cst_37 {dimension_numbers = #tpu.dot_dimension_numbers<[1], [0], [0], [1], [0, 0, 1, 1], [], []>} : vector<8x50xbf16>, vector<50x512xbf16>, vector<8x512xf32> -> vector<8x512xf32>
    %59 = arith.addf %53, %58 : vector<8x512xf32>
    %60 = vector.extract_strided_slice %16 {offsets = [56, 0], sizes = [8, 50], strides = [1, 1]} : vector<128x50xf32> to vector<8x50xf32>
    %61 = arith.truncf %60 : vector<8x50xf32> to vector<8x50xbf16>
    %c7 = arith.constant 7 : index
    %c0_38 = arith.constant 0 : index
    %c0_39 = arith.constant 0 : index
    %62 = vector.load %arg7[%c7, %c0_38, %c0_39] : memref<16x50x512xbf16, #tpu.memory_space<vmem>>, vector<1x50x512xbf16>
    %63 = vector.shape_cast %62 : vector<1x50x512xbf16> to vector<50x512xbf16>
    %cst_40 = arith.constant dense<0.000000e+00> : vector<8x512xf32>
    %64 = tpu.matmul %61, %63, %cst_40 {dimension_numbers = #tpu.dot_dimension_numbers<[1], [0], [0], [1], [0, 0, 1, 1], [], []>} : vector<8x50xbf16>, vector<50x512xbf16>, vector<8x512xf32> -> vector<8x512xf32>
    %65 = arith.addf %59, %64 : vector<8x512xf32>
    %66 = vector.extract_strided_slice %16 {offsets = [64, 0], sizes = [8, 50], strides = [1, 1]} : vector<128x50xf32> to vector<8x50xf32>
    %67 = arith.truncf %66 : vector<8x50xf32> to vector<8x50xbf16>
    %c8 = arith.constant 8 : index
    %c0_41 = arith.constant 0 : index
    %c0_42 = arith.constant 0 : index
    %68 = vector.load %arg7[%c8, %c0_41, %c0_42] : memref<16x50x512xbf16, #tpu.memory_space<vmem>>, vector<1x50x512xbf16>
    %69 = vector.shape_cast %68 : vector<1x50x512xbf16> to vector<50x512xbf16>
    %cst_43 = arith.constant dense<0.000000e+00> : vector<8x512xf32>
    %70 = tpu.matmul %67, %69, %cst_43 {dimension_numbers = #tpu.dot_dimension_numbers<[1], [0], [0], [1], [0, 0, 1, 1], [], []>} : vector<8x50xbf16>, vector<50x512xbf16>, vector<8x512xf32> -> vector<8x512xf32>
    %71 = arith.addf %65, %70 : vector<8x512xf32>
    %72 = vector.extract_strided_slice %16 {offsets = [72, 0], sizes = [8, 50], strides = [1, 1]} : vector<128x50xf32> to vector<8x50xf32>
    %73 = arith.truncf %72 : vector<8x50xf32> to vector<8x50xbf16>
    %c9 = arith.constant 9 : index
    %c0_44 = arith.constant 0 : index
    %c0_45 = arith.constant 0 : index
    %74 = vector.load %arg7[%c9, %c0_44, %c0_45] : memref<16x50x512xbf16, #tpu.memory_space<vmem>>, vector<1x50x512xbf16>
    %75 = vector.shape_cast %74 : vector<1x50x512xbf16> to vector<50x512xbf16>
    %cst_46 = arith.constant dense<0.000000e+00> : vector<8x512xf32>
    %76 = tpu.matmul %73, %75, %cst_46 {dimension_numbers = #tpu.dot_dimension_numbers<[1], [0], [0], [1], [0, 0, 1, 1], [], []>} : vector<8x50xbf16>, vector<50x512xbf16>, vector<8x512xf32> -> vector<8x512xf32>
    %77 = arith.addf %71, %76 : vector<8x512xf32>
    %78 = vector.extract_strided_slice %16 {offsets = [80, 0], sizes = [8, 50], strides = [1, 1]} : vector<128x50xf32> to vector<8x50xf32>
    %79 = arith.truncf %78 : vector<8x50xf32> to vector<8x50xbf16>
    %c10 = arith.constant 10 : index
    %c0_47 = arith.constant 0 : index
    %c0_48 = arith.constant 0 : index
    %80 = vector.load %arg7[%c10, %c0_47, %c0_48] : memref<16x50x512xbf16, #tpu.memory_space<vmem>>, vector<1x50x512xbf16>
    %81 = vector.shape_cast %80 : vector<1x50x512xbf16> to vector<50x512xbf16>
    %cst_49 = arith.constant dense<0.000000e+00> : vector<8x512xf32>
    %82 = tpu.matmul %79, %81, %cst_49 {dimension_numbers = #tpu.dot_dimension_numbers<[1], [0], [0], [1], [0, 0, 1, 1], [], []>} : vector<8x50xbf16>, vector<50x512xbf16>, vector<8x512xf32> -> vector<8x512xf32>
    %83 = arith.addf %77, %82 : vector<8x512xf32>
    %84 = vector.extract_strided_slice %16 {offsets = [88, 0], sizes = [8, 50], strides = [1, 1]} : vector<128x50xf32> to vector<8x50xf32>
    %85 = arith.truncf %84 : vector<8x50xf32> to vector<8x50xbf16>
    %c11 = arith.constant 11 : index
    %c0_50 = arith.constant 0 : index
    %c0_51 = arith.constant 0 : index
    %86 = vector.load %arg7[%c11, %c0_50, %c0_51] : memref<16x50x512xbf16, #tpu.memory_space<vmem>>, vector<1x50x512xbf16>
    %87 = vector.shape_cast %86 : vector<1x50x512xbf16> to vector<50x512xbf16>
    %cst_52 = arith.constant dense<0.000000e+00> : vector<8x512xf32>
    %88 = tpu.matmul %85, %87, %cst_52 {dimension_numbers = #tpu.dot_dimension_numbers<[1], [0], [0], [1], [0, 0, 1, 1], [], []>} : vector<8x50xbf16>, vector<50x512xbf16>, vector<8x512xf32> -> vector<8x512xf32>
    %89 = arith.addf %83, %88 : vector<8x512xf32>
    %90 = vector.extract_strided_slice %16 {offsets = [96, 0], sizes = [8, 50], strides = [1, 1]} : vector<128x50xf32> to vector<8x50xf32>
    %91 = arith.truncf %90 : vector<8x50xf32> to vector<8x50xbf16>
    %c12 = arith.constant 12 : index
    %c0_53 = arith.constant 0 : index
    %c0_54 = arith.constant 0 : index
    %92 = vector.load %arg7[%c12, %c0_53, %c0_54] : memref<16x50x512xbf16, #tpu.memory_space<vmem>>, vector<1x50x512xbf16>
    %93 = vector.shape_cast %92 : vector<1x50x512xbf16> to vector<50x512xbf16>
    %cst_55 = arith.constant dense<0.000000e+00> : vector<8x512xf32>
    %94 = tpu.matmul %91, %93, %cst_55 {dimension_numbers = #tpu.dot_dimension_numbers<[1], [0], [0], [1], [0, 0, 1, 1], [], []>} : vector<8x50xbf16>, vector<50x512xbf16>, vector<8x512xf32> -> vector<8x512xf32>
    %95 = arith.addf %89, %94 : vector<8x512xf32>
    %96 = vector.extract_strided_slice %16 {offsets = [104, 0], sizes = [8, 50], strides = [1, 1]} : vector<128x50xf32> to vector<8x50xf32>
    %97 = arith.truncf %96 : vector<8x50xf32> to vector<8x50xbf16>
    %c13 = arith.constant 13 : index
    %c0_56 = arith.constant 0 : index
    %c0_57 = arith.constant 0 : index
    %98 = vector.load %arg7[%c13, %c0_56, %c0_57] : memref<16x50x512xbf16, #tpu.memory_space<vmem>>, vector<1x50x512xbf16>
    %99 = vector.shape_cast %98 : vector<1x50x512xbf16> to vector<50x512xbf16>
    %cst_58 = arith.constant dense<0.000000e+00> : vector<8x512xf32>
    %100 = tpu.matmul %97, %99, %cst_58 {dimension_numbers = #tpu.dot_dimension_numbers<[1], [0], [0], [1], [0, 0, 1, 1], [], []>} : vector<8x50xbf16>, vector<50x512xbf16>, vector<8x512xf32> -> vector<8x512xf32>
    %101 = arith.addf %95, %100 : vector<8x512xf32>
    %102 = vector.extract_strided_slice %16 {offsets = [112, 0], sizes = [8, 50], strides = [1, 1]} : vector<128x50xf32> to vector<8x50xf32>
    %103 = arith.truncf %102 : vector<8x50xf32> to vector<8x50xbf16>
    %c14 = arith.constant 14 : index
    %c0_59 = arith.constant 0 : index
    %c0_60 = arith.constant 0 : index
    %104 = vector.load %arg7[%c14, %c0_59, %c0_60] : memref<16x50x512xbf16, #tpu.memory_space<vmem>>, vector<1x50x512xbf16>
    %105 = vector.shape_cast %104 : vector<1x50x512xbf16> to vector<50x512xbf16>
    %cst_61 = arith.constant dense<0.000000e+00> : vector<8x512xf32>
    %106 = tpu.matmul %103, %105, %cst_61 {dimension_numbers = #tpu.dot_dimension_numbers<[1], [0], [0], [1], [0, 0, 1, 1], [], []>} : vector<8x50xbf16>, vector<50x512xbf16>, vector<8x512xf32> -> vector<8x512xf32>
    %107 = arith.addf %101, %106 : vector<8x512xf32>
    %108 = vector.extract_strided_slice %16 {offsets = [120, 0], sizes = [8, 50], strides = [1, 1]} : vector<128x50xf32> to vector<8x50xf32>
    %109 = arith.truncf %108 : vector<8x50xf32> to vector<8x50xbf16>
    %c15 = arith.constant 15 : index
    %c0_62 = arith.constant 0 : index
    %c0_63 = arith.constant 0 : index
    %110 = vector.load %arg7[%c15, %c0_62, %c0_63] : memref<16x50x512xbf16, #tpu.memory_space<vmem>>, vector<1x50x512xbf16>
    %111 = vector.shape_cast %110 : vector<1x50x512xbf16> to vector<50x512xbf16>
    %cst_64 = arith.constant dense<0.000000e+00> : vector<8x512xf32>
    %112 = tpu.matmul %109, %111, %cst_64 {dimension_numbers = #tpu.dot_dimension_numbers<[1], [0], [0], [1], [0, 0, 1, 1], [], []>} : vector<8x50xbf16>, vector<50x512xbf16>, vector<8x512xf32> -> vector<8x512xf32>
    %113 = arith.addf %107, %112 : vector<8x512xf32>
    %c0_65 = arith.constant 0 : index
    %c0_66 = arith.constant 0 : index
    %114 = vector.load %arg8[%c0_65, %c0_66] : memref<1x512xf32, #tpu.memory_space<vmem>>, vector<1x512xf32>
    %115 = vector.broadcast %114 : vector<1x512xf32> to vector<8x512xf32>
    %116 = arith.addf %113, %115 : vector<8x512xf32>
    %cst_67 = arith.constant 0.000000e+00 : f32
    %117 = vector.broadcast %cst_67 : f32 to vector<8x512xf32>
    %118 = arith.maximumf %116, %117 : vector<8x512xf32>
    %c0_68 = arith.constant 0 : index
    %c0_69 = arith.constant 0 : index
    %119 = vector.load %arg9[%c0_68, %c0_69] : memref<512x256xf32, #tpu.memory_space<vmem>>, vector<512x256xf32>
    %cst_70 = arith.constant dense<0.000000e+00> : vector<8x256xf32>
    %120 = tpu.matmul %118, %119, %cst_70 {dimension_numbers = #tpu.dot_dimension_numbers<[1], [0], [0], [1], [0, 0, 1, 1], [], []>} : vector<8x512xf32>, vector<512x256xf32>, vector<8x256xf32> -> vector<8x256xf32>
    %c0_71 = arith.constant 0 : index
    %c0_72 = arith.constant 0 : index
    %121 = vector.load %arg10[%c0_71, %c0_72] : memref<1x256xf32, #tpu.memory_space<vmem>>, vector<1x256xf32>
    %122 = vector.broadcast %121 : vector<1x256xf32> to vector<8x256xf32>
    %123 = arith.addf %120, %122 : vector<8x256xf32>
    %124 = math.tanh %123 : vector<8x256xf32>
    %125 = vector.extract_strided_slice %124 {offsets = [0, 0], sizes = [8, 128], strides = [1, 1]} : vector<8x256xf32> to vector<8x128xf32>
    %c0_73 = arith.constant 0 : index
    %c0_74 = arith.constant 0 : index
    %126 = vector.load %arg11[%c0_73, %c0_74] : memref<128x2xf32, #tpu.memory_space<vmem>>, vector<128x2xf32>
    %cst_75 = arith.constant dense<0.000000e+00> : vector<8x2xf32>
    %127 = tpu.matmul %125, %126, %cst_75 {dimension_numbers = #tpu.dot_dimension_numbers<[1], [0], [0], [1], [0, 0, 1, 1], [], []>} : vector<8x128xf32>, vector<128x2xf32>, vector<8x2xf32> -> vector<8x2xf32>
    %c0_76 = arith.constant 0 : index
    %c0_77 = arith.constant 0 : index
    %128 = vector.load %arg12[%c0_76, %c0_77] : memref<1x2xf32, #tpu.memory_space<vmem>>, vector<1x2xf32>
    %129 = vector.broadcast %128 : vector<1x2xf32> to vector<8x2xf32>
    %130 = arith.addf %127, %129 : vector<8x2xf32>
    %131 = vector.extract_strided_slice %124 {offsets = [0, 128], sizes = [8, 128], strides = [1, 1]} : vector<8x256xf32> to vector<8x128xf32>
    %c0_78 = arith.constant 0 : index
    %c0_79 = arith.constant 0 : index
    %132 = vector.load %arg13[%c0_78, %c0_79] : memref<128x2xf32, #tpu.memory_space<vmem>>, vector<128x2xf32>
    %cst_80 = arith.constant dense<0.000000e+00> : vector<8x2xf32>
    %133 = tpu.matmul %131, %132, %cst_80 {dimension_numbers = #tpu.dot_dimension_numbers<[1], [0], [0], [1], [0, 0, 1, 1], [], []>} : vector<8x128xf32>, vector<128x2xf32>, vector<8x2xf32> -> vector<8x2xf32>
    %c0_81 = arith.constant 0 : index
    %c0_82 = arith.constant 0 : index
    %134 = vector.load %arg14[%c0_81, %c0_82] : memref<1x2xf32, #tpu.memory_space<vmem>>, vector<1x2xf32>
    %135 = vector.broadcast %134 : vector<1x2xf32> to vector<8x2xf32>
    %136 = arith.addf %133, %135 : vector<8x2xf32>
    %cst_83 = arith.constant dense<0xFF800000> : vector<2xf32>
    %137 = vector.multi_reduction <maximumf>, %130, %cst_83 [0] : vector<8x2xf32> to vector<2xf32>
    %138 = vector.shape_cast %137 : vector<2xf32> to vector<1x2xf32>
    %139 = vector.broadcast %138 : vector<1x2xf32> to vector<8x2xf32>
    %140 = arith.subf %130, %139 : vector<8x2xf32>
    %141 = math.exp %140 : vector<8x2xf32>
    %cst_84 = arith.constant dense<0.000000e+00> : vector<2xf32>
    %142 = vector.multi_reduction <add>, %141, %cst_84 [0] : vector<8x2xf32> to vector<2xf32>
    %143 = vector.shape_cast %142 : vector<2xf32> to vector<1x2xf32>
    %144 = tpu.reciprocal %143 {approx = true} : vector<1x2xf32> -> vector<1x2xf32>
    %145 = vector.broadcast %144 : vector<1x2xf32> to vector<8x2xf32>
    %146 = arith.mulf %141, %145 : vector<8x2xf32>
    %cst_85 = arith.constant dense<0xFF800000> : vector<8xf32>
    %147 = vector.multi_reduction <maximumf>, %136, %cst_85 [1] : vector<8x2xf32> to vector<8xf32>
    %148 = vector.shape_cast %147 : vector<8xf32> to vector<8x1xf32>
    %149 = vector.broadcast %148 : vector<8x1xf32> to vector<8x2xf32>
    %150 = arith.subf %136, %149 : vector<8x2xf32>
    %151 = math.exp %150 : vector<8x2xf32>
    %cst_86 = arith.constant dense<0.000000e+00> : vector<8xf32>
    %152 = vector.multi_reduction <add>, %151, %cst_86 [1] : vector<8x2xf32> to vector<8xf32>
    %153 = vector.shape_cast %152 : vector<8xf32> to vector<8x1xf32>
    %154 = tpu.reciprocal %153 {approx = true} : vector<8x1xf32> -> vector<8x1xf32>
    %155 = vector.broadcast %154 : vector<8x1xf32> to vector<8x2xf32>
    %156 = arith.mulf %151, %155 : vector<8x2xf32>
    %157 = arith.mulf %146, %156 : vector<8x2xf32>
    %cst_87 = arith.constant dense<0xFF800000> : vector<8xf32>
    %158 = vector.multi_reduction <maximumf>, %157, %cst_87 [1] : vector<8x2xf32> to vector<8xf32>
    %159 = vector.shape_cast %158 : vector<8xf32> to vector<8x1xf32>
    %160 = vector.broadcast %159 : vector<8x1xf32> to vector<8x512xf32>
    %161 = arith.mulf %160, %118 : vector<8x512xf32>
    %cst_88 = arith.constant dense<0.000000e+00> : vector<512xf32>
    %162 = vector.multi_reduction <add>, %161, %cst_88 [0] : vector<8x512xf32> to vector<512xf32>
    %163 = vector.shape_cast %162 : vector<512xf32> to vector<1x512xf32>
    %c0_89 = arith.constant 0 : index
    %c0_90 = arith.constant 0 : index
    %164 = vector.load %arg15[%c0_89, %c0_90] : memref<1x512xf32, #tpu.memory_space<vmem>>, vector<1x512xf32>
    %165 = arith.mulf %163, %164 : vector<1x512xf32>
    %cst_91 = arith.constant dense<0.000000e+00> : vector<1xf32>
    %166 = vector.multi_reduction <add>, %165, %cst_91 [1] : vector<1x512xf32> to vector<1xf32>
    %167 = vector.shape_cast %166 : vector<1xf32> to vector<1x1xf32>
    %c0_92 = arith.constant 0 : index
    %c0_93 = arith.constant 0 : index
    %168 = vector.load %arg16[%c0_92, %c0_93] : memref<1x1xf32, #tpu.memory_space<vmem>>, vector<1x1xf32>
    %169 = arith.addf %167, %168 : vector<1x1xf32>
    %cst_94 = arith.constant 0.000000e+00 : f32
    %170 = vector.broadcast %cst_94 : f32 to vector<1x1xf32>
    %171 = arith.subf %170, %169 : vector<1x1xf32>
    %172 = math.exp %171 : vector<1x1xf32>
    %cst_95 = arith.constant 1.000000e+00 : f32
    %173 = vector.broadcast %cst_95 : f32 to vector<1x1xf32>
    %174 = arith.addf %173, %172 : vector<1x1xf32>
    %175 = tpu.reciprocal %174 {approx = true} : vector<1x1xf32> -> vector<1x1xf32>
    %c0_96 = arith.constant 0 : index
    %c0_97 = arith.constant 0 : index
    %176 = vector.load %arg17[%c0_96, %c0_97] : memref<1x1xf32, #tpu.memory_space<vmem>>, vector<1x1xf32>
    tpu.vector_store %arg17[%c0_96, %c0_97], %175 {strides = array<i32>} : memref<1x1xf32, #tpu.memory_space<vmem>>, vector<1x1xf32>,
    %c0_98 = arith.constant 0 : index
    %c0_99 = arith.constant 0 : index
    %177 = vector.load %arg18[%c0_98, %c0_99] : memref<8x1xf32, #tpu.memory_space<vmem>>, vector<8x1xf32>
    tpu.vector_store %arg18[%c0_98, %c0_99], %159 {strides = array<i32>} : memref<8x1xf32, #tpu.memory_space<vmem>>, vector<8x1xf32>,
    return
  }
  func.func @transform_0(%arg0: i32) -> (i32, i32) {
    %c0_i32 = arith.constant 0 : i32
    %c0_i32_0 = arith.constant 0 : i32
    %c0_i32_1 = arith.constant 0 : i32
    return %c0_i32, %c0_i32_0 : i32, i32
  }
  func.func @transform_1(%arg0: i32) -> (i32, i32) {
    %c0_i32 = arith.constant 0 : i32
    %c0_i32_0 = arith.constant 0 : i32
    %c0_i32_1 = arith.constant 0 : i32
    return %c0_i32, %c0_i32_0 : i32, i32
  }
  func.func @transform_2(%arg0: i32) -> (i32, i32) {
    %c0_i32 = arith.constant 0 : i32
    %c0_i32_0 = arith.constant 0 : i32
    %c0_i32_1 = arith.constant 0 : i32
    return %c0_i32, %c0_i32_0 : i32, i32
  }
  func.func @transform_3(%arg0: i32) -> (i32, i32) {
    %c0_i32 = arith.constant 0 : i32
    %c0_i32_0 = arith.constant 0 : i32
    %c0_i32_1 = arith.constant 0 : i32
    return %c0_i32, %c0_i32_0 : i32, i32
  }
  func.func @transform_4(%arg0: i32) -> (i32, i32) {
    %c0_i32 = arith.constant 0 : i32
    %c0_i32_0 = arith.constant 0 : i32
    %c0_i32_1 = arith.constant 0 : i32
    return %c0_i32, %c0_i32_0 : i32, i32
  }
  func.func @transform_5(%arg0: i32) -> (i32, i32) {
    %c0_i32 = arith.constant 0 : i32
    %c0_i32_0 = arith.constant 0 : i32
    %c0_i32_1 = arith.constant 0 : i32
    return %c0_i32, %c0_i32_0 : i32, i32
  }
  func.func @transform_6(%arg0: i32) -> (i32, i32, i32) {
    %c0_i32 = arith.constant 0 : i32
    %c0_i32_0 = arith.constant 0 : i32
    %c0_i32_1 = arith.constant 0 : i32
    %c0_i32_2 = arith.constant 0 : i32
    return %c0_i32, %c0_i32_0, %c0_i32_1 : i32, i32, i32
  }
  func.func @transform_7(%arg0: i32) -> (i32, i32) {
    %c0_i32 = arith.constant 0 : i32
    %c0_i32_0 = arith.constant 0 : i32
    %c0_i32_1 = arith.constant 0 : i32
    return %c0_i32, %c0_i32_0 : i32, i32
  }
  func.func @transform_8(%arg0: i32) -> (i32, i32) {
    %c0_i32 = arith.constant 0 : i32
    %c0_i32_0 = arith.constant 0 : i32
    %c0_i32_1 = arith.constant 0 : i32
    return %c0_i32, %c0_i32_0 : i32, i32
  }
  func.func @transform_9(%arg0: i32) -> (i32, i32) {
    %c0_i32 = arith.constant 0 : i32
    %c0_i32_0 = arith.constant 0 : i32
    %c0_i32_1 = arith.constant 0 : i32
    return %c0_i32, %c0_i32_0 : i32, i32
  }
  func.func @transform_10(%arg0: i32) -> (i32, i32) {
    %c0_i32 = arith.constant 0 : i32
    %c0_i32_0 = arith.constant 0 : i32
    %c0_i32_1 = arith.constant 0 : i32
    return %c0_i32, %c0_i32_0 : i32, i32
  }
  func.func @transform_11(%arg0: i32) -> (i32, i32) {
    %c0_i32 = arith.constant 0 : i32
    %c0_i32_0 = arith.constant 0 : i32
    %c0_i32_1 = arith.constant 0 : i32
    return %c0_i32, %c0_i32_0 : i32, i32
  }
  func.func @transform_12(%arg0: i32) -> (i32, i32) {
    %c0_i32 = arith.constant 0 : i32
    %c0_i32_0 = arith.constant 0 : i32
    %c0_i32_1 = arith.constant 0 : i32
    return %c0_i32, %c0_i32_0 : i32, i32
  }
  func.func @transform_13(%arg0: i32) -> (i32, i32) {
    %c0_i32 = arith.constant 0 : i32
    %c0_i32_0 = arith.constant 0 : i32
    %c0_i32_1 = arith.constant 0 : i32
    return %c0_i32, %c0_i32_0 : i32, i32
  }
  func.func @transform_14(%arg0: i32) -> (i32, i32) {
    %c0_i32 = arith.constant 0 : i32
    %c0_i32_0 = arith.constant 0 : i32
    %c0_i32_1 = arith.constant 0 : i32
    return %c0_i32, %c0_i32_0 : i32, i32
  }
  func.func @transform_15(%arg0: i32) -> (i32, i32) {
    %c0_i32 = arith.constant 0 : i32
    %c0_i32_0 = arith.constant 0 : i32
    %c0_i32_1 = arith.constant 0 : i32
    return %c0_i32, %c0_i32_0 : i32, i32
  }
  func.func @transform_16(%arg0: i32) -> (i32, i32) {
    %c0_i32 = arith.constant 0 : i32
    %c0_i32_0 = arith.constant 0 : i32
    %c0_i32_1 = arith.constant 0 : i32
    return %c0_i32, %c0_i32_0 : i32, i32
  }
  func.func @transform_17(%arg0: i32) -> (i32, i32) {
    %c0_i32 = arith.constant 0 : i32
    %c0_i32_0 = arith.constant 0 : i32
    %c0_i32_1 = arith.constant 0 : i32
    return %c0_i32, %c0_i32_0 : i32, i32
  }
}

</mosaic_0001>

<llo_original>
// kernel: ma_midn_forward.2
$region0: #{ma_midn_forward.2}
  #allocation0 [shape = 'u32[]', space=smem, size = 0x4, offset = 0x4, fixed_abs, tag = 'smem constant byte address 0x4 - core index']
  #allocation1 [shape = 'u32[144,128]{1,0:T(1,128)}', space=vmem, size = 0x12000, scoped, tag = 'internal scratch']
  %s0 = inlined_call_operand.vmem [shape: bf16[128,1280], index: 0, kind: input, shape index: {}]
  %s1 = inlined_call_operand.vmem [shape: bf16[128,1280], index: 1, kind: input, shape index: {}]
  %s2 = inlined_call_operand.vmem [shape: bf16[128,1280], index: 2, kind: input, shape index: {}]
  %s3 = inlined_call_operand.vmem [shape: bf16[128,1280], index: 3, kind: input, shape index: {}]
  %s4 = inlined_call_operand.vmem [shape: bf16[20,128], index: 4, kind: input, shape index: {}]
  %s5 = inlined_call_operand.vmem [shape: f32[20,1], index: 5, kind: input, shape index: {}]
  %s6 = inlined_call_operand.vmem [shape: f32[20,1280], index: 6, kind: output, shape index: {}]
  %s7 = sld [smem:[#allocation0]]
  $region180: #{ma_midn_forward.2} parent=0
    _
  %s9 = ssub.s32 1, %s7
  %s10 = scalar_select 0, %s9, %s7
  $region1: #{ma_midn_forward.2} parent=0
    #allocation2 [shape = 'u8[327680]{0}', space=vmem, size = 0x50000, scoped, tag = 'input window, operand 0']
    #allocation3 [shape = 'u8[327680]{0}', space=vmem, size = 0x50000, scoped, tag = 'input window, operand 1']
    #allocation4 [shape = 'u8[327680]{0}', space=vmem, size = 0x50000, scoped, tag = 'input window, operand 2']
    #allocation5 [shape = 'u8[327680]{0}', space=vmem, size = 0x50000, scoped, tag = 'input window, operand 3']
    #allocation6 [shape = 'u8[122880]{0}', space=vmem, size = 0x1e000, scoped, tag = 'output window, operand 0']
    loop: start=0, step=1, limit=4
    $region2: #{ma_midn_forward.2} parent=1 // loop_pre_header
      _
    $region3: #{ma_midn_forward.2} parent=1 // loop_header
      %s12 = sphi 0, %s16
      %p13 = scmp.ge.s32.totalorder %s12, 4
      %s22 = sphi 0, %s24
      %s25 = sphi 0, %s22
      %s26 = sphi 0, %s25
      %s42 = sphi 0, %s26
      %s48 = sphi 0, %s50
      %s51 = sphi 0, %s48
      %s52 = sphi 0, %s51
      %s68 = sphi 0, %s52
      %s74 = sphi 0, %s76
      %s77 = sphi 0, %s74
      %s78 = sphi 0, %s77
      %s94 = sphi 0, %s78
      %s100 = sphi 0, %s102
      %s103 = sphi 0, %s100
      %s104 = sphi 0, %s103
      %s120 = sphi 0, %s104
      %s124 = sphi 0, %s124
      %s126 = sphi 0, %s124
      %s127 = sphi 0, %s126
      %s141 = sphi 0, %s127
      %s145 = sphi 0, %s145
      %s147 = sphi 0, %s145
      %s148 = sphi 0, %s147
      %s162 = sphi 0, %s148
      %s168 = sphi 0, %s170
      %s171 = sphi 0, %s168
      %s172 = sphi 0, %s171
      %s188 = sphi 0, %s172
    $region4: #{ma_midn_forward.2} parent=1 // loop_header_branch
      %15 = sbr.rel (%p13) target = $region8
    $region5: #{ma_midn_forward.2} parent=1 // loop_body
      %s17 = ssub.s32 %s12, 1
      %s18 = ssub.s32 %s12, 2
      %s19 = sadd.s32 %s12, 1
      %s20 = ssub.s32 %s12, %s19
      %p21 = scmp.eq.s32.totalorder %s20, 0
      %s23 = sadd.s32 %s22, 1
      %s24 = scalar_select %p21, %s22, %s23
      %p27 = pneg %p21
      %p28 = scmp.eq.s32.totalorder %s12, 1
      %p29 = por %p27, %p28
      %p30 = scmp.ne.s32.totalorder %s22, %s25
      %p31 = scmp.eq.s32.totalorder %s12, 0
      %p32 = por %p30, %p31
      %p33 = scmp.ne.s32.totalorder %s22, %s25
      %p34 = scmp.eq.s32.totalorder %s17, 1
      %p35 = por %p33, %p34
      %p36 = scmp.ne.s32.totalorder %s25, %s26
      %p37 = scmp.eq.s32.totalorder %s17, 0
      %p38 = por %p36, %p37
      %p39 = scmp.ne.s32.totalorder %s25, %s26
      %p40 = scmp.eq.s32.totalorder %s18, 1
      %p41 = por %p39, %p40
      %p43 = scmp.ne.s32.totalorder %s26, %s42
      %p44 = scmp.eq.s32.totalorder %s18, 0
      %p45 = por %p43, %p44
      %s46 = ssub.s32 %s12, %s19
      %p47 = scmp.eq.s32.totalorder %s46, 0
      %s49 = sadd.s32 %s48, 1
      %s50 = scalar_select %p47, %s48, %s49
      %p53 = pneg %p47
      %p54 = scmp.eq.s32.totalorder %s12, 1
      %p55 = por %p53, %p54
      %p56 = scmp.ne.s32.totalorder %s48, %s51
      %p57 = scmp.eq.s32.totalorder %s12, 0
      %p58 = por %p56, %p57
      %p59 = scmp.ne.s32.totalorder %s48, %s51
      %p60 = scmp.eq.s32.totalorder %s17, 1
      %p61 = por %p59, %p60
      %p62 = scmp.ne.s32.totalorder %s51, %s52
      %p63 = scmp.eq.s32.totalorder %s17, 0
      %p64 = por %p62, %p63
      %p65 = scmp.ne.s32.totalorder %s51, %s52
      %p66 = scmp.eq.s32.totalorder %s18, 1
      %p67 = por %p65, %p66
      %p69 = scmp.ne.s32.totalorder %s52, %s68
      %p70 = scmp.eq.s32.totalorder %s18, 0
      %p71 = por %p69, %p70
      %s72 = ssub.s32 %s12, %s19
      %p73 = scmp.eq.s32.totalorder %s72, 0
      %s75 = sadd.s32 %s74, 1
      %s76 = scalar_select %p73, %s74, %s75
      %p79 = pneg %p73
      %p80 = scmp.eq.s32.totalorder %s12, 1
      %p81 = por %p79, %p80
      %p82 = scmp.ne.s32.totalorder %s74, %s77
      %p83 = scmp.eq.s32.totalorder %s12, 0
      %p84 = por %p82, %p83
      %p85 = scmp.ne.s32.totalorder %s74, %s77
      %p86 = scmp.eq.s32.totalorder %s17, 1
      %p87 = por %p85, %p86
      %p88 = scmp.ne.s32.totalorder %s77, %s78
      %p89 = scmp.eq.s32.totalorder %s17, 0
      %p90 = por %p88, %p89
      %p91 = scmp.ne.s32.totalorder %s77, %s78
      %p92 = scmp.eq.s32.totalorder %s18, 1
      %p93 = por %p91, %p92
      %p95 = scmp.ne.s32.totalorder %s78, %s94
      %p96 = scmp.eq.s32.totalorder %s18, 0
      %p97 = por %p95, %p96
      %s98 = ssub.s32 %s12, %s19
      %p99 = scmp.eq.s32.totalorder %s98, 0
      %s101 = sadd.s32 %s100, 1
      %s102 = scalar_select %p99, %s100, %s101
      %p105 = pneg %p99
      %p106 = scmp.eq.s32.totalorder %s12, 1
      %p107 = por %p105, %p106
      %p108 = scmp.ne.s32.totalorder %s100, %s103
      %p109 = scmp.eq.s32.totalorder %s12, 0
      %p110 = por %p108, %p109
      %p111 = scmp.ne.s32.totalorder %s100, %s103
      %p112 = scmp.eq.s32.totalorder %s17, 1
      %p113 = por %p111, %p112
      %p114 = scmp.ne.s32.totalorder %s103, %s104
      %p115 = scmp.eq.s32.totalorder %s17, 0
      %p116 = por %p114, %p115
      %p117 = scmp.ne.s32.totalorder %s103, %s104
      %p118 = scmp.eq.s32.totalorder %s18, 1
      %p119 = por %p117, %p118
      %p121 = scmp.ne.s32.totalorder %s104, %s120
      %p122 = scmp.eq.s32.totalorder %s18, 0
      %p123 = por %p121, %p122
      %s125 = sadd.s32 %s124, 1
      %p128 = scmp.eq.s32.totalorder %s12, 1
      %p129 = scmp.ne.s32.totalorder %s124, %s126
      %p130 = scmp.eq.s32.totalorder %s12, 0
      %p131 = por %p129, %p130
      %p132 = scmp.ne.s32.totalorder %s124, %s126
      %p133 = scmp.eq.s32.totalorder %s17, 1
      %p134 = por %p132, %p133
      %p135 = scmp.ne.s32.totalorder %s126, %s127
      %p136 = scmp.eq.s32.totalorder %s17, 0
      %p137 = por %p135, %p136
      %p138 = scmp.ne.s32.totalorder %s126, %s127
      %p139 = scmp.eq.s32.totalorder %s18, 1
      %p140 = por %p138, %p139
      %p142 = scmp.ne.s32.totalorder %s127, %s141
      %p143 = scmp.eq.s32.totalorder %s18, 0
      %p144 = por %p142, %p143
      %s146 = sadd.s32 %s145, 1
      %p149 = scmp.eq.s32.totalorder %s12, 1
      %p150 = scmp.ne.s32.totalorder %s145, %s147
      %p151 = scmp.eq.s32.totalorder %s12, 0
      %p152 = por %p150, %p151
      %p153 = scmp.ne.s32.totalorder %s145, %s147
      %p154 = scmp.eq.s32.totalorder %s17, 1
      %p155 = por %p153, %p154
      %p156 = scmp.ne.s32.totalorder %s147, %s148
      %p157 = scmp.eq.s32.totalorder %s17, 0
      %p158 = por %p156, %p157
      %p159 = scmp.ne.s32.totalorder %s147, %s148
      %p160 = scmp.eq.s32.totalorder %s18, 1
      %p161 = por %p159, %p160
      %p163 = scmp.ne.s32.totalorder %s148, %s162
      %p164 = scmp.eq.s32.totalorder %s18, 0
      %p165 = por %p163, %p164
      %s166 = ssub.s32 %s12, %s19
      %p167 = scmp.eq.s32.totalorder %s166, 0
      %s169 = sadd.s32 %s168, 1
      %s170 = scalar_select %p167, %s168, %s169
      %p173 = pneg %p167
      %p174 = scmp.eq.s32.totalorder %s12, 1
      %p175 = por %p173, %p174
      %p176 = scmp.ne.s32.totalorder %s168, %s171
      %p177 = scmp.eq.s32.totalorder %s12, 0
      %p178 = por %p176, %p177
      %p179 = scmp.ne.s32.totalorder %s168, %s171
      %p180 = scmp.eq.s32.totalorder %s17, 1
      %p181 = por %p179, %p180
      %p182 = scmp.ne.s32.totalorder %s171, %s172
      %p183 = scmp.eq.s32.totalorder %s17, 0
      %p184 = por %p182, %p183
      %p185 = scmp.ne.s32.totalorder %s171, %s172
      %p186 = scmp.eq.s32.totalorder %s18, 1
      %p187 = por %p185, %p186
      %p189 = scmp.ne.s32.totalorder %s172, %s188
      %p190 = scmp.eq.s32.totalorder %s18, 0
      %p191 = por %p189, %p190
      %p192 = scmp.le.s32.totalorder 1, %s12
      %p193 = scmp.lt.s32.totalorder %s12, 3
      %p194 = pnand %p192, %p193
      %p195 = pneg %p194
      // Predicated region
      $region9: #{ma_midn_forward.2} parent=5 // pred_check
        _
      $region10: #{ma_midn_forward.2} parent=5 // pred_check_branch
        %197 = sbr.rel (%p194) target = $region12
      $region11: #{ma_midn_forward.2} parent=5 // pred_region
        %s198 = ssub.s32 %s12, 1
        // Predicated region
        $region13: #{ma_midn_forward.2} parent=11 // pred_check
          %p199 = pneg %p137
        $region14: #{ma_midn_forward.2} parent=11 // pred_check_branch
          %201 = sbr.rel (%p199) target = $region16
        $region15: #{ma_midn_forward.2} parent=11 // pred_region
          _
        $region16: #{ma_midn_forward.2} parent=11 // pred_fallthru
          _
        // Predicated region
        $region17: #{ma_midn_forward.2} parent=11 // pred_check
          %p202 = pneg %p158
        $region18: #{ma_midn_forward.2} parent=11 // pred_check_branch
          %204 = sbr.rel (%p202) target = $region20
        $region19: #{ma_midn_forward.2} parent=11 // pred_region
          _
        $region20: #{ma_midn_forward.2} parent=11 // pred_fallthru
          _
      $region12: #{ma_midn_forward.2} parent=5 // pred_fallthru
        _
      %p205 = scmp.lt.s32.totalorder %s12, 2
      // Predicated region
      $region21: #{ma_midn_forward.2} parent=5 // pred_check
        %p206 = pneg %p205
      $region22: #{ma_midn_forward.2} parent=5 // pred_check_branch
        %208 = sbr.rel (%p206) target = $region24
      $region23: #{ma_midn_forward.2} parent=5 // pred_region
        // Predicated region
        $region25: #{ma_midn_forward.2} parent=23 // pred_check
          %p209 = pneg %p32
        $region26: #{ma_midn_forward.2} parent=23 // pred_check_branch
          %211 = sbr.rel (%p209) target = $region28
        $region27: #{ma_midn_forward.2} parent=23 // pred_region
          %s212 = sand.u32 %s22, 1
          %s213 = sand.u32 %s22, 1
          %s214 = smul.addr %s213, 320
          %s215 = scalar_lea.vmem [#allocation2], %s214
          %s216 = smul.u32 5, %s12
          %s217 = smul.addr %s216, 4
          %s218 = scalar_lea.vmem %s0, %s217
          // Predicated region
          $region29: #{ma_midn_forward.2} parent=27 // pred_check
            _
          $region30: #{ma_midn_forward.2} parent=27 // pred_check_branch
            %220 = sbr.rel (0) target = $region32
          $region31: #{ma_midn_forward.2} parent=27 // pred_region
            // Predicated region
            $region33: #{ma_midn_forward.2} parent=31 // pred_check
              _
            $region34: #{ma_midn_forward.2} parent=31 // pred_check_branch
              %222 = sbr.rel (0) target = $region36
            $region35: #{ma_midn_forward.2} parent=31 // pred_region
              %s223 = scalar_lea.vmem %s218, 16
              %s224 = scalar_lea.vmem %s215, 16 [#allocation2]
              loop: start=0, step=1, limit=1
              $region37: #{ma_midn_forward.2} parent=35 // loop_pre_header
                _
              $region38: #{ma_midn_forward.2} parent=35 // loop_header
                %s226 = sphi 0, %s230
                %p227 = scmp.ge.s32.totalorder %s226, 1
                %s231 = sphi %s218, %s218
                %s232 = sphi %s215, %s215
              $region39: #{ma_midn_forward.2} parent=35 // loop_header_branch
                %229 = sbr.rel (%p227) target = $region43
              $region40: #{ma_midn_forward.2} parent=35 // loop_body
                %v233 = vld [vmem:[%s231] sm:$0xff]
                %234 = vst [vmem:[%s232] sm:$0xff] %v233
                %v235 = vld [vmem:[%s231 + $0x8] sm:$0xff]
                %236 = vst [vmem:[%s232 + $0x8] sm:$0xff] %v235
                %v237 = vld [vmem:[%s231 + $0x28] sm:$0xff]
                %238 = vst [vmem:[%s232 + $0x14] sm:$0xff] %v237
                %v239 = vld [vmem:[%s231 + $0x30] sm:$0xff]
                %240 = vst [vmem:[%s232 + $0x1c] sm:$0xff] %v239
                %v241 = vld [vmem:[%s231 + $0x50] sm:$0xff]
                %242 = vst [vmem:[%s232 + $0x28] sm:$0xff] %v241
                %v243 = vld [vmem:[%s231 + $0x58] sm:$0xff]
                %244 = vst [vmem:[%s232 + $0x30] sm:$0xff] %v243
                %v245 = vld [vmem:[%s231 + $0x78] sm:$0xff]
                %246 = vst [vmem:[%s232 + $0x3c] sm:$0xff] %v245
                %v247 = vld [vmem:[%s231 + $0x80] sm:$0xff]
                %248 = vst [vmem:[%s232 + $0x44] sm:$0xff] %v247
                %v249 = vld [vmem:[%s231 + $0xa0] sm:$0xff]
                %250 = vst [vmem:[%s232 + $0x50] sm:$0xff] %v249
                %v251 = vld [vmem:[%s231 + $0xa8] sm:$0xff]
                %252 = vst [vmem:[%s232 + $0x58] sm:$0xff] %v251
                %v253 = vld [vmem:[%s231 + $0xc8] sm:$0xff]
                %254 = vst [vmem:[%s232 + $0x64] sm:$0xff] %v253
                %v255 = vld [vmem:[%s231 + $0xd0] sm:$0xff]
                %256 = vst [vmem:[%s232 + $0x6c] sm:$0xff] %v255
                %v257 = vld [vmem:[%s231 + $0xf0] sm:$0xff]
                %258 = vst [vmem:[%s232 + $0x78] sm:$0xff] %v257
                %v259 = vld [vmem:[%s231 + $0xf8] sm:$0xff]
                %260 = vst [vmem:[%s232 + $0x80] sm:$0xff] %v259
                %v261 = vld [vmem:[%s231 + $0x118] sm:$0xff]
                %262 = vst [vmem:[%s232 + $0x8c] sm:$0xff] %v261
                %v263 = vld [vmem:[%s231 + $0x120] sm:$0xff]
                %264 = vst [vmem:[%s232 + $0x94] sm:$0xff] %v263
                %v265 = vld [vmem:[%s231 + $0x140] sm:$0xff]
                %266 = vst [vmem:[%s232 + $0xa0] sm:$0xff] %v265
                %v267 = vld [vmem:[%s231 + $0x148] sm:$0xff]
                %268 = vst [vmem:[%s232 + $0xa8] sm:$0xff] %v267
                %v269 = vld [vmem:[%s231 + $0x168] sm:$0xff]
                %270 = vst [vmem:[%s232 + $0xb4] sm:$0xff] %v269
                %v271 = vld [vmem:[%s231 + $0x170] sm:$0xff]
                %272 = vst [vmem:[%s232 + $0xbc] sm:$0xff] %v271
                %v273 = vld [vmem:[%s231 + $0x190] sm:$0xff]
                %274 = vst [vmem:[%s232 + $0xc8] sm:$0xff] %v273
                %v275 = vld [vmem:[%s231 + $0x198] sm:$0xff]
                %276 = vst [vmem:[%s232 + $0xd0] sm:$0xff] %v275
                %v277 = vld [vmem:[%s231 + $0x1b8] sm:$0xff]
                %278 = vst [vmem:[%s232 + $0xdc] sm:$0xff] %v277
                %v279 = vld [vmem:[%s231 + $0x1c0] sm:$0xff]
                %280 = vst [vmem:[%s232 + $0xe4] sm:$0xff] %v279
                %v281 = vld [vmem:[%s231 + $0x1e0] sm:$0xff]
                %282 = vst [vmem:[%s232 + $0xf0] sm:$0xff] %v281
                %v283 = vld [vmem:[%s231 + $0x1e8] sm:$0xff]
                %284 = vst [vmem:[%s232 + $0xf8] sm:$0xff] %v283
                %v285 = vld [vmem:[%s231 + $0x208] sm:$0xff]
                %286 = vst [vmem:[%s232 + $0x104] sm:$0xff] %v285
                %v287 = vld [vmem:[%s231 + $0x210] sm:$0xff]
                %288 = vst [vmem:[%s232 + $0x10c] sm:$0xff] %v287
                %v289 = vld [vmem:[%s231 + $0x230] sm:$0xff]
                %290 = vst [vmem:[%s232 + $0x118] sm:$0xff] %v289
                %v291 = vld [vmem:[%s231 + $0x238] sm:$0xff]
                %292 = vst [vmem:[%s232 + $0x120] sm:$0xff] %v291
                %v293 = vld [vmem:[%s231 + $0x258] sm:$0xff]
                %294 = vst [vmem:[%s232 + $0x12c] sm:$0xff] %v293
                %v295 = vld [vmem:[%s231 + $0x260] sm:$0xff]
                %296 = vst [vmem:[%s232 + $0x134] sm:$0xff] %v295
              $region41: #{ma_midn_forward.2} parent=35 // loop_footer
                %s230 = sadd.s32 1, %s226
              $region42: #{ma_midn_forward.2} parent=35 // loop_footer_branch
                %225 = sbr.rel target = $region38
              $region43: #{ma_midn_forward.2} parent=35 // loop_exit
                _
              loop: start=0, step=1, limit=1
              $region44: #{ma_midn_forward.2} parent=35 // loop_pre_header
                _
              $region45: #{ma_midn_forward.2} parent=35 // loop_header
                %s299 = sphi 0, %s303
                %p300 = scmp.ge.s32.totalorder %s299, 1
                %s304 = sphi %s223, %s223
                %s305 = sphi %s224, %s224
              $region46: #{ma_midn_forward.2} parent=35 // loop_header_branch
                %302 = sbr.rel (%p300) target = $region50
              $region47: #{ma_midn_forward.2} parent=35 // loop_body
                %v306 = vld [vmem:[%s304] sm:$0xf]
                %307 = vst [vmem:[%s305] sm:$0xf] %v306
                %v308 = vld [vmem:[%s304 + $0x28] sm:$0xf]
                %309 = vst [vmem:[%s305 + $0x14] sm:$0xf] %v308
                %v310 = vld [vmem:[%s304 + $0x50] sm:$0xf]
                %311 = vst [vmem:[%s305 + $0x28] sm:$0xf] %v310
                %v312 = vld [vmem:[%s304 + $0x78] sm:$0xf]
                %313 = vst [vmem:[%s305 + $0x3c] sm:$0xf] %v312
                %v314 = vld [vmem:[%s304 + $0xa0] sm:$0xf]
                %315 = vst [vmem:[%s305 + $0x50] sm:$0xf] %v314
                %v316 = vld [vmem:[%s304 + $0xc8] sm:$0xf]
                %317 = vst [vmem:[%s305 + $0x64] sm:$0xf] %v316
                %v318 = vld [vmem:[%s304 + $0xf0] sm:$0xf]
                %319 = vst [vmem:[%s305 + $0x78] sm:$0xf] %v318
                %v320 = vld [vmem:[%s304 + $0x118] sm:$0xf]
                %321 = vst [vmem:[%s305 + $0x8c] sm:$0xf] %v320
                %v322 = vld [vmem:[%s304 + $0x140] sm:$0xf]
                %323 = vst [vmem:[%s305 + $0xa0] sm:$0xf] %v322
                %v324 = vld [vmem:[%s304 + $0x168] sm:$0xf]
                %325 = vst [vmem:[%s305 + $0xb4] sm:$0xf] %v324
                %v326 = vld [vmem:[%s304 + $0x190] sm:$0xf]
                %327 = vst [vmem:[%s305 + $0xc8] sm:$0xf] %v326
                %v328 = vld [vmem:[%s304 + $0x1b8] sm:$0xf]
                %329 = vst [vmem:[%s305 + $0xdc] sm:$0xf] %v328
                %v330 = vld [vmem:[%s304 + $0x1e0] sm:$0xf]
                %331 = vst [vmem:[%s305 + $0xf0] sm:$0xf] %v330
                %v332 = vld [vmem:[%s304 + $0x208] sm:$0xf]
                %333 = vst [vmem:[%s305 + $0x104] sm:$0xf] %v332
                %v334 = vld [vmem:[%s304 + $0x230] sm:$0xf]
                %335 = vst [vmem:[%s305 + $0x118] sm:$0xf] %v334
                %v336 = vld [vmem:[%s304 + $0x258] sm:$0xf]
                %337 = vst [vmem:[%s305 + $0x12c] sm:$0xf] %v336
              $region48: #{ma_midn_forward.2} parent=35 // loop_footer
                %s303 = sadd.s32 1, %s299
              $region49: #{ma_midn_forward.2} parent=35 // loop_footer_branch
                %298 = sbr.rel target = $region45
              $region50: #{ma_midn_forward.2} parent=35 // loop_exit
                _
            $region36: #{ma_midn_forward.2} parent=31 // pred_fallthru
              _
          $region32: #{ma_midn_forward.2} parent=27 // pred_fallthru
            _
          %338 = vnop
        $region28: #{ma_midn_forward.2} parent=23 // pred_fallthru
          _
        // Predicated region
        $region51: #{ma_midn_forward.2} parent=23 // pred_check
          %p339 = pneg %p58
        $region52: #{ma_midn_forward.2} parent=23 // pred_check_branch
          %341 = sbr.rel (%p339) target = $region54
        $region53: #{ma_midn_forward.2} parent=23 // pred_region
          %s342 = sand.u32 %s48, 1
          %s343 = sand.u32 %s48, 1
          %s344 = smul.addr %s343, 320
          %s345 = scalar_lea.vmem [#allocation3], %s344
          %s346 = smul.u32 5, %s12
          %s347 = smul.addr %s346, 4
          %s348 = scalar_lea.vmem %s1, %s347
          // Predicated region
          $region55: #{ma_midn_forward.2} parent=53 // pred_check
            _
          $region56: #{ma_midn_forward.2} parent=53 // pred_check_branch
            %350 = sbr.rel (0) target = $region58
          $region57: #{ma_midn_forward.2} parent=53 // pred_region
            // Predicated region
            $region59: #{ma_midn_forward.2} parent=57 // pred_check
              _
            $region60: #{ma_midn_forward.2} parent=57 // pred_check_branch
              %352 = sbr.rel (0) target = $region62
            $region61: #{ma_midn_forward.2} parent=57 // pred_region
              %s353 = scalar_lea.vmem %s348, 16
              %s354 = scalar_lea.vmem %s345, 16 [#allocation3]
              loop: start=0, step=1, limit=1
              $region63: #{ma_midn_forward.2} parent=61 // loop_pre_header
                _
              $region64: #{ma_midn_forward.2} parent=61 // loop_header
                %s356 = sphi 0, %s360
                %p357 = scmp.ge.s32.totalorder %s356, 1
                %s361 = sphi %s348, %s348
                %s362 = sphi %s345, %s345
              $region65: #{ma_midn_forward.2} parent=61 // loop_header_branch
                %359 = sbr.rel (%p357) target = $region69
              $region66: #{ma_midn_forward.2} parent=61 // loop_body
                %v363 = vld [vmem:[%s361] sm:$0xff]
                %364 = vst [vmem:[%s362] sm:$0xff] %v363
                %v365 = vld [vmem:[%s361 + $0x8] sm:$0xff]
                %366 = vst [vmem:[%s362 + $0x8] sm:$0xff] %v365
                %v367 = vld [vmem:[%s361 + $0x28] sm:$0xff]
                %368 = vst [vmem:[%s362 + $0x14] sm:$0xff] %v367
                %v369 = vld [vmem:[%s361 + $0x30] sm:$0xff]
                %370 = vst [vmem:[%s362 + $0x1c] sm:$0xff] %v369
                %v371 = vld [vmem:[%s361 + $0x50] sm:$0xff]
                %372 = vst [vmem:[%s362 + $0x28] sm:$0xff] %v371
                %v373 = vld [vmem:[%s361 + $0x58] sm:$0xff]
                %374 = vst [vmem:[%s362 + $0x30] sm:$0xff] %v373
                %v375 = vld [vmem:[%s361 + $0x78] sm:$0xff]
                %376 = vst [vmem:[%s362 + $0x3c] sm:$0xff] %v375
                %v377 = vld [vmem:[%s361 + $0x80] sm:$0xff]
                %378 = vst [vmem:[%s362 + $0x44] sm:$0xff] %v377
                %v379 = vld [vmem:[%s361 + $0xa0] sm:$0xff]
                %380 = vst [vmem:[%s362 + $0x50] sm:$0xff] %v379
                %v381 = vld [vmem:[%s361 + $0xa8] sm:$0xff]
                %382 = vst [vmem:[%s362 + $0x58] sm:$0xff] %v381
                %v383 = vld [vmem:[%s361 + $0xc8] sm:$0xff]
                %384 = vst [vmem:[%s362 + $0x64] sm:$0xff] %v383
                %v385 = vld [vmem:[%s361 + $0xd0] sm:$0xff]
                %386 = vst [vmem:[%s362 + $0x6c] sm:$0xff] %v385
                %v387 = vld [vmem:[%s361 + $0xf0] sm:$0xff]
                %388 = vst [vmem:[%s362 + $0x78] sm:$0xff] %v387
                %v389 = vld [vmem:[%s361 + $0xf8] sm:$0xff]
                %390 = vst [vmem:[%s362 + $0x80] sm:$0xff] %v389
                %v391 = vld [vmem:[%s361 + $0x118] sm:$0xff]
                %392 = vst [vmem:[%s362 + $0x8c] sm:$0xff] %v391
                %v393 = vld [vmem:[%s361 + $0x120] sm:$0xff]
                %394 = vst [vmem:[%s362 + $0x94] sm:$0xff] %v393
                %v395 = vld [vmem:[%s361 + $0x140] sm:$0xff]
                %396 = vst [vmem:[%s362 + $0xa0] sm:$0xff] %v395
                %v397 = vld [vmem:[%s361 + $0x148] sm:$0xff]
                %398 = vst [vmem:[%s362 + $0xa8] sm:$0xff] %v397
                %v399 = vld [vmem:[%s361 + $0x168] sm:$0xff]
                %400 = vst [vmem:[%s362 + $0xb4] sm:$0xff] %v399
                %v401 = vld [vmem:[%s361 + $0x170] sm:$0xff]
                %402 = vst [vmem:[%s362 + $0xbc] sm:$0xff] %v401
                %v403 = vld [vmem:[%s361 + $0x190] sm:$0xff]
                %404 = vst [vmem:[%s362 + $0xc8] sm:$0xff] %v403
                %v405 = vld [vmem:[%s361 + $0x198] sm:$0xff]
                %406 = vst [vmem:[%s362 + $0xd0] sm:$0xff] %v405
                %v407 = vld [vmem:[%s361 + $0x1b8] sm:$0xff]
                %408 = vst [vmem:[%s362 + $0xdc] sm:$0xff] %v407
                %v409 = vld [vmem:[%s361 + $0x1c0] sm:$0xff]
                %410 = vst [vmem:[%s362 + $0xe4] sm:$0xff] %v409
                %v411 = vld [vmem:[%s361 + $0x1e0] sm:$0xff]
                %412 = vst [vmem:[%s362 + $0xf0] sm:$0xff] %v411
                %v413 = vld [vmem:[%s361 + $0x1e8] sm:$0xff]
                %414 = vst [vmem:[%s362 + $0xf8] sm:$0xff] %v413
                %v415 = vld [vmem:[%s361 + $0x208] sm:$0xff]
                %416 = vst [vmem:[%s362 + $0x104] sm:$0xff] %v415
                %v417 = vld [vmem:[%s361 + $0x210] sm:$0xff]
                %418 = vst [vmem:[%s362 + $0x10c] sm:$0xff] %v417
                %v419 = vld [vmem:[%s361 + $0x230] sm:$0xff]
                %420 = vst [vmem:[%s362 + $0x118] sm:$0xff] %v419
                %v421 = vld [vmem:[%s361 + $0x238] sm:$0xff]
                %422 = vst [vmem:[%s362 + $0x120] sm:$0xff] %v421
                %v423 = vld [vmem:[%s361 + $0x258] sm:$0xff]
                %424 = vst [vmem:[%s362 + $0x12c] sm:$0xff] %v423
                %v425 = vld [vmem:[%s361 + $0x260] sm:$0xff]
                %426 = vst [vmem:[%s362 + $0x134] sm:$0xff] %v425
              $region67: #{ma_midn_forward.2} parent=61 // loop_footer
                %s360 = sadd.s32 1, %s356
              $region68: #{ma_midn_forward.2} parent=61 // loop_footer_branch
                %355 = sbr.rel target = $region64
              $region69: #{ma_midn_forward.2} parent=61 // loop_exit
                _
              loop: start=0, step=1, limit=1
              $region70: #{ma_midn_forward.2} parent=61 // loop_pre_header
                _
              $region71: #{ma_midn_forward.2} parent=61 // loop_header
                %s429 = sphi 0, %s433
                %p430 = scmp.ge.s32.totalorder %s429, 1
                %s434 = sphi %s353, %s353
                %s435 = sphi %s354, %s354
              $region72: #{ma_midn_forward.2} parent=61 // loop_header_branch
                %432 = sbr.rel (%p430) target = $region76
              $region73: #{ma_midn_forward.2} parent=61 // loop_body
                %v436 = vld [vmem:[%s434] sm:$0xf]
                %437 = vst [vmem:[%s435] sm:$0xf] %v436
                %v438 = vld [vmem:[%s434 + $0x28] sm:$0xf]
                %439 = vst [vmem:[%s435 + $0x14] sm:$0xf] %v438
                %v440 = vld [vmem:[%s434 + $0x50] sm:$0xf]
                %441 = vst [vmem:[%s435 + $0x28] sm:$0xf] %v440
                %v442 = vld [vmem:[%s434 + $0x78] sm:$0xf]
                %443 = vst [vmem:[%s435 + $0x3c] sm:$0xf] %v442
                %v444 = vld [vmem:[%s434 + $0xa0] sm:$0xf]
                %445 = vst [vmem:[%s435 + $0x50] sm:$0xf] %v444
                %v446 = vld [vmem:[%s434 + $0xc8] sm:$0xf]
                %447 = vst [vmem:[%s435 + $0x64] sm:$0xf] %v446
                %v448 = vld [vmem:[%s434 + $0xf0] sm:$0xf]
                %449 = vst [vmem:[%s435 + $0x78] sm:$0xf] %v448
                %v450 = vld [vmem:[%s434 + $0x118] sm:$0xf]
                %451 = vst [vmem:[%s435 + $0x8c] sm:$0xf] %v450
                %v452 = vld [vmem:[%s434 + $0x140] sm:$0xf]
                %453 = vst [vmem:[%s435 + $0xa0] sm:$0xf] %v452
                %v454 = vld [vmem:[%s434 + $0x168] sm:$0xf]
                %455 = vst [vmem:[%s435 + $0xb4] sm:$0xf] %v454
                %v456 = vld [vmem:[%s434 + $0x190] sm:$0xf]
                %457 = vst [vmem:[%s435 + $0xc8] sm:$0xf] %v456
                %v458 = vld [vmem:[%s434 + $0x1b8] sm:$0xf]
                %459 = vst [vmem:[%s435 + $0xdc] sm:$0xf] %v458
                %v460 = vld [vmem:[%s434 + $0x1e0] sm:$0xf]
                %461 = vst [vmem:[%s435 + $0xf0] sm:$0xf] %v460
                %v462 = vld [vmem:[%s434 + $0x208] sm:$0xf]
                %463 = vst [vmem:[%s435 + $0x104] sm:$0xf] %v462
                %v464 = vld [vmem:[%s434 + $0x230] sm:$0xf]
                %465 = vst [vmem:[%s435 + $0x118] sm:$0xf] %v464
                %v466 = vld [vmem:[%s434 + $0x258] sm:$0xf]
                %467 = vst [vmem:[%s435 + $0x12c] sm:$0xf] %v466
              $region74: #{ma_midn_forward.2} parent=61 // loop_footer
                %s433 = sadd.s32 1, %s429
              $region75: #{ma_midn_forward.2} parent=61 // loop_footer_branch
                %428 = sbr.rel target = $region71
              $region76: #{ma_midn_forward.2} parent=61 // loop_exit
                _
            $region62: #{ma_midn_forward.2} parent=57 // pred_fallthru
              _
          $region58: #{ma_midn_forward.2} parent=53 // pred_fallthru
            _
          %468 = vnop
        $region54: #{ma_midn_forward.2} parent=23 // pred_fallthru
          _
        // Predicated region
        $region77: #{ma_midn_forward.2} parent=23 // pred_check
          %p469 = pneg %p84
        $region78: #{ma_midn_forward.2} parent=23 // pred_check_branch
          %471 = sbr.rel (%p469) target = $region80
        $region79: #{ma_midn_forward.2} parent=23 // pred_region
          %s472 = sand.u32 %s74, 1
          %s473 = sand.u32 %s74, 1
          %s474 = smul.addr %s473, 320
          %s475 = scalar_lea.vmem [#allocation4], %s474
          %s476 = smul.u32 5, %s12
          %s477 = smul.addr %s476, 4
          %s478 = scalar_lea.vmem %s2, %s477
          // Predicated region
          $region81: #{ma_midn_forward.2} parent=79 // pred_check
            _
          $region82: #{ma_midn_forward.2} parent=79 // pred_check_branch
            %480 = sbr.rel (0) target = $region84
          $region83: #{ma_midn_forward.2} parent=79 // pred_region
            // Predicated region
            $region85: #{ma_midn_forward.2} parent=83 // pred_check
              _
            $region86: #{ma_midn_forward.2} parent=83 // pred_check_branch
              %482 = sbr.rel (0) target = $region88
            $region87: #{ma_midn_forward.2} parent=83 // pred_region
              %s483 = scalar_lea.vmem %s478, 16
              %s484 = scalar_lea.vmem %s475, 16 [#allocation4]
              loop: start=0, step=1, limit=1
              $region89: #{ma_midn_forward.2} parent=87 // loop_pre_header
                _
              $region90: #{ma_midn_forward.2} parent=87 // loop_header
                %s486 = sphi 0, %s490
                %p487 = scmp.ge.s32.totalorder %s486, 1
                %s491 = sphi %s478, %s478
                %s492 = sphi %s475, %s475
              $region91: #{ma_midn_forward.2} parent=87 // loop_header_branch
                %489 = sbr.rel (%p487) target = $region95
              $region92: #{ma_midn_forward.2} parent=87 // loop_body
                %v493 = vld [vmem:[%s491] sm:$0xff]
                %494 = vst [vmem:[%s492] sm:$0xff] %v493
                %v495 = vld [vmem:[%s491 + $0x8] sm:$0xff]
                %496 = vst [vmem:[%s492 + $0x8] sm:$0xff] %v495
                %v497 = vld [vmem:[%s491 + $0x28] sm:$0xff]
                %498 = vst [vmem:[%s492 + $0x14] sm:$0xff] %v497
                %v499 = vld [vmem:[%s491 + $0x30] sm:$0xff]
                %500 = vst [vmem:[%s492 + $0x1c] sm:$0xff] %v499
                %v501 = vld [vmem:[%s491 + $0x50] sm:$0xff]
                %502 = vst [vmem:[%s492 + $0x28] sm:$0xff] %v501
                %v503 = vld [vmem:[%s491 + $0x58] sm:$0xff]
                %504 = vst [vmem:[%s492 + $0x30] sm:$0xff] %v503
                %v505 = vld [vmem:[%s491 + $0x78] sm:$0xff]
                %506 = vst [vmem:[%s492 + $0x3c] sm:$0xff] %v505
                %v507 = vld [vmem:[%s491 + $0x80] sm:$0xff]
                %508 = vst [vmem:[%s492 + $0x44] sm:$0xff] %v507
                %v509 = vld [vmem:[%s491 + $0xa0] sm:$0xff]
                %510 = vst [vmem:[%s492 + $0x50] sm:$0xff] %v509
                %v511 = vld [vmem:[%s491 + $0xa8] sm:$0xff]
                %512 = vst [vmem:[%s492 + $0x58] sm:$0xff] %v511
                %v513 = vld [vmem:[%s491 + $0xc8] sm:$0xff]
                %514 = vst [vmem:[%s492 + $0x64] sm:$0xff] %v513
                %v515 = vld [vmem:[%s491 + $0xd0] sm:$0xff]
                %516 = vst [vmem:[%s492 + $0x6c] sm:$0xff] %v515
                %v517 = vld [vmem:[%s491 + $0xf0] sm:$0xff]
                %518 = vst [vmem:[%s492 + $0x78] sm:$0xff] %v517
                %v519 = vld [vmem:[%s491 + $0xf8] sm:$0xff]
                %520 = vst [vmem:[%s492 + $0x80] sm:$0xff] %v519
                %v521 = vld [vmem:[%s491 + $0x118] sm:$0xff]
                %522 = vst [vmem:[%s492 + $0x8c] sm:$0xff] %v521
                %v523 = vld [vmem:[%s491 + $0x120] sm:$0xff]
                %524 = vst [vmem:[%s492 + $0x94] sm:$0xff] %v523
                %v525 = vld [vmem:[%s491 + $0x140] sm:$0xff]
                %526 = vst [vmem:[%s492 + $0xa0] sm:$0xff] %v525
                %v527 = vld [vmem:[%s491 + $0x148] sm:$0xff]
                %528 = vst [vmem:[%s492 + $0xa8] sm:$0xff] %v527
                %v529 = vld [vmem:[%s491 + $0x168] sm:$0xff]
                %530 = vst [vmem:[%s492 + $0xb4] sm:$0xff] %v529
                %v531 = vld [vmem:[%s491 + $0x170] sm:$0xff]
                %532 = vst [vmem:[%s492 + $0xbc] sm:$0xff] %v531
                %v533 = vld [vmem:[%s491 + $0x190] sm:$0xff]
                %534 = vst [vmem:[%s492 + $0xc8] sm:$0xff] %v533
                %v535 = vld [vmem:[%s491 + $0x198] sm:$0xff]
                %536 = vst [vmem:[%s492 + $0xd0] sm:$0xff] %v535
                %v537 = vld [vmem:[%s491 + $0x1b8] sm:$0xff]
                %538 = vst [vmem:[%s492 + $0xdc] sm:$0xff] %v537
                %v539 = vld [vmem:[%s491 + $0x1c0] sm:$0xff]
                %540 = vst [vmem:[%s492 + $0xe4] sm:$0xff] %v539
                %v541 = vld [vmem:[%s491 + $0x1e0] sm:$0xff]
                %542 = vst [vmem:[%s492 + $0xf0] sm:$0xff] %v541
                %v543 = vld [vmem:[%s491 + $0x1e8] sm:$0xff]
                %544 = vst [vmem:[%s492 + $0xf8] sm:$0xff] %v543
                %v545 = vld [vmem:[%s491 + $0x208] sm:$0xff]
                %546 = vst [vmem:[%s492 + $0x104] sm:$0xff] %v545
                %v547 = vld [vmem:[%s491 + $0x210] sm:$0xff]
                %548 = vst [vmem:[%s492 + $0x10c] sm:$0xff] %v547
                %v549 = vld [vmem:[%s491 + $0x230] sm:$0xff]
                %550 = vst [vmem:[%s492 + $0x118] sm:$0xff] %v549
                %v551 = vld [vmem:[%s491 + $0x238] sm:$0xff]
                %552 = vst [vmem:[%s492 + $0x120] sm:$0xff] %v551
                %v553 = vld [vmem:[%s491 + $0x258] sm:$0xff]
                %554 = vst [vmem:[%s492 + $0x12c] sm:$0xff] %v553
                %v555 = vld [vmem:[%s491 + $0x260] sm:$0xff]
                %556 = vst [vmem:[%s492 + $0x134] sm:$0xff] %v555
              $region93: #{ma_midn_forward.2} parent=87 // loop_footer
                %s490 = sadd.s32 1, %s486
              $region94: #{ma_midn_forward.2} parent=87 // loop_footer_branch
                %485 = sbr.rel target = $region90
              $region95: #{ma_midn_forward.2} parent=87 // loop_exit
                _
              loop: start=0, step=1, limit=1
              $region96: #{ma_midn_forward.2} parent=87 // loop_pre_header
                _
              $region97: #{ma_midn_forward.2} parent=87 // loop_header
                %s559 = sphi 0, %s563
                %p560 = scmp.ge.s32.totalorder %s559, 1
                %s564 = sphi %s483, %s483
                %s565 = sphi %s484, %s484
              $region98: #{ma_midn_forward.2} parent=87 // loop_header_branch
                %562 = sbr.rel (%p560) target = $region102
              $region99: #{ma_midn_forward.2} parent=87 // loop_body
                %v566 = vld [vmem:[%s564] sm:$0xf]
                %567 = vst [vmem:[%s565] sm:$0xf] %v566
                %v568 = vld [vmem:[%s564 + $0x28] sm:$0xf]
                %569 = vst [vmem:[%s565 + $0x14] sm:$0xf] %v568
                %v570 = vld [vmem:[%s564 + $0x50] sm:$0xf]
                %571 = vst [vmem:[%s565 + $0x28] sm:$0xf] %v570
                %v572 = vld [vmem:[%s564 + $0x78] sm:$0xf]
                %573 = vst [vmem:[%s565 + $0x3c] sm:$0xf] %v572
                %v574 = vld [vmem:[%s564 + $0xa0] sm:$0xf]
                %575 = vst [vmem:[%s565 + $0x50] sm:$0xf] %v574
                %v576 = vld [vmem:[%s564 + $0xc8] sm:$0xf]
                %577 = vst [vmem:[%s565 + $0x64] sm:$0xf] %v576
                %v578 = vld [vmem:[%s564 + $0xf0] sm:$0xf]
                %579 = vst [vmem:[%s565 + $0x78] sm:$0xf] %v578
                %v580 = vld [vmem:[%s564 + $0x118] sm:$0xf]
                %581 = vst [vmem:[%s565 + $0x8c] sm:$0xf] %v580
                %v582 = vld [vmem:[%s564 + $0x140] sm:$0xf]
                %583 = vst [vmem:[%s565 + $0xa0] sm:$0xf] %v582
                %v584 = vld [vmem:[%s564 + $0x168] sm:$0xf]
                %585 = vst [vmem:[%s565 + $0xb4] sm:$0xf] %v584
                %v586 = vld [vmem:[%s564 + $0x190] sm:$0xf]
                %587 = vst [vmem:[%s565 + $0xc8] sm:$0xf] %v586
                %v588 = vld [vmem:[%s564 + $0x1b8] sm:$0xf]
                %589 = vst [vmem:[%s565 + $0xdc] sm:$0xf] %v588
                %v590 = vld [vmem:[%s564 + $0x1e0] sm:$0xf]
                %591 = vst [vmem:[%s565 + $0xf0] sm:$0xf] %v590
                %v592 = vld [vmem:[%s564 + $0x208] sm:$0xf]
                %593 = vst [vmem:[%s565 + $0x104] sm:$0xf] %v592
                %v594 = vld [vmem:[%s564 + $0x230] sm:$0xf]
                %595 = vst [vmem:[%s565 + $0x118] sm:$0xf] %v594
                %v596 = vld [vmem:[%s564 + $0x258] sm:$0xf]
                %597 = vst [vmem:[%s565 + $0x12c] sm:$0xf] %v596
              $region100: #{ma_midn_forward.2} parent=87 // loop_footer
                %s563 = sadd.s32 1, %s559
              $region101: #{ma_midn_forward.2} parent=87 // loop_footer_branch
                %558 = sbr.rel target = $region97
              $region102: #{ma_midn_forward.2} parent=87 // loop_exit
                _
            $region88: #{ma_midn_forward.2} parent=83 // pred_fallthru
              _
          $region84: #{ma_midn_forward.2} parent=79 // pred_fallthru
            _
          %598 = vnop
        $region80: #{ma_midn_forward.2} parent=23 // pred_fallthru
          _
        // Predicated region
        $region103: #{ma_midn_forward.2} parent=23 // pred_check
          %p599 = pneg %p110
        $region104: #{ma_midn_forward.2} parent=23 // pred_check_branch
          %601 = sbr.rel (%p599) target = $region106
        $region105: #{ma_midn_forward.2} parent=23 // pred_region
          %s602 = sand.u32 %s100, 1
          %s603 = sand.u32 %s100, 1
          %s604 = smul.addr %s603, 320
          %s605 = scalar_lea.vmem [#allocation5], %s604
          %s606 = smul.u32 5, %s12
          %s607 = smul.addr %s606, 4
          %s608 = scalar_lea.vmem %s3, %s607
          // Predicated region
          $region107: #{ma_midn_forward.2} parent=105 // pred_check
            _
          $region108: #{ma_midn_forward.2} parent=105 // pred_check_branch
            %610 = sbr.rel (0) target = $region110
          $region109: #{ma_midn_forward.2} parent=105 // pred_region
            // Predicated region
            $region111: #{ma_midn_forward.2} parent=109 // pred_check
              _
            $region112: #{ma_midn_forward.2} parent=109 // pred_check_branch
              %612 = sbr.rel (0) target = $region114
            $region113: #{ma_midn_forward.2} parent=109 // pred_region
              %s613 = scalar_lea.vmem %s608, 16
              %s614 = scalar_lea.vmem %s605, 16 [#allocation5]
              loop: start=0, step=1, limit=1
              $region115: #{ma_midn_forward.2} parent=113 // loop_pre_header
                _
              $region116: #{ma_midn_forward.2} parent=113 // loop_header
                %s616 = sphi 0, %s620
                %p617 = scmp.ge.s32.totalorder %s616, 1
                %s621 = sphi %s608, %s608
                %s622 = sphi %s605, %s605
              $region117: #{ma_midn_forward.2} parent=113 // loop_header_branch
                %619 = sbr.rel (%p617) target = $region121
              $region118: #{ma_midn_forward.2} parent=113 // loop_body
                %v623 = vld [vmem:[%s621] sm:$0xff]
                %624 = vst [vmem:[%s622] sm:$0xff] %v623
                %v625 = vld [vmem:[%s621 + $0x8] sm:$0xff]
                %626 = vst [vmem:[%s622 + $0x8] sm:$0xff] %v625
                %v627 = vld [vmem:[%s621 + $0x28] sm:$0xff]
                %628 = vst [vmem:[%s622 + $0x14] sm:$0xff] %v627
                %v629 = vld [vmem:[%s621 + $0x30] sm:$0xff]
                %630 = vst [vmem:[%s622 + $0x1c] sm:$0xff] %v629
                %v631 = vld [vmem:[%s621 + $0x50] sm:$0xff]
                %632 = vst [vmem:[%s622 + $0x28] sm:$0xff] %v631
                %v633 = vld [vmem:[%s621 + $0x58] sm:$0xff]
                %634 = vst [vmem:[%s622 + $0x30] sm:$0xff] %v633
                %v635 = vld [vmem:[%s621 + $0x78] sm:$0xff]
                %636 = vst [vmem:[%s622 + $0x3c] sm:$0xff] %v635
                %v637 = vld [vmem:[%s621 + $0x80] sm:$0xff]
                %638 = vst [vmem:[%s622 + $0x44] sm:$0xff] %v637
                %v639 = vld [vmem:[%s621 + $0xa0] sm:$0xff]
                %640 = vst [vmem:[%s622 + $0x50] sm:$0xff] %v639
                %v641 = vld [vmem:[%s621 + $0xa8] sm:$0xff]
                %642 = vst [vmem:[%s622 + $0x58] sm:$0xff] %v641
                %v643 = vld [vmem:[%s621 + $0xc8] sm:$0xff]
                %644 = vst [vmem:[%s622 + $0x64] sm:$0xff] %v643
                %v645 = vld [vmem:[%s621 + $0xd0] sm:$0xff]
                %646 = vst [vmem:[%s622 + $0x6c] sm:$0xff] %v645
                %v647 = vld [vmem:[%s621 + $0xf0] sm:$0xff]
                %648 = vst [vmem:[%s622 + $0x78] sm:$0xff] %v647
                %v649 = vld [vmem:[%s621 + $0xf8] sm:$0xff]
                %650 = vst [vmem:[%s622 + $0x80] sm:$0xff] %v649
                %v651 = vld [vmem:[%s621 + $0x118] sm:$0xff]
                %652 = vst [vmem:[%s622 + $0x8c] sm:$0xff] %v651
                %v653 = vld [vmem:[%s621 + $0x120] sm:$0xff]
                %654 = vst [vmem:[%s622 + $0x94] sm:$0xff] %v653
                %v655 = vld [vmem:[%s621 + $0x140] sm:$0xff]
                %656 = vst [vmem:[%s622 + $0xa0] sm:$0xff] %v655
                %v657 = vld [vmem:[%s621 + $0x148] sm:$0xff]
                %658 = vst [vmem:[%s622 + $0xa8] sm:$0xff] %v657
                %v659 = vld [vmem:[%s621 + $0x168] sm:$0xff]
                %660 = vst [vmem:[%s622 + $0xb4] sm:$0xff] %v659
                %v661 = vld [vmem:[%s621 + $0x170] sm:$0xff]
                %662 = vst [vmem:[%s622 + $0xbc] sm:$0xff] %v661
                %v663 = vld [vmem:[%s621 + $0x190] sm:$0xff]
                %664 = vst [vmem:[%s622 + $0xc8] sm:$0xff] %v663
                %v665 = vld [vmem:[%s621 + $0x198] sm:$0xff]
                %666 = vst [vmem:[%s622 + $0xd0] sm:$0xff] %v665
                %v667 = vld [vmem:[%s621 + $0x1b8] sm:$0xff]
                %668 = vst [vmem:[%s622 + $0xdc] sm:$0xff] %v667
                %v669 = vld [vmem:[%s621 + $0x1c0] sm:$0xff]
                %670 = vst [vmem:[%s622 + $0xe4] sm:$0xff] %v669
                %v671 = vld [vmem:[%s621 + $0x1e0] sm:$0xff]
                %672 = vst [vmem:[%s622 + $0xf0] sm:$0xff] %v671
                %v673 = vld [vmem:[%s621 + $0x1e8] sm:$0xff]
                %674 = vst [vmem:[%s622 + $0xf8] sm:$0xff] %v673
                %v675 = vld [vmem:[%s621 + $0x208] sm:$0xff]
                %676 = vst [vmem:[%s622 + $0x104] sm:$0xff] %v675
                %v677 = vld [vmem:[%s621 + $0x210] sm:$0xff]
                %678 = vst [vmem:[%s622 + $0x10c] sm:$0xff] %v677
                %v679 = vld [vmem:[%s621 + $0x230] sm:$0xff]
                %680 = vst [vmem:[%s622 + $0x118] sm:$0xff] %v679
                %v681 = vld [vmem:[%s621 + $0x238] sm:$0xff]
                %682 = vst [vmem:[%s622 + $0x120] sm:$0xff] %v681
                %v683 = vld [vmem:[%s621 + $0x258] sm:$0xff]
                %684 = vst [vmem:[%s622 + $0x12c] sm:$0xff] %v683
                %v685 = vld [vmem:[%s621 + $0x260] sm:$0xff]
                %686 = vst [vmem:[%s622 + $0x134] sm:$0xff] %v685
              $region119: #{ma_midn_forward.2} parent=113 // loop_footer
                %s620 = sadd.s32 1, %s616
              $region120: #{ma_midn_forward.2} parent=113 // loop_footer_branch
                %615 = sbr.rel target = $region116
              $region121: #{ma_midn_forward.2} parent=113 // loop_exit
                _
              loop: start=0, step=1, limit=1
              $region122: #{ma_midn_forward.2} parent=113 // loop_pre_header
                _
              $region123: #{ma_midn_forward.2} parent=113 // loop_header
                %s689 = sphi 0, %s693
                %p690 = scmp.ge.s32.totalorder %s689, 1
                %s694 = sphi %s613, %s613
                %s695 = sphi %s614, %s614
              $region124: #{ma_midn_forward.2} parent=113 // loop_header_branch
                %692 = sbr.rel (%p690) target = $region128
              $region125: #{ma_midn_forward.2} parent=113 // loop_body
                %v696 = vld [vmem:[%s694] sm:$0xf]
                %697 = vst [vmem:[%s695] sm:$0xf] %v696
                %v698 = vld [vmem:[%s694 + $0x28] sm:$0xf]
                %699 = vst [vmem:[%s695 + $0x14] sm:$0xf] %v698
                %v700 = vld [vmem:[%s694 + $0x50] sm:$0xf]
                %701 = vst [vmem:[%s695 + $0x28] sm:$0xf] %v700
                %v702 = vld [vmem:[%s694 + $0x78] sm:$0xf]
                %703 = vst [vmem:[%s695 + $0x3c] sm:$0xf] %v702
                %v704 = vld [vmem:[%s694 + $0xa0] sm:$0xf]
                %705 = vst [vmem:[%s695 + $0x50] sm:$0xf] %v704
                %v706 = vld [vmem:[%s694 + $0xc8] sm:$0xf]
                %707 = vst [vmem:[%s695 + $0x64] sm:$0xf] %v706
                %v708 = vld [vmem:[%s694 + $0xf0] sm:$0xf]
                %709 = vst [vmem:[%s695 + $0x78] sm:$0xf] %v708
                %v710 = vld [vmem:[%s694 + $0x118] sm:$0xf]
                %711 = vst [vmem:[%s695 + $0x8c] sm:$0xf] %v710
                %v712 = vld [vmem:[%s694 + $0x140] sm:$0xf]
                %713 = vst [vmem:[%s695 + $0xa0] sm:$0xf] %v712
                %v714 = vld [vmem:[%s694 + $0x168] sm:$0xf]
                %715 = vst [vmem:[%s695 + $0xb4] sm:$0xf] %v714
                %v716 = vld [vmem:[%s694 + $0x190] sm:$0xf]
                %717 = vst [vmem:[%s695 + $0xc8] sm:$0xf] %v716
                %v718 = vld [vmem:[%s694 + $0x1b8] sm:$0xf]
                %719 = vst [vmem:[%s695 + $0xdc] sm:$0xf] %v718
                %v720 = vld [vmem:[%s694 + $0x1e0] sm:$0xf]
                %721 = vst [vmem:[%s695 + $0xf0] sm:$0xf] %v720
                %v722 = vld [vmem:[%s694 + $0x208] sm:$0xf]
                %723 = vst [vmem:[%s695 + $0x104] sm:$0xf] %v722
                %v724 = vld [vmem:[%s694 + $0x230] sm:$0xf]
                %725 = vst [vmem:[%s695 + $0x118] sm:$0xf] %v724
                %v726 = vld [vmem:[%s694 + $0x258] sm:$0xf]
                %727 = vst [vmem:[%s695 + $0x12c] sm:$0xf] %v726
              $region126: #{ma_midn_forward.2} parent=113 // loop_footer
                %s693 = sadd.s32 1, %s689
              $region127: #{ma_midn_forward.2} parent=113 // loop_footer_branch
                %688 = sbr.rel target = $region123
              $region128: #{ma_midn_forward.2} parent=113 // loop_exit
                _
            $region114: #{ma_midn_forward.2} parent=109 // pred_fallthru
              _
          $region110: #{ma_midn_forward.2} parent=105 // pred_fallthru
            _
          %728 = vnop
        $region106: #{ma_midn_forward.2} parent=23 // pred_fallthru
          _
      $region24: #{ma_midn_forward.2} parent=5 // pred_fallthru
        _
      %p729 = scmp.le.s32.totalorder 1, %s12
      %p730 = scmp.lt.s32.totalorder %s12, 3
      %p731 = pnand %p729, %p730
      %p732 = pneg %p731
      // Predicated region
      $region129: #{ma_midn_forward.2} parent=5 // pred_check
        _
      $region130: #{ma_midn_forward.2} parent=5 // pred_check_branch
        %734 = sbr.rel (%p731) target = $region132
      $region131: #{ma_midn_forward.2} parent=5 // pred_region
        %s735 = ssub.s32 %s12, 1
        %s736 = sand.u32 %s25, 1
        %s737 = sand.u32 %s25, 1
        %s738 = smul.addr %s737, 320
        %s739 = scalar_lea.vmem [#allocation2], %s738
        // Predicated region
        $region133: #{ma_midn_forward.2} parent=131 // pred_check
          %p740 = pneg %p38
        $region134: #{ma_midn_forward.2} parent=131 // pred_check_branch
          %742 = sbr.rel (%p740) target = $region136
        $region135: #{ma_midn_forward.2} parent=131 // pred_region
          _
        $region136: #{ma_midn_forward.2} parent=131 // pred_fallthru
          _
        %s743 = sand.u32 %s51, 1
        %s744 = sand.u32 %s51, 1
        %s745 = smul.addr %s744, 320
        %s746 = scalar_lea.vmem [#allocation3], %s745
        // Predicated region
        $region137: #{ma_midn_forward.2} parent=131 // pred_check
          %p747 = pneg %p64
        $region138: #{ma_midn_forward.2} parent=131 // pred_check_branch
          %749 = sbr.rel (%p747) target = $region140
        $region139: #{ma_midn_forward.2} parent=131 // pred_region
          _
        $region140: #{ma_midn_forward.2} parent=131 // pred_fallthru
          _
        %s750 = sand.u32 %s77, 1
        %s751 = sand.u32 %s77, 1
        %s752 = smul.addr %s751, 320
        %s753 = scalar_lea.vmem [#allocation4], %s752
        // Predicated region
        $region141: #{ma_midn_forward.2} parent=131 // pred_check
          %p754 = pneg %p90
        $region142: #{ma_midn_forward.2} parent=131 // pred_check_branch
          %756 = sbr.rel (%p754) target = $region144
        $region143: #{ma_midn_forward.2} parent=131 // pred_region
          _
        $region144: #{ma_midn_forward.2} parent=131 // pred_fallthru
          _
        %s757 = sand.u32 %s103, 1
        %s758 = sand.u32 %s103, 1
        %s759 = smul.addr %s758, 320
        %s760 = scalar_lea.vmem [#allocation5], %s759
        // Predicated region
        $region145: #{ma_midn_forward.2} parent=131 // pred_check
          %p761 = pneg %p116
        $region146: #{ma_midn_forward.2} parent=131 // pred_check_branch
          %763 = sbr.rel (%p761) target = $region148
        $region147: #{ma_midn_forward.2} parent=131 // pred_region
          _
        $region148: #{ma_midn_forward.2} parent=131 // pred_fallthru
          _
        %s764 = sand.u32 %s25, 1
        %s765 = sand.u32 %s25, 1
        %s766 = smul.addr %s765, 320
        %s767 = scalar_lea.vmem [#allocation2], %s766
        %p768 = pneg %p38
        %p769 = pneg %p35
        %s770 = sand.u32 %s51, 1
        %s771 = sand.u32 %s51, 1
        %s772 = smul.addr %s771, 320
        %s773 = scalar_lea.vmem [#allocation3], %s772
        %p774 = pneg %p64
        %p775 = pneg %p61
        %s776 = sand.u32 %s77, 1
        %s777 = sand.u32 %s77, 1
        %s778 = smul.addr %s777, 320
        %s779 = scalar_lea.vmem [#allocation4], %s778
        %p780 = pneg %p90
        %p781 = pneg %p87
        %s782 = sand.u32 %s103, 1
        %s783 = sand.u32 %s103, 1
        %s784 = smul.addr %s783, 320
        %s785 = scalar_lea.vmem [#allocation5], %s784
        %p786 = pneg %p116
        %p787 = pneg %p113
        %p788 = pneg %p137
        %p789 = pneg %p134
        %p790 = pneg %p158
        %p791 = pneg %p155
        %p792 = pneg %p184
        %p793 = pneg %p181
        %s794 = sand.u32 %s171, 1
        %s795 = sand.u32 %s171, 1
        %s796 = smul.addr %s795, 120
        %s797 = scalar_lea.vmem [#allocation6], %s796
        %s798 = smul.u32 5, %s17
        %s799 = smul.u32 5, %s17
        %s800 = smul.u32 5, %s17
        %s801 = smul.u32 5, %s17
        %s802 = smul.u32 5, %s17
        %v804 = vld [vmem:[%s4] sm:$0xf]
        %v805 = vld [vmem:[%s4 + $0x4] sm:$0xf]
        %v806 = vld [vmem:[%s4 + $0x8] sm:$0x3]
        %v807 = vld [vmem:[%s739] sm:$0xff]
        %v808 = vld [vmem:[%s739 + $0x8] sm:$0xff]
        %v809 = vld [vmem:[%s739 + $0x10] sm:$0xf]
        %v810 = vld [vmem:[%s739 + $0x14] sm:$0xff]
        %v811 = vld [vmem:[%s739 + $0x1c] sm:$0xff]
        %v812 = vld [vmem:[%s739 + $0x24] sm:$0xf]
        %v813 = vld [vmem:[%s739 + $0x28] sm:$0xff]
        %v814 = vld [vmem:[%s739 + $0x30] sm:$0xff]
        %v815 = vld [vmem:[%s739 + $0x38] sm:$0xf]
        %v816 = vld [vmem:[%s739 + $0x3c] sm:$0xff]
        %v817 = vld [vmem:[%s739 + $0x44] sm:$0xff]
        %v818 = vld [vmem:[%s739 + $0x4c] sm:$0xf]
        %v819 = vld [vmem:[%s739 + $0x50] sm:$0xff]
        %v820 = vld [vmem:[%s739 + $0x58] sm:$0xff]
        %v821 = vld [vmem:[%s739 + $0x60] sm:$0xf]
        %v822 = vld [vmem:[%s739 + $0x64] sm:$0xff]
        %v823 = vld [vmem:[%s739 + $0x6c] sm:$0xff]
        %v824 = vld [vmem:[%s739 + $0x74] sm:$0xf]
        %v825 = vld [vmem:[%s739 + $0x78] sm:$0xff]
        %v826 = vld [vmem:[%s739 + $0x80] sm:$0xff]
        %v827 = vld [vmem:[%s739 + $0x88] sm:$0xf]
        %v828 = vld [vmem:[%s739 + $0x8c] sm:$0xff]
        %v829 = vld [vmem:[%s739 + $0x94] sm:$0xff]
        %v830 = vld [vmem:[%s739 + $0x9c] sm:$0xf]
        %v831 = vld [vmem:[%s739 + $0xa0] sm:$0xff]
        %v832 = vld [vmem:[%s739 + $0xa8] sm:$0xff]
        %v833 = vld [vmem:[%s739 + $0xb0] sm:$0xf]
        %v834 = vld [vmem:[%s739 + $0xb4] sm:$0xff]
        %v835 = vld [vmem:[%s739 + $0xbc] sm:$0xff]
        %v836 = vld [vmem:[%s739 + $0xc4] sm:$0xf]
        %v837 = vld [vmem:[%s739 + $0xc8] sm:$0xff]
        %v838 = vld [vmem:[%s739 + $0xd0] sm:$0xff]
        %v839 = vld [vmem:[%s739 + $0xd8] sm:$0xf]
        %v840 = vld [vmem:[%s739 + $0xdc] sm:$0xff]
        %v841 = vld [vmem:[%s739 + $0xe4] sm:$0xff]
        %v842 = vld [vmem:[%s739 + $0xec] sm:$0xf]
        %v843 = vld [vmem:[%s739 + $0xf0] sm:$0xff]
        %v844 = vld [vmem:[%s739 + $0xf8] sm:$0xff]
        %v845 = vld [vmem:[%s739 + $0x100] sm:$0xf]
        %v846 = vld [vmem:[%s739 + $0x104] sm:$0xff]
        %v847 = vld [vmem:[%s739 + $0x10c] sm:$0xff]
        %v848 = vld [vmem:[%s739 + $0x114] sm:$0xf]
        %v849 = vld [vmem:[%s739 + $0x118] sm:$0xff]
        %v850 = vld [vmem:[%s739 + $0x120] sm:$0xff]
        %v851 = vld [vmem:[%s739 + $0x128] sm:$0xf]
        %v852 = vld [vmem:[%s739 + $0x12c] sm:$0xff]
        %v853 = vld [vmem:[%s739 + $0x134] sm:$0xff]
        %v854 = vld [vmem:[%s739 + $0x13c] sm:$0xf]
        %v858 = vunpack.c.l.b16 %v804
        %v859 = vunpack.c.l.b16 %v805
        %v860 = vunpack.c.l.b16 %v806
        %v861 = vpack.c.b16 %v859, %v858
        %v862 = vpack.c.b16 %v860, %v860
        %v913 = vunpack.c.l.b16 %v807
        %v914 = vunpack.c.h.b16 %v807
        %v915 = vunpack.c.l.b16 %v808
        %v916 = vunpack.c.h.b16 %v808
        %v917 = vunpack.c.l.b16 %v809
        %v918 = vunpack.c.l.b16 %v810
        %v919 = vunpack.c.h.b16 %v810
        %v920 = vunpack.c.l.b16 %v811
        %v921 = vunpack.c.h.b16 %v811
        %v922 = vunpack.c.l.b16 %v812
        %v923 = vunpack.c.l.b16 %v813
        %v924 = vunpack.c.h.b16 %v813
        %v925 = vunpack.c.l.b16 %v814
        %v926 = vunpack.c.h.b16 %v814
        %v927 = vunpack.c.l.b16 %v815
        %v928 = vunpack.c.l.b16 %v816
        %v929 = vunpack.c.h.b16 %v816
        %v930 = vunpack.c.l.b16 %v817
        %v931 = vunpack.c.h.b16 %v817
        %v932 = vunpack.c.l.b16 %v818
        %v933 = vunpack.c.l.b16 %v819
        %v934 = vunpack.c.h.b16 %v819
        %v935 = vunpack.c.l.b16 %v820
        %v936 = vunpack.c.h.b16 %v820
        %v937 = vunpack.c.l.b16 %v821
        %v938 = vunpack.c.l.b16 %v822
        %v939 = vunpack.c.h.b16 %v822
        %v940 = vunpack.c.l.b16 %v823
        %v941 = vunpack.c.h.b16 %v823
        %v942 = vunpack.c.l.b16 %v824
        %v943 = vunpack.c.l.b16 %v825
        %v944 = vunpack.c.h.b16 %v825
        %v945 = vunpack.c.l.b16 %v826
        %v946 = vunpack.c.h.b16 %v826
        %v947 = vunpack.c.l.b16 %v827
        %v948 = vunpack.c.l.b16 %v828
        %v949 = vunpack.c.h.b16 %v828
        %v950 = vunpack.c.l.b16 %v829
        %v951 = vunpack.c.h.b16 %v829
        %v952 = vunpack.c.l.b16 %v830
        %v953 = vunpack.c.l.b16 %v831
        %v954 = vunpack.c.h.b16 %v831
        %v955 = vunpack.c.l.b16 %v832
        %v956 = vunpack.c.h.b16 %v832
        %v957 = vunpack.c.l.b16 %v833
        %v958 = vunpack.c.l.b16 %v834
        %v959 = vunpack.c.h.b16 %v834
        %v960 = vunpack.c.l.b16 %v835
        %v961 = vunpack.c.h.b16 %v835
        %v962 = vunpack.c.l.b16 %v836
        %v963 = vunpack.c.l.b16 %v837
        %v964 = vunpack.c.h.b16 %v837
        %v965 = vunpack.c.l.b16 %v838
        %v966 = vunpack.c.h.b16 %v838
        %v967 = vunpack.c.l.b16 %v839
        %v968 = vunpack.c.l.b16 %v840
        %v969 = vunpack.c.h.b16 %v840
        %v970 = vunpack.c.l.b16 %v841
        %v971 = vunpack.c.h.b16 %v841
        %v972 = vunpack.c.l.b16 %v842
        %v973 = vunpack.c.l.b16 %v843
        %v974 = vunpack.c.h.b16 %v843
        %v975 = vunpack.c.l.b16 %v844
        %v976 = vunpack.c.h.b16 %v844
        %v977 = vunpack.c.l.b16 %v845
        %v978 = vunpack.c.l.b16 %v846
        %v979 = vunpack.c.h.b16 %v846
        %v980 = vunpack.c.l.b16 %v847
        %v981 = vunpack.c.h.b16 %v847
        %v982 = vunpack.c.l.b16 %v848
        %v983 = vunpack.c.l.b16 %v849
        %v984 = vunpack.c.h.b16 %v849
        %v985 = vunpack.c.l.b16 %v850
        %v986 = vunpack.c.h.b16 %v850
        %v987 = vunpack.c.l.b16 %v851
        %v988 = vunpack.c.l.b16 %v852
        %v989 = vunpack.c.h.b16 %v852
        %v990 = vunpack.c.l.b16 %v853
        %v991 = vunpack.c.h.b16 %v853
        %v992 = vunpack.c.l.b16 %v854
        %v993 = vpack.c.b16 %v918, %v913
        %v994 = vpack.c.b16 %v919, %v914
        %v995 = vpack.c.b16 %v920, %v915
        %v996 = vpack.c.b16 %v921, %v916
        %v997 = vpack.c.b16 %v922, %v917
        %v998 = vpack.c.b16 %v928, %v923
        %v999 = vpack.c.b16 %v929, %v924
        %v1000 = vpack.c.b16 %v930, %v925
        %v1001 = vpack.c.b16 %v931, %v926
        %v1002 = vpack.c.b16 %v932, %v927
        %v1003 = vpack.c.b16 %v938, %v933
        %v1004 = vpack.c.b16 %v939, %v934
        %v1005 = vpack.c.b16 %v940, %v935
        %v1006 = vpack.c.b16 %v941, %v936
        %v1007 = vpack.c.b16 %v942, %v937
        %v1008 = vpack.c.b16 %v948, %v943
        %v1009 = vpack.c.b16 %v949, %v944
        %v1010 = vpack.c.b16 %v950, %v945
        %v1011 = vpack.c.b16 %v951, %v946
        %v1012 = vpack.c.b16 %v952, %v947
        %v1013 = vpack.c.b16 %v958, %v953
        %v1014 = vpack.c.b16 %v959, %v954
        %v1015 = vpack.c.b16 %v960, %v955
        %v1016 = vpack.c.b16 %v961, %v956
        %v1017 = vpack.c.b16 %v962, %v957
        %v1018 = vpack.c.b16 %v968, %v963
        %v1019 = vpack.c.b16 %v969, %v964
        %v1020 = vpack.c.b16 %v970, %v965
        %v1021 = vpack.c.b16 %v971, %v966
        %v1022 = vpack.c.b16 %v972, %v967
        %v1023 = vpack.c.b16 %v978, %v973
        %v1024 = vpack.c.b16 %v979, %v974
        %v1025 = vpack.c.b16 %v980, %v975
        %v1026 = vpack.c.b16 %v981, %v976
        %v1027 = vpack.c.b16 %v982, %v977
        %v1028 = vpack.c.b16 %v988, %v983
        %v1029 = vpack.c.b16 %v989, %v984
        %v1030 = vpack.c.b16 %v990, %v985
        %v1031 = vpack.c.b16 %v991, %v986
        %v1032 = vpack.c.b16 %v992, %v987
        %1073 = vmatprep.subr.bf16.mxu0 %v994
        %1074 = vmatpush1.bf16.msra.mxu0 %v993
        %1075 = vmatprep.subr.bf16.mxu0 %v999
        %1076 = vmatpush1.bf16.msra.mxu0 %v998
        %1077 = vmatprep.subr.bf16.mxu0 %v1004
        %1078 = vmatpush1.bf16.msra.mxu0 %v1003
        %1079 = vmatprep.subr.bf16.mxu0 %v1009
        %1080 = vmatpush1.bf16.msra.mxu0 %v1008
        %1081 = vmatprep.subr.bf16.mxu0 %v1014
        %1082 = vmatpush1.bf16.msra.mxu0 %v1013
        %1083 = vmatprep.subr.bf16.mxu0 %v1019
        %1084 = vmatpush1.bf16.msra.mxu0 %v1018
        %1085 = vmatprep.subr.bf16.mxu0 %v1024
        %1086 = vmatpush1.bf16.msra.mxu0 %v1023
        %1087 = vmatprep.subr.bf16.mxu0 %v1029
        %1088 = vmatpush1.bf16.msra.mxu0 %v1028
        %1089 = vmatprep.subr.bf16.mxu0 0
        %1090 = vmatpush1.bf16.msra.mxu0 0
        %1091 = vmatprep.subr.bf16.mxu0 0
        %1092 = vmatpush1.bf16.msra.mxu0 0
        %1093 = vmatprep.subr.bf16.mxu0 0
        %1094 = vmatpush1.bf16.msra.mxu0 0
        %1095 = vmatprep.subr.bf16.mxu0 0
        %1096 = vmatpush1.bf16.msra.mxu0 0
        %1097 = vmatprep.subr.bf16.mxu0 0
        %1098 = vmatpush1.bf16.msra.mxu0 0
        %1099 = vmatprep.subr.bf16.mxu0 0
        %1100 = vmatpush1.bf16.msra.mxu0 0
        %1101 = vmatprep.subr.bf16.mxu0 0
        %1102 = vmatpush1.bf16.msra.mxu0 0
        %1103 = vmatprep.subr.bf16.mxu0 0
        %1104 = vmatpush1.bf16.msra.mxu0 0
        %1105 = vmatprep.mubr.bf16.mxu0 0
        %1106 = vmatmul.mubr.bf16.gmra.mrb[0].mxu0 %v861
        %v1107 = vpop.f32.mrb[0].mxu0
        %v1108 = vadd.f32 0.0, %v1107
        %v1109 = vpop.f32.mrb[0].mxu0
        %v1110 = vadd.f32 0.0, %v1109
        %v1111 = vpop.f32.mrb[0].mxu0
        %v1112 = vadd.f32 0.0, %v1111
        %v1113 = vpop.f32.mrb[0].mxu0
        %v1114 = vadd.f32 0.0, %v1113
        %1115 = vmatprep.mubr.bf16.mxu0 0
        %1116 = vmatmul.mubr.bf16.gmra.mrb[0].mxu0 %v862
        %v1117 = vpop.f32.mrb[0].mxu0
        %v1118 = vadd.f32 0.0, %v1117
        %v1119 = vpop.f32.mrb[0].mxu0
        %v1120 = vadd.f32 0.0, %v1119
        %v1121 = vpop.f32.mrb[0].mxu0
        %v1122 = vpop.f32.mrb[0].mxu0
        %1123 = vdwg.mxu0
        %1124 = vmatprep.subr.bf16.mxu0 %v996
        %1125 = vmatpush1.bf16.msra.mxu0 %v995
        %1126 = vmatprep.subr.bf16.mxu0 %v1001
        %1127 = vmatpush1.bf16.msra.mxu0 %v1000
        %1128 = vmatprep.subr.bf16.mxu0 %v1006
        %1129 = vmatpush1.bf16.msra.mxu0 %v1005
        %1130 = vmatprep.subr.bf16.mxu0 %v1011
        %1131 = vmatpush1.bf16.msra.mxu0 %v1010
        %1132 = vmatprep.subr.bf16.mxu0 %v1016
        %1133 = vmatpush1.bf16.msra.mxu0 %v1015
        %1134 = vmatprep.subr.bf16.mxu0 %v1021
        %1135 = vmatpush1.bf16.msra.mxu0 %v1020
        %1136 = vmatprep.subr.bf16.mxu0 %v1026
        %1137 = vmatpush1.bf16.msra.mxu0 %v1025
        %1138 = vmatprep.subr.bf16.mxu0 %v1031
        %1139 = vmatpush1.bf16.msra.mxu0 %v1030
        %1140 = vmatprep.subr.bf16.mxu0 0
        %1141 = vmatpush1.bf16.msra.mxu0 0
        %1142 = vmatprep.subr.bf16.mxu0 0
        %1143 = vmatpush1.bf16.msra.mxu0 0
        %1144 = vmatprep.subr.bf16.mxu0 0
        %1145 = vmatpush1.bf16.msra.mxu0 0
        %1146 = vmatprep.subr.bf16.mxu0 0
        %1147 = vmatpush1.bf16.msra.mxu0 0
        %1148 = vmatprep.subr.bf16.mxu0 0
        %1149 = vmatpush1.bf16.msra.mxu0 0
        %1150 = vmatprep.subr.bf16.mxu0 0
        %1151 = vmatpush1.bf16.msra.mxu0 0
        %1152 = vmatprep.subr.bf16.mxu0 0
        %1153 = vmatpush1.bf16.msra.mxu0 0
        %1154 = vmatprep.subr.bf16.mxu0 0
        %1155 = vmatpush1.bf16.msra.mxu0 0
        %1156 = vmatprep.mubr.bf16.mxu0 0
        %1157 = vmatmul.mubr.bf16.gmra.mrb[0].mxu0 %v861
        %v1158 = vpop.f32.mrb[0].mxu0
        %v1159 = vadd.f32 0.0, %v1158
        %v1160 = vpop.f32.mrb[0].mxu0
        %v1161 = vadd.f32 0.0, %v1160
        %v1162 = vpop.f32.mrb[0].mxu0
        %v1163 = vadd.f32 0.0, %v1162
        %v1164 = vpop.f32.mrb[0].mxu0
        %v1165 = vadd.f32 0.0, %v1164
        %1166 = vmatprep.mubr.bf16.mxu0 0
        %1167 = vmatmul.mubr.bf16.gmra.mrb[0].mxu0 %v862
        %v1168 = vpop.f32.mrb[0].mxu0
        %v1169 = vadd.f32 0.0, %v1168
        %v1170 = vpop.f32.mrb[0].mxu0
        %v1171 = vadd.f32 0.0, %v1170
        %v1172 = vpop.f32.mrb[0].mxu0
        %v1173 = vpop.f32.mrb[0].mxu0
        %1174 = vdwg.mxu0
        %1175 = vmatprep.subr.bf16.mxu0 0
        %1176 = vmatpush1.bf16.msra.mxu0 %v997
        %1177 = vmatprep.subr.bf16.mxu0 0
        %1178 = vmatpush1.bf16.msra.mxu0 %v1002
        %1179 = vmatprep.subr.bf16.mxu0 0
        %1180 = vmatpush1.bf16.msra.mxu0 %v1007
        %1181 = vmatprep.subr.bf16.mxu0 0
        %1182 = vmatpush1.bf16.msra.mxu0 %v1012
        %1183 = vmatprep.subr.bf16.mxu0 0
        %1184 = vmatpush1.bf16.msra.mxu0 %v1017
        %1185 = vmatprep.subr.bf16.mxu0 0
        %1186 = vmatpush1.bf16.msra.mxu0 %v1022
        %1187 = vmatprep.subr.bf16.mxu0 0
        %1188 = vmatpush1.bf16.msra.mxu0 %v1027
        %1189 = vmatprep.subr.bf16.mxu0 0
        %1190 = vmatpush1.bf16.msra.mxu0 %v1032
        %1191 = vmatprep.subr.bf16.mxu0 0
        %1192 = vmatpush1.bf16.msra.mxu0 0
        %1193 = vmatprep.subr.bf16.mxu0 0
        %1194 = vmatpush1.bf16.msra.mxu0 0
        %1195 = vmatprep.subr.bf16.mxu0 0
        %1196 = vmatpush1.bf16.msra.mxu0 0
        %1197 = vmatprep.subr.bf16.mxu0 0
        %1198 = vmatpush1.bf16.msra.mxu0 0
        %1199 = vmatprep.subr.bf16.mxu0 0
        %1200 = vmatpush1.bf16.msra.mxu0 0
        %1201 = vmatprep.subr.bf16.mxu0 0
        %1202 = vmatpush1.bf16.msra.mxu0 0
        %1203 = vmatprep.subr.bf16.mxu0 0
        %1204 = vmatpush1.bf16.msra.mxu0 0
        %1205 = vmatprep.subr.bf16.mxu0 0
        %1206 = vmatpush1.bf16.msra.mxu0 0
        %1207 = vmatprep.mubr.bf16.mxu0 0
        %1208 = vmatmul.mubr.bf16.gmra.mrb[0].mxu0 %v861
        %v1209 = vpop.f32.mrb[0].mxu0
        %v1210 = vadd.f32 0.0, %v1209
        %v1211 = vpop.f32.mrb[0].mxu0
        %v1212 = vpop.f32.mrb[0].mxu0
        %v1213 = vadd.f32 0.0, %v1212
        %v1214 = vpop.f32.mrb[0].mxu0
        %1215 = vmatprep.mubr.bf16.mxu0 0
        %1216 = vmatmul.mubr.bf16.gmra.mrb[0].mxu0 %v862
        %v1217 = vpop.f32.mrb[0].mxu0
        %v1218 = vadd.f32 0.0, %v1217
        %v1219 = vpop.f32.mrb[0].mxu0
        %v1220 = vpop.f32.mrb[0].mxu0
        %v1221 = vpop.f32.mrb[0].mxu0
        %1222 = vdwg.mxu0
        %v1223 = vld [vmem:[%s746] sm:$0xff]
        %v1224 = vld [vmem:[%s746 + $0x8] sm:$0xff]
        %v1225 = vld [vmem:[%s746 + $0x10] sm:$0xf]
        %v1226 = vld [vmem:[%s746 + $0x14] sm:$0xff]
        %v1227 = vld [vmem:[%s746 + $0x1c] sm:$0xff]
        %v1228 = vld [vmem:[%s746 + $0x24] sm:$0xf]
        %v1229 = vld [vmem:[%s746 + $0x28] sm:$0xff]
        %v1230 = vld [vmem:[%s746 + $0x30] sm:$0xff]
        %v1231 = vld [vmem:[%s746 + $0x38] sm:$0xf]
        %v1232 = vld [vmem:[%s746 + $0x3c] sm:$0xff]
        %v1233 = vld [vmem:[%s746 + $0x44] sm:$0xff]
        %v1234 = vld [vmem:[%s746 + $0x4c] sm:$0xf]
        %v1235 = vld [vmem:[%s746 + $0x50] sm:$0xff]
        %v1236 = vld [vmem:[%s746 + $0x58] sm:$0xff]
        %v1237 = vld [vmem:[%s746 + $0x60] sm:$0xf]
        %v1238 = vld [vmem:[%s746 + $0x64] sm:$0xff]
        %v1239 = vld [vmem:[%s746 + $0x6c] sm:$0xff]
        %v1240 = vld [vmem:[%s746 + $0x74] sm:$0xf]
        %v1241 = vld [vmem:[%s746 + $0x78] sm:$0xff]
        %v1242 = vld [vmem:[%s746 + $0x80] sm:$0xff]
        %v1243 = vld [vmem:[%s746 + $0x88] sm:$0xf]
        %v1244 = vld [vmem:[%s746 + $0x8c] sm:$0xff]
        %v1245 = vld [vmem:[%s746 + $0x94] sm:$0xff]
        %v1246 = vld [vmem:[%s746 + $0x9c] sm:$0xf]
        %v1247 = vld [vmem:[%s746 + $0xa0] sm:$0xff]
        %v1248 = vld [vmem:[%s746 + $0xa8] sm:$0xff]
        %v1249 = vld [vmem:[%s746 + $0xb0] sm:$0xf]
        %v1250 = vld [vmem:[%s746 + $0xb4] sm:$0xff]
        %v1251 = vld [vmem:[%s746 + $0xbc] sm:$0xff]
        %v1252 = vld [vmem:[%s746 + $0xc4] sm:$0xf]
        %v1253 = vld [vmem:[%s746 + $0xc8] sm:$0xff]
        %v1254 = vld [vmem:[%s746 + $0xd0] sm:$0xff]
        %v1255 = vld [vmem:[%s746 + $0xd8] sm:$0xf]
        %v1256 = vld [vmem:[%s746 + $0xdc] sm:$0xff]
        %v1257 = vld [vmem:[%s746 + $0xe4] sm:$0xff]
        %v1258 = vld [vmem:[%s746 + $0xec] sm:$0xf]
        %v1259 = vld [vmem:[%s746 + $0xf0] sm:$0xff]
        %v1260 = vld [vmem:[%s746 + $0xf8] sm:$0xff]
        %v1261 = vld [vmem:[%s746 + $0x100] sm:$0xf]
        %v1262 = vld [vmem:[%s746 + $0x104] sm:$0xff]
        %v1263 = vld [vmem:[%s746 + $0x10c] sm:$0xff]
        %v1264 = vld [vmem:[%s746 + $0x114] sm:$0xf]
        %v1265 = vld [vmem:[%s746 + $0x118] sm:$0xff]
        %v1266 = vld [vmem:[%s746 + $0x120] sm:$0xff]
        %v1267 = vld [vmem:[%s746 + $0x128] sm:$0xf]
        %v1268 = vld [vmem:[%s746 + $0x12c] sm:$0xff]
        %v1269 = vld [vmem:[%s746 + $0x134] sm:$0xff]
        %v1270 = vld [vmem:[%s746 + $0x13c] sm:$0xf]
        %v1319 = vunpack.c.l.b16 %v1223
        %v1320 = vunpack.c.h.b16 %v1223
        %v1321 = vunpack.c.l.b16 %v1224
        %v1322 = vunpack.c.h.b16 %v1224
        %v1323 = vunpack.c.l.b16 %v1225
        %v1324 = vunpack.c.l.b16 %v1226
        %v1325 = vunpack.c.h.b16 %v1226
        %v1326 = vunpack.c.l.b16 %v1227
        %v1327 = vunpack.c.h.b16 %v1227
        %v1328 = vunpack.c.l.b16 %v1228
        %v1329 = vunpack.c.l.b16 %v1229
        %v1330 = vunpack.c.h.b16 %v1229
        %v1331 = vunpack.c.l.b16 %v1230
        %v1332 = vunpack.c.h.b16 %v1230
        %v1333 = vunpack.c.l.b16 %v1231
        %v1334 = vunpack.c.l.b16 %v1232
        %v1335 = vunpack.c.h.b16 %v1232
        %v1336 = vunpack.c.l.b16 %v1233
        %v1337 = vunpack.c.h.b16 %v1233
        %v1338 = vunpack.c.l.b16 %v1234
        %v1339 = vunpack.c.l.b16 %v1235
        %v1340 = vunpack.c.h.b16 %v1235
        %v1341 = vunpack.c.l.b16 %v1236
        %v1342 = vunpack.c.h.b16 %v1236
        %v1343 = vunpack.c.l.b16 %v1237
        %v1344 = vunpack.c.l.b16 %v1238
        %v1345 = vunpack.c.h.b16 %v1238
        %v1346 = vunpack.c.l.b16 %v1239
        %v1347 = vunpack.c.h.b16 %v1239
        %v1348 = vunpack.c.l.b16 %v1240
        %v1349 = vunpack.c.l.b16 %v1241
        %v1350 = vunpack.c.h.b16 %v1241
        %v1351 = vunpack.c.l.b16 %v1242
        %v1352 = vunpack.c.h.b16 %v1242
        %v1353 = vunpack.c.l.b16 %v1243
        %v1354 = vunpack.c.l.b16 %v1244
        %v1355 = vunpack.c.h.b16 %v1244
        %v1356 = vunpack.c.l.b16 %v1245
        %v1357 = vunpack.c.h.b16 %v1245
        %v1358 = vunpack.c.l.b16 %v1246
        %v1359 = vunpack.c.l.b16 %v1247
        %v1360 = vunpack.c.h.b16 %v1247
        %v1361 = vunpack.c.l.b16 %v1248
        %v1362 = vunpack.c.h.b16 %v1248
        %v1363 = vunpack.c.l.b16 %v1249
        %v1364 = vunpack.c.l.b16 %v1250
        %v1365 = vunpack.c.h.b16 %v1250
        %v1366 = vunpack.c.l.b16 %v1251
        %v1367 = vunpack.c.h.b16 %v1251
        %v1368 = vunpack.c.l.b16 %v1252
        %v1369 = vunpack.c.l.b16 %v1253
        %v1370 = vunpack.c.h.b16 %v1253
        %v1371 = vunpack.c.l.b16 %v1254
        %v1372 = vunpack.c.h.b16 %v1254
        %v1373 = vunpack.c.l.b16 %v1255
        %v1374 = vunpack.c.l.b16 %v1256
        %v1375 = vunpack.c.h.b16 %v1256
        %v1376 = vunpack.c.l.b16 %v1257
        %v1377 = vunpack.c.h.b16 %v1257
        %v1378 = vunpack.c.l.b16 %v1258
        %v1379 = vunpack.c.l.b16 %v1259
        %v1380 = vunpack.c.h.b16 %v1259
        %v1381 = vunpack.c.l.b16 %v1260
        %v1382 = vunpack.c.h.b16 %v1260
        %v1383 = vunpack.c.l.b16 %v1261
        %v1384 = vunpack.c.l.b16 %v1262
        %v1385 = vunpack.c.h.b16 %v1262
        %v1386 = vunpack.c.l.b16 %v1263
        %v1387 = vunpack.c.h.b16 %v1263
        %v1388 = vunpack.c.l.b16 %v1264
        %v1389 = vunpack.c.l.b16 %v1265
        %v1390 = vunpack.c.h.b16 %v1265
        %v1391 = vunpack.c.l.b16 %v1266
        %v1392 = vunpack.c.h.b16 %v1266
        %v1393 = vunpack.c.l.b16 %v1267
        %v1394 = vunpack.c.l.b16 %v1268
        %v1395 = vunpack.c.h.b16 %v1268
        %v1396 = vunpack.c.l.b16 %v1269
        %v1397 = vunpack.c.h.b16 %v1269
        %v1398 = vunpack.c.l.b16 %v1270
        %v1399 = vpack.c.b16 %v1324, %v1319
        %v1400 = vpack.c.b16 %v1325, %v1320
        %v1401 = vpack.c.b16 %v1326, %v1321
        %v1402 = vpack.c.b16 %v1327, %v1322
        %v1403 = vpack.c.b16 %v1328, %v1323
        %v1404 = vpack.c.b16 %v1334, %v1329
        %v1405 = vpack.c.b16 %v1335, %v1330
        %v1406 = vpack.c.b16 %v1336, %v1331
        %v1407 = vpack.c.b16 %v1337, %v1332
        %v1408 = vpack.c.b16 %v1338, %v1333
        %v1409 = vpack.c.b16 %v1344, %v1339
        %v1410 = vpack.c.b16 %v1345, %v1340
        %v1411 = vpack.c.b16 %v1346, %v1341
        %v1412 = vpack.c.b16 %v1347, %v1342
        %v1413 = vpack.c.b16 %v1348, %v1343
        %v1414 = vpack.c.b16 %v1354, %v1349
        %v1415 = vpack.c.b16 %v1355, %v1350
        %v1416 = vpack.c.b16 %v1356, %v1351
        %v1417 = vpack.c.b16 %v1357, %v1352
        %v1418 = vpack.c.b16 %v1358, %v1353
        %v1419 = vpack.c.b16 %v1364, %v1359
        %v1420 = vpack.c.b16 %v1365, %v1360
        %v1421 = vpack.c.b16 %v1366, %v1361
        %v1422 = vpack.c.b16 %v1367, %v1362
        %v1423 = vpack.c.b16 %v1368, %v1363
        %v1424 = vpack.c.b16 %v1374, %v1369
        %v1425 = vpack.c.b16 %v1375, %v1370
        %v1426 = vpack.c.b16 %v1376, %v1371
        %v1427 = vpack.c.b16 %v1377, %v1372
        %v1428 = vpack.c.b16 %v1378, %v1373
        %v1429 = vpack.c.b16 %v1384, %v1379
        %v1430 = vpack.c.b16 %v1385, %v1380
        %v1431 = vpack.c.b16 %v1386, %v1381
        %v1432 = vpack.c.b16 %v1387, %v1382
        %v1433 = vpack.c.b16 %v1388, %v1383
        %v1434 = vpack.c.b16 %v1394, %v1389
        %v1435 = vpack.c.b16 %v1395, %v1390
        %v1436 = vpack.c.b16 %v1396, %v1391
        %v1437 = vpack.c.b16 %v1397, %v1392
        %v1438 = vpack.c.b16 %v1398, %v1393
        %1479 = vmatprep.subr.bf16.mxu0 %v1400
        %1480 = vmatpush1.bf16.msra.mxu0 %v1399
        %1481 = vmatprep.subr.bf16.mxu0 %v1405
        %1482 = vmatpush1.bf16.msra.mxu0 %v1404
        %1483 = vmatprep.subr.bf16.mxu0 %v1410
        %1484 = vmatpush1.bf16.msra.mxu0 %v1409
        %1485 = vmatprep.subr.bf16.mxu0 %v1415
        %1486 = vmatpush1.bf16.msra.mxu0 %v1414
        %1487 = vmatprep.subr.bf16.mxu0 %v1420
        %1488 = vmatpush1.bf16.msra.mxu0 %v1419
        %1489 = vmatprep.subr.bf16.mxu0 %v1425
        %1490 = vmatpush1.bf16.msra.mxu0 %v1424
        %1491 = vmatprep.subr.bf16.mxu0 %v1430
        %1492 = vmatpush1.bf16.msra.mxu0 %v1429
        %1493 = vmatprep.subr.bf16.mxu0 %v1435
        %1494 = vmatpush1.bf16.msra.mxu0 %v1434
        %1495 = vmatprep.subr.bf16.mxu0 0
        %1496 = vmatpush1.bf16.msra.mxu0 0
        %1497 = vmatprep.subr.bf16.mxu0 0
        %1498 = vmatpush1.bf16.msra.mxu0 0
        %1499 = vmatprep.subr.bf16.mxu0 0
        %1500 = vmatpush1.bf16.msra.mxu0 0
        %1501 = vmatprep.subr.bf16.mxu0 0
        %1502 = vmatpush1.bf16.msra.mxu0 0
        %1503 = vmatprep.subr.bf16.mxu0 0
        %1504 = vmatpush1.bf16.msra.mxu0 0
        %1505 = vmatprep.subr.bf16.mxu0 0
        %1506 = vmatpush1.bf16.msra.mxu0 0
        %1507 = vmatprep.subr.bf16.mxu0 0
        %1508 = vmatpush1.bf16.msra.mxu0 0
        %1509 = vmatprep.subr.bf16.mxu0 0
        %1510 = vmatpush1.bf16.msra.mxu0 0
        %1511 = vmatprep.mubr.bf16.mxu0 0
        %1512 = vmatmul.mubr.bf16.gmra.mrb[0].mxu0 %v861
        %v1513 = vpop.f32.mrb[0].mxu0
        %v1514 = vadd.f32 0.0, %v1513
        %v1515 = vpop.f32.mrb[0].mxu0
        %v1516 = vadd.f32 0.0, %v1515
        %v1517 = vpop.f32.mrb[0].mxu0
        %v1518 = vadd.f32 0.0, %v1517
        %v1519 = vpop.f32.mrb[0].mxu0
        %v1520 = vadd.f32 0.0, %v1519
        %1521 = vmatprep.mubr.bf16.mxu0 0
        %1522 = vmatmul.mubr.bf16.gmra.mrb[0].mxu0 %v862
        %v1523 = vpop.f32.mrb[0].mxu0
        %v1524 = vadd.f32 0.0, %v1523
        %v1525 = vpop.f32.mrb[0].mxu0
        %v1526 = vadd.f32 0.0, %v1525
        %v1527 = vpop.f32.mrb[0].mxu0
        %v1528 = vpop.f32.mrb[0].mxu0
        %1529 = vdwg.mxu0
        %1530 = vmatprep.subr.bf16.mxu0 %v1402
        %1531 = vmatpush1.bf16.msra.mxu0 %v1401
        %1532 = vmatprep.subr.bf16.mxu0 %v1407
        %1533 = vmatpush1.bf16.msra.mxu0 %v1406
        %1534 = vmatprep.subr.bf16.mxu0 %v1412
        %1535 = vmatpush1.bf16.msra.mxu0 %v1411
        %1536 = vmatprep.subr.bf16.mxu0 %v1417
        %1537 = vmatpush1.bf16.msra.mxu0 %v1416
        %1538 = vmatprep.subr.bf16.mxu0 %v1422
        %1539 = vmatpush1.bf16.msra.mxu0 %v1421
        %1540 = vmatprep.subr.bf16.mxu0 %v1427
        %1541 = vmatpush1.bf16.msra.mxu0 %v1426
        %1542 = vmatprep.subr.bf16.mxu0 %v1432
        %1543 = vmatpush1.bf16.msra.mxu0 %v1431
        %1544 = vmatprep.subr.bf16.mxu0 %v1437
        %1545 = vmatpush1.bf16.msra.mxu0 %v1436
        %1546 = vmatprep.subr.bf16.mxu0 0
        %1547 = vmatpush1.bf16.msra.mxu0 0
        %1548 = vmatprep.subr.bf16.mxu0 0
        %1549 = vmatpush1.bf16.msra.mxu0 0
        %1550 = vmatprep.subr.bf16.mxu0 0
        %1551 = vmatpush1.bf16.msra.mxu0 0
        %1552 = vmatprep.subr.bf16.mxu0 0
        %1553 = vmatpush1.bf16.msra.mxu0 0
        %1554 = vmatprep.subr.bf16.mxu0 0
        %1555 = vmatpush1.bf16.msra.mxu0 0
        %1556 = vmatprep.subr.bf16.mxu0 0
        %1557 = vmatpush1.bf16.msra.mxu0 0
        %1558 = vmatprep.subr.bf16.mxu0 0
        %1559 = vmatpush1.bf16.msra.mxu0 0
        %1560 = vmatprep.subr.bf16.mxu0 0
        %1561 = vmatpush1.bf16.msra.mxu0 0
        %1562 = vmatprep.mubr.bf16.mxu0 0
        %1563 = vmatmul.mubr.bf16.gmra.mrb[0].mxu0 %v861
        %v1564 = vpop.f32.mrb[0].mxu0
        %v1565 = vadd.f32 0.0, %v1564
        %v1566 = vpop.f32.mrb[0].mxu0
        %v1567 = vadd.f32 0.0, %v1566
        %v1568 = vpop.f32.mrb[0].mxu0
        %v1569 = vadd.f32 0.0, %v1568
        %v1570 = vpop.f32.mrb[0].mxu0
        %v1571 = vadd.f32 0.0, %v1570
        %1572 = vmatprep.mubr.bf16.mxu0 0
        %1573 = vmatmul.mubr.bf16.gmra.mrb[0].mxu0 %v862
        %v1574 = vpop.f32.mrb[0].mxu0
        %v1575 = vadd.f32 0.0, %v1574
        %v1576 = vpop.f32.mrb[0].mxu0
        %v1577 = vadd.f32 0.0, %v1576
        %v1578 = vpop.f32.mrb[0].mxu0
        %v1579 = vpop.f32.mrb[0].mxu0
        %1580 = vdwg.mxu0
        %1581 = vmatprep.subr.bf16.mxu0 0
        %1582 = vmatpush1.bf16.msra.mxu0 %v1403
        %1583 = vmatprep.subr.bf16.mxu0 0
        %1584 = vmatpush1.bf16.msra.mxu0 %v1408
        %1585 = vmatprep.subr.bf16.mxu0 0
        %1586 = vmatpush1.bf16.msra.mxu0 %v1413
        %1587 = vmatprep.subr.bf16.mxu0 0
        %1588 = vmatpush1.bf16.msra.mxu0 %v1418
        %1589 = vmatprep.subr.bf16.mxu0 0
        %1590 = vmatpush1.bf16.msra.mxu0 %v1423
        %1591 = vmatprep.subr.bf16.mxu0 0
        %1592 = vmatpush1.bf16.msra.mxu0 %v1428
        %1593 = vmatprep.subr.bf16.mxu0 0
        %1594 = vmatpush1.bf16.msra.mxu0 %v1433
        %1595 = vmatprep.subr.bf16.mxu0 0
        %1596 = vmatpush1.bf16.msra.mxu0 %v1438
        %1597 = vmatprep.subr.bf16.mxu0 0
        %1598 = vmatpush1.bf16.msra.mxu0 0
        %1599 = vmatprep.subr.bf16.mxu0 0
        %1600 = vmatpush1.bf16.msra.mxu0 0
        %1601 = vmatprep.subr.bf16.mxu0 0
        %1602 = vmatpush1.bf16.msra.mxu0 0
        %1603 = vmatprep.subr.bf16.mxu0 0
        %1604 = vmatpush1.bf16.msra.mxu0 0
        %1605 = vmatprep.subr.bf16.mxu0 0
        %1606 = vmatpush1.bf16.msra.mxu0 0
        %1607 = vmatprep.subr.bf16.mxu0 0
        %1608 = vmatpush1.bf16.msra.mxu0 0
        %1609 = vmatprep.subr.bf16.mxu0 0
        %1610 = vmatpush1.bf16.msra.mxu0 0
        %1611 = vmatprep.subr.bf16.mxu0 0
        %1612 = vmatpush1.bf16.msra.mxu0 0
        %1613 = vmatprep.mubr.bf16.mxu0 0
        %1614 = vmatmul.mubr.bf16.gmra.mrb[0].mxu0 %v861
        %v1615 = vpop.f32.mrb[0].mxu0
        %v1616 = vadd.f32 0.0, %v1615
        %v1617 = vpop.f32.mrb[0].mxu0
        %v1618 = vpop.f32.mrb[0].mxu0
        %v1619 = vadd.f32 0.0, %v1618
        %v1620 = vpop.f32.mrb[0].mxu0
        %1621 = vmatprep.mubr.bf16.mxu0 0
        %1622 = vmatmul.mubr.bf16.gmra.mrb[0].mxu0 %v862
        %v1623 = vpop.f32.mrb[0].mxu0
        %v1624 = vadd.f32 0.0, %v1623
        %v1625 = vpop.f32.mrb[0].mxu0
        %v1626 = vpop.f32.mrb[0].mxu0
        %v1627 = vpop.f32.mrb[0].mxu0
        %1628 = vdwg.mxu0
        %v1629 = vld [vmem:[%s753] sm:$0xff]
        %v1630 = vld [vmem:[%s753 + $0x8] sm:$0xff]
        %v1631 = vld [vmem:[%s753 + $0x10] sm:$0xf]
        %v1632 = vld [vmem:[%s753 + $0x14] sm:$0xff]
        %v1633 = vld [vmem:[%s753 + $0x1c] sm:$0xff]
        %v1634 = vld [vmem:[%s753 + $0x24] sm:$0xf]
        %v1635 = vld [vmem:[%s753 + $0x28] sm:$0xff]
        %v1636 = vld [vmem:[%s753 + $0x30] sm:$0xff]
        %v1637 = vld [vmem:[%s753 + $0x38] sm:$0xf]
        %v1638 = vld [vmem:[%s753 + $0x3c] sm:$0xff]
        %v1639 = vld [vmem:[%s753 + $0x44] sm:$0xff]
        %v1640 = vld [vmem:[%s753 + $0x4c] sm:$0xf]
        %v1641 = vld [vmem:[%s753 + $0x50] sm:$0xff]
        %v1642 = vld [vmem:[%s753 + $0x58] sm:$0xff]
        %v1643 = vld [vmem:[%s753 + $0x60] sm:$0xf]
        %v1644 = vld [vmem:[%s753 + $0x64] sm:$0xff]
        %v1645 = vld [vmem:[%s753 + $0x6c] sm:$0xff]
        %v1646 = vld [vmem:[%s753 + $0x74] sm:$0xf]
        %v1647 = vld [vmem:[%s753 + $0x78] sm:$0xff]
        %v1648 = vld [vmem:[%s753 + $0x80] sm:$0xff]
        %v1649 = vld [vmem:[%s753 + $0x88] sm:$0xf]
        %v1650 = vld [vmem:[%s753 + $0x8c] sm:$0xff]
        %v1651 = vld [vmem:[%s753 + $0x94] sm:$0xff]
        %v1652 = vld [vmem:[%s753 + $0x9c] sm:$0xf]
        %v1653 = vld [vmem:[%s753 + $0xa0] sm:$0xff]
        %v1654 = vld [vmem:[%s753 + $0xa8] sm:$0xff]
        %v1655 = vld [vmem:[%s753 + $0xb0] sm:$0xf]
        %v1656 = vld [vmem:[%s753 + $0xb4] sm:$0xff]
        %v1657 = vld [vmem:[%s753 + $0xbc] sm:$0xff]
        %v1658 = vld [vmem:[%s753 + $0xc4] sm:$0xf]
        %v1659 = vld [vmem:[%s753 + $0xc8] sm:$0xff]
        %v1660 = vld [vmem:[%s753 + $0xd0] sm:$0xff]
        %v1661 = vld [vmem:[%s753 + $0xd8] sm:$0xf]
        %v1662 = vld [vmem:[%s753 + $0xdc] sm:$0xff]
        %v1663 = vld [vmem:[%s753 + $0xe4] sm:$0xff]
        %v1664 = vld [vmem:[%s753 + $0xec] sm:$0xf]
        %v1665 = vld [vmem:[%s753 + $0xf0] sm:$0xff]
        %v1666 = vld [vmem:[%s753 + $0xf8] sm:$0xff]
        %v1667 = vld [vmem:[%s753 + $0x100] sm:$0xf]
        %v1668 = vld [vmem:[%s753 + $0x104] sm:$0xff]
        %v1669 = vld [vmem:[%s753 + $0x10c] sm:$0xff]
        %v1670 = vld [vmem:[%s753 + $0x114] sm:$0xf]
        %v1671 = vld [vmem:[%s753 + $0x118] sm:$0xff]
        %v1672 = vld [vmem:[%s753 + $0x120] sm:$0xff]
        %v1673 = vld [vmem:[%s753 + $0x128] sm:$0xf]
        %v1674 = vld [vmem:[%s753 + $0x12c] sm:$0xff]
        %v1675 = vld [vmem:[%s753 + $0x134] sm:$0xff]
        %v1676 = vld [vmem:[%s753 + $0x13c] sm:$0xf]
        %v1725 = vunpack.c.l.b16 %v1629
        %v1726 = vunpack.c.h.b16 %v1629
        %v1727 = vunpack.c.l.b16 %v1630
        %v1728 = vunpack.c.h.b16 %v1630
        %v1729 = vunpack.c.l.b16 %v1631
        %v1730 = vunpack.c.l.b16 %v1632
        %v1731 = vunpack.c.h.b16 %v1632
        %v1732 = vunpack.c.l.b16 %v1633
        %v1733 = vunpack.c.h.b16 %v1633
        %v1734 = vunpack.c.l.b16 %v1634
        %v1735 = vunpack.c.l.b16 %v1635
        %v1736 = vunpack.c.h.b16 %v1635
        %v1737 = vunpack.c.l.b16 %v1636
        %v1738 = vunpack.c.h.b16 %v1636
        %v1739 = vunpack.c.l.b16 %v1637
        %v1740 = vunpack.c.l.b16 %v1638
        %v1741 = vunpack.c.h.b16 %v1638
        %v1742 = vunpack.c.l.b16 %v1639
        %v1743 = vunpack.c.h.b16 %v1639
        %v1744 = vunpack.c.l.b16 %v1640
        %v1745 = vunpack.c.l.b16 %v1641
        %v1746 = vunpack.c.h.b16 %v1641
        %v1747 = vunpack.c.l.b16 %v1642
        %v1748 = vunpack.c.h.b16 %v1642
        %v1749 = vunpack.c.l.b16 %v1643
        %v1750 = vunpack.c.l.b16 %v1644
        %v1751 = vunpack.c.h.b16 %v1644
        %v1752 = vunpack.c.l.b16 %v1645
        %v1753 = vunpack.c.h.b16 %v1645
        %v1754 = vunpack.c.l.b16 %v1646
        %v1755 = vunpack.c.l.b16 %v1647
        %v1756 = vunpack.c.h.b16 %v1647
        %v1757 = vunpack.c.l.b16 %v1648
        %v1758 = vunpack.c.h.b16 %v1648
        %v1759 = vunpack.c.l.b16 %v1649
        %v1760 = vunpack.c.l.b16 %v1650
        %v1761 = vunpack.c.h.b16 %v1650
        %v1762 = vunpack.c.l.b16 %v1651
        %v1763 = vunpack.c.h.b16 %v1651
        %v1764 = vunpack.c.l.b16 %v1652
        %v1765 = vunpack.c.l.b16 %v1653
        %v1766 = vunpack.c.h.b16 %v1653
        %v1767 = vunpack.c.l.b16 %v1654
        %v1768 = vunpack.c.h.b16 %v1654
        %v1769 = vunpack.c.l.b16 %v1655
        %v1770 = vunpack.c.l.b16 %v1656
        %v1771 = vunpack.c.h.b16 %v1656
        %v1772 = vunpack.c.l.b16 %v1657
        %v1773 = vunpack.c.h.b16 %v1657
        %v1774 = vunpack.c.l.b16 %v1658
        %v1775 = vunpack.c.l.b16 %v1659
        %v1776 = vunpack.c.h.b16 %v1659
        %v1777 = vunpack.c.l.b16 %v1660
        %v1778 = vunpack.c.h.b16 %v1660
        %v1779 = vunpack.c.l.b16 %v1661
        %v1780 = vunpack.c.l.b16 %v1662
        %v1781 = vunpack.c.h.b16 %v1662
        %v1782 = vunpack.c.l.b16 %v1663
        %v1783 = vunpack.c.h.b16 %v1663
        %v1784 = vunpack.c.l.b16 %v1664
        %v1785 = vunpack.c.l.b16 %v1665
        %v1786 = vunpack.c.h.b16 %v1665
        %v1787 = vunpack.c.l.b16 %v1666
        %v1788 = vunpack.c.h.b16 %v1666
        %v1789 = vunpack.c.l.b16 %v1667
        %v1790 = vunpack.c.l.b16 %v1668
        %v1791 = vunpack.c.h.b16 %v1668
        %v1792 = vunpack.c.l.b16 %v1669
        %v1793 = vunpack.c.h.b16 %v1669
        %v1794 = vunpack.c.l.b16 %v1670
        %v1795 = vunpack.c.l.b16 %v1671
        %v1796 = vunpack.c.h.b16 %v1671
        %v1797 = vunpack.c.l.b16 %v1672
        %v1798 = vunpack.c.h.b16 %v1672
        %v1799 = vunpack.c.l.b16 %v1673
        %v1800 = vunpack.c.l.b16 %v1674
        %v1801 = vunpack.c.h.b16 %v1674
        %v1802 = vunpack.c.l.b16 %v1675
        %v1803 = vunpack.c.h.b16 %v1675
        %v1804 = vunpack.c.l.b16 %v1676
        %v1805 = vpack.c.b16 %v1730, %v1725
        %v1806 = vpack.c.b16 %v1731, %v1726
        %v1807 = vpack.c.b16 %v1732, %v1727
        %v1808 = vpack.c.b16 %v1733, %v1728
        %v1809 = vpack.c.b16 %v1734, %v1729
        %v1810 = vpack.c.b16 %v1740, %v1735
        %v1811 = vpack.c.b16 %v1741, %v1736
        %v1812 = vpack.c.b16 %v1742, %v1737
        %v1813 = vpack.c.b16 %v1743, %v1738
        %v1814 = vpack.c.b16 %v1744, %v1739
        %v1815 = vpack.c.b16 %v1750, %v1745
        %v1816 = vpack.c.b16 %v1751, %v1746
        %v1817 = vpack.c.b16 %v1752, %v1747
        %v1818 = vpack.c.b16 %v1753, %v1748
        %v1819 = vpack.c.b16 %v1754, %v1749
        %v1820 = vpack.c.b16 %v1760, %v1755
        %v1821 = vpack.c.b16 %v1761, %v1756
        %v1822 = vpack.c.b16 %v1762, %v1757
        %v1823 = vpack.c.b16 %v1763, %v1758
        %v1824 = vpack.c.b16 %v1764, %v1759
        %v1825 = vpack.c.b16 %v1770, %v1765
        %v1826 = vpack.c.b16 %v1771, %v1766
        %v1827 = vpack.c.b16 %v1772, %v1767
        %v1828 = vpack.c.b16 %v1773, %v1768
        %v1829 = vpack.c.b16 %v1774, %v1769
        %v1830 = vpack.c.b16 %v1780, %v1775
        %v1831 = vpack.c.b16 %v1781, %v1776
        %v1832 = vpack.c.b16 %v1782, %v1777
        %v1833 = vpack.c.b16 %v1783, %v1778
        %v1834 = vpack.c.b16 %v1784, %v1779
        %v1835 = vpack.c.b16 %v1790, %v1785
        %v1836 = vpack.c.b16 %v1791, %v1786
        %v1837 = vpack.c.b16 %v1792, %v1787
        %v1838 = vpack.c.b16 %v1793, %v1788
        %v1839 = vpack.c.b16 %v1794, %v1789
        %v1840 = vpack.c.b16 %v1800, %v1795
        %v1841 = vpack.c.b16 %v1801, %v1796
        %v1842 = vpack.c.b16 %v1802, %v1797
        %v1843 = vpack.c.b16 %v1803, %v1798
        %v1844 = vpack.c.b16 %v1804, %v1799
        %1885 = vmatprep.subr.bf16.mxu0 %v1806
        %1886 = vmatpush1.bf16.msra.mxu0 %v1805
        %1887 = vmatprep.subr.bf16.mxu0 %v1811
        %1888 = vmatpush1.bf16.msra.mxu0 %v1810
        %1889 = vmatprep.subr.bf16.mxu0 %v1816
        %1890 = vmatpush1.bf16.msra.mxu0 %v1815
        %1891 = vmatprep.subr.bf16.mxu0 %v1821
        %1892 = vmatpush1.bf16.msra.mxu0 %v1820
        %1893 = vmatprep.subr.bf16.mxu0 %v1826
        %1894 = vmatpush1.bf16.msra.mxu0 %v1825
        %1895 = vmatprep.subr.bf16.mxu0 %v1831
        %1896 = vmatpush1.bf16.msra.mxu0 %v1830
        %1897 = vmatprep.subr.bf16.mxu0 %v1836
        %1898 = vmatpush1.bf16.msra.mxu0 %v1835
        %1899 = vmatprep.subr.bf16.mxu0 %v1841
        %1900 = vmatpush1.bf16.msra.mxu0 %v1840
        %1901 = vmatprep.subr.bf16.mxu0 0
        %1902 = vmatpush1.bf16.msra.mxu0 0
        %1903 = vmatprep.subr.bf16.mxu0 0
        %1904 = vmatpush1.bf16.msra.mxu0 0
        %1905 = vmatprep.subr.bf16.mxu0 0
        %1906 = vmatpush1.bf16.msra.mxu0 0
        %1907 = vmatprep.subr.bf16.mxu0 0
        %1908 = vmatpush1.bf16.msra.mxu0 0
        %1909 = vmatprep.subr.bf16.mxu0 0
        %1910 = vmatpush1.bf16.msra.mxu0 0
        %1911 = vmatprep.subr.bf16.mxu0 0
        %1912 = vmatpush1.bf16.msra.mxu0 0
        %1913 = vmatprep.subr.bf16.mxu0 0
        %1914 = vmatpush1.bf16.msra.mxu0 0
        %1915 = vmatprep.subr.bf16.mxu0 0
        %1916 = vmatpush1.bf16.msra.mxu0 0
        %1917 = vmatprep.mubr.bf16.mxu0 0
        %1918 = vmatmul.mubr.bf16.gmra.mrb[0].mxu0 %v861
        %v1919 = vpop.f32.mrb[0].mxu0
        %v1920 = vadd.f32 0.0, %v1919
        %v1921 = vpop.f32.mrb[0].mxu0
        %v1922 = vadd.f32 0.0, %v1921
        %v1923 = vpop.f32.mrb[0].mxu0
        %v1924 = vadd.f32 0.0, %v1923
        %v1925 = vpop.f32.mrb[0].mxu0
        %v1926 = vadd.f32 0.0, %v1925
        %1927 = vmatprep.mubr.bf16.mxu0 0
        %1928 = vmatmul.mubr.bf16.gmra.mrb[0].mxu0 %v862
        %v1929 = vpop.f32.mrb[0].mxu0
        %v1930 = vadd.f32 0.0, %v1929
        %v1931 = vpop.f32.mrb[0].mxu0
        %v1932 = vadd.f32 0.0, %v1931
        %v1933 = vpop.f32.mrb[0].mxu0
        %v1934 = vpop.f32.mrb[0].mxu0
        %1935 = vdwg.mxu0
        %1936 = vmatprep.subr.bf16.mxu0 %v1808
        %1937 = vmatpush1.bf16.msra.mxu0 %v1807
        %1938 = vmatprep.subr.bf16.mxu0 %v1813
        %1939 = vmatpush1.bf16.msra.mxu0 %v1812
        %1940 = vmatprep.subr.bf16.mxu0 %v1818
        %1941 = vmatpush1.bf16.msra.mxu0 %v1817
        %1942 = vmatprep.subr.bf16.mxu0 %v1823
        %1943 = vmatpush1.bf16.msra.mxu0 %v1822
        %1944 = vmatprep.subr.bf16.mxu0 %v1828
        %1945 = vmatpush1.bf16.msra.mxu0 %v1827
        %1946 = vmatprep.subr.bf16.mxu0 %v1833
        %1947 = vmatpush1.bf16.msra.mxu0 %v1832
        %1948 = vmatprep.subr.bf16.mxu0 %v1838
        %1949 = vmatpush1.bf16.msra.mxu0 %v1837
        %1950 = vmatprep.subr.bf16.mxu0 %v1843
        %1951 = vmatpush1.bf16.msra.mxu0 %v1842
        %1952 = vmatprep.subr.bf16.mxu0 0
        %1953 = vmatpush1.bf16.msra.mxu0 0
        %1954 = vmatprep.subr.bf16.mxu0 0
        %1955 = vmatpush1.bf16.msra.mxu0 0
        %1956 = vmatprep.subr.bf16.mxu0 0
        %1957 = vmatpush1.bf16.msra.mxu0 0
        %1958 = vmatprep.subr.bf16.mxu0 0
        %1959 = vmatpush1.bf16.msra.mxu0 0
        %1960 = vmatprep.subr.bf16.mxu0 0
        %1961 = vmatpush1.bf16.msra.mxu0 0
        %1962 = vmatprep.subr.bf16.mxu0 0
        %1963 = vmatpush1.bf16.msra.mxu0 0
        %1964 = vmatprep.subr.bf16.mxu0 0
        %1965 = vmatpush1.bf16.msra.mxu0 0
        %1966 = vmatprep.subr.bf16.mxu0 0
        %1967 = vmatpush1.bf16.msra.mxu0 0
        %1968 = vmatprep.mubr.bf16.mxu0 0
        %1969 = vmatmul.mubr.bf16.gmra.mrb[0].mxu0 %v861
        %v1970 = vpop.f32.mrb[0].mxu0
        %v1971 = vadd.f32 0.0, %v1970
        %v1972 = vpop.f32.mrb[0].mxu0
        %v1973 = vadd.f32 0.0, %v1972
        %v1974 = vpop.f32.mrb[0].mxu0
        %v1975 = vadd.f32 0.0, %v1974
        %v1976 = vpop.f32.mrb[0].mxu0
        %v1977 = vadd.f32 0.0, %v1976
        %1978 = vmatprep.mubr.bf16.mxu0 0
        %1979 = vmatmul.mubr.bf16.gmra.mrb[0].mxu0 %v862
        %v1980 = vpop.f32.mrb[0].mxu0
        %v1981 = vadd.f32 0.0, %v1980
        %v1982 = vpop.f32.mrb[0].mxu0
        %v1983 = vadd.f32 0.0, %v1982
        %v1984 = vpop.f32.mrb[0].mxu0
        %v1985 = vpop.f32.mrb[0].mxu0
        %1986 = vdwg.mxu0
        %1987 = vmatprep.subr.bf16.mxu0 0
        %1988 = vmatpush1.bf16.msra.mxu0 %v1809
        %1989 = vmatprep.subr.bf16.mxu0 0
        %1990 = vmatpush1.bf16.msra.mxu0 %v1814
        %1991 = vmatprep.subr.bf16.mxu0 0
        %1992 = vmatpush1.bf16.msra.mxu0 %v1819
        %1993 = vmatprep.subr.bf16.mxu0 0
        %1994 = vmatpush1.bf16.msra.mxu0 %v1824
        %1995 = vmatprep.subr.bf16.mxu0 0
        %1996 = vmatpush1.bf16.msra.mxu0 %v1829
        %1997 = vmatprep.subr.bf16.mxu0 0
        %1998 = vmatpush1.bf16.msra.mxu0 %v1834
        %1999 = vmatprep.subr.bf16.mxu0 0
        %2000 = vmatpush1.bf16.msra.mxu0 %v1839
        %2001 = vmatprep.subr.bf16.mxu0 0
        %2002 = vmatpush1.bf16.msra.mxu0 %v1844
        %2003 = vmatprep.subr.bf16.mxu0 0
        %2004 = vmatpush1.bf16.msra.mxu0 0
        %2005 = vmatprep.subr.bf16.mxu0 0
        %2006 = vmatpush1.bf16.msra.mxu0 0
        %2007 = vmatprep.subr.bf16.mxu0 0
        %2008 = vmatpush1.bf16.msra.mxu0 0
        %2009 = vmatprep.subr.bf16.mxu0 0
        %2010 = vmatpush1.bf16.msra.mxu0 0
        %2011 = vmatprep.subr.bf16.mxu0 0
        %2012 = vmatpush1.bf16.msra.mxu0 0
        %2013 = vmatprep.subr.bf16.mxu0 0
        %2014 = vmatpush1.bf16.msra.mxu0 0
        %2015 = vmatprep.subr.bf16.mxu0 0
        %2016 = vmatpush1.bf16.msra.mxu0 0
        %2017 = vmatprep.subr.bf16.mxu0 0
        %2018 = vmatpush1.bf16.msra.mxu0 0
        %2019 = vmatprep.mubr.bf16.mxu0 0
        %2020 = vmatmul.mubr.bf16.gmra.mrb[0].mxu0 %v861
        %v2021 = vpop.f32.mrb[0].mxu0
        %v2022 = vadd.f32 0.0, %v2021
        %v2023 = vpop.f32.mrb[0].mxu0
        %v2024 = vpop.f32.mrb[0].mxu0
        %v2025 = vadd.f32 0.0, %v2024
        %v2026 = vpop.f32.mrb[0].mxu0
        %2027 = vmatprep.mubr.bf16.mxu0 0
        %2028 = vmatmul.mubr.bf16.gmra.mrb[0].mxu0 %v862
        %v2029 = vpop.f32.mrb[0].mxu0
        %v2030 = vadd.f32 0.0, %v2029
        %v2031 = vpop.f32.mrb[0].mxu0
        %v2032 = vpop.f32.mrb[0].mxu0
        %v2033 = vpop.f32.mrb[0].mxu0
        %2034 = vdwg.mxu0
        %v2035 = vld [vmem:[%s760] sm:$0xff]
        %v2036 = vld [vmem:[%s760 + $0x8] sm:$0xff]
        %v2037 = vld [vmem:[%s760 + $0x10] sm:$0xf]
        %v2038 = vld [vmem:[%s760 + $0x14] sm:$0xff]
        %v2039 = vld [vmem:[%s760 + $0x1c] sm:$0xff]
        %v2040 = vld [vmem:[%s760 + $0x24] sm:$0xf]
        %v2041 = vld [vmem:[%s760 + $0x28] sm:$0xff]
        %v2042 = vld [vmem:[%s760 + $0x30] sm:$0xff]
        %v2043 = vld [vmem:[%s760 + $0x38] sm:$0xf]
        %v2044 = vld [vmem:[%s760 + $0x3c] sm:$0xff]
        %v2045 = vld [vmem:[%s760 + $0x44] sm:$0xff]
        %v2046 = vld [vmem:[%s760 + $0x4c] sm:$0xf]
        %v2047 = vld [vmem:[%s760 + $0x50] sm:$0xff]
        %v2048 = vld [vmem:[%s760 + $0x58] sm:$0xff]
        %v2049 = vld [vmem:[%s760 + $0x60] sm:$0xf]
        %v2050 = vld [vmem:[%s760 + $0x64] sm:$0xff]
        %v2051 = vld [vmem:[%s760 + $0x6c] sm:$0xff]
        %v2052 = vld [vmem:[%s760 + $0x74] sm:$0xf]
        %v2053 = vld [vmem:[%s760 + $0x78] sm:$0xff]
        %v2054 = vld [vmem:[%s760 + $0x80] sm:$0xff]
        %v2055 = vld [vmem:[%s760 + $0x88] sm:$0xf]
        %v2056 = vld [vmem:[%s760 + $0x8c] sm:$0xff]
        %v2057 = vld [vmem:[%s760 + $0x94] sm:$0xff]
        %v2058 = vld [vmem:[%s760 + $0x9c] sm:$0xf]
        %v2059 = vld [vmem:[%s760 + $0xa0] sm:$0xff]
        %v2060 = vld [vmem:[%s760 + $0xa8] sm:$0xff]
        %v2061 = vld [vmem:[%s760 + $0xb0] sm:$0xf]
        %v2062 = vld [vmem:[%s760 + $0xb4] sm:$0xff]
        %v2063 = vld [vmem:[%s760 + $0xbc] sm:$0xff]
        %v2064 = vld [vmem:[%s760 + $0xc4] sm:$0xf]
        %v2065 = vld [vmem:[%s760 + $0xc8] sm:$0xff]
        %v2066 = vld [vmem:[%s760 + $0xd0] sm:$0xff]
        %v2067 = vld [vmem:[%s760 + $0xd8] sm:$0xf]
        %v2068 = vld [vmem:[%s760 + $0xdc] sm:$0xff]
        %v2069 = vld [vmem:[%s760 + $0xe4] sm:$0xff]
        %v2070 = vld [vmem:[%s760 + $0xec] sm:$0xf]
        %v2071 = vld [vmem:[%s760 + $0xf0] sm:$0xff]
        %v2072 = vld [vmem:[%s760 + $0xf8] sm:$0xff]
        %v2073 = vld [vmem:[%s760 + $0x100] sm:$0xf]
        %v2074 = vld [vmem:[%s760 + $0x104] sm:$0xff]
        %v2075 = vld [vmem:[%s760 + $0x10c] sm:$0xff]
        %v2076 = vld [vmem:[%s760 + $0x114] sm:$0xf]
        %v2077 = vld [vmem:[%s760 + $0x118] sm:$0xff]
        %v2078 = vld [vmem:[%s760 + $0x120] sm:$0xff]
        %v2079 = vld [vmem:[%s760 + $0x128] sm:$0xf]
        %v2080 = vld [vmem:[%s760 + $0x12c] sm:$0xff]
        %v2081 = vld [vmem:[%s760 + $0x134] sm:$0xff]
        %v2082 = vld [vmem:[%s760 + $0x13c] sm:$0xf]
        %v2131 = vunpack.c.l.b16 %v2035
        %v2132 = vunpack.c.h.b16 %v2035
        %v2133 = vunpack.c.l.b16 %v2036
        %v2134 = vunpack.c.h.b16 %v2036
        %v2135 = vunpack.c.l.b16 %v2037
        %v2136 = vunpack.c.l.b16 %v2038
        %v2137 = vunpack.c.h.b16 %v2038
        %v2138 = vunpack.c.l.b16 %v2039
        %v2139 = vunpack.c.h.b16 %v2039
        %v2140 = vunpack.c.l.b16 %v2040
        %v2141 = vunpack.c.l.b16 %v2041
        %v2142 = vunpack.c.h.b16 %v2041
        %v2143 = vunpack.c.l.b16 %v2042
        %v2144 = vunpack.c.h.b16 %v2042
        %v2145 = vunpack.c.l.b16 %v2043
        %v2146 = vunpack.c.l.b16 %v2044
        %v2147 = vunpack.c.h.b16 %v2044
        %v2148 = vunpack.c.l.b16 %v2045
        %v2149 = vunpack.c.h.b16 %v2045
        %v2150 = vunpack.c.l.b16 %v2046
        %v2151 = vunpack.c.l.b16 %v2047
        %v2152 = vunpack.c.h.b16 %v2047
        %v2153 = vunpack.c.l.b16 %v2048
        %v2154 = vunpack.c.h.b16 %v2048
        %v2155 = vunpack.c.l.b16 %v2049
        %v2156 = vunpack.c.l.b16 %v2050
        %v2157 = vunpack.c.h.b16 %v2050
        %v2158 = vunpack.c.l.b16 %v2051
        %v2159 = vunpack.c.h.b16 %v2051
        %v2160 = vunpack.c.l.b16 %v2052
        %v2161 = vunpack.c.l.b16 %v2053
        %v2162 = vunpack.c.h.b16 %v2053
        %v2163 = vunpack.c.l.b16 %v2054
        %v2164 = vunpack.c.h.b16 %v2054
        %v2165 = vunpack.c.l.b16 %v2055
        %v2166 = vunpack.c.l.b16 %v2056
        %v2167 = vunpack.c.h.b16 %v2056
        %v2168 = vunpack.c.l.b16 %v2057
        %v2169 = vunpack.c.h.b16 %v2057
        %v2170 = vunpack.c.l.b16 %v2058
        %v2171 = vunpack.c.l.b16 %v2059
        %v2172 = vunpack.c.h.b16 %v2059
        %v2173 = vunpack.c.l.b16 %v2060
        %v2174 = vunpack.c.h.b16 %v2060
        %v2175 = vunpack.c.l.b16 %v2061
        %v2176 = vunpack.c.l.b16 %v2062
        %v2177 = vunpack.c.h.b16 %v2062
        %v2178 = vunpack.c.l.b16 %v2063
        %v2179 = vunpack.c.h.b16 %v2063
        %v2180 = vunpack.c.l.b16 %v2064
        %v2181 = vunpack.c.l.b16 %v2065
        %v2182 = vunpack.c.h.b16 %v2065
        %v2183 = vunpack.c.l.b16 %v2066
        %v2184 = vunpack.c.h.b16 %v2066
        %v2185 = vunpack.c.l.b16 %v2067
        %v2186 = vunpack.c.l.b16 %v2068
        %v2187 = vunpack.c.h.b16 %v2068
        %v2188 = vunpack.c.l.b16 %v2069
        %v2189 = vunpack.c.h.b16 %v2069
        %v2190 = vunpack.c.l.b16 %v2070
        %v2191 = vunpack.c.l.b16 %v2071
        %v2192 = vunpack.c.h.b16 %v2071
        %v2193 = vunpack.c.l.b16 %v2072
        %v2194 = vunpack.c.h.b16 %v2072
        %v2195 = vunpack.c.l.b16 %v2073
        %v2196 = vunpack.c.l.b16 %v2074
        %v2197 = vunpack.c.h.b16 %v2074
        %v2198 = vunpack.c.l.b16 %v2075
        %v2199 = vunpack.c.h.b16 %v2075
        %v2200 = vunpack.c.l.b16 %v2076
        %v2201 = vunpack.c.l.b16 %v2077
        %v2202 = vunpack.c.h.b16 %v2077
        %v2203 = vunpack.c.l.b16 %v2078
        %v2204 = vunpack.c.h.b16 %v2078
        %v2205 = vunpack.c.l.b16 %v2079
        %v2206 = vunpack.c.l.b16 %v2080
        %v2207 = vunpack.c.h.b16 %v2080
        %v2208 = vunpack.c.l.b16 %v2081
        %v2209 = vunpack.c.h.b16 %v2081
        %v2210 = vunpack.c.l.b16 %v2082
        %v2211 = vpack.c.b16 %v2136, %v2131
        %v2212 = vpack.c.b16 %v2137, %v2132
        %v2213 = vpack.c.b16 %v2138, %v2133
        %v2214 = vpack.c.b16 %v2139, %v2134
        %v2215 = vpack.c.b16 %v2140, %v2135
        %v2216 = vpack.c.b16 %v2146, %v2141
        %v2217 = vpack.c.b16 %v2147, %v2142
        %v2218 = vpack.c.b16 %v2148, %v2143
        %v2219 = vpack.c.b16 %v2149, %v2144
        %v2220 = vpack.c.b16 %v2150, %v2145
        %v2221 = vpack.c.b16 %v2156, %v2151
        %v2222 = vpack.c.b16 %v2157, %v2152
        %v2223 = vpack.c.b16 %v2158, %v2153
        %v2224 = vpack.c.b16 %v2159, %v2154
        %v2225 = vpack.c.b16 %v2160, %v2155
        %v2226 = vpack.c.b16 %v2166, %v2161
        %v2227 = vpack.c.b16 %v2167, %v2162
        %v2228 = vpack.c.b16 %v2168, %v2163
        %v2229 = vpack.c.b16 %v2169, %v2164
        %v2230 = vpack.c.b16 %v2170, %v2165
        %v2231 = vpack.c.b16 %v2176, %v2171
        %v2232 = vpack.c.b16 %v2177, %v2172
        %v2233 = vpack.c.b16 %v2178, %v2173
        %v2234 = vpack.c.b16 %v2179, %v2174
        %v2235 = vpack.c.b16 %v2180, %v2175
        %v2236 = vpack.c.b16 %v2186, %v2181
        %v2237 = vpack.c.b16 %v2187, %v2182
        %v2238 = vpack.c.b16 %v2188, %v2183
        %v2239 = vpack.c.b16 %v2189, %v2184
        %v2240 = vpack.c.b16 %v2190, %v2185
        %v2241 = vpack.c.b16 %v2196, %v2191
        %v2242 = vpack.c.b16 %v2197, %v2192
        %v2243 = vpack.c.b16 %v2198, %v2193
        %v2244 = vpack.c.b16 %v2199, %v2194
        %v2245 = vpack.c.b16 %v2200, %v2195
        %v2246 = vpack.c.b16 %v2206, %v2201
        %v2247 = vpack.c.b16 %v2207, %v2202
        %v2248 = vpack.c.b16 %v2208, %v2203
        %v2249 = vpack.c.b16 %v2209, %v2204
        %v2250 = vpack.c.b16 %v2210, %v2205
        %2291 = vmatprep.subr.bf16.mxu0 %v2212
        %2292 = vmatpush1.bf16.msra.mxu0 %v2211
        %2293 = vmatprep.subr.bf16.mxu0 %v2217
        %2294 = vmatpush1.bf16.msra.mxu0 %v2216
        %2295 = vmatprep.subr.bf16.mxu0 %v2222
        %2296 = vmatpush1.bf16.msra.mxu0 %v2221
        %2297 = vmatprep.subr.bf16.mxu0 %v2227
        %2298 = vmatpush1.bf16.msra.mxu0 %v2226
        %2299 = vmatprep.subr.bf16.mxu0 %v2232
        %2300 = vmatpush1.bf16.msra.mxu0 %v2231
        %2301 = vmatprep.subr.bf16.mxu0 %v2237
        %2302 = vmatpush1.bf16.msra.mxu0 %v2236
        %2303 = vmatprep.subr.bf16.mxu0 %v2242
        %2304 = vmatpush1.bf16.msra.mxu0 %v2241
        %2305 = vmatprep.subr.bf16.mxu0 %v2247
        %2306 = vmatpush1.bf16.msra.mxu0 %v2246
        %2307 = vmatprep.subr.bf16.mxu0 0
        %2308 = vmatpush1.bf16.msra.mxu0 0
        %2309 = vmatprep.subr.bf16.mxu0 0
        %2310 = vmatpush1.bf16.msra.mxu0 0
        %2311 = vmatprep.subr.bf16.mxu0 0
        %2312 = vmatpush1.bf16.msra.mxu0 0
        %2313 = vmatprep.subr.bf16.mxu0 0
        %2314 = vmatpush1.bf16.msra.mxu0 0
        %2315 = vmatprep.subr.bf16.mxu0 0
        %2316 = vmatpush1.bf16.msra.mxu0 0
        %2317 = vmatprep.subr.bf16.mxu0 0
        %2318 = vmatpush1.bf16.msra.mxu0 0
        %2319 = vmatprep.subr.bf16.mxu0 0
        %2320 = vmatpush1.bf16.msra.mxu0 0
        %2321 = vmatprep.subr.bf16.mxu0 0
        %2322 = vmatpush1.bf16.msra.mxu0 0
        %2323 = vmatprep.mubr.bf16.mxu0 0
        %2324 = vmatmul.mubr.bf16.gmra.mrb[0].mxu0 %v861
        %v2325 = vpop.f32.mrb[0].mxu0
        %v2326 = vadd.f32 0.0, %v2325
        %v2327 = vpop.f32.mrb[0].mxu0
        %v2328 = vadd.f32 0.0, %v2327
        %v2329 = vpop.f32.mrb[0].mxu0
        %v2330 = vadd.f32 0.0, %v2329
        %v2331 = vpop.f32.mrb[0].mxu0
        %v2332 = vadd.f32 0.0, %v2331
        %2333 = vmatprep.mubr.bf16.mxu0 0
        %2334 = vmatmul.mubr.bf16.gmra.mrb[0].mxu0 %v862
        %v2335 = vpop.f32.mrb[0].mxu0
        %v2336 = vadd.f32 0.0, %v2335
        %v2337 = vpop.f32.mrb[0].mxu0
        %v2338 = vadd.f32 0.0, %v2337
        %v2339 = vpop.f32.mrb[0].mxu0
        %v2340 = vpop.f32.mrb[0].mxu0
        %2341 = vdwg.mxu0
        %2342 = vmatprep.subr.bf16.mxu0 %v2214
        %2343 = vmatpush1.bf16.msra.mxu0 %v2213
        %2344 = vmatprep.subr.bf16.mxu0 %v2219
        %2345 = vmatpush1.bf16.msra.mxu0 %v2218
        %2346 = vmatprep.subr.bf16.mxu0 %v2224
        %2347 = vmatpush1.bf16.msra.mxu0 %v2223
        %2348 = vmatprep.subr.bf16.mxu0 %v2229
        %2349 = vmatpush1.bf16.msra.mxu0 %v2228
        %2350 = vmatprep.subr.bf16.mxu0 %v2234
        %2351 = vmatpush1.bf16.msra.mxu0 %v2233
        %2352 = vmatprep.subr.bf16.mxu0 %v2239
        %2353 = vmatpush1.bf16.msra.mxu0 %v2238
        %2354 = vmatprep.subr.bf16.mxu0 %v2244
        %2355 = vmatpush1.bf16.msra.mxu0 %v2243
        %2356 = vmatprep.subr.bf16.mxu0 %v2249
        %2357 = vmatpush1.bf16.msra.mxu0 %v2248
        %2358 = vmatprep.subr.bf16.mxu0 0
        %2359 = vmatpush1.bf16.msra.mxu0 0
        %2360 = vmatprep.subr.bf16.mxu0 0
        %2361 = vmatpush1.bf16.msra.mxu0 0
        %2362 = vmatprep.subr.bf16.mxu0 0
        %2363 = vmatpush1.bf16.msra.mxu0 0
        %2364 = vmatprep.subr.bf16.mxu0 0
        %2365 = vmatpush1.bf16.msra.mxu0 0
        %2366 = vmatprep.subr.bf16.mxu0 0
        %2367 = vmatpush1.bf16.msra.mxu0 0
        %2368 = vmatprep.subr.bf16.mxu0 0
        %2369 = vmatpush1.bf16.msra.mxu0 0
        %2370 = vmatprep.subr.bf16.mxu0 0
        %2371 = vmatpush1.bf16.msra.mxu0 0
        %2372 = vmatprep.subr.bf16.mxu0 0
        %2373 = vmatpush1.bf16.msra.mxu0 0
        %2374 = vmatprep.mubr.bf16.mxu0 0
        %2375 = vmatmul.mubr.bf16.gmra.mrb[0].mxu0 %v861
        %v2376 = vpop.f32.mrb[0].mxu0
        %v2377 = vadd.f32 0.0, %v2376
        %v2378 = vpop.f32.mrb[0].mxu0
        %v2379 = vadd.f32 0.0, %v2378
        %v2380 = vpop.f32.mrb[0].mxu0
        %v2381 = vadd.f32 0.0, %v2380
        %v2382 = vpop.f32.mrb[0].mxu0
        %v2383 = vadd.f32 0.0, %v2382
        %2384 = vmatprep.mubr.bf16.mxu0 0
        %2385 = vmatmul.mubr.bf16.gmra.mrb[0].mxu0 %v862
        %v2386 = vpop.f32.mrb[0].mxu0
        %v2387 = vadd.f32 0.0, %v2386
        %v2388 = vpop.f32.mrb[0].mxu0
        %v2389 = vadd.f32 0.0, %v2388
        %v2390 = vpop.f32.mrb[0].mxu0
        %v2391 = vpop.f32.mrb[0].mxu0
        %2392 = vdwg.mxu0
        %2393 = vmatprep.subr.bf16.mxu0 0
        %2394 = vmatpush1.bf16.msra.mxu0 %v2215
        %2395 = vmatprep.subr.bf16.mxu0 0
        %2396 = vmatpush1.bf16.msra.mxu0 %v2220
        %2397 = vmatprep.subr.bf16.mxu0 0
        %2398 = vmatpush1.bf16.msra.mxu0 %v2225
        %2399 = vmatprep.subr.bf16.mxu0 0
        %2400 = vmatpush1.bf16.msra.mxu0 %v2230
        %2401 = vmatprep.subr.bf16.mxu0 0
        %2402 = vmatpush1.bf16.msra.mxu0 %v2235
        %2403 = vmatprep.subr.bf16.mxu0 0
        %2404 = vmatpush1.bf16.msra.mxu0 %v2240
        %2405 = vmatprep.subr.bf16.mxu0 0
        %2406 = vmatpush1.bf16.msra.mxu0 %v2245
        %2407 = vmatprep.subr.bf16.mxu0 0
        %2408 = vmatpush1.bf16.msra.mxu0 %v2250
        %2409 = vmatprep.subr.bf16.mxu0 0
        %2410 = vmatpush1.bf16.msra.mxu0 0
        %2411 = vmatprep.subr.bf16.mxu0 0
        %2412 = vmatpush1.bf16.msra.mxu0 0
        %2413 = vmatprep.subr.bf16.mxu0 0
        %2414 = vmatpush1.bf16.msra.mxu0 0
        %2415 = vmatprep.subr.bf16.mxu0 0
        %2416 = vmatpush1.bf16.msra.mxu0 0
        %2417 = vmatprep.subr.bf16.mxu0 0
        %2418 = vmatpush1.bf16.msra.mxu0 0
        %2419 = vmatprep.subr.bf16.mxu0 0
        %2420 = vmatpush1.bf16.msra.mxu0 0
        %2421 = vmatprep.subr.bf16.mxu0 0
        %2422 = vmatpush1.bf16.msra.mxu0 0
        %2423 = vmatprep.subr.bf16.mxu0 0
        %2424 = vmatpush1.bf16.msra.mxu0 0
        %2425 = vmatprep.mubr.bf16.mxu0 0
        %2426 = vmatmul.mubr.bf16.gmra.mrb[0].mxu0 %v861
        %v2427 = vpop.f32.mrb[0].mxu0
        %v2428 = vadd.f32 0.0, %v2427
        %v2429 = vpop.f32.mrb[0].mxu0
        %v2430 = vpop.f32.mrb[0].mxu0
        %v2431 = vadd.f32 0.0, %v2430
        %v2432 = vpop.f32.mrb[0].mxu0
        %2433 = vmatprep.mubr.bf16.mxu0 0
        %2434 = vmatmul.mubr.bf16.gmra.mrb[0].mxu0 %v862
        %v2435 = vpop.f32.mrb[0].mxu0
        %v2436 = vadd.f32 0.0, %v2435
        %v2437 = vpop.f32.mrb[0].mxu0
        %v2438 = vpop.f32.mrb[0].mxu0
        %v2439 = vpop.f32.mrb[0].mxu0
        %2440 = vdwg.mxu0
        %v2441 = vmax.f32 %v1108, %v1514
        %v2442 = vmax.f32 %v1110, %v1516
        %v2443 = vmax.f32 %v1159, %v1565
        %v2444 = vmax.f32 %v1161, %v1567
        %v2445 = vmax.f32 %v1210, %v1616
        %v2446 = vmax.f32 %v1112, %v1518
        %v2447 = vmax.f32 %v1114, %v1520
        %v2448 = vmax.f32 %v1163, %v1569
        %v2449 = vmax.f32 %v1165, %v1571
        %v2450 = vmax.f32 %v1213, %v1619
        %v2451 = vmax.f32 %v1118, %v1524
        %v2452 = vmax.f32 %v1120, %v1526
        %v2453 = vmax.f32 %v1169, %v1575
        %v2454 = vmax.f32 %v1171, %v1577
        %v2455 = vmax.f32 %v1218, %v1624
        %v2456 = vmax.f32 %v1920, %v2326
        %v2457 = vmax.f32 %v1922, %v2328
        %v2458 = vmax.f32 %v1971, %v2377
        %v2459 = vmax.f32 %v1973, %v2379
        %v2460 = vmax.f32 %v2022, %v2428
        %v2461 = vmax.f32 %v1924, %v2330
        %v2462 = vmax.f32 %v1926, %v2332
        %v2463 = vmax.f32 %v1975, %v2381
        %v2464 = vmax.f32 %v1977, %v2383
        %v2465 = vmax.f32 %v2025, %v2431
        %v2466 = vmax.f32 %v1930, %v2336
        %v2467 = vmax.f32 %v1932, %v2338
        %v2468 = vmax.f32 %v1981, %v2387
        %v2469 = vmax.f32 %v1983, %v2389
        %v2470 = vmax.f32 %v2030, %v2436
        %v2471 = vmax.f32 %v2441, %v2456
        %v2472 = vmax.f32 %v2442, %v2457
        %v2473 = vmax.f32 %v2443, %v2458
        %v2474 = vmax.f32 %v2444, %v2459
        %v2475 = vmax.f32 %v2445, %v2460
        %v2476 = vmax.f32 %v2446, %v2461
        %v2477 = vmax.f32 %v2447, %v2462
        %v2478 = vmax.f32 %v2448, %v2463
        %v2479 = vmax.f32 %v2449, %v2464
        %v2480 = vmax.f32 %v2450, %v2465
        %v2481 = vmax.f32 %v2451, %v2466
        %v2482 = vmax.f32 %v2452, %v2467
        %v2483 = vmax.f32 %v2453, %v2468
        %v2484 = vmax.f32 %v2454, %v2469
        %v2485 = vmax.f32 %v2455, %v2470
        %v2486 = vld [vmem:[%s5] sm:$0xff]
        %v2487 = vld [vmem:[%s5 + $0x8] sm:$0xff]
        %v2488 = vld [vmem:[%s5 + $0x10] sm:$0xf]
        %2490 = vset.pattern.permute.xlu0 0
        %2491 = vperm.xlu0 %2490, %v2486
        %v2492 = vpop.permute.xlu0 %2491
        %2495 = vset.pattern.permute.xlu0 0
        %2496 = vperm.xlu0 %2495, %v2487
        %v2497 = vpop.permute.xlu0 %2496
        %2500 = vset.pattern.permute.xlu0 0
        %2501 = vperm.xlu0 %2500, %v2488
        %v2502 = vpop.permute.xlu0 %2501
        %v2504 = vadd.f32 %v2471, %v2492
        %v2505 = vadd.f32 %v2472, %v2492
        %v2506 = vadd.f32 %v2473, %v2492
        %v2507 = vadd.f32 %v2474, %v2492
        %v2508 = vadd.f32 %v2475, %v2492
        %v2509 = vadd.f32 %v2476, %v2497
        %v2510 = vadd.f32 %v2477, %v2497
        %v2511 = vadd.f32 %v2478, %v2497
        %v2512 = vadd.f32 %v2479, %v2497
        %v2513 = vadd.f32 %v2480, %v2497
        %v2514 = vadd.f32 %v2481, %v2502
        %v2515 = vadd.f32 %v2482, %v2502
        %v2516 = vadd.f32 %v2483, %v2502
        %v2517 = vadd.f32 %v2484, %v2502
        %v2518 = vadd.f32 %v2485, %v2502
        %v2519 = vmax.f32 %v2504, 0.0
        %v2520 = vmax.f32 %v2505, 0.0
        %v2521 = vmax.f32 %v2506, 0.0
        %v2522 = vmax.f32 %v2507, 0.0
        %v2523 = vmax.f32 %v2508, 0.0
        %v2524 = vmax.f32 %v2509, 0.0
        %v2525 = vmax.f32 %v2510, 0.0
        %v2526 = vmax.f32 %v2511, 0.0
        %v2527 = vmax.f32 %v2512, 0.0
        %v2528 = vmax.f32 %v2513, 0.0
        %v2529 = vmax.f32 %v2514, 0.0
        %v2530 = vmax.f32 %v2515, 0.0
        %v2531 = vmax.f32 %v2516, 0.0
        %v2532 = vmax.f32 %v2517, 0.0
        %v2533 = vmax.f32 %v2518, 0.0
        %2534 = vst [vmem:[%s797] sm:$0xff] %v2519
        %2535 = vst [vmem:[%s797 + $0x8] sm:$0xff] %v2520
        %2536 = vst [vmem:[%s797 + $0x10] sm:$0xff] %v2521
        %2537 = vst [vmem:[%s797 + $0x18] sm:$0xff] %v2522
        %2538 = vst [vmem:[%s797 + $0x20] sm:$0xff] %v2523
        %2539 = vst [vmem:[%s797 + $0x28] sm:$0xff] %v2524
        %2540 = vst [vmem:[%s797 + $0x30] sm:$0xff] %v2525
        %2541 = vst [vmem:[%s797 + $0x38] sm:$0xff] %v2526
        %2542 = vst [vmem:[%s797 + $0x40] sm:$0xff] %v2527
        %2543 = vst [vmem:[%s797 + $0x48] sm:$0xff] %v2528
        %2544 = vst [vmem:[%s797 + $0x50] sm:$0xf] %v2529
        %2545 = vst [vmem:[%s797 + $0x58] sm:$0xf] %v2530
        %2546 = vst [vmem:[%s797 + $0x60] sm:$0xf] %v2531
        %2547 = vst [vmem:[%s797 + $0x68] sm:$0xf] %v2532
        %2548 = vst [vmem:[%s797 + $0x70] sm:$0xf] %v2533
        %s2549 = sand.u32 %s171, 1
        %s2550 = sand.u32 %s171, 1
        %s2551 = smul.addr %s2550, 120
        %s2552 = scalar_lea.vmem [#allocation6], %s2551
        // Predicated region
        $region149: #{ma_midn_forward.2} parent=131 // pred_check
          %p2553 = pneg %p181
        $region150: #{ma_midn_forward.2} parent=131 // pred_check_branch
          %2555 = sbr.rel (%p2553) target = $region152
        $region151: #{ma_midn_forward.2} parent=131 // pred_region
          %s2556 = smul.u32 5, %s17
          %s2557 = smul.addr %s2556, 8
          %s2558 = scalar_lea.vmem %s6, %s2557
          // Predicated region
          $region153: #{ma_midn_forward.2} parent=151 // pred_check
            _
          $region154: #{ma_midn_forward.2} parent=151 // pred_check_branch
            %2560 = sbr.rel (0) target = $region156
          $region155: #{ma_midn_forward.2} parent=151 // pred_region
            // Predicated region
            $region157: #{ma_midn_forward.2} parent=155 // pred_check
              _
            $region158: #{ma_midn_forward.2} parent=155 // pred_check_branch
              %2562 = sbr.rel (0) target = $region160
            $region159: #{ma_midn_forward.2} parent=155 // pred_region
              loop: start=0, step=1, limit=1
              $region161: #{ma_midn_forward.2} parent=159 // loop_pre_header
                _
              $region162: #{ma_midn_forward.2} parent=159 // loop_header
                %s2564 = sphi 0, %s2568
                %p2565 = scmp.ge.s32.totalorder %s2564, 1
                %s2569 = sphi %s2552, %s2552
                %s2570 = sphi %s2558, %s2558
              $region163: #{ma_midn_forward.2} parent=159 // loop_header_branch
                %2567 = sbr.rel (%p2565) target = $region167
              $region164: #{ma_midn_forward.2} parent=159 // loop_body
                %v2571 = vld [vmem:[%s2569] sm:$0xff]
                %2572 = vst [vmem:[%s2570] sm:$0xff] %v2571
                %v2573 = vld [vmem:[%s2569 + $0x8] sm:$0xff]
                %2574 = vst [vmem:[%s2570 + $0x8] sm:$0xff] %v2573
                %v2575 = vld [vmem:[%s2569 + $0x10] sm:$0xff]
                %2576 = vst [vmem:[%s2570 + $0x10] sm:$0xff] %v2575
                %v2577 = vld [vmem:[%s2569 + $0x18] sm:$0xff]
                %2578 = vst [vmem:[%s2570 + $0x18] sm:$0xff] %v2577
                %v2579 = vld [vmem:[%s2569 + $0x20] sm:$0xff]
                %2580 = vst [vmem:[%s2570 + $0x20] sm:$0xff] %v2579
                %v2581 = vld [vmem:[%s2569 + $0x28] sm:$0xff]
                %2582 = vst [vmem:[%s2570 + $0x50] sm:$0xff] %v2581
                %v2583 = vld [vmem:[%s2569 + $0x30] sm:$0xff]
                %2584 = vst [vmem:[%s2570 + $0x58] sm:$0xff] %v2583
                %v2585 = vld [vmem:[%s2569 + $0x38] sm:$0xff]
                %2586 = vst [vmem:[%s2570 + $0x60] sm:$0xff] %v2585
                %v2587 = vld [vmem:[%s2569 + $0x40] sm:$0xff]
                %2588 = vst [vmem:[%s2570 + $0x68] sm:$0xff] %v2587
                %v2589 = vld [vmem:[%s2569 + $0x48] sm:$0xff]
                %2590 = vst [vmem:[%s2570 + $0x70] sm:$0xff] %v2589
                %v2591 = vld [vmem:[%s2569 + $0x50] sm:$0xff]
                %2592 = vst [vmem:[%s2570 + $0xa0] sm:$0xff] %v2591
                %v2593 = vld [vmem:[%s2569 + $0x58] sm:$0xff]
                %2594 = vst [vmem:[%s2570 + $0xa8] sm:$0xff] %v2593
                %v2595 = vld [vmem:[%s2569 + $0x60] sm:$0xff]
                %2596 = vst [vmem:[%s2570 + $0xb0] sm:$0xff] %v2595
                %v2597 = vld [vmem:[%s2569 + $0x68] sm:$0xff]
                %2598 = vst [vmem:[%s2570 + $0xb8] sm:$0xff] %v2597
                %v2599 = vld [vmem:[%s2569 + $0x70] sm:$0xff]
                %2600 = vst [vmem:[%s2570 + $0xc0] sm:$0xff] %v2599
              $region165: #{ma_midn_forward.2} parent=159 // loop_footer
                %s2568 = sadd.s32 1, %s2564
              $region166: #{ma_midn_forward.2} parent=159 // loop_footer_branch
                %2563 = sbr.rel target = $region162
              $region167: #{ma_midn_forward.2} parent=159 // loop_exit
                _
            $region160: #{ma_midn_forward.2} parent=155 // pred_fallthru
              _
            // Predicated region
            $region168: #{ma_midn_forward.2} parent=155 // pred_check
              _
            $region169: #{ma_midn_forward.2} parent=155 // pred_check_branch
              %2602 = sbr.rel target = $region171
            $region170: #{ma_midn_forward.2} parent=155 // pred_region
              _
            $region171: #{ma_midn_forward.2} parent=155 // pred_fallthru
              _
          $region156: #{ma_midn_forward.2} parent=151 // pred_fallthru
            _
          %2603 = vnop
        $region152: #{ma_midn_forward.2} parent=131 // pred_fallthru
          _
      $region132: #{ma_midn_forward.2} parent=5 // pred_fallthru
        _
      %p2604 = scmp.le.s32.totalorder 2, %s12
      // Predicated region
      $region172: #{ma_midn_forward.2} parent=5 // pred_check
        %p2605 = pneg %p2604
      $region173: #{ma_midn_forward.2} parent=5 // pred_check_branch
        %2607 = sbr.rel (%p2605) target = $region175
      $region174: #{ma_midn_forward.2} parent=5 // pred_region
        %s2608 = ssub.s32 %s12, 2
        // Predicated region
        $region176: #{ma_midn_forward.2} parent=174 // pred_check
          %p2609 = pneg %p187
        $region177: #{ma_midn_forward.2} parent=174 // pred_check_branch
          %2611 = sbr.rel (%p2609) target = $region179
        $region178: #{ma_midn_forward.2} parent=174 // pred_region
          %s2612 = sand.u32 %s172, 1
          %s2613 = sand.u32 %s172, 1
          %s2614 = smul.addr %s2613, 120
          %s2615 = scalar_lea.vmem [#allocation6], %s2614
        $region179: #{ma_midn_forward.2} parent=174 // pred_fallthru
          _
      $region175: #{ma_midn_forward.2} parent=5 // pred_fallthru
        _
    $region6: #{ma_midn_forward.2} parent=1 // loop_footer
      %s16 = sadd.s32 1, %s12
    $region7: #{ma_midn_forward.2} parent=1 // loop_footer_branch
      %11 = sbr.rel target = $region3
    $region8: #{ma_midn_forward.2} parent=1 // loop_exit
      _

// kernel: ma_midn_forward.3
$region0: #{ma_midn_forward.3}
  #allocation0 [shape = 'u32[]', space=smem, size = 0x4, offset = 0x4, fixed_abs, tag = 'smem constant byte address 0x4 - core index']
  #allocation1 [shape = 'u32[144,128]{1,0:T(1,128)}', space=vmem, size = 0x12000, scoped, tag = 'internal scratch']
  #allocation2 [shape = 'f32[1,1]{1,0:T(1,128)S(1)}', space=vmem, size = 0x200, scoped, tag = 'scoped memory for ma_midn_forward.3']
  %s0 = inlined_call_operand.vmem [shape: bf16[128,512], index: 0, kind: input, shape index: {}]
  %s1 = inlined_call_operand.vmem [shape: bf16[128,512], index: 1, kind: input, shape index: {}]
  %s2 = inlined_call_operand.vmem [shape: bf16[128,512], index: 2, kind: input, shape index: {}]
  %s3 = inlined_call_operand.vmem [shape: bf16[128,512], index: 3, kind: input, shape index: {}]
  %s4 = inlined_call_operand.vmem [shape: bf16[512,50], index: 4, kind: input, shape index: {}]
  %s5 = inlined_call_operand.vmem [shape: f32[1,50], index: 5, kind: input, shape index: {}]
  %s6 = inlined_call_operand.vmem [shape: bf16[16,50,512], index: 6, kind: input, shape index: {}]
  %s7 = inlined_call_operand.vmem [shape: f32[1,512], index: 7, kind: input, shape index: {}]
  %s8 = inlined_call_operand.vmem [shape: f32[512,256], index: 8, kind: input, shape index: {}]
  %s9 = inlined_call_operand.vmem [shape: f32[1,256], index: 9, kind: input, shape index: {}]
  %s10 = inlined_call_operand.vmem [shape: f32[128,2], index: 10, kind: input, shape index: {}]
  %s11 = inlined_call_operand.vmem [shape: f32[1,2], index: 11, kind: input, shape index: {}]
  %s12 = inlined_call_operand.vmem [shape: f32[128,2], index: 12, kind: input, shape index: {}]
  %s13 = inlined_call_operand.vmem [shape: f32[1,2], index: 13, kind: input, shape index: {}]
  %s14 = inlined_call_operand.vmem [shape: f32[1,512], index: 14, kind: input, shape index: {}]
  %s15 = inlined_call_operand.<no memory space> [shape: f32[1,1], index: 15, kind: input, shape index: {}]
  %s16 = inlined_call_operand.hbm [shape: f32[1,1], index: 16, kind: output, shape index: {0}]
  %s17 = inlined_call_operand.vmem [shape: f32[8,1], index: 17, kind: output, shape index: {1}]
  %18 = xla_tuple %s16, %s17
  %s19 = sld [smem:[#allocation0]]
  $region82: #{ma_midn_forward.3} parent=0
    _
  %s21 = ssub.s32 1, %s19
  %s22 = scalar_select 0, %s21, %s19
  %v23 = vstv %s15
  %24 = vst [vmem:[#allocation2] sm:$0x1] %v23
  $region1: #{ma_midn_forward.3} parent=0
    #allocation3 [shape = 'u8[512]{0}', space=vmem, size = 0x400, scoped, tag = 'output window, operand 0, single buffered']
    #allocation4 [shape = 's32[1]{0}', space=sflag, size = 0x4, scoped, tag = 'scoped memory for ma_midn_forward.3']
    %25 = vsyncpa [#allocation4], 0
    // Predicated region
    $region2: #{ma_midn_forward.3} parent=1 // pred_check
      _
    $region3: #{ma_midn_forward.3} parent=1 // pred_check_branch
      %27 = sbr.rel (0) target = $region5
    $region4: #{ma_midn_forward.3} parent=1 // pred_region
      _
    $region5: #{ma_midn_forward.3} parent=1 // pred_fallthru
      _
    // Predicated region
    $region6: #{ma_midn_forward.3} parent=1 // pred_check
      _
    $region7: #{ma_midn_forward.3} parent=1 // pred_check_branch
      %29 = sbr.rel (0) target = $region9
    $region8: #{ma_midn_forward.3} parent=1 // pred_region
      _
    $region9: #{ma_midn_forward.3} parent=1 // pred_fallthru
      _
    // Predicated region
    $region10: #{ma_midn_forward.3} parent=1 // pred_check
      _
    $region11: #{ma_midn_forward.3} parent=1 // pred_check_branch
      %31 = sbr.rel (0) target = $region13
    $region12: #{ma_midn_forward.3} parent=1 // pred_region
      _
    $region13: #{ma_midn_forward.3} parent=1 // pred_fallthru
      _
    // Predicated region
    $region14: #{ma_midn_forward.3} parent=1 // pred_check
      _
    $region15: #{ma_midn_forward.3} parent=1 // pred_check_branch
      %33 = sbr.rel (0) target = $region17
    $region16: #{ma_midn_forward.3} parent=1 // pred_region
      _
    $region17: #{ma_midn_forward.3} parent=1 // pred_fallthru
      _
    // Predicated region
    $region18: #{ma_midn_forward.3} parent=1 // pred_check
      _
    $region19: #{ma_midn_forward.3} parent=1 // pred_check_branch
      %35 = sbr.rel (0) target = $region21
    $region20: #{ma_midn_forward.3} parent=1 // pred_region
      _
    $region21: #{ma_midn_forward.3} parent=1 // pred_fallthru
      _
    // Predicated region
    $region22: #{ma_midn_forward.3} parent=1 // pred_check
      _
    $region23: #{ma_midn_forward.3} parent=1 // pred_check_branch
      %37 = sbr.rel (0) target = $region25
    $region24: #{ma_midn_forward.3} parent=1 // pred_region
      _
    $region25: #{ma_midn_forward.3} parent=1 // pred_fallthru
      _
    // Predicated region
    $region26: #{ma_midn_forward.3} parent=1 // pred_check
      _
    $region27: #{ma_midn_forward.3} parent=1 // pred_check_branch
      %39 = sbr.rel (0) target = $region29
    $region28: #{ma_midn_forward.3} parent=1 // pred_region
      _
    $region29: #{ma_midn_forward.3} parent=1 // pred_fallthru
      _
    // Predicated region
    $region30: #{ma_midn_forward.3} parent=1 // pred_check
      _
    $region31: #{ma_midn_forward.3} parent=1 // pred_check_branch
      %41 = sbr.rel (0) target = $region33
    $region32: #{ma_midn_forward.3} parent=1 // pred_region
      _
    $region33: #{ma_midn_forward.3} parent=1 // pred_fallthru
      _
    // Predicated region
    $region34: #{ma_midn_forward.3} parent=1 // pred_check
      _
    $region35: #{ma_midn_forward.3} parent=1 // pred_check_branch
      %43 = sbr.rel (0) target = $region37
    $region36: #{ma_midn_forward.3} parent=1 // pred_region
      _
    $region37: #{ma_midn_forward.3} parent=1 // pred_fallthru
      _
    // Predicated region
    $region38: #{ma_midn_forward.3} parent=1 // pred_check
      _
    $region39: #{ma_midn_forward.3} parent=1 // pred_check_branch
      %45 = sbr.rel (0) target = $region41
    $region40: #{ma_midn_forward.3} parent=1 // pred_region
      _
    $region41: #{ma_midn_forward.3} parent=1 // pred_fallthru
      _
    // Predicated region
    $region42: #{ma_midn_forward.3} parent=1 // pred_check
      _
    $region43: #{ma_midn_forward.3} parent=1 // pred_check_branch
      %47 = sbr.rel (0) target = $region45
    $region44: #{ma_midn_forward.3} parent=1 // pred_region
      _
    $region45: #{ma_midn_forward.3} parent=1 // pred_fallthru
      _
    // Predicated region
    $region46: #{ma_midn_forward.3} parent=1 // pred_check
      _
    $region47: #{ma_midn_forward.3} parent=1 // pred_check_branch
      %49 = sbr.rel (0) target = $region49
    $region48: #{ma_midn_forward.3} parent=1 // pred_region
      _
    $region49: #{ma_midn_forward.3} parent=1 // pred_fallthru
      _
    // Predicated region
    $region50: #{ma_midn_forward.3} parent=1 // pred_check
      _
    $region51: #{ma_midn_forward.3} parent=1 // pred_check_branch
      %51 = sbr.rel (0) target = $region53
    $region52: #{ma_midn_forward.3} parent=1 // pred_region
      _
    $region53: #{ma_midn_forward.3} parent=1 // pred_fallthru
      _
    // Predicated region
    $region54: #{ma_midn_forward.3} parent=1 // pred_check
      _
    $region55: #{ma_midn_forward.3} parent=1 // pred_check_branch
      %53 = sbr.rel (0) target = $region57
    $region56: #{ma_midn_forward.3} parent=1 // pred_region
      _
    $region57: #{ma_midn_forward.3} parent=1 // pred_fallthru
      _
    // Predicated region
    $region58: #{ma_midn_forward.3} parent=1 // pred_check
      _
    $region59: #{ma_midn_forward.3} parent=1 // pred_check_branch
      %55 = sbr.rel (0) target = $region61
    $region60: #{ma_midn_forward.3} parent=1 // pred_region
      _
    $region61: #{ma_midn_forward.3} parent=1 // pred_fallthru
      _
    // Predicated region
    $region62: #{ma_midn_forward.3} parent=1 // pred_check
      _
    $region63: #{ma_midn_forward.3} parent=1 // pred_check_branch
      %57 = sbr.rel (0) target = $region65
    $region64: #{ma_midn_forward.3} parent=1 // pred_region
      _
    $region65: #{ma_midn_forward.3} parent=1 // pred_fallthru
      _
    %v59 = vld [vmem:[%s4] sm:$0xf]
    %v60 = vld [vmem:[%s4 + $0x4] sm:$0xf]
    %v61 = vld [vmem:[%s4 + $0x8] sm:$0xf]
    %v62 = vld [vmem:[%s4 + $0xc] sm:$0xf]
    %v63 = vld [vmem:[%s4 + $0x10] sm:$0xf]
    %v64 = vld [vmem:[%s4 + $0x14] sm:$0xf]
    %v65 = vld [vmem:[%s4 + $0x18] sm:$0xf]
    %v66 = vld [vmem:[%s4 + $0x1c] sm:$0xf]
    %v67 = vld [vmem:[%s4 + $0x20] sm:$0xf]
    %v68 = vld [vmem:[%s4 + $0x24] sm:$0xf]
    %v69 = vld [vmem:[%s4 + $0x28] sm:$0xf]
    %v70 = vld [vmem:[%s4 + $0x2c] sm:$0xf]
    %v71 = vld [vmem:[%s4 + $0x30] sm:$0xf]
    %v72 = vld [vmem:[%s4 + $0x34] sm:$0xf]
    %v73 = vld [vmem:[%s4 + $0x38] sm:$0xf]
    %v74 = vld [vmem:[%s4 + $0x3c] sm:$0xf]
    %v75 = vld [vmem:[%s4 + $0x40] sm:$0xf]
    %v76 = vld [vmem:[%s4 + $0x44] sm:$0xf]
    %v77 = vld [vmem:[%s4 + $0x48] sm:$0xf]
    %v78 = vld [vmem:[%s4 + $0x4c] sm:$0xf]
    %v79 = vld [vmem:[%s4 + $0x50] sm:$0xf]
    %v80 = vld [vmem:[%s4 + $0x54] sm:$0xf]
    %v81 = vld [vmem:[%s4 + $0x58] sm:$0xf]
    %v82 = vld [vmem:[%s4 + $0x5c] sm:$0xf]
    %v83 = vld [vmem:[%s4 + $0x60] sm:$0xf]
    %v84 = vld [vmem:[%s4 + $0x64] sm:$0xf]
    %v85 = vld [vmem:[%s4 + $0x68] sm:$0xf]
    %v86 = vld [vmem:[%s4 + $0x6c] sm:$0xf]
    %v87 = vld [vmem:[%s4 + $0x70] sm:$0xf]
    %v88 = vld [vmem:[%s4 + $0x74] sm:$0xf]
    %v89 = vld [vmem:[%s4 + $0x78] sm:$0xf]
    %v90 = vld [vmem:[%s4 + $0x7c] sm:$0xf]
    %v91 = vld [vmem:[%s4 + $0x80] sm:$0xf]
    %v92 = vld [vmem:[%s4 + $0x84] sm:$0xf]
    %v93 = vld [vmem:[%s4 + $0x88] sm:$0xf]
    %v94 = vld [vmem:[%s4 + $0x8c] sm:$0xf]
    %v95 = vld [vmem:[%s4 + $0x90] sm:$0xf]
    %v96 = vld [vmem:[%s4 + $0x94] sm:$0xf]
    %v97 = vld [vmem:[%s4 + $0x98] sm:$0xf]
    %v98 = vld [vmem:[%s4 + $0x9c] sm:$0xf]
    %v99 = vld [vmem:[%s4 + $0xa0] sm:$0xf]
    %v100 = vld [vmem:[%s4 + $0xa4] sm:$0xf]
    %v101 = vld [vmem:[%s4 + $0xa8] sm:$0xf]
    %v102 = vld [vmem:[%s4 + $0xac] sm:$0xf]
    %v103 = vld [vmem:[%s4 + $0xb0] sm:$0xf]
    %v104 = vld [vmem:[%s4 + $0xb4] sm:$0xf]
    %v105 = vld [vmem:[%s4 + $0xb8] sm:$0xf]
    %v106 = vld [vmem:[%s4 + $0xbc] sm:$0xf]
    %v107 = vld [vmem:[%s4 + $0xc0] sm:$0xf]
    %v108 = vld [vmem:[%s4 + $0xc4] sm:$0xf]
    %v109 = vld [vmem:[%s4 + $0xc8] sm:$0xf]
    %v110 = vld [vmem:[%s4 + $0xcc] sm:$0xf]
    %v111 = vld [vmem:[%s4 + $0xd0] sm:$0xf]
    %v112 = vld [vmem:[%s4 + $0xd4] sm:$0xf]
    %v113 = vld [vmem:[%s4 + $0xd8] sm:$0xf]
    %v114 = vld [vmem:[%s4 + $0xdc] sm:$0xf]
    %v115 = vld [vmem:[%s4 + $0xe0] sm:$0xf]
    %v116 = vld [vmem:[%s4 + $0xe4] sm:$0xf]
    %v117 = vld [vmem:[%s4 + $0xe8] sm:$0xf]
    %v118 = vld [vmem:[%s4 + $0xec] sm:$0xf]
    %v119 = vld [vmem:[%s4 + $0xf0] sm:$0xf]
    %v120 = vld [vmem:[%s4 + $0xf4] sm:$0xf]
    %v121 = vld [vmem:[%s4 + $0xf8] sm:$0xf]
    %v122 = vld [vmem:[%s4 + $0xfc] sm:$0xf]
    %v123 = vld [vmem:[%s0] sm:$0xff]
    %v124 = vld [vmem:[%s0 + $0x8] sm:$0xff]
    %v125 = vld [vmem:[%s0 + $0x10] sm:$0xff]
    %v126 = vld [vmem:[%s0 + $0x18] sm:$0xff]
    %v127 = vld [vmem:[%s0 + $0x20] sm:$0xff]
    %v128 = vld [vmem:[%s0 + $0x28] sm:$0xff]
    %v129 = vld [vmem:[%s0 + $0x30] sm:$0xff]
    %v130 = vld [vmem:[%s0 + $0x38] sm:$0xff]
    %v131 = vld [vmem:[%s0 + $0x40] sm:$0xff]
    %v132 = vld [vmem:[%s0 + $0x48] sm:$0xff]
    %v133 = vld [vmem:[%s0 + $0x50] sm:$0xff]
    %v134 = vld [vmem:[%s0 + $0x58] sm:$0xff]
    %v135 = vld [vmem:[%s0 + $0x60] sm:$0xff]
    %v136 = vld [vmem:[%s0 + $0x68] sm:$0xff]
    %v137 = vld [vmem:[%s0 + $0x70] sm:$0xff]
    %v138 = vld [vmem:[%s0 + $0x78] sm:$0xff]
    %v139 = vld [vmem:[%s0 + $0x80] sm:$0xff]
    %v140 = vld [vmem:[%s0 + $0x88] sm:$0xff]
    %v141 = vld [vmem:[%s0 + $0x90] sm:$0xff]
    %v142 = vld [vmem:[%s0 + $0x98] sm:$0xff]
    %v143 = vld [vmem:[%s0 + $0xa0] sm:$0xff]
    %v144 = vld [vmem:[%s0 + $0xa8] sm:$0xff]
    %v145 = vld [vmem:[%s0 + $0xb0] sm:$0xff]
    %v146 = vld [vmem:[%s0 + $0xb8] sm:$0xff]
    %v147 = vld [vmem:[%s0 + $0xc0] sm:$0xff]
    %v148 = vld [vmem:[%s0 + $0xc8] sm:$0xff]
    %v149 = vld [vmem:[%s0 + $0xd0] sm:$0xff]
    %v150 = vld [vmem:[%s0 + $0xd8] sm:$0xff]
    %v151 = vld [vmem:[%s0 + $0xe0] sm:$0xff]
    %v152 = vld [vmem:[%s0 + $0xe8] sm:$0xff]
    %v153 = vld [vmem:[%s0 + $0xf0] sm:$0xff]
    %v154 = vld [vmem:[%s0 + $0xf8] sm:$0xff]
    %v187 = vunpack.c.l.b16 %v123
    %v188 = vunpack.c.h.b16 %v123
    %v189 = vunpack.c.l.b16 %v124
    %v190 = vunpack.c.h.b16 %v124
    %v191 = vunpack.c.l.b16 %v125
    %v192 = vunpack.c.h.b16 %v125
    %v193 = vunpack.c.l.b16 %v126
    %v194 = vunpack.c.h.b16 %v126
    %v195 = vunpack.c.l.b16 %v127
    %v196 = vunpack.c.h.b16 %v127
    %v197 = vunpack.c.l.b16 %v128
    %v198 = vunpack.c.h.b16 %v128
    %v199 = vunpack.c.l.b16 %v129
    %v200 = vunpack.c.h.b16 %v129
    %v201 = vunpack.c.l.b16 %v130
    %v202 = vunpack.c.h.b16 %v130
    %v203 = vunpack.c.l.b16 %v131
    %v204 = vunpack.c.h.b16 %v131
    %v205 = vunpack.c.l.b16 %v132
    %v206 = vunpack.c.h.b16 %v132
    %v207 = vunpack.c.l.b16 %v133
    %v208 = vunpack.c.h.b16 %v133
    %v209 = vunpack.c.l.b16 %v134
    %v210 = vunpack.c.h.b16 %v134
    %v211 = vunpack.c.l.b16 %v135
    %v212 = vunpack.c.h.b16 %v135
    %v213 = vunpack.c.l.b16 %v136
    %v214 = vunpack.c.h.b16 %v136
    %v215 = vunpack.c.l.b16 %v137
    %v216 = vunpack.c.h.b16 %v137
    %v217 = vunpack.c.l.b16 %v138
    %v218 = vunpack.c.h.b16 %v138
    %v219 = vunpack.c.l.b16 %v139
    %v220 = vunpack.c.h.b16 %v139
    %v221 = vunpack.c.l.b16 %v140
    %v222 = vunpack.c.h.b16 %v140
    %v223 = vunpack.c.l.b16 %v141
    %v224 = vunpack.c.h.b16 %v141
    %v225 = vunpack.c.l.b16 %v142
    %v226 = vunpack.c.h.b16 %v142
    %v227 = vunpack.c.l.b16 %v143
    %v228 = vunpack.c.h.b16 %v143
    %v229 = vunpack.c.l.b16 %v144
    %v230 = vunpack.c.h.b16 %v144
    %v231 = vunpack.c.l.b16 %v145
    %v232 = vunpack.c.h.b16 %v145
    %v233 = vunpack.c.l.b16 %v146
    %v234 = vunpack.c.h.b16 %v146
    %v235 = vunpack.c.l.b16 %v147
    %v236 = vunpack.c.h.b16 %v147
    %v237 = vunpack.c.l.b16 %v148
    %v238 = vunpack.c.h.b16 %v148
    %v239 = vunpack.c.l.b16 %v149
    %v240 = vunpack.c.h.b16 %v149
    %v241 = vunpack.c.l.b16 %v150
    %v242 = vunpack.c.h.b16 %v150
    %v243 = vunpack.c.l.b16 %v151
    %v244 = vunpack.c.h.b16 %v151
    %v245 = vunpack.c.l.b16 %v152
    %v246 = vunpack.c.h.b16 %v152
    %v247 = vunpack.c.l.b16 %v153
    %v248 = vunpack.c.h.b16 %v153
    %v249 = vunpack.c.l.b16 %v154
    %v250 = vunpack.c.h.b16 %v154
    %v251 = vpack.c.b16 %v191, %v187
    %v252 = vpack.c.b16 %v192, %v188
    %v253 = vpack.c.b16 %v193, %v189
    %v254 = vpack.c.b16 %v194, %v190
    %v255 = vpack.c.b16 %v199, %v195
    %v256 = vpack.c.b16 %v200, %v196
    %v257 = vpack.c.b16 %v201, %v197
    %v258 = vpack.c.b16 %v202, %v198
    %v259 = vpack.c.b16 %v207, %v203
    %v260 = vpack.c.b16 %v208, %v204
    %v261 = vpack.c.b16 %v209, %v205
    %v262 = vpack.c.b16 %v210, %v206
    %v263 = vpack.c.b16 %v215, %v211
    %v264 = vpack.c.b16 %v216, %v212
    %v265 = vpack.c.b16 %v217, %v213
    %v266 = vpack.c.b16 %v218, %v214
    %v267 = vpack.c.b16 %v223, %v219
    %v268 = vpack.c.b16 %v224, %v220
    %v269 = vpack.c.b16 %v225, %v221
    %v270 = vpack.c.b16 %v226, %v222
    %v271 = vpack.c.b16 %v231, %v227
    %v272 = vpack.c.b16 %v232, %v228
    %v273 = vpack.c.b16 %v233, %v229
    %v274 = vpack.c.b16 %v234, %v230
    %v275 = vpack.c.b16 %v239, %v235
    %v276 = vpack.c.b16 %v240, %v236
    %v277 = vpack.c.b16 %v241, %v237
    %v278 = vpack.c.b16 %v242, %v238
    %v279 = vpack.c.b16 %v247, %v243
    %v280 = vpack.c.b16 %v248, %v244
    %v281 = vpack.c.b16 %v249, %v245
    %v282 = vpack.c.b16 %v250, %v246
    %v379 = vunpack.c.l.b16 %v59
    %v380 = vunpack.c.l.b16 %v60
    %v381 = vunpack.c.l.b16 %v61
    %v382 = vunpack.c.l.b16 %v62
    %v383 = vunpack.c.l.b16 %v63
    %v384 = vunpack.c.l.b16 %v64
    %v385 = vunpack.c.l.b16 %v65
    %v386 = vunpack.c.l.b16 %v66
    %v387 = vunpack.c.l.b16 %v67
    %v388 = vunpack.c.l.b16 %v68
    %v389 = vunpack.c.l.b16 %v69
    %v390 = vunpack.c.l.b16 %v70
    %v391 = vunpack.c.l.b16 %v71
    %v392 = vunpack.c.l.b16 %v72
    %v393 = vunpack.c.l.b16 %v73
    %v394 = vunpack.c.l.b16 %v74
    %v395 = vunpack.c.l.b16 %v75
    %v396 = vunpack.c.l.b16 %v76
    %v397 = vunpack.c.l.b16 %v77
    %v398 = vunpack.c.l.b16 %v78
    %v399 = vunpack.c.l.b16 %v79
    %v400 = vunpack.c.l.b16 %v80
    %v401 = vunpack.c.l.b16 %v81
    %v402 = vunpack.c.l.b16 %v82
    %v403 = vunpack.c.l.b16 %v83
    %v404 = vunpack.c.l.b16 %v84
    %v405 = vunpack.c.l.b16 %v85
    %v406 = vunpack.c.l.b16 %v86
    %v407 = vunpack.c.l.b16 %v87
    %v408 = vunpack.c.l.b16 %v88
    %v409 = vunpack.c.l.b16 %v89
    %v410 = vunpack.c.l.b16 %v90
    %v411 = vunpack.c.l.b16 %v91
    %v412 = vunpack.c.l.b16 %v92
    %v413 = vunpack.c.l.b16 %v93
    %v414 = vunpack.c.l.b16 %v94
    %v415 = vunpack.c.l.b16 %v95
    %v416 = vunpack.c.l.b16 %v96
    %v417 = vunpack.c.l.b16 %v97
    %v418 = vunpack.c.l.b16 %v98
    %v419 = vunpack.c.l.b16 %v99
    %v420 = vunpack.c.l.b16 %v100
    %v421 = vunpack.c.l.b16 %v101
    %v422 = vunpack.c.l.b16 %v102
    %v423 = vunpack.c.l.b16 %v103
    %v424 = vunpack.c.l.b16 %v104
    %v425 = vunpack.c.l.b16 %v105
    %v426 = vunpack.c.l.b16 %v106
    %v427 = vunpack.c.l.b16 %v107
    %v428 = vunpack.c.l.b16 %v108
    %v429 = vunpack.c.l.b16 %v109
    %v430 = vunpack.c.l.b16 %v110
    %v431 = vunpack.c.l.b16 %v111
    %v432 = vunpack.c.l.b16 %v112
    %v433 = vunpack.c.l.b16 %v113
    %v434 = vunpack.c.l.b16 %v114
    %v435 = vunpack.c.l.b16 %v115
    %v436 = vunpack.c.l.b16 %v116
    %v437 = vunpack.c.l.b16 %v117
    %v438 = vunpack.c.l.b16 %v118
    %v439 = vunpack.c.l.b16 %v119
    %v440 = vunpack.c.l.b16 %v120
    %v441 = vunpack.c.l.b16 %v121
    %v442 = vunpack.c.l.b16 %v122
    %v443 = vpack.c.b16 %v380, %v379
    %v444 = vpack.c.b16 %v382, %v381
    %v445 = vpack.c.b16 %v384, %v383
    %v446 = vpack.c.b16 %v386, %v385
    %v447 = vpack.c.b16 %v388, %v387
    %v448 = vpack.c.b16 %v390, %v389
    %v449 = vpack.c.b16 %v392, %v391
    %v450 = vpack.c.b16 %v394, %v393
    %v451 = vpack.c.b16 %v396, %v395
    %v452 = vpack.c.b16 %v398, %v397
    %v453 = vpack.c.b16 %v400, %v399
    %v454 = vpack.c.b16 %v402, %v401
    %v455 = vpack.c.b16 %v404, %v403
    %v456 = vpack.c.b16 %v406, %v405
    %v457 = vpack.c.b16 %v408, %v407
    %v458 = vpack.c.b16 %v410, %v409
    %v459 = vpack.c.b16 %v412, %v411
    %v460 = vpack.c.b16 %v414, %v413
    %v461 = vpack.c.b16 %v416, %v415
    %v462 = vpack.c.b16 %v418, %v417
    %v463 = vpack.c.b16 %v420, %v419
    %v464 = vpack.c.b16 %v422, %v421
    %v465 = vpack.c.b16 %v424, %v423
    %v466 = vpack.c.b16 %v426, %v425
    %v467 = vpack.c.b16 %v428, %v427
    %v468 = vpack.c.b16 %v430, %v429
    %v469 = vpack.c.b16 %v432, %v431
    %v470 = vpack.c.b16 %v434, %v433
    %v471 = vpack.c.b16 %v436, %v435
    %v472 = vpack.c.b16 %v438, %v437
    %v473 = vpack.c.b16 %v440, %v439
    %v474 = vpack.c.b16 %v442, %v441
    %507 = vmatprep.subr.bf16.mxu0 0
    %508 = vmatpush1.bf16.msra.mxu0 %v443
    %509 = vmatprep.subr.bf16.mxu0 0
    %510 = vmatpush1.bf16.msra.mxu0 %v444
    %511 = vmatprep.subr.bf16.mxu0 0
    %512 = vmatpush1.bf16.msra.mxu0 %v445
    %513 = vmatprep.subr.bf16.mxu0 0
    %514 = vmatpush1.bf16.msra.mxu0 %v446
    %515 = vmatprep.subr.bf16.mxu0 0
    %516 = vmatpush1.bf16.msra.mxu0 %v447
    %517 = vmatprep.subr.bf16.mxu0 0
    %518 = vmatpush1.bf16.msra.mxu0 %v448
    %519 = vmatprep.subr.bf16.mxu0 0
    %520 = vmatpush1.bf16.msra.mxu0 %v449
    %521 = vmatprep.subr.bf16.mxu0 0
    %522 = vmatpush1.bf16.msra.mxu0 %v450
    %523 = vmatprep.subr.bf16.mxu0 0
    %524 = vmatpush1.bf16.msra.mxu0 %v451
    %525 = vmatprep.subr.bf16.mxu0 0
    %526 = vmatpush1.bf16.msra.mxu0 %v452
    %527 = vmatprep.subr.bf16.mxu0 0
    %528 = vmatpush1.bf16.msra.mxu0 %v453
    %529 = vmatprep.subr.bf16.mxu0 0
    %530 = vmatpush1.bf16.msra.mxu0 %v454
    %531 = vmatprep.subr.bf16.mxu0 0
    %532 = vmatpush1.bf16.msra.mxu0 %v455
    %533 = vmatprep.subr.bf16.mxu0 0
    %534 = vmatpush1.bf16.msra.mxu0 %v456
    %535 = vmatprep.subr.bf16.mxu0 0
    %536 = vmatpush1.bf16.msra.mxu0 %v457
    %537 = vmatprep.subr.bf16.mxu0 0
    %538 = vmatpush1.bf16.msra.mxu0 %v458
    %539 = vmatprep.mubr.bf16.mxu0 %v252
    %540 = vmatmul.mubr.bf16.gmra.mrb[0].mxu0 %v251
    %v541 = vpop.f32.mrb[0].mxu0
    %v542 = vadd.f32 0.0, %v541
    %v543 = vpop.f32.mrb[0].mxu0
    %v544 = vpop.f32.mrb[0].mxu0
    %v545 = vadd.f32 0.0, %v544
    %v546 = vpop.f32.mrb[0].mxu0
    %547 = vmatprep.mubr.bf16.mxu0 %v256
    %548 = vmatmul.mubr.bf16.gmra.mrb[0].mxu0 %v255
    %v549 = vpop.f32.mrb[0].mxu0
    %v550 = vadd.f32 0.0, %v549
    %v551 = vpop.f32.mrb[0].mxu0
    %v552 = vpop.f32.mrb[0].mxu0
    %v553 = vadd.f32 0.0, %v552
    %v554 = vpop.f32.mrb[0].mxu0
    %555 = vmatprep.mubr.bf16.mxu0 %v260
    %556 = vmatmul.mubr.bf16.gmra.mrb[0].mxu0 %v259
    %v557 = vpop.f32.mrb[0].mxu0
    %v558 = vadd.f32 0.0, %v557
    %v559 = vpop.f32.mrb[0].mxu0
    %v560 = vpop.f32.mrb[0].mxu0
    %v561 = vadd.f32 0.0, %v560
    %v562 = vpop.f32.mrb[0].mxu0
    %563 = vmatprep.mubr.bf16.mxu0 %v264
    %564 = vmatmul.mubr.bf16.gmra.mrb[0].mxu0 %v263
    %v565 = vpop.f32.mrb[0].mxu0
    %v566 = vadd.f32 0.0, %v565
    %v567 = vpop.f32.mrb[0].mxu0
    %v568 = vpop.f32.mrb[0].mxu0
    %v569 = vadd.f32 0.0, %v568
    %v570 = vpop.f32.mrb[0].mxu0
    %571 = vmatprep.mubr.bf16.mxu0 %v268
    %572 = vmatmul.mubr.bf16.gmra.mrb[0].mxu0 %v267
    %v573 = vpop.f32.mrb[0].mxu0
    %v574 = vadd.f32 0.0, %v573
    %v575 = vpop.f32.mrb[0].mxu0
    %v576 = vpop.f32.mrb[0].mxu0
    %v577 = vadd.f32 0.0, %v576
    %v578 = vpop.f32.mrb[0].mxu0
    %579 = vmatprep.mubr.bf16.mxu0 %v272
    %580 = vmatmul.mubr.bf16.gmra.mrb[0].mxu0 %v271
    %v581 = vpop.f32.mrb[0].mxu0
    %v582 = vadd.f32 0.0, %v581
    %v583 = vpop.f32.mrb[0].mxu0
    %v584 = vpop.f32.mrb[0].mxu0
    %v585 = vadd.f32 0.0, %v584
    %v586 = vpop.f32.mrb[0].mxu0
    %587 = vmatprep.mubr.bf16.mxu0 %v276
    %588 = vmatmul.mubr.bf16.gmra.mrb[0].mxu0 %v275
    %v589 = vpop.f32.mrb[0].mxu0
    %v590 = vadd.f32 0.0, %v589
    %v591 = vpop.f32.mrb[0].mxu0
    %v592 = vpop.f32.mrb[0].mxu0
    %v593 = vadd.f32 0.0, %v592
    %v594 = vpop.f32.mrb[0].mxu0
    %595 = vmatprep.mubr.bf16.mxu0 %v280
    %596 = vmatmul.mubr.bf16.gmra.mrb[0].mxu0 %v279
    %v597 = vpop.f32.mrb[0].mxu0
    %v598 = vadd.f32 0.0, %v597
    %v599 = vpop.f32.mrb[0].mxu0
    %v600 = vpop.f32.mrb[0].mxu0
    %v601 = vadd.f32 0.0, %v600
    %v602 = vpop.f32.mrb[0].mxu0
    %603 = vdwg.mxu0
    %604 = vmatprep.subr.bf16.mxu0 0
    %605 = vmatpush1.bf16.msra.mxu0 %v459
    %606 = vmatprep.subr.bf16.mxu0 0
    %607 = vmatpush1.bf16.msra.mxu0 %v460
    %608 = vmatprep.subr.bf16.mxu0 0
    %609 = vmatpush1.bf16.msra.mxu0 %v461
    %610 = vmatprep.subr.bf16.mxu0 0
    %611 = vmatpush1.bf16.msra.mxu0 %v462
    %612 = vmatprep.subr.bf16.mxu0 0
    %613 = vmatpush1.bf16.msra.mxu0 %v463
    %614 = vmatprep.subr.bf16.mxu0 0
    %615 = vmatpush1.bf16.msra.mxu0 %v464
    %616 = vmatprep.subr.bf16.mxu0 0
    %617 = vmatpush1.bf16.msra.mxu0 %v465
    %618 = vmatprep.subr.bf16.mxu0 0
    %619 = vmatpush1.bf16.msra.mxu0 %v466
    %620 = vmatprep.subr.bf16.mxu0 0
    %621 = vmatpush1.bf16.msra.mxu0 %v467
    %622 = vmatprep.subr.bf16.mxu0 0
    %623 = vmatpush1.bf16.msra.mxu0 %v468
    %624 = vmatprep.subr.bf16.mxu0 0
    %625 = vmatpush1.bf16.msra.mxu0 %v469
    %626 = vmatprep.subr.bf16.mxu0 0
    %627 = vmatpush1.bf16.msra.mxu0 %v470
    %628 = vmatprep.subr.bf16.mxu0 0
    %629 = vmatpush1.bf16.msra.mxu0 %v471
    %630 = vmatprep.subr.bf16.mxu0 0
    %631 = vmatpush1.bf16.msra.mxu0 %v472
    %632 = vmatprep.subr.bf16.mxu0 0
    %633 = vmatpush1.bf16.msra.mxu0 %v473
    %634 = vmatprep.subr.bf16.mxu0 0
    %635 = vmatpush1.bf16.msra.mxu0 %v474
    %636 = vmatprep.mubr.bf16.mxu0 %v254
    %637 = vmatmul.mubr.bf16.gmra.mrb[0].mxu0 %v253
    %v638 = vpop.f32.mrb[0].mxu0
    %v639 = vadd.f32 %v542, %v638
    %v640 = vpop.f32.mrb[0].mxu0
    %v641 = vpop.f32.mrb[0].mxu0
    %v642 = vadd.f32 %v545, %v641
    %v643 = vpop.f32.mrb[0].mxu0
    %644 = vmatprep.mubr.bf16.mxu0 %v258
    %645 = vmatmul.mubr.bf16.gmra.mrb[0].mxu0 %v257
    %v646 = vpop.f32.mrb[0].mxu0
    %v647 = vadd.f32 %v550, %v646
    %v648 = vpop.f32.mrb[0].mxu0
    %v649 = vpop.f32.mrb[0].mxu0
    %v650 = vadd.f32 %v553, %v649
    %v651 = vpop.f32.mrb[0].mxu0
    %652 = vmatprep.mubr.bf16.mxu0 %v262
    %653 = vmatmul.mubr.bf16.gmra.mrb[0].mxu0 %v261
    %v654 = vpop.f32.mrb[0].mxu0
    %v655 = vadd.f32 %v558, %v654
    %v656 = vpop.f32.mrb[0].mxu0
    %v657 = vpop.f32.mrb[0].mxu0
    %v658 = vadd.f32 %v561, %v657
    %v659 = vpop.f32.mrb[0].mxu0
    %660 = vmatprep.mubr.bf16.mxu0 %v266
    %661 = vmatmul.mubr.bf16.gmra.mrb[0].mxu0 %v265
    %v662 = vpop.f32.mrb[0].mxu0
    %v663 = vadd.f32 %v566, %v662
    %v664 = vpop.f32.mrb[0].mxu0
    %v665 = vpop.f32.mrb[0].mxu0
    %v666 = vadd.f32 %v569, %v665
    %v667 = vpop.f32.mrb[0].mxu0
    %668 = vmatprep.mubr.bf16.mxu0 %v270
    %669 = vmatmul.mubr.bf16.gmra.mrb[0].mxu0 %v269
    %v670 = vpop.f32.mrb[0].mxu0
    %v671 = vadd.f32 %v574, %v670
    %v672 = vpop.f32.mrb[0].mxu0
    %v673 = vpop.f32.mrb[0].mxu0
    %v674 = vadd.f32 %v577, %v673
    %v675 = vpop.f32.mrb[0].mxu0
    %676 = vmatprep.mubr.bf16.mxu0 %v274
    %677 = vmatmul.mubr.bf16.gmra.mrb[0].mxu0 %v273
    %v678 = vpop.f32.mrb[0].mxu0
    %v679 = vadd.f32 %v582, %v678
    %v680 = vpop.f32.mrb[0].mxu0
    %v681 = vpop.f32.mrb[0].mxu0
    %v682 = vadd.f32 %v585, %v681
    %v683 = vpop.f32.mrb[0].mxu0
    %684 = vmatprep.mubr.bf16.mxu0 %v278
    %685 = vmatmul.mubr.bf16.gmra.mrb[0].mxu0 %v277
    %v686 = vpop.f32.mrb[0].mxu0
    %v687 = vadd.f32 %v590, %v686
    %v688 = vpop.f32.mrb[0].mxu0
    %v689 = vpop.f32.mrb[0].mxu0
    %v690 = vadd.f32 %v593, %v689
    %v691 = vpop.f32.mrb[0].mxu0
    %692 = vmatprep.mubr.bf16.mxu0 %v282
    %693 = vmatmul.mubr.bf16.gmra.mrb[0].mxu0 %v281
    %v694 = vpop.f32.mrb[0].mxu0
    %v695 = vadd.f32 %v598, %v694
    %v696 = vpop.f32.mrb[0].mxu0
    %v697 = vpop.f32.mrb[0].mxu0
    %v698 = vadd.f32 %v601, %v697
    %v699 = vpop.f32.mrb[0].mxu0
    %700 = vdwg.mxu0
    %v701 = vld [vmem:[%s1] sm:$0xff]
    %v702 = vld [vmem:[%s1 + $0x8] sm:$0xff]
    %v703 = vld [vmem:[%s1 + $0x10] sm:$0xff]
    %v704 = vld [vmem:[%s1 + $0x18] sm:$0xff]
    %v705 = vld [vmem:[%s1 + $0x20] sm:$0xff]
    %v706 = vld [vmem:[%s1 + $0x28] sm:$0xff]
    %v707 = vld [vmem:[%s1 + $0x30] sm:$0xff]
    %v708 = vld [vmem:[%s1 + $0x38] sm:$0xff]
    %v709 = vld [vmem:[%s1 + $0x40] sm:$0xff]
    %v710 = vld [vmem:[%s1 + $0x48] sm:$0xff]
    %v711 = vld [vmem:[%s1 + $0x50] sm:$0xff]
    %v712 = vld [vmem:[%s1 + $0x58] sm:$0xff]
    %v713 = vld [vmem:[%s1 + $0x60] sm:$0xff]
    %v714 = vld [vmem:[%s1 + $0x68] sm:$0xff]
    %v715 = vld [vmem:[%s1 + $0x70] sm:$0xff]
    %v716 = vld [vmem:[%s1 + $0x78] sm:$0xff]
    %v717 = vld [vmem:[%s1 + $0x80] sm:$0xff]
    %v718 = vld [vmem:[%s1 + $0x88] sm:$0xff]
    %v719 = vld [vmem:[%s1 + $0x90] sm:$0xff]
    %v720 = vld [vmem:[%s1 + $0x98] sm:$0xff]
    %v721 = vld [vmem:[%s1 + $0xa0] sm:$0xff]
    %v722 = vld [vmem:[%s1 + $0xa8] sm:$0xff]
    %v723 = vld [vmem:[%s1 + $0xb0] sm:$0xff]
    %v724 = vld [vmem:[%s1 + $0xb8] sm:$0xff]
    %v725 = vld [vmem:[%s1 + $0xc0] sm:$0xff]
    %v726 = vld [vmem:[%s1 + $0xc8] sm:$0xff]
    %v727 = vld [vmem:[%s1 + $0xd0] sm:$0xff]
    %v728 = vld [vmem:[%s1 + $0xd8] sm:$0xff]
    %v729 = vld [vmem:[%s1 + $0xe0] sm:$0xff]
    %v730 = vld [vmem:[%s1 + $0xe8] sm:$0xff]
    %v731 = vld [vmem:[%s1 + $0xf0] sm:$0xff]
    %v732 = vld [vmem:[%s1 + $0xf8] sm:$0xff]
    %v765 = vunpack.c.l.b16 %v701
    %v766 = vunpack.c.h.b16 %v701
    %v767 = vunpack.c.l.b16 %v702
    %v768 = vunpack.c.h.b16 %v702
    %v769 = vunpack.c.l.b16 %v703
    %v770 = vunpack.c.h.b16 %v703
    %v771 = vunpack.c.l.b16 %v704
    %v772 = vunpack.c.h.b16 %v704
    %v773 = vunpack.c.l.b16 %v705
    %v774 = vunpack.c.h.b16 %v705
    %v775 = vunpack.c.l.b16 %v706
    %v776 = vunpack.c.h.b16 %v706
    %v777 = vunpack.c.l.b16 %v707
    %v778 = vunpack.c.h.b16 %v707
    %v779 = vunpack.c.l.b16 %v708
    %v780 = vunpack.c.h.b16 %v708
    %v781 = vunpack.c.l.b16 %v709
    %v782 = vunpack.c.h.b16 %v709
    %v783 = vunpack.c.l.b16 %v710
    %v784 = vunpack.c.h.b16 %v710
    %v785 = vunpack.c.l.b16 %v711
    %v786 = vunpack.c.h.b16 %v711
    %v787 = vunpack.c.l.b16 %v712
    %v788 = vunpack.c.h.b16 %v712
    %v789 = vunpack.c.l.b16 %v713
    %v790 = vunpack.c.h.b16 %v713
    %v791 = vunpack.c.l.b16 %v714
    %v792 = vunpack.c.h.b16 %v714
    %v793 = vunpack.c.l.b16 %v715
    %v794 = vunpack.c.h.b16 %v715
    %v795 = vunpack.c.l.b16 %v716
    %v796 = vunpack.c.h.b16 %v716
    %v797 = vunpack.c.l.b16 %v717
    %v798 = vunpack.c.h.b16 %v717
    %v799 = vunpack.c.l.b16 %v718
    %v800 = vunpack.c.h.b16 %v718
    %v801 = vunpack.c.l.b16 %v719
    %v802 = vunpack.c.h.b16 %v719
    %v803 = vunpack.c.l.b16 %v720
    %v804 = vunpack.c.h.b16 %v720
    %v805 = vunpack.c.l.b16 %v721
    %v806 = vunpack.c.h.b16 %v721
    %v807 = vunpack.c.l.b16 %v722
    %v808 = vunpack.c.h.b16 %v722
    %v809 = vunpack.c.l.b16 %v723
    %v810 = vunpack.c.h.b16 %v723
    %v811 = vunpack.c.l.b16 %v724
    %v812 = vunpack.c.h.b16 %v724
    %v813 = vunpack.c.l.b16 %v725
    %v814 = vunpack.c.h.b16 %v725
    %v815 = vunpack.c.l.b16 %v726
    %v816 = vunpack.c.h.b16 %v726
    %v817 = vunpack.c.l.b16 %v727
    %v818 = vunpack.c.h.b16 %v727
    %v819 = vunpack.c.l.b16 %v728
    %v820 = vunpack.c.h.b16 %v728
    %v821 = vunpack.c.l.b16 %v729
    %v822 = vunpack.c.h.b16 %v729
    %v823 = vunpack.c.l.b16 %v730
    %v824 = vunpack.c.h.b16 %v730
    %v825 = vunpack.c.l.b16 %v731
    %v826 = vunpack.c.h.b16 %v731
    %v827 = vunpack.c.l.b16 %v732
    %v828 = vunpack.c.h.b16 %v732
    %v829 = vpack.c.b16 %v769, %v765
    %v830 = vpack.c.b16 %v770, %v766
    %v831 = vpack.c.b16 %v771, %v767
    %v832 = vpack.c.b16 %v772, %v768
    %v833 = vpack.c.b16 %v777, %v773
    %v834 = vpack.c.b16 %v778, %v774
    %v835 = vpack.c.b16 %v779, %v775
    %v836 = vpack.c.b16 %v780, %v776
    %v837 = vpack.c.b16 %v785, %v781
    %v838 = vpack.c.b16 %v786, %v782
    %v839 = vpack.c.b16 %v787, %v783
    %v840 = vpack.c.b16 %v788, %v784
    %v841 = vpack.c.b16 %v793, %v789
    %v842 = vpack.c.b16 %v794, %v790
    %v843 = vpack.c.b16 %v795, %v791
    %v844 = vpack.c.b16 %v796, %v792
    %v845 = vpack.c.b16 %v801, %v797
    %v846 = vpack.c.b16 %v802, %v798
    %v847 = vpack.c.b16 %v803, %v799
    %v848 = vpack.c.b16 %v804, %v800
    %v849 = vpack.c.b16 %v809, %v805
    %v850 = vpack.c.b16 %v810, %v806
    %v851 = vpack.c.b16 %v811, %v807
    %v852 = vpack.c.b16 %v812, %v808
    %v853 = vpack.c.b16 %v817, %v813
    %v854 = vpack.c.b16 %v818, %v814
    %v855 = vpack.c.b16 %v819, %v815
    %v856 = vpack.c.b16 %v820, %v816
    %v857 = vpack.c.b16 %v825, %v821
    %v858 = vpack.c.b16 %v826, %v822
    %v859 = vpack.c.b16 %v827, %v823
    %v860 = vpack.c.b16 %v828, %v824
    %893 = vmatprep.subr.bf16.mxu0 0
    %894 = vmatpush1.bf16.msra.mxu0 %v443
    %895 = vmatprep.subr.bf16.mxu0 0
    %896 = vmatpush1.bf16.msra.mxu0 %v444
    %897 = vmatprep.subr.bf16.mxu0 0
    %898 = vmatpush1.bf16.msra.mxu0 %v445
    %899 = vmatprep.subr.bf16.mxu0 0
    %900 = vmatpush1.bf16.msra.mxu0 %v446
    %901 = vmatprep.subr.bf16.mxu0 0
    %902 = vmatpush1.bf16.msra.mxu0 %v447
    %903 = vmatprep.subr.bf16.mxu0 0
    %904 = vmatpush1.bf16.msra.mxu0 %v448
    %905 = vmatprep.subr.bf16.mxu0 0
    %906 = vmatpush1.bf16.msra.mxu0 %v449
    %907 = vmatprep.subr.bf16.mxu0 0
    %908 = vmatpush1.bf16.msra.mxu0 %v450
    %909 = vmatprep.subr.bf16.mxu0 0
    %910 = vmatpush1.bf16.msra.mxu0 %v451
    %911 = vmatprep.subr.bf16.mxu0 0
    %912 = vmatpush1.bf16.msra.mxu0 %v452
    %913 = vmatprep.subr.bf16.mxu0 0
    %914 = vmatpush1.bf16.msra.mxu0 %v453
    %915 = vmatprep.subr.bf16.mxu0 0
    %916 = vmatpush1.bf16.msra.mxu0 %v454
    %917 = vmatprep.subr.bf16.mxu0 0
    %918 = vmatpush1.bf16.msra.mxu0 %v455
    %919 = vmatprep.subr.bf16.mxu0 0
    %920 = vmatpush1.bf16.msra.mxu0 %v456
    %921 = vmatprep.subr.bf16.mxu0 0
    %922 = vmatpush1.bf16.msra.mxu0 %v457
    %923 = vmatprep.subr.bf16.mxu0 0
    %924 = vmatpush1.bf16.msra.mxu0 %v458
    %925 = vmatprep.mubr.bf16.mxu0 %v830
    %926 = vmatmul.mubr.bf16.gmra.mrb[0].mxu0 %v829
    %v927 = vpop.f32.mrb[0].mxu0
    %v928 = vadd.f32 0.0, %v927
    %v929 = vpop.f32.mrb[0].mxu0
    %v930 = vpop.f32.mrb[0].mxu0
    %v931 = vadd.f32 0.0, %v930
    %v932 = vpop.f32.mrb[0].mxu0
    %933 = vmatprep.mubr.bf16.mxu0 %v834
    %934 = vmatmul.mubr.bf16.gmra.mrb[0].mxu0 %v833
    %v935 = vpop.f32.mrb[0].mxu0
    %v936 = vadd.f32 0.0, %v935
    %v937 = vpop.f32.mrb[0].mxu0
    %v938 = vpop.f32.mrb[0].mxu0
    %v939 = vadd.f32 0.0, %v938
    %v940 = vpop.f32.mrb[0].mxu0
    %941 = vmatprep.mubr.bf16.mxu0 %v838
    %942 = vmatmul.mubr.bf16.gmra.mrb[0].mxu0 %v837
    %v943 = vpop.f32.mrb[0].mxu0
    %v944 = vadd.f32 0.0, %v943
    %v945 = vpop.f32.mrb[0].mxu0
    %v946 = vpop.f32.mrb[0].mxu0
    %v947 = vadd.f32 0.0, %v946
    %v948 = vpop.f32.mrb[0].mxu0
    %949 = vmatprep.mubr.bf16.mxu0 %v842
    %950 = vmatmul.mubr.bf16.gmra.mrb[0].mxu0 %v841
    %v951 = vpop.f32.mrb[0].mxu0
    %v952 = vadd.f32 0.0, %v951
    %v953 = vpop.f32.mrb[0].mxu0
    %v954 = vpop.f32.mrb[0].mxu0
    %v955 = vadd.f32 0.0, %v954
    %v956 = vpop.f32.mrb[0].mxu0
    %957 = vmatprep.mubr.bf16.mxu0 %v846
    %958 = vmatmul.mubr.bf16.gmra.mrb[0].mxu0 %v845
    %v959 = vpop.f32.mrb[0].mxu0
    %v960 = vadd.f32 0.0, %v959
    %v961 = vpop.f32.mrb[0].mxu0
    %v962 = vpop.f32.mrb[0].mxu0
    %v963 = vadd.f32 0.0, %v962
    %v964 = vpop.f32.mrb[0].mxu0
    %965 = vmatprep.mubr.bf16.mxu0 %v850
    %966 = vmatmul.mubr.bf16.gmra.mrb[0].mxu0 %v849
    %v967 = vpop.f32.mrb[0].mxu0
    %v968 = vadd.f32 0.0, %v967
    %v969 = vpop.f32.mrb[0].mxu0
    %v970 = vpop.f32.mrb[0].mxu0
    %v971 = vadd.f32 0.0, %v970
    %v972 = vpop.f32.mrb[0].mxu0
    %973 = vmatprep.mubr.bf16.mxu0 %v854
    %974 = vmatmul.mubr.bf16.gmra.mrb[0].mxu0 %v853
    %v975 = vpop.f32.mrb[0].mxu0
    %v976 = vadd.f32 0.0, %v975
    %v977 = vpop.f32.mrb[0].mxu0
    %v978 = vpop.f32.mrb[0].mxu0
    %v979 = vadd.f32 0.0, %v978
    %v980 = vpop.f32.mrb[0].mxu0
    %981 = vmatprep.mubr.bf16.mxu0 %v858
    %982 = vmatmul.mubr.bf16.gmra.mrb[0].mxu0 %v857
    %v983 = vpop.f32.mrb[0].mxu0
    %v984 = vadd.f32 0.0, %v983
    %v985 = vpop.f32.mrb[0].mxu0
    %v986 = vpop.f32.mrb[0].mxu0
    %v987 = vadd.f32 0.0, %v986
    %v988 = vpop.f32.mrb[0].mxu0
    %989 = vdwg.mxu0
    %990 = vmatprep.subr.bf16.mxu0 0
    %991 = vmatpush1.bf16.msra.mxu0 %v459
    %992 = vmatprep.subr.bf16.mxu0 0
    %993 = vmatpush1.bf16.msra.mxu0 %v460
    %994 = vmatprep.subr.bf16.mxu0 0
    %995 = vmatpush1.bf16.msra.mxu0 %v461
    %996 = vmatprep.subr.bf16.mxu0 0
    %997 = vmatpush1.bf16.msra.mxu0 %v462
    %998 = vmatprep.subr.bf16.mxu0 0
    %999 = vmatpush1.bf16.msra.mxu0 %v463
    %1000 = vmatprep.subr.bf16.mxu0 0
    %1001 = vmatpush1.bf16.msra.mxu0 %v464
    %1002 = vmatprep.subr.bf16.mxu0 0
    %1003 = vmatpush1.bf16.msra.mxu0 %v465
    %1004 = vmatprep.subr.bf16.mxu0 0
    %1005 = vmatpush1.bf16.msra.mxu0 %v466
    %1006 = vmatprep.subr.bf16.mxu0 0
    %1007 = vmatpush1.bf16.msra.mxu0 %v467
    %1008 = vmatprep.subr.bf16.mxu0 0
    %1009 = vmatpush1.bf16.msra.mxu0 %v468
    %1010 = vmatprep.subr.bf16.mxu0 0
    %1011 = vmatpush1.bf16.msra.mxu0 %v469
    %1012 = vmatprep.subr.bf16.mxu0 0
    %1013 = vmatpush1.bf16.msra.mxu0 %v470
    %1014 = vmatprep.subr.bf16.mxu0 0
    %1015 = vmatpush1.bf16.msra.mxu0 %v471
    %1016 = vmatprep.subr.bf16.mxu0 0
    %1017 = vmatpush1.bf16.msra.mxu0 %v472
    %1018 = vmatprep.subr.bf16.mxu0 0
    %1019 = vmatpush1.bf16.msra.mxu0 %v473
    %1020 = vmatprep.subr.bf16.mxu0 0
    %1021 = vmatpush1.bf16.msra.mxu0 %v474
    %1022 = vmatprep.mubr.bf16.mxu0 %v832
    %1023 = vmatmul.mubr.bf16.gmra.mrb[0].mxu0 %v831
    %v1024 = vpop.f32.mrb[0].mxu0
    %v1025 = vadd.f32 %v928, %v1024
    %v1026 = vpop.f32.mrb[0].mxu0
    %v1027 = vpop.f32.mrb[0].mxu0
    %v1028 = vadd.f32 %v931, %v1027
    %v1029 = vpop.f32.mrb[0].mxu0
    %1030 = vmatprep.mubr.bf16.mxu0 %v836
    %1031 = vmatmul.mubr.bf16.gmra.mrb[0].mxu0 %v835
    %v1032 = vpop.f32.mrb[0].mxu0
    %v1033 = vadd.f32 %v936, %v1032
    %v1034 = vpop.f32.mrb[0].mxu0
    %v1035 = vpop.f32.mrb[0].mxu0
    %v1036 = vadd.f32 %v939, %v1035
    %v1037 = vpop.f32.mrb[0].mxu0
    %1038 = vmatprep.mubr.bf16.mxu0 %v840
    %1039 = vmatmul.mubr.bf16.gmra.mrb[0].mxu0 %v839
    %v1040 = vpop.f32.mrb[0].mxu0
    %v1041 = vadd.f32 %v944, %v1040
    %v1042 = vpop.f32.mrb[0].mxu0
    %v1043 = vpop.f32.mrb[0].mxu0
    %v1044 = vadd.f32 %v947, %v1043
    %v1045 = vpop.f32.mrb[0].mxu0
    %1046 = vmatprep.mubr.bf16.mxu0 %v844
    %1047 = vmatmul.mubr.bf16.gmra.mrb[0].mxu0 %v843
    %v1048 = vpop.f32.mrb[0].mxu0
    %v1049 = vadd.f32 %v952, %v1048
    %v1050 = vpop.f32.mrb[0].mxu0
    %v1051 = vpop.f32.mrb[0].mxu0
    %v1052 = vadd.f32 %v955, %v1051
    %v1053 = vpop.f32.mrb[0].mxu0
    %1054 = vmatprep.mubr.bf16.mxu0 %v848
    %1055 = vmatmul.mubr.bf16.gmra.mrb[0].mxu0 %v847
    %v1056 = vpop.f32.mrb[0].mxu0
    %v1057 = vadd.f32 %v960, %v1056
    %v1058 = vpop.f32.mrb[0].mxu0
    %v1059 = vpop.f32.mrb[0].mxu0
    %v1060 = vadd.f32 %v963, %v1059
    %v1061 = vpop.f32.mrb[0].mxu0
    %1062 = vmatprep.mubr.bf16.mxu0 %v852
    %1063 = vmatmul.mubr.bf16.gmra.mrb[0].mxu0 %v851
    %v1064 = vpop.f32.mrb[0].mxu0
    %v1065 = vadd.f32 %v968, %v1064
    %v1066 = vpop.f32.mrb[0].mxu0
    %v1067 = vpop.f32.mrb[0].mxu0
    %v1068 = vadd.f32 %v971, %v1067
    %v1069 = vpop.f32.mrb[0].mxu0
    %1070 = vmatprep.mubr.bf16.mxu0 %v856
    %1071 = vmatmul.mubr.bf16.gmra.mrb[0].mxu0 %v855
    %v1072 = vpop.f32.mrb[0].mxu0
    %v1073 = vadd.f32 %v976, %v1072
    %v1074 = vpop.f32.mrb[0].mxu0
    %v1075 = vpop.f32.mrb[0].mxu0
    %v1076 = vadd.f32 %v979, %v1075
    %v1077 = vpop.f32.mrb[0].mxu0
    %1078 = vmatprep.mubr.bf16.mxu0 %v860
    %1079 = vmatmul.mubr.bf16.gmra.mrb[0].mxu0 %v859
    %v1080 = vpop.f32.mrb[0].mxu0
    %v1081 = vadd.f32 %v984, %v1080
    %v1082 = vpop.f32.mrb[0].mxu0
    %v1083 = vpop.f32.mrb[0].mxu0
    %v1084 = vadd.f32 %v987, %v1083
    %v1085 = vpop.f32.mrb[0].mxu0
    %1086 = vdwg.mxu0
    %v1087 = vld [vmem:[%s2] sm:$0xff]
    %v1088 = vld [vmem:[%s2 + $0x8] sm:$0xff]
    %v1089 = vld [vmem:[%s2 + $0x10] sm:$0xff]
    %v1090 = vld [vmem:[%s2 + $0x18] sm:$0xff]
    %v1091 = vld [vmem:[%s2 + $0x20] sm:$0xff]
    %v1092 = vld [vmem:[%s2 + $0x28] sm:$0xff]
    %v1093 = vld [vmem:[%s2 + $0x30] sm:$0xff]
    %v1094 = vld [vmem:[%s2 + $0x38] sm:$0xff]
    %v1095 = vld [vmem:[%s2 + $0x40] sm:$0xff]
    %v1096 = vld [vmem:[%s2 + $0x48] sm:$0xff]
    %v1097 = vld [vmem:[%s2 + $0x50] sm:$0xff]
    %v1098 = vld [vmem:[%s2 + $0x58] sm:$0xff]
    %v1099 = vld [vmem:[%s2 + $0x60] sm:$0xff]
    %v1100 = vld [vmem:[%s2 + $0x68] sm:$0xff]
    %v1101 = vld [vmem:[%s2 + $0x70] sm:$0xff]
    %v1102 = vld [vmem:[%s2 + $0x78] sm:$0xff]
    %v1103 = vld [vmem:[%s2 + $0x80] sm:$0xff]
    %v1104 = vld [vmem:[%s2 + $0x88] sm:$0xff]
    %v1105 = vld [vmem:[%s2 + $0x90] sm:$0xff]
    %v1106 = vld [vmem:[%s2 + $0x98] sm:$0xff]
    %v1107 = vld [vmem:[%s2 + $0xa0] sm:$0xff]
    %v1108 = vld [vmem:[%s2 + $0xa8] sm:$0xff]
    %v1109 = vld [vmem:[%s2 + $0xb0] sm:$0xff]
    %v1110 = vld [vmem:[%s2 + $0xb8] sm:$0xff]
    %v1111 = vld [vmem:[%s2 + $0xc0] sm:$0xff]
    %v1112 = vld [vmem:[%s2 + $0xc8] sm:$0xff]
    %v1113 = vld [vmem:[%s2 + $0xd0] sm:$0xff]
    %v1114 = vld [vmem:[%s2 + $0xd8] sm:$0xff]
    %v1115 = vld [vmem:[%s2 + $0xe0] sm:$0xff]
    %v1116 = vld [vmem:[%s2 + $0xe8] sm:$0xff]
    %v1117 = vld [vmem:[%s2 + $0xf0] sm:$0xff]
    %v1118 = vld [vmem:[%s2 + $0xf8] sm:$0xff]
    %v1151 = vunpack.c.l.b16 %v1087
    %v1152 = vunpack.c.h.b16 %v1087
    %v1153 = vunpack.c.l.b16 %v1088
    %v1154 = vunpack.c.h.b16 %v1088
    %v1155 = vunpack.c.l.b16 %v1089
    %v1156 = vunpack.c.h.b16 %v1089
    %v1157 = vunpack.c.l.b16 %v1090
    %v1158 = vunpack.c.h.b16 %v1090
    %v1159 = vunpack.c.l.b16 %v1091
    %v1160 = vunpack.c.h.b16 %v1091
    %v1161 = vunpack.c.l.b16 %v1092
    %v1162 = vunpack.c.h.b16 %v1092
    %v1163 = vunpack.c.l.b16 %v1093
    %v1164 = vunpack.c.h.b16 %v1093
    %v1165 = vunpack.c.l.b16 %v1094
    %v1166 = vunpack.c.h.b16 %v1094
    %v1167 = vunpack.c.l.b16 %v1095
    %v1168 = vunpack.c.h.b16 %v1095
    %v1169 = vunpack.c.l.b16 %v1096
    %v1170 = vunpack.c.h.b16 %v1096
    %v1171 = vunpack.c.l.b16 %v1097
    %v1172 = vunpack.c.h.b16 %v1097
    %v1173 = vunpack.c.l.b16 %v1098
    %v1174 = vunpack.c.h.b16 %v1098
    %v1175 = vunpack.c.l.b16 %v1099
    %v1176 = vunpack.c.h.b16 %v1099
    %v1177 = vunpack.c.l.b16 %v1100
    %v1178 = vunpack.c.h.b16 %v1100
    %v1179 = vunpack.c.l.b16 %v1101
    %v1180 = vunpack.c.h.b16 %v1101
    %v1181 = vunpack.c.l.b16 %v1102
    %v1182 = vunpack.c.h.b16 %v1102
    %v1183 = vunpack.c.l.b16 %v1103
    %v1184 = vunpack.c.h.b16 %v1103
    %v1185 = vunpack.c.l.b16 %v1104
    %v1186 = vunpack.c.h.b16 %v1104
    %v1187 = vunpack.c.l.b16 %v1105
    %v1188 = vunpack.c.h.b16 %v1105
    %v1189 = vunpack.c.l.b16 %v1106
    %v1190 = vunpack.c.h.b16 %v1106
    %v1191 = vunpack.c.l.b16 %v1107
    %v1192 = vunpack.c.h.b16 %v1107
    %v1193 = vunpack.c.l.b16 %v1108
    %v1194 = vunpack.c.h.b16 %v1108
    %v1195 = vunpack.c.l.b16 %v1109
    %v1196 = vunpack.c.h.b16 %v1109
    %v1197 = vunpack.c.l.b16 %v1110
    %v1198 = vunpack.c.h.b16 %v1110
    %v1199 = vunpack.c.l.b16 %v1111
    %v1200 = vunpack.c.h.b16 %v1111
    %v1201 = vunpack.c.l.b16 %v1112
    %v1202 = vunpack.c.h.b16 %v1112
    %v1203 = vunpack.c.l.b16 %v1113
    %v1204 = vunpack.c.h.b16 %v1113
    %v1205 = vunpack.c.l.b16 %v1114
    %v1206 = vunpack.c.h.b16 %v1114
    %v1207 = vunpack.c.l.b16 %v1115
    %v1208 = vunpack.c.h.b16 %v1115
    %v1209 = vunpack.c.l.b16 %v1116
    %v1210 = vunpack.c.h.b16 %v1116
    %v1211 = vunpack.c.l.b16 %v1117
    %v1212 = vunpack.c.h.b16 %v1117
    %v1213 = vunpack.c.l.b16 %v1118
    %v1214 = vunpack.c.h.b16 %v1118
    %v1215 = vpack.c.b16 %v1155, %v1151
    %v1216 = vpack.c.b16 %v1156, %v1152
    %v1217 = vpack.c.b16 %v1157, %v1153
    %v1218 = vpack.c.b16 %v1158, %v1154
    %v1219 = vpack.c.b16 %v1163, %v1159
    %v1220 = vpack.c.b16 %v1164, %v1160
    %v1221 = vpack.c.b16 %v1165, %v1161
    %v1222 = vpack.c.b16 %v1166, %v1162
    %v1223 = vpack.c.b16 %v1171, %v1167
    %v1224 = vpack.c.b16 %v1172, %v1168
    %v1225 = vpack.c.b16 %v1173, %v1169
    %v1226 = vpack.c.b16 %v1174, %v1170
    %v1227 = vpack.c.b16 %v1179, %v1175
    %v1228 = vpack.c.b16 %v1180, %v1176
    %v1229 = vpack.c.b16 %v1181, %v1177
    %v1230 = vpack.c.b16 %v1182, %v1178
    %v1231 = vpack.c.b16 %v1187, %v1183
    %v1232 = vpack.c.b16 %v1188, %v1184
    %v1233 = vpack.c.b16 %v1189, %v1185
    %v1234 = vpack.c.b16 %v1190, %v1186
    %v1235 = vpack.c.b16 %v1195, %v1191
    %v1236 = vpack.c.b16 %v1196, %v1192
    %v1237 = vpack.c.b16 %v1197, %v1193
    %v1238 = vpack.c.b16 %v1198, %v1194
    %v1239 = vpack.c.b16 %v1203, %v1199
    %v1240 = vpack.c.b16 %v1204, %v1200
    %v1241 = vpack.c.b16 %v1205, %v1201
    %v1242 = vpack.c.b16 %v1206, %v1202
    %v1243 = vpack.c.b16 %v1211, %v1207
    %v1244 = vpack.c.b16 %v1212, %v1208
    %v1245 = vpack.c.b16 %v1213, %v1209
    %v1246 = vpack.c.b16 %v1214, %v1210
    %1279 = vmatprep.subr.bf16.mxu0 0
    %1280 = vmatpush1.bf16.msra.mxu0 %v443
    %1281 = vmatprep.subr.bf16.mxu0 0
    %1282 = vmatpush1.bf16.msra.mxu0 %v444
    %1283 = vmatprep.subr.bf16.mxu0 0
    %1284 = vmatpush1.bf16.msra.mxu0 %v445
    %1285 = vmatprep.subr.bf16.mxu0 0
    %1286 = vmatpush1.bf16.msra.mxu0 %v446
    %1287 = vmatprep.subr.bf16.mxu0 0
    %1288 = vmatpush1.bf16.msra.mxu0 %v447
    %1289 = vmatprep.subr.bf16.mxu0 0
    %1290 = vmatpush1.bf16.msra.mxu0 %v448
    %1291 = vmatprep.subr.bf16.mxu0 0
    %1292 = vmatpush1.bf16.msra.mxu0 %v449
    %1293 = vmatprep.subr.bf16.mxu0 0
    %1294 = vmatpush1.bf16.msra.mxu0 %v450
    %1295 = vmatprep.subr.bf16.mxu0 0
    %1296 = vmatpush1.bf16.msra.mxu0 %v451
    %1297 = vmatprep.subr.bf16.mxu0 0
    %1298 = vmatpush1.bf16.msra.mxu0 %v452
    %1299 = vmatprep.subr.bf16.mxu0 0
    %1300 = vmatpush1.bf16.msra.mxu0 %v453
    %1301 = vmatprep.subr.bf16.mxu0 0
    %1302 = vmatpush1.bf16.msra.mxu0 %v454
    %1303 = vmatprep.subr.bf16.mxu0 0
    %1304 = vmatpush1.bf16.msra.mxu0 %v455
    %1305 = vmatprep.subr.bf16.mxu0 0
    %1306 = vmatpush1.bf16.msra.mxu0 %v456
    %1307 = vmatprep.subr.bf16.mxu0 0
    %1308 = vmatpush1.bf16.msra.mxu0 %v457
    %1309 = vmatprep.subr.bf16.mxu0 0
    %1310 = vmatpush1.bf16.msra.mxu0 %v458
    %1311 = vmatprep.mubr.bf16.mxu0 %v1216
    %1312 = vmatmul.mubr.bf16.gmra.mrb[0].mxu0 %v1215
    %v1313 = vpop.f32.mrb[0].mxu0
    %v1314 = vadd.f32 0.0, %v1313
    %v1315 = vpop.f32.mrb[0].mxu0
    %v1316 = vpop.f32.mrb[0].mxu0
    %v1317 = vadd.f32 0.0, %v1316
    %v1318 = vpop.f32.mrb[0].mxu0
    %1319 = vmatprep.mubr.bf16.mxu0 %v1220
    %1320 = vmatmul.mubr.bf16.gmra.mrb[0].mxu0 %v1219
    %v1321 = vpop.f32.mrb[0].mxu0
    %v1322 = vadd.f32 0.0, %v1321
    %v1323 = vpop.f32.mrb[0].mxu0
    %v1324 = vpop.f32.mrb[0].mxu0
    %v1325 = vadd.f32 0.0, %v1324
    %v1326 = vpop.f32.mrb[0].mxu0
    %1327 = vmatprep.mubr.bf16.mxu0 %v1224
    %1328 = vmatmul.mubr.bf16.gmra.mrb[0].mxu0 %v1223
    %v1329 = vpop.f32.mrb[0].mxu0
    %v1330 = vadd.f32 0.0, %v1329
    %v1331 = vpop.f32.mrb[0].mxu0
    %v1332 = vpop.f32.mrb[0].mxu0
    %v1333 = vadd.f32 0.0, %v1332
    %v1334 = vpop.f32.mrb[0].mxu0
    %1335 = vmatprep.mubr.bf16.mxu0 %v1228
    %1336 = vmatmul.mubr.bf16.gmra.mrb[0].mxu0 %v1227
    %v1337 = vpop.f32.mrb[0].mxu0
    %v1338 = vadd.f32 0.0, %v1337
    %v1339 = vpop.f32.mrb[0].mxu0
    %v1340 = vpop.f32.mrb[0].mxu0
    %v1341 = vadd.f32 0.0, %v1340
    %v1342 = vpop.f32.mrb[0].mxu0
    %1343 = vmatprep.mubr.bf16.mxu0 %v1232
    %1344 = vmatmul.mubr.bf16.gmra.mrb[0].mxu0 %v1231
    %v1345 = vpop.f32.mrb[0].mxu0
    %v1346 = vadd.f32 0.0, %v1345
    %v1347 = vpop.f32.mrb[0].mxu0
    %v1348 = vpop.f32.mrb[0].mxu0
    %v1349 = vadd.f32 0.0, %v1348
    %v1350 = vpop.f32.mrb[0].mxu0
    %1351 = vmatprep.mubr.bf16.mxu0 %v1236
    %1352 = vmatmul.mubr.bf16.gmra.mrb[0].mxu0 %v1235
    %v1353 = vpop.f32.mrb[0].mxu0
    %v1354 = vadd.f32 0.0, %v1353
    %v1355 = vpop.f32.mrb[0].mxu0
    %v1356 = vpop.f32.mrb[0].mxu0
    %v1357 = vadd.f32 0.0, %v1356
    %v1358 = vpop.f32.mrb[0].mxu0
    %1359 = vmatprep.mubr.bf16.mxu0 %v1240
    %1360 = vmatmul.mubr.bf16.gmra.mrb[0].mxu0 %v1239
    %v1361 = vpop.f32.mrb[0].mxu0
    %v1362 = vadd.f32 0.0, %v1361
    %v1363 = vpop.f32.mrb[0].mxu0
    %v1364 = vpop.f32.mrb[0].mxu0
    %v1365 = vadd.f32 0.0, %v1364
    %v1366 = vpop.f32.mrb[0].mxu0
    %1367 = vmatprep.mubr.bf16.mxu0 %v1244
    %1368 = vmatmul.mubr.bf16.gmra.mrb[0].mxu0 %v1243
    %v1369 = vpop.f32.mrb[0].mxu0
    %v1370 = vadd.f32 0.0, %v1369
    %v1371 = vpop.f32.mrb[0].mxu0
    %v1372 = vpop.f32.mrb[0].mxu0
    %v1373 = vadd.f32 0.0, %v1372
    %v1374 = vpop.f32.mrb[0].mxu0
    %1375 = vdwg.mxu0
    %1376 = vmatprep.subr.bf16.mxu0 0
    %1377 = vmatpush1.bf16.msra.mxu0 %v459
    %1378 = vmatprep.subr.bf16.mxu0 0
    %1379 = vmatpush1.bf16.msra.mxu0 %v460
    %1380 = vmatprep.subr.bf16.mxu0 0
    %1381 = vmatpush1.bf16.msra.mxu0 %v461
    %1382 = vmatprep.subr.bf16.mxu0 0
    %1383 = vmatpush1.bf16.msra.mxu0 %v462
    %1384 = vmatprep.subr.bf16.mxu0 0
    %1385 = vmatpush1.bf16.msra.mxu0 %v463
    %1386 = vmatprep.subr.bf16.mxu0 0
    %1387 = vmatpush1.bf16.msra.mxu0 %v464
    %1388 = vmatprep.subr.bf16.mxu0 0
    %1389 = vmatpush1.bf16.msra.mxu0 %v465
    %1390 = vmatprep.subr.bf16.mxu0 0
    %1391 = vmatpush1.bf16.msra.mxu0 %v466
    %1392 = vmatprep.subr.bf16.mxu0 0
    %1393 = vmatpush1.bf16.msra.mxu0 %v467
    %1394 = vmatprep.subr.bf16.mxu0 0
    %1395 = vmatpush1.bf16.msra.mxu0 %v468
    %1396 = vmatprep.subr.bf16.mxu0 0
    %1397 = vmatpush1.bf16.msra.mxu0 %v469
    %1398 = vmatprep.subr.bf16.mxu0 0
    %1399 = vmatpush1.bf16.msra.mxu0 %v470
    %1400 = vmatprep.subr.bf16.mxu0 0
    %1401 = vmatpush1.bf16.msra.mxu0 %v471
    %1402 = vmatprep.subr.bf16.mxu0 0
    %1403 = vmatpush1.bf16.msra.mxu0 %v472
    %1404 = vmatprep.subr.bf16.mxu0 0
    %1405 = vmatpush1.bf16.msra.mxu0 %v473
    %1406 = vmatprep.subr.bf16.mxu0 0
    %1407 = vmatpush1.bf16.msra.mxu0 %v474
    %1408 = vmatprep.mubr.bf16.mxu0 %v1218
    %1409 = vmatmul.mubr.bf16.gmra.mrb[0].mxu0 %v1217
    %v1410 = vpop.f32.mrb[0].mxu0
    %v1411 = vadd.f32 %v1314, %v1410
    %v1412 = vpop.f32.mrb[0].mxu0
    %v1413 = vpop.f32.mrb[0].mxu0
    %v1414 = vadd.f32 %v1317, %v1413
    %v1415 = vpop.f32.mrb[0].mxu0
    %1416 = vmatprep.mubr.bf16.mxu0 %v1222
    %1417 = vmatmul.mubr.bf16.gmra.mrb[0].mxu0 %v1221
    %v1418 = vpop.f32.mrb[0].mxu0
    %v1419 = vadd.f32 %v1322, %v1418
    %v1420 = vpop.f32.mrb[0].mxu0
    %v1421 = vpop.f32.mrb[0].mxu0
    %v1422 = vadd.f32 %v1325, %v1421
    %v1423 = vpop.f32.mrb[0].mxu0
    %1424 = vmatprep.mubr.bf16.mxu0 %v1226
    %1425 = vmatmul.mubr.bf16.gmra.mrb[0].mxu0 %v1225
    %v1426 = vpop.f32.mrb[0].mxu0
    %v1427 = vadd.f32 %v1330, %v1426
    %v1428 = vpop.f32.mrb[0].mxu0
    %v1429 = vpop.f32.mrb[0].mxu0
    %v1430 = vadd.f32 %v1333, %v1429
    %v1431 = vpop.f32.mrb[0].mxu0
    %1432 = vmatprep.mubr.bf16.mxu0 %v1230
    %1433 = vmatmul.mubr.bf16.gmra.mrb[0].mxu0 %v1229
    %v1434 = vpop.f32.mrb[0].mxu0
    %v1435 = vadd.f32 %v1338, %v1434
    %v1436 = vpop.f32.mrb[0].mxu0
    %v1437 = vpop.f32.mrb[0].mxu0
    %v1438 = vadd.f32 %v1341, %v1437
    %v1439 = vpop.f32.mrb[0].mxu0
    %1440 = vmatprep.mubr.bf16.mxu0 %v1234
    %1441 = vmatmul.mubr.bf16.gmra.mrb[0].mxu0 %v1233
    %v1442 = vpop.f32.mrb[0].mxu0
    %v1443 = vadd.f32 %v1346, %v1442
    %v1444 = vpop.f32.mrb[0].mxu0
    %v1445 = vpop.f32.mrb[0].mxu0
    %v1446 = vadd.f32 %v1349, %v1445
    %v1447 = vpop.f32.mrb[0].mxu0
    %1448 = vmatprep.mubr.bf16.mxu0 %v1238
    %1449 = vmatmul.mubr.bf16.gmra.mrb[0].mxu0 %v1237
    %v1450 = vpop.f32.mrb[0].mxu0
    %v1451 = vadd.f32 %v1354, %v1450
    %v1452 = vpop.f32.mrb[0].mxu0
    %v1453 = vpop.f32.mrb[0].mxu0
    %v1454 = vadd.f32 %v1357, %v1453
    %v1455 = vpop.f32.mrb[0].mxu0
    %1456 = vmatprep.mubr.bf16.mxu0 %v1242
    %1457 = vmatmul.mubr.bf16.gmra.mrb[0].mxu0 %v1241
    %v1458 = vpop.f32.mrb[0].mxu0
    %v1459 = vadd.f32 %v1362, %v1458
    %v1460 = vpop.f32.mrb[0].mxu0
    %v1461 = vpop.f32.mrb[0].mxu0
    %v1462 = vadd.f32 %v1365, %v1461
    %v1463 = vpop.f32.mrb[0].mxu0
    %1464 = vmatprep.mubr.bf16.mxu0 %v1246
    %1465 = vmatmul.mubr.bf16.gmra.mrb[0].mxu0 %v1245
    %v1466 = vpop.f32.mrb[0].mxu0
    %v1467 = vadd.f32 %v1370, %v1466
    %v1468 = vpop.f32.mrb[0].mxu0
    %v1469 = vpop.f32.mrb[0].mxu0
    %v1470 = vadd.f32 %v1373, %v1469
    %v1471 = vpop.f32.mrb[0].mxu0
    %1472 = vdwg.mxu0
    %v1473 = vld [vmem:[%s3] sm:$0xff]
    %v1474 = vld [vmem:[%s3 + $0x8] sm:$0xff]
    %v1475 = vld [vmem:[%s3 + $0x10] sm:$0xff]
    %v1476 = vld [vmem:[%s3 + $0x18] sm:$0xff]
    %v1477 = vld [vmem:[%s3 + $0x20] sm:$0xff]
    %v1478 = vld [vmem:[%s3 + $0x28] sm:$0xff]
    %v1479 = vld [vmem:[%s3 + $0x30] sm:$0xff]
    %v1480 = vld [vmem:[%s3 + $0x38] sm:$0xff]
    %v1481 = vld [vmem:[%s3 + $0x40] sm:$0xff]
    %v1482 = vld [vmem:[%s3 + $0x48] sm:$0xff]
    %v1483 = vld [vmem:[%s3 + $0x50] sm:$0xff]
    %v1484 = vld [vmem:[%s3 + $0x58] sm:$0xff]
    %v1485 = vld [vmem:[%s3 + $0x60] sm:$0xff]
    %v1486 = vld [vmem:[%s3 + $0x68] sm:$0xff]
    %v1487 = vld [vmem:[%s3 + $0x70] sm:$0xff]
    %v1488 = vld [vmem:[%s3 + $0x78] sm:$0xff]
    %v1489 = vld [vmem:[%s3 + $0x80] sm:$0xff]
    %v1490 = vld [vmem:[%s3 + $0x88] sm:$0xff]
    %v1491 = vld [vmem:[%s3 + $0x90] sm:$0xff]
    %v1492 = vld [vmem:[%s3 + $0x98] sm:$0xff]
    %v1493 = vld [vmem:[%s3 + $0xa0] sm:$0xff]
    %v1494 = vld [vmem:[%s3 + $0xa8] sm:$0xff]
    %v1495 = vld [vmem:[%s3 + $0xb0] sm:$0xff]
    %v1496 = vld [vmem:[%s3 + $0xb8] sm:$0xff]
    %v1497 = vld [vmem:[%s3 + $0xc0] sm:$0xff]
    %v1498 = vld [vmem:[%s3 + $0xc8] sm:$0xff]
    %v1499 = vld [vmem:[%s3 + $0xd0] sm:$0xff]
    %v1500 = vld [vmem:[%s3 + $0xd8] sm:$0xff]
    %v1501 = vld [vmem:[%s3 + $0xe0] sm:$0xff]
    %v1502 = vld [vmem:[%s3 + $0xe8] sm:$0xff]
    %v1503 = vld [vmem:[%s3 + $0xf0] sm:$0xff]
    %v1504 = vld [vmem:[%s3 + $0xf8] sm:$0xff]
    %v1537 = vunpack.c.l.b16 %v1473
    %v1538 = vunpack.c.h.b16 %v1473
    %v1539 = vunpack.c.l.b16 %v1474
    %v1540 = vunpack.c.h.b16 %v1474
    %v1541 = vunpack.c.l.b16 %v1475
    %v1542 = vunpack.c.h.b16 %v1475
    %v1543 = vunpack.c.l.b16 %v1476
    %v1544 = vunpack.c.h.b16 %v1476
    %v1545 = vunpack.c.l.b16 %v1477
    %v1546 = vunpack.c.h.b16 %v1477
    %v1547 = vunpack.c.l.b16 %v1478
    %v1548 = vunpack.c.h.b16 %v1478
    %v1549 = vunpack.c.l.b16 %v1479
    %v1550 = vunpack.c.h.b16 %v1479
    %v1551 = vunpack.c.l.b16 %v1480
    %v1552 = vunpack.c.h.b16 %v1480
    %v1553 = vunpack.c.l.b16 %v1481
    %v1554 = vunpack.c.h.b16 %v1481
    %v1555 = vunpack.c.l.b16 %v1482
    %v1556 = vunpack.c.h.b16 %v1482
    %v1557 = vunpack.c.l.b16 %v1483
    %v1558 = vunpack.c.h.b16 %v1483
    %v1559 = vunpack.c.l.b16 %v1484
    %v1560 = vunpack.c.h.b16 %v1484
    %v1561 = vunpack.c.l.b16 %v1485
    %v1562 = vunpack.c.h.b16 %v1485
    %v1563 = vunpack.c.l.b16 %v1486
    %v1564 = vunpack.c.h.b16 %v1486
    %v1565 = vunpack.c.l.b16 %v1487
    %v1566 = vunpack.c.h.b16 %v1487
    %v1567 = vunpack.c.l.b16 %v1488
    %v1568 = vunpack.c.h.b16 %v1488
    %v1569 = vunpack.c.l.b16 %v1489
    %v1570 = vunpack.c.h.b16 %v1489
    %v1571 = vunpack.c.l.b16 %v1490
    %v1572 = vunpack.c.h.b16 %v1490
    %v1573 = vunpack.c.l.b16 %v1491
    %v1574 = vunpack.c.h.b16 %v1491
    %v1575 = vunpack.c.l.b16 %v1492
    %v1576 = vunpack.c.h.b16 %v1492
    %v1577 = vunpack.c.l.b16 %v1493
    %v1578 = vunpack.c.h.b16 %v1493
    %v1579 = vunpack.c.l.b16 %v1494
    %v1580 = vunpack.c.h.b16 %v1494
    %v1581 = vunpack.c.l.b16 %v1495
    %v1582 = vunpack.c.h.b16 %v1495
    %v1583 = vunpack.c.l.b16 %v1496
    %v1584 = vunpack.c.h.b16 %v1496
    %v1585 = vunpack.c.l.b16 %v1497
    %v1586 = vunpack.c.h.b16 %v1497
    %v1587 = vunpack.c.l.b16 %v1498
    %v1588 = vunpack.c.h.b16 %v1498
    %v1589 = vunpack.c.l.b16 %v1499
    %v1590 = vunpack.c.h.b16 %v1499
    %v1591 = vunpack.c.l.b16 %v1500
    %v1592 = vunpack.c.h.b16 %v1500
    %v1593 = vunpack.c.l.b16 %v1501
    %v1594 = vunpack.c.h.b16 %v1501
    %v1595 = vunpack.c.l.b16 %v1502
    %v1596 = vunpack.c.h.b16 %v1502
    %v1597 = vunpack.c.l.b16 %v1503
    %v1598 = vunpack.c.h.b16 %v1503
    %v1599 = vunpack.c.l.b16 %v1504
    %v1600 = vunpack.c.h.b16 %v1504
    %v1601 = vpack.c.b16 %v1541, %v1537
    %v1602 = vpack.c.b16 %v1542, %v1538
    %v1603 = vpack.c.b16 %v1543, %v1539
    %v1604 = vpack.c.b16 %v1544, %v1540
    %v1605 = vpack.c.b16 %v1549, %v1545
    %v1606 = vpack.c.b16 %v1550, %v1546
    %v1607 = vpack.c.b16 %v1551, %v1547
    %v1608 = vpack.c.b16 %v1552, %v1548
    %v1609 = vpack.c.b16 %v1557, %v1553
    %v1610 = vpack.c.b16 %v1558, %v1554
    %v1611 = vpack.c.b16 %v1559, %v1555
    %v1612 = vpack.c.b16 %v1560, %v1556
    %v1613 = vpack.c.b16 %v1565, %v1561
    %v1614 = vpack.c.b16 %v1566, %v1562
    %v1615 = vpack.c.b16 %v1567, %v1563
    %v1616 = vpack.c.b16 %v1568, %v1564
    %v1617 = vpack.c.b16 %v1573, %v1569
    %v1618 = vpack.c.b16 %v1574, %v1570
    %v1619 = vpack.c.b16 %v1575, %v1571
    %v1620 = vpack.c.b16 %v1576, %v1572
    %v1621 = vpack.c.b16 %v1581, %v1577
    %v1622 = vpack.c.b16 %v1582, %v1578
    %v1623 = vpack.c.b16 %v1583, %v1579
    %v1624 = vpack.c.b16 %v1584, %v1580
    %v1625 = vpack.c.b16 %v1589, %v1585
    %v1626 = vpack.c.b16 %v1590, %v1586
    %v1627 = vpack.c.b16 %v1591, %v1587
    %v1628 = vpack.c.b16 %v1592, %v1588
    %v1629 = vpack.c.b16 %v1597, %v1593
    %v1630 = vpack.c.b16 %v1598, %v1594
    %v1631 = vpack.c.b16 %v1599, %v1595
    %v1632 = vpack.c.b16 %v1600, %v1596
    %1665 = vmatprep.subr.bf16.mxu0 0
    %1666 = vmatpush1.bf16.msra.mxu0 %v443
    %1667 = vmatprep.subr.bf16.mxu0 0
    %1668 = vmatpush1.bf16.msra.mxu0 %v444
    %1669 = vmatprep.subr.bf16.mxu0 0
    %1670 = vmatpush1.bf16.msra.mxu0 %v445
    %1671 = vmatprep.subr.bf16.mxu0 0
    %1672 = vmatpush1.bf16.msra.mxu0 %v446
    %1673 = vmatprep.subr.bf16.mxu0 0
    %1674 = vmatpush1.bf16.msra.mxu0 %v447
    %1675 = vmatprep.subr.bf16.mxu0 0
    %1676 = vmatpush1.bf16.msra.mxu0 %v448
    %1677 = vmatprep.subr.bf16.mxu0 0
    %1678 = vmatpush1.bf16.msra.mxu0 %v449
    %1679 = vmatprep.subr.bf16.mxu0 0
    %1680 = vmatpush1.bf16.msra.mxu0 %v450
    %1681 = vmatprep.subr.bf16.mxu0 0
    %1682 = vmatpush1.bf16.msra.mxu0 %v451
    %1683 = vmatprep.subr.bf16.mxu0 0
    %1684 = vmatpush1.bf16.msra.mxu0 %v452
    %1685 = vmatprep.subr.bf16.mxu0 0
    %1686 = vmatpush1.bf16.msra.mxu0 %v453
    %1687 = vmatprep.subr.bf16.mxu0 0
    %1688 = vmatpush1.bf16.msra.mxu0 %v454
    %1689 = vmatprep.subr.bf16.mxu0 0
    %1690 = vmatpush1.bf16.msra.mxu0 %v455
    %1691 = vmatprep.subr.bf16.mxu0 0
    %1692 = vmatpush1.bf16.msra.mxu0 %v456
    %1693 = vmatprep.subr.bf16.mxu0 0
    %1694 = vmatpush1.bf16.msra.mxu0 %v457
    %1695 = vmatprep.subr.bf16.mxu0 0
    %1696 = vmatpush1.bf16.msra.mxu0 %v458
    %1697 = vmatprep.mubr.bf16.mxu0 %v1602
    %1698 = vmatmul.mubr.bf16.gmra.mrb[0].mxu0 %v1601
    %v1699 = vpop.f32.mrb[0].mxu0
    %v1700 = vadd.f32 0.0, %v1699
    %v1701 = vpop.f32.mrb[0].mxu0
    %v1702 = vpop.f32.mrb[0].mxu0
    %v1703 = vadd.f32 0.0, %v1702
    %v1704 = vpop.f32.mrb[0].mxu0
    %1705 = vmatprep.mubr.bf16.mxu0 %v1606
    %1706 = vmatmul.mubr.bf16.gmra.mrb[0].mxu0 %v1605
    %v1707 = vpop.f32.mrb[0].mxu0
    %v1708 = vadd.f32 0.0, %v1707
    %v1709 = vpop.f32.mrb[0].mxu0
    %v1710 = vpop.f32.mrb[0].mxu0
    %v1711 = vadd.f32 0.0, %v1710
    %v1712 = vpop.f32.mrb[0].mxu0
    %1713 = vmatprep.mubr.bf16.mxu0 %v1610
    %1714 = vmatmul.mubr.bf16.gmra.mrb[0].mxu0 %v1609
    %v1715 = vpop.f32.mrb[0].mxu0
    %v1716 = vadd.f32 0.0, %v1715
    %v1717 = vpop.f32.mrb[0].mxu0
    %v1718 = vpop.f32.mrb[0].mxu0
    %v1719 = vadd.f32 0.0, %v1718
    %v1720 = vpop.f32.mrb[0].mxu0
    %1721 = vmatprep.mubr.bf16.mxu0 %v1614
    %1722 = vmatmul.mubr.bf16.gmra.mrb[0].mxu0 %v1613
    %v1723 = vpop.f32.mrb[0].mxu0
    %v1724 = vadd.f32 0.0, %v1723
    %v1725 = vpop.f32.mrb[0].mxu0
    %v1726 = vpop.f32.mrb[0].mxu0
    %v1727 = vadd.f32 0.0, %v1726
    %v1728 = vpop.f32.mrb[0].mxu0
    %1729 = vmatprep.mubr.bf16.mxu0 %v1618
    %1730 = vmatmul.mubr.bf16.gmra.mrb[0].mxu0 %v1617
    %v1731 = vpop.f32.mrb[0].mxu0
    %v1732 = vadd.f32 0.0, %v1731
    %v1733 = vpop.f32.mrb[0].mxu0
    %v1734 = vpop.f32.mrb[0].mxu0
    %v1735 = vadd.f32 0.0, %v1734
    %v1736 = vpop.f32.mrb[0].mxu0
    %1737 = vmatprep.mubr.bf16.mxu0 %v1622
    %1738 = vmatmul.mubr.bf16.gmra.mrb[0].mxu0 %v1621
    %v1739 = vpop.f32.mrb[0].mxu0
    %v1740 = vadd.f32 0.0, %v1739
    %v1741 = vpop.f32.mrb[0].mxu0
    %v1742 = vpop.f32.mrb[0].mxu0
    %v1743 = vadd.f32 0.0, %v1742
    %v1744 = vpop.f32.mrb[0].mxu0
    %1745 = vmatprep.mubr.bf16.mxu0 %v1626
    %1746 = vmatmul.mubr.bf16.gmra.mrb[0].mxu0 %v1625
    %v1747 = vpop.f32.mrb[0].mxu0
    %v1748 = vadd.f32 0.0, %v1747
    %v1749 = vpop.f32.mrb[0].mxu0
    %v1750 = vpop.f32.mrb[0].mxu0
    %v1751 = vadd.f32 0.0, %v1750
    %v1752 = vpop.f32.mrb[0].mxu0
    %1753 = vmatprep.mubr.bf16.mxu0 %v1630
    %1754 = vmatmul.mubr.bf16.gmra.mrb[0].mxu0 %v1629
    %v1755 = vpop.f32.mrb[0].mxu0
    %v1756 = vadd.f32 0.0, %v1755
    %v1757 = vpop.f32.mrb[0].mxu0
    %v1758 = vpop.f32.mrb[0].mxu0
    %v1759 = vadd.f32 0.0, %v1758
    %v1760 = vpop.f32.mrb[0].mxu0
    %1761 = vdwg.mxu0
    %1762 = vmatprep.subr.bf16.mxu0 0
    %1763 = vmatpush1.bf16.msra.mxu0 %v459
    %1764 = vmatprep.subr.bf16.mxu0 0
    %1765 = vmatpush1.bf16.msra.mxu0 %v460
    %1766 = vmatprep.subr.bf16.mxu0 0
    %1767 = vmatpush1.bf16.msra.mxu0 %v461
    %1768 = vmatprep.subr.bf16.mxu0 0
    %1769 = vmatpush1.bf16.msra.mxu0 %v462
    %1770 = vmatprep.subr.bf16.mxu0 0
    %1771 = vmatpush1.bf16.msra.mxu0 %v463
    %1772 = vmatprep.subr.bf16.mxu0 0
    %1773 = vmatpush1.bf16.msra.mxu0 %v464
    %1774 = vmatprep.subr.bf16.mxu0 0
    %1775 = vmatpush1.bf16.msra.mxu0 %v465
    %1776 = vmatprep.subr.bf16.mxu0 0
    %1777 = vmatpush1.bf16.msra.mxu0 %v466
    %1778 = vmatprep.subr.bf16.mxu0 0
    %1779 = vmatpush1.bf16.msra.mxu0 %v467
    %1780 = vmatprep.subr.bf16.mxu0 0
    %1781 = vmatpush1.bf16.msra.mxu0 %v468
    %1782 = vmatprep.subr.bf16.mxu0 0
    %1783 = vmatpush1.bf16.msra.mxu0 %v469
    %1784 = vmatprep.subr.bf16.mxu0 0
    %1785 = vmatpush1.bf16.msra.mxu0 %v470
    %1786 = vmatprep.subr.bf16.mxu0 0
    %1787 = vmatpush1.bf16.msra.mxu0 %v471
    %1788 = vmatprep.subr.bf16.mxu0 0
    %1789 = vmatpush1.bf16.msra.mxu0 %v472
    %1790 = vmatprep.subr.bf16.mxu0 0
    %1791 = vmatpush1.bf16.msra.mxu0 %v473
    %1792 = vmatprep.subr.bf16.mxu0 0
    %1793 = vmatpush1.bf16.msra.mxu0 %v474
    %1794 = vmatprep.mubr.bf16.mxu0 %v1604
    %1795 = vmatmul.mubr.bf16.gmra.mrb[0].mxu0 %v1603
    %v1796 = vpop.f32.mrb[0].mxu0
    %v1797 = vadd.f32 %v1700, %v1796
    %v1798 = vpop.f32.mrb[0].mxu0
    %v1799 = vpop.f32.mrb[0].mxu0
    %v1800 = vadd.f32 %v1703, %v1799
    %v1801 = vpop.f32.mrb[0].mxu0
    %1802 = vmatprep.mubr.bf16.mxu0 %v1608
    %1803 = vmatmul.mubr.bf16.gmra.mrb[0].mxu0 %v1607
    %v1804 = vpop.f32.mrb[0].mxu0
    %v1805 = vadd.f32 %v1708, %v1804
    %v1806 = vpop.f32.mrb[0].mxu0
    %v1807 = vpop.f32.mrb[0].mxu0
    %v1808 = vadd.f32 %v1711, %v1807
    %v1809 = vpop.f32.mrb[0].mxu0
    %1810 = vmatprep.mubr.bf16.mxu0 %v1612
    %1811 = vmatmul.mubr.bf16.gmra.mrb[0].mxu0 %v1611
    %v1812 = vpop.f32.mrb[0].mxu0
    %v1813 = vadd.f32 %v1716, %v1812
    %v1814 = vpop.f32.mrb[0].mxu0
    %v1815 = vpop.f32.mrb[0].mxu0
    %v1816 = vadd.f32 %v1719, %v1815
    %v1817 = vpop.f32.mrb[0].mxu0
    %1818 = vmatprep.mubr.bf16.mxu0 %v1616
    %1819 = vmatmul.mubr.bf16.gmra.mrb[0].mxu0 %v1615
    %v1820 = vpop.f32.mrb[0].mxu0
    %v1821 = vadd.f32 %v1724, %v1820
    %v1822 = vpop.f32.mrb[0].mxu0
    %v1823 = vpop.f32.mrb[0].mxu0
    %v1824 = vadd.f32 %v1727, %v1823
    %v1825 = vpop.f32.mrb[0].mxu0
    %1826 = vmatprep.mubr.bf16.mxu0 %v1620
    %1827 = vmatmul.mubr.bf16.gmra.mrb[0].mxu0 %v1619
    %v1828 = vpop.f32.mrb[0].mxu0
    %v1829 = vadd.f32 %v1732, %v1828
    %v1830 = vpop.f32.mrb[0].mxu0
    %v1831 = vpop.f32.mrb[0].mxu0
    %v1832 = vadd.f32 %v1735, %v1831
    %v1833 = vpop.f32.mrb[0].mxu0
    %1834 = vmatprep.mubr.bf16.mxu0 %v1624
    %1835 = vmatmul.mubr.bf16.gmra.mrb[0].mxu0 %v1623
    %v1836 = vpop.f32.mrb[0].mxu0
    %v1837 = vadd.f32 %v1740, %v1836
    %v1838 = vpop.f32.mrb[0].mxu0
    %v1839 = vpop.f32.mrb[0].mxu0
    %v1840 = vadd.f32 %v1743, %v1839
    %v1841 = vpop.f32.mrb[0].mxu0
    %1842 = vmatprep.mubr.bf16.mxu0 %v1628
    %1843 = vmatmul.mubr.bf16.gmra.mrb[0].mxu0 %v1627
    %v1844 = vpop.f32.mrb[0].mxu0
    %v1845 = vadd.f32 %v1748, %v1844
    %v1846 = vpop.f32.mrb[0].mxu0
    %v1847 = vpop.f32.mrb[0].mxu0
    %v1848 = vadd.f32 %v1751, %v1847
    %v1849 = vpop.f32.mrb[0].mxu0
    %1850 = vmatprep.mubr.bf16.mxu0 %v1632
    %1851 = vmatmul.mubr.bf16.gmra.mrb[0].mxu0 %v1631
    %v1852 = vpop.f32.mrb[0].mxu0
    %v1853 = vadd.f32 %v1756, %v1852
    %v1854 = vpop.f32.mrb[0].mxu0
    %v1855 = vpop.f32.mrb[0].mxu0
    %v1856 = vadd.f32 %v1759, %v1855
    %v1857 = vpop.f32.mrb[0].mxu0
    %1858 = vdwg.mxu0
    %v1859 = vmax.f32 %v639, %v1025
    %v1860 = vmax.f32 %v642, %v1028
    %v1861 = vmax.f32 %v647, %v1033
    %v1862 = vmax.f32 %v650, %v1036
    %v1863 = vmax.f32 %v655, %v1041
    %v1864 = vmax.f32 %v658, %v1044
    %v1865 = vmax.f32 %v663, %v1049
    %v1866 = vmax.f32 %v666, %v1052
    %v1867 = vmax.f32 %v671, %v1057
    %v1868 = vmax.f32 %v674, %v1060
    %v1869 = vmax.f32 %v679, %v1065
    %v1870 = vmax.f32 %v682, %v1068
    %v1871 = vmax.f32 %v687, %v1073
    %v1872 = vmax.f32 %v690, %v1076
    %v1873 = vmax.f32 %v695, %v1081
    %v1874 = vmax.f32 %v698, %v1084
    %v1875 = vmax.f32 %v1411, %v1797
    %v1876 = vmax.f32 %v1414, %v1800
    %v1877 = vmax.f32 %v1419, %v1805
    %v1878 = vmax.f32 %v1422, %v1808
    %v1879 = vmax.f32 %v1427, %v1813
    %v1880 = vmax.f32 %v1430, %v1816
    %v1881 = vmax.f32 %v1435, %v1821
    %v1882 = vmax.f32 %v1438, %v1824
    %v1883 = vmax.f32 %v1443, %v1829
    %v1884 = vmax.f32 %v1446, %v1832
    %v1885 = vmax.f32 %v1451, %v1837
    %v1886 = vmax.f32 %v1454, %v1840
    %v1887 = vmax.f32 %v1459, %v1845
    %v1888 = vmax.f32 %v1462, %v1848
    %v1889 = vmax.f32 %v1467, %v1853
    %v1890 = vmax.f32 %v1470, %v1856
    %v1891 = vmax.f32 %v1859, %v1875
    %v1892 = vmax.f32 %v1860, %v1876
    %v1893 = vmax.f32 %v1861, %v1877
    %v1894 = vmax.f32 %v1862, %v1878
    %v1895 = vmax.f32 %v1863, %v1879
    %v1896 = vmax.f32 %v1864, %v1880
    %v1897 = vmax.f32 %v1865, %v1881
    %v1898 = vmax.f32 %v1866, %v1882
    %v1899 = vmax.f32 %v1867, %v1883
    %v1900 = vmax.f32 %v1868, %v1884
    %v1901 = vmax.f32 %v1869, %v1885
    %v1902 = vmax.f32 %v1870, %v1886
    %v1903 = vmax.f32 %v1871, %v1887
    %v1904 = vmax.f32 %v1872, %v1888
    %v1905 = vmax.f32 %v1873, %v1889
    %v1906 = vmax.f32 %v1874, %v1890
    %v1907 = vld [vmem:[%s5] sm:$0x1]
    %v1909 = vlaneseq
    %v1910 = vshrl.u32 %v1909, 7
    %v1911 = vsub.s32 0, %v1910
    %v1912 = vrot.slane %v1907, %v1911
    %v1914 = vadd.f32 %v1891, %v1912
    %v1915 = vadd.f32 %v1892, %v1912
    %v1916 = vadd.f32 %v1893, %v1912
    %v1917 = vadd.f32 %v1894, %v1912
    %v1918 = vadd.f32 %v1895, %v1912
    %v1919 = vadd.f32 %v1896, %v1912
    %v1920 = vadd.f32 %v1897, %v1912
    %v1921 = vadd.f32 %v1898, %v1912
    %v1922 = vadd.f32 %v1899, %v1912
    %v1923 = vadd.f32 %v1900, %v1912
    %v1924 = vadd.f32 %v1901, %v1912
    %v1925 = vadd.f32 %v1902, %v1912
    %v1926 = vadd.f32 %v1903, %v1912
    %v1927 = vadd.f32 %v1904, %v1912
    %v1928 = vadd.f32 %v1905, %v1912
    %v1929 = vadd.f32 %v1906, %v1912
    %v1930 = vmax.f32 %v1914, 0.0
    %v1931 = vmax.f32 %v1915, 0.0
    %v1932 = vmax.f32 %v1916, 0.0
    %v1933 = vmax.f32 %v1917, 0.0
    %v1934 = vmax.f32 %v1918, 0.0
    %v1935 = vmax.f32 %v1919, 0.0
    %v1936 = vmax.f32 %v1920, 0.0
    %v1937 = vmax.f32 %v1921, 0.0
    %v1938 = vmax.f32 %v1922, 0.0
    %v1939 = vmax.f32 %v1923, 0.0
    %v1940 = vmax.f32 %v1924, 0.0
    %v1941 = vmax.f32 %v1925, 0.0
    %v1942 = vmax.f32 %v1926, 0.0
    %v1943 = vmax.f32 %v1927, 0.0
    %v1944 = vmax.f32 %v1928, 0.0
    %v1945 = vmax.f32 %v1929, 0.0
    %v1946 = vpack.c.bf16 %v1930, %v1930
    %v1947 = vld [vmem:[%s6] sm:$0xff]
    %v1948 = vld [vmem:[%s6 + $0x8] sm:$0xff]
    %v1949 = vld [vmem:[%s6 + $0x10] sm:$0xff]
    %v1950 = vld [vmem:[%s6 + $0x18] sm:$0xff]
    %v1951 = vld [vmem:[%s6 + $0x20] sm:$0xff]
    %v1952 = vld [vmem:[%s6 + $0x28] sm:$0xff]
    %v1953 = vld [vmem:[%s6 + $0x30] sm:$0xff]
    %v1954 = vld [vmem:[%s6 + $0x38] sm:$0xff]
    %v1955 = vld [vmem:[%s6 + $0x40] sm:$0xff]
    %v1956 = vld [vmem:[%s6 + $0x48] sm:$0xff]
    %v1957 = vld [vmem:[%s6 + $0x50] sm:$0xff]
    %v1958 = vld [vmem:[%s6 + $0x58] sm:$0xff]
    %v1959 = vld [vmem:[%s6 + $0x60] sm:$0x11]
    %v1960 = vld [vmem:[%s6 + $0x68] sm:$0x11]
    %v1961 = vpack.c.bf16 %v1931, %v1931
    %s1962 = scalar_lea.vmem %s6, 112
    %v1963 = vld [vmem:[%s1962] sm:$0xff]
    %v1964 = vld [vmem:[%s1962 + $0x8] sm:$0xff]
    %v1965 = vld [vmem:[%s1962 + $0x10] sm:$0xff]
    %v1966 = vld [vmem:[%s1962 + $0x18] sm:$0xff]
    %v1967 = vld [vmem:[%s1962 + $0x20] sm:$0xff]
    %v1968 = vld [vmem:[%s1962 + $0x28] sm:$0xff]
    %v1969 = vld [vmem:[%s1962 + $0x30] sm:$0xff]
    %v1970 = vld [vmem:[%s1962 + $0x38] sm:$0xff]
    %v1971 = vld [vmem:[%s1962 + $0x40] sm:$0xff]
    %v1972 = vld [vmem:[%s1962 + $0x48] sm:$0xff]
    %v1973 = vld [vmem:[%s1962 + $0x50] sm:$0xff]
    %v1974 = vld [vmem:[%s1962 + $0x58] sm:$0xff]
    %v1975 = vld [vmem:[%s1962 + $0x60] sm:$0x11]
    %v1976 = vld [vmem:[%s1962 + $0x68] sm:$0x11]
    %v1991 = vunpack.c.l.b16 %v1963
    %v1992 = vunpack.c.h.b16 %v1963
    %v1993 = vunpack.c.l.b16 %v1964
    %v1994 = vunpack.c.h.b16 %v1964
    %v1995 = vunpack.c.l.b16 %v1965
    %v1996 = vunpack.c.h.b16 %v1965
    %v1997 = vunpack.c.l.b16 %v1966
    %v1998 = vunpack.c.h.b16 %v1966
    %v1999 = vunpack.c.l.b16 %v1967
    %v2000 = vunpack.c.h.b16 %v1967
    %v2001 = vunpack.c.l.b16 %v1968
    %v2002 = vunpack.c.h.b16 %v1968
    %v2003 = vunpack.c.l.b16 %v1969
    %v2004 = vunpack.c.h.b16 %v1969
    %v2005 = vunpack.c.l.b16 %v1970
    %v2006 = vunpack.c.h.b16 %v1970
    %v2007 = vunpack.c.l.b16 %v1971
    %v2008 = vunpack.c.h.b16 %v1971
    %v2009 = vunpack.c.l.b16 %v1972
    %v2010 = vunpack.c.h.b16 %v1972
    %v2011 = vunpack.c.l.b16 %v1973
    %v2012 = vunpack.c.h.b16 %v1973
    %v2013 = vunpack.c.l.b16 %v1974
    %v2014 = vunpack.c.h.b16 %v1974
    %v2015 = vunpack.c.l.b16 %v1975
    %v2016 = vunpack.c.h.b16 %v1975
    %v2017 = vunpack.c.l.b16 %v1976
    %v2018 = vunpack.c.h.b16 %v1976
    %v2019 = vpack.c.b16 %v1995, %v1991
    %v2020 = vpack.c.b16 %v1996, %v1992
    %v2021 = vpack.c.b16 %v1997, %v1993
    %v2022 = vpack.c.b16 %v1998, %v1994
    %v2023 = vpack.c.b16 %v2003, %v1999
    %v2024 = vpack.c.b16 %v2004, %v2000
    %v2025 = vpack.c.b16 %v2005, %v2001
    %v2026 = vpack.c.b16 %v2006, %v2002
    %v2027 = vpack.c.b16 %v2011, %v2007
    %v2028 = vpack.c.b16 %v2012, %v2008
    %v2029 = vpack.c.b16 %v2013, %v2009
    %v2030 = vpack.c.b16 %v2014, %v2010
    %v2031 = vpack.c.b16 %v2015, %v2015
    %v2032 = vpack.c.b16 %v2016, %v2016
    %v2033 = vpack.c.b16 %v2017, %v2017
    %v2034 = vpack.c.b16 %v2018, %v2018
    %vm2047 = vcmask 408576
    %v2049 = vsel %vm2047, %v1961, 0
    %vm2051 = vcmask 1040384
    %v2053 = vsel %vm2051, %v2031, 0
    %v2056 = vsel %vm2051, %v2032, 0
    %v2059 = vsel %vm2051, %v2033, 0
    %v2062 = vsel %vm2051, %v2034, 0
    %2064 = vmatprep.subr.bf16.mxu0 %v2020
    %2065 = vmatpush1.bf16.msra.mxu0 %v2019
    %2066 = vmatprep.subr.bf16.mxu0 %v2024
    %2067 = vmatpush1.bf16.msra.mxu0 %v2023
    %2068 = vmatprep.subr.bf16.mxu0 %v2028
    %2069 = vmatpush1.bf16.msra.mxu0 %v2027
    %2070 = vmatprep.subr.bf16.mxu0 %v2056
    %2071 = vmatpush1.bf16.msra.mxu0 %v2053
    %2072 = vmatprep.subr.bf16.mxu0 0
    %2073 = vmatpush1.bf16.msra.mxu0 0
    %2074 = vmatprep.subr.bf16.mxu0 0
    %2075 = vmatpush1.bf16.msra.mxu0 0
    %2076 = vmatprep.subr.bf16.mxu0 0
    %2077 = vmatpush1.bf16.msra.mxu0 0
    %2078 = vmatprep.subr.bf16.mxu0 0
    %2079 = vmatpush1.bf16.msra.mxu0 0
    %2080 = vmatprep.subr.bf16.mxu0 0
    %2081 = vmatpush1.bf16.msra.mxu0 0
    %2082 = vmatprep.subr.bf16.mxu0 0
    %2083 = vmatpush1.bf16.msra.mxu0 0
    %2084 = vmatprep.subr.bf16.mxu0 0
    %2085 = vmatpush1.bf16.msra.mxu0 0
    %2086 = vmatprep.subr.bf16.mxu0 0
    %2087 = vmatpush1.bf16.msra.mxu0 0
    %2088 = vmatprep.subr.bf16.mxu0 0
    %2089 = vmatpush1.bf16.msra.mxu0 0
    %2090 = vmatprep.subr.bf16.mxu0 0
    %2091 = vmatpush1.bf16.msra.mxu0 0
    %2092 = vmatprep.subr.bf16.mxu0 0
    %2093 = vmatpush1.bf16.msra.mxu0 0
    %2094 = vmatprep.subr.bf16.mxu0 0
    %2095 = vmatpush1.bf16.msra.mxu0 0
    %2096 = vmatprep.mubr.bf16.mxu0 0
    %2097 = vmatmul.mubr.bf16.gmra.mrb[0].mxu0 %v2049
    %v2098 = vpop.f32.mrb[0].mxu0
    %v2099 = vadd.f32 0.0, %v2098
    %v2100 = vpop.f32.mrb[0].mxu0
    %v2101 = vadd.f32 0.0, %v2100
    %v2102 = vpop.f32.mrb[0].mxu0
    %v2103 = vpop.f32.mrb[0].mxu0
    %2104 = vdwg.mxu0
    %2105 = vmatprep.subr.bf16.mxu0 %v2022
    %2106 = vmatpush1.bf16.msra.mxu0 %v2021
    %2107 = vmatprep.subr.bf16.mxu0 %v2026
    %2108 = vmatpush1.bf16.msra.mxu0 %v2025
    %2109 = vmatprep.subr.bf16.mxu0 %v2030
    %2110 = vmatpush1.bf16.msra.mxu0 %v2029
    %2111 = vmatprep.subr.bf16.mxu0 %v2062
    %2112 = vmatpush1.bf16.msra.mxu0 %v2059
    %2113 = vmatprep.subr.bf16.mxu0 0
    %2114 = vmatpush1.bf16.msra.mxu0 0
    %2115 = vmatprep.subr.bf16.mxu0 0
    %2116 = vmatpush1.bf16.msra.mxu0 0
    %2117 = vmatprep.subr.bf16.mxu0 0
    %2118 = vmatpush1.bf16.msra.mxu0 0
    %2119 = vmatprep.subr.bf16.mxu0 0
    %2120 = vmatpush1.bf16.msra.mxu0 0
    %2121 = vmatprep.subr.bf16.mxu0 0
    %2122 = vmatpush1.bf16.msra.mxu0 0
    %2123 = vmatprep.subr.bf16.mxu0 0
    %2124 = vmatpush1.bf16.msra.mxu0 0
    %2125 = vmatprep.subr.bf16.mxu0 0
    %2126 = vmatpush1.bf16.msra.mxu0 0
    %2127 = vmatprep.subr.bf16.mxu0 0
    %2128 = vmatpush1.bf16.msra.mxu0 0
    %2129 = vmatprep.subr.bf16.mxu0 0
    %2130 = vmatpush1.bf16.msra.mxu0 0
    %2131 = vmatprep.subr.bf16.mxu0 0
    %2132 = vmatpush1.bf16.msra.mxu0 0
    %2133 = vmatprep.subr.bf16.mxu0 0
    %2134 = vmatpush1.bf16.msra.mxu0 0
    %2135 = vmatprep.subr.bf16.mxu0 0
    %2136 = vmatpush1.bf16.msra.mxu0 0
    %2137 = vmatprep.mubr.bf16.mxu0 0
    %2138 = vmatmul.mubr.bf16.gmra.mrb[0].mxu0 %v2049
    %v2139 = vpop.f32.mrb[0].mxu0
    %v2140 = vadd.f32 0.0, %v2139
    %v2141 = vpop.f32.mrb[0].mxu0
    %v2142 = vadd.f32 0.0, %v2141
    %v2143 = vpop.f32.mrb[0].mxu0
    %v2144 = vpop.f32.mrb[0].mxu0
    %2145 = vdwg.mxu0
    %v2160 = vunpack.c.l.b16 %v1947
    %v2161 = vunpack.c.h.b16 %v1947
    %v2162 = vunpack.c.l.b16 %v1948
    %v2163 = vunpack.c.h.b16 %v1948
    %v2164 = vunpack.c.l.b16 %v1949
    %v2165 = vunpack.c.h.b16 %v1949
    %v2166 = vunpack.c.l.b16 %v1950
    %v2167 = vunpack.c.h.b16 %v1950
    %v2168 = vunpack.c.l.b16 %v1951
    %v2169 = vunpack.c.h.b16 %v1951
    %v2170 = vunpack.c.l.b16 %v1952
    %v2171 = vunpack.c.h.b16 %v1952
    %v2172 = vunpack.c.l.b16 %v1953
    %v2173 = vunpack.c.h.b16 %v1953
    %v2174 = vunpack.c.l.b16 %v1954
    %v2175 = vunpack.c.h.b16 %v1954
    %v2176 = vunpack.c.l.b16 %v1955
    %v2177 = vunpack.c.h.b16 %v1955
    %v2178 = vunpack.c.l.b16 %v1956
    %v2179 = vunpack.c.h.b16 %v1956
    %v2180 = vunpack.c.l.b16 %v1957
    %v2181 = vunpack.c.h.b16 %v1957
    %v2182 = vunpack.c.l.b16 %v1958
    %v2183 = vunpack.c.h.b16 %v1958
    %v2184 = vunpack.c.l.b16 %v1959
    %v2185 = vunpack.c.h.b16 %v1959
    %v2186 = vunpack.c.l.b16 %v1960
    %v2187 = vunpack.c.h.b16 %v1960
    %v2188 = vpack.c.b16 %v2164, %v2160
    %v2189 = vpack.c.b16 %v2165, %v2161
    %v2190 = vpack.c.b16 %v2166, %v2162
    %v2191 = vpack.c.b16 %v2167, %v2163
    %v2192 = vpack.c.b16 %v2172, %v2168
    %v2193 = vpack.c.b16 %v2173, %v2169
    %v2194 = vpack.c.b16 %v2174, %v2170
    %v2195 = vpack.c.b16 %v2175, %v2171
    %v2196 = vpack.c.b16 %v2180, %v2176
    %v2197 = vpack.c.b16 %v2181, %v2177
    %v2198 = vpack.c.b16 %v2182, %v2178
    %v2199 = vpack.c.b16 %v2183, %v2179
    %v2200 = vpack.c.b16 %v2184, %v2184
    %v2201 = vpack.c.b16 %v2185, %v2185
    %v2202 = vpack.c.b16 %v2186, %v2186
    %v2203 = vpack.c.b16 %v2187, %v2187
    %v2217 = vsel %vm2047, %v1946, 0
    %v2220 = vsel %vm2051, %v2200, 0
    %v2223 = vsel %vm2051, %v2201, 0
    %v2226 = vsel %vm2051, %v2202, 0
    %v2229 = vsel %vm2051, %v2203, 0
    %2231 = vmatprep.subr.bf16.mxu0 %v2189
    %2232 = vmatpush1.bf16.msra.mxu0 %v2188
    %2233 = vmatprep.subr.bf16.mxu0 %v2193
    %2234 = vmatpush1.bf16.msra.mxu0 %v2192
    %2235 = vmatprep.subr.bf16.mxu0 %v2197
    %2236 = vmatpush1.bf16.msra.mxu0 %v2196
    %2237 = vmatprep.subr.bf16.mxu0 %v2223
    %2238 = vmatpush1.bf16.msra.mxu0 %v2220
    %2239 = vmatprep.subr.bf16.mxu0 0
    %2240 = vmatpush1.bf16.msra.mxu0 0
    %2241 = vmatprep.subr.bf16.mxu0 0
    %2242 = vmatpush1.bf16.msra.mxu0 0
    %2243 = vmatprep.subr.bf16.mxu0 0
    %2244 = vmatpush1.bf16.msra.mxu0 0
    %2245 = vmatprep.subr.bf16.mxu0 0
    %2246 = vmatpush1.bf16.msra.mxu0 0
    %2247 = vmatprep.subr.bf16.mxu0 0
    %2248 = vmatpush1.bf16.msra.mxu0 0
    %2249 = vmatprep.subr.bf16.mxu0 0
    %2250 = vmatpush1.bf16.msra.mxu0 0
    %2251 = vmatprep.subr.bf16.mxu0 0
    %2252 = vmatpush1.bf16.msra.mxu0 0
    %2253 = vmatprep.subr.bf16.mxu0 0
    %2254 = vmatpush1.bf16.msra.mxu0 0
    %2255 = vmatprep.subr.bf16.mxu0 0
    %2256 = vmatpush1.bf16.msra.mxu0 0
    %2257 = vmatprep.subr.bf16.mxu0 0
    %2258 = vmatpush1.bf16.msra.mxu0 0
    %2259 = vmatprep.subr.bf16.mxu0 0
    %2260 = vmatpush1.bf16.msra.mxu0 0
    %2261 = vmatprep.subr.bf16.mxu0 0
    %2262 = vmatpush1.bf16.msra.mxu0 0
    %2263 = vmatprep.mubr.bf16.mxu0 0
    %2264 = vmatmul.mubr.bf16.gmra.mrb[0].mxu0 %v2217
    %v2265 = vpop.f32.mrb[0].mxu0
    %v2266 = vadd.f32 %v2099, %v2265
    %v2267 = vpop.f32.mrb[0].mxu0
    %v2268 = vadd.f32 %v2101, %v2267
    %v2269 = vpop.f32.mrb[0].mxu0
    %v2270 = vpop.f32.mrb[0].mxu0
    %2271 = vdwg.mxu0
    %2272 = vmatprep.subr.bf16.mxu0 %v2191
    %2273 = vmatpush1.bf16.msra.mxu0 %v2190
    %2274 = vmatprep.subr.bf16.mxu0 %v2195
    %2275 = vmatpush1.bf16.msra.mxu0 %v2194
    %2276 = vmatprep.subr.bf16.mxu0 %v2199
    %2277 = vmatpush1.bf16.msra.mxu0 %v2198
    %2278 = vmatprep.subr.bf16.mxu0 %v2229
    %2279 = vmatpush1.bf16.msra.mxu0 %v2226
    %2280 = vmatprep.subr.bf16.mxu0 0
    %2281 = vmatpush1.bf16.msra.mxu0 0
    %2282 = vmatprep.subr.bf16.mxu0 0
    %2283 = vmatpush1.bf16.msra.mxu0 0
    %2284 = vmatprep.subr.bf16.mxu0 0
    %2285 = vmatpush1.bf16.msra.mxu0 0
    %2286 = vmatprep.subr.bf16.mxu0 0
    %2287 = vmatpush1.bf16.msra.mxu0 0
    %2288 = vmatprep.subr.bf16.mxu0 0
    %2289 = vmatpush1.bf16.msra.mxu0 0
    %2290 = vmatprep.subr.bf16.mxu0 0
    %2291 = vmatpush1.bf16.msra.mxu0 0
    %2292 = vmatprep.subr.bf16.mxu0 0
    %2293 = vmatpush1.bf16.msra.mxu0 0
    %2294 = vmatprep.subr.bf16.mxu0 0
    %2295 = vmatpush1.bf16.msra.mxu0 0
    %2296 = vmatprep.subr.bf16.mxu0 0
    %2297 = vmatpush1.bf16.msra.mxu0 0
    %2298 = vmatprep.subr.bf16.mxu0 0
    %2299 = vmatpush1.bf16.msra.mxu0 0
    %2300 = vmatprep.subr.bf16.mxu0 0
    %2301 = vmatpush1.bf16.msra.mxu0 0
    %2302 = vmatprep.subr.bf16.mxu0 0
    %2303 = vmatpush1.bf16.msra.mxu0 0
    %2304 = vmatprep.mubr.bf16.mxu0 0
    %2305 = vmatmul.mubr.bf16.gmra.mrb[0].mxu0 %v2217
    %v2306 = vpop.f32.mrb[0].mxu0
    %v2307 = vadd.f32 %v2140, %v2306
    %v2308 = vpop.f32.mrb[0].mxu0
    %v2309 = vadd.f32 %v2142, %v2308
    %v2310 = vpop.f32.mrb[0].mxu0
    %v2311 = vpop.f32.mrb[0].mxu0
    %2312 = vdwg.mxu0
    %v2313 = vpack.c.bf16 %v1932, %v1932
    %s2314 = scalar_lea.vmem %s6, 224
    %v2315 = vld [vmem:[%s2314] sm:$0xff]
    %v2316 = vld [vmem:[%s2314 + $0x8] sm:$0xff]
    %v2317 = vld [vmem:[%s2314 + $0x10] sm:$0xff]
    %v2318 = vld [vmem:[%s2314 + $0x18] sm:$0xff]
    %v2319 = vld [vmem:[%s2314 + $0x20] sm:$0xff]
    %v2320 = vld [vmem:[%s2314 + $0x28] sm:$0xff]
    %v2321 = vld [vmem:[%s2314 + $0x30] sm:$0xff]
    %v2322 = vld [vmem:[%s2314 + $0x38] sm:$0xff]
    %v2323 = vld [vmem:[%s2314 + $0x40] sm:$0xff]
    %v2324 = vld [vmem:[%s2314 + $0x48] sm:$0xff]
    %v2325 = vld [vmem:[%s2314 + $0x50] sm:$0xff]
    %v2326 = vld [vmem:[%s2314 + $0x58] sm:$0xff]
    %v2327 = vld [vmem:[%s2314 + $0x60] sm:$0x11]
    %v2328 = vld [vmem:[%s2314 + $0x68] sm:$0x11]
    %v2343 = vunpack.c.l.b16 %v2315
    %v2344 = vunpack.c.h.b16 %v2315
    %v2345 = vunpack.c.l.b16 %v2316
    %v2346 = vunpack.c.h.b16 %v2316
    %v2347 = vunpack.c.l.b16 %v2317
    %v2348 = vunpack.c.h.b16 %v2317
    %v2349 = vunpack.c.l.b16 %v2318
    %v2350 = vunpack.c.h.b16 %v2318
    %v2351 = vunpack.c.l.b16 %v2319
    %v2352 = vunpack.c.h.b16 %v2319
    %v2353 = vunpack.c.l.b16 %v2320
    %v2354 = vunpack.c.h.b16 %v2320
    %v2355 = vunpack.c.l.b16 %v2321
    %v2356 = vunpack.c.h.b16 %v2321
    %v2357 = vunpack.c.l.b16 %v2322
    %v2358 = vunpack.c.h.b16 %v2322
    %v2359 = vunpack.c.l.b16 %v2323
    %v2360 = vunpack.c.h.b16 %v2323
    %v2361 = vunpack.c.l.b16 %v2324
    %v2362 = vunpack.c.h.b16 %v2324
    %v2363 = vunpack.c.l.b16 %v2325
    %v2364 = vunpack.c.h.b16 %v2325
    %v2365 = vunpack.c.l.b16 %v2326
    %v2366 = vunpack.c.h.b16 %v2326
    %v2367 = vunpack.c.l.b16 %v2327
    %v2368 = vunpack.c.h.b16 %v2327
    %v2369 = vunpack.c.l.b16 %v2328
    %v2370 = vunpack.c.h.b16 %v2328
    %v2371 = vpack.c.b16 %v2347, %v2343
    %v2372 = vpack.c.b16 %v2348, %v2344
    %v2373 = vpack.c.b16 %v2349, %v2345
    %v2374 = vpack.c.b16 %v2350, %v2346
    %v2375 = vpack.c.b16 %v2355, %v2351
    %v2376 = vpack.c.b16 %v2356, %v2352
    %v2377 = vpack.c.b16 %v2357, %v2353
    %v2378 = vpack.c.b16 %v2358, %v2354
    %v2379 = vpack.c.b16 %v2363, %v2359
    %v2380 = vpack.c.b16 %v2364, %v2360
    %v2381 = vpack.c.b16 %v2365, %v2361
    %v2382 = vpack.c.b16 %v2366, %v2362
    %v2383 = vpack.c.b16 %v2367, %v2367
    %v2384 = vpack.c.b16 %v2368, %v2368
    %v2385 = vpack.c.b16 %v2369, %v2369
    %v2386 = vpack.c.b16 %v2370, %v2370
    %v2400 = vsel %vm2047, %v2313, 0
    %v2403 = vsel %vm2051, %v2383, 0
    %v2406 = vsel %vm2051, %v2384, 0
    %v2409 = vsel %vm2051, %v2385, 0
    %v2412 = vsel %vm2051, %v2386, 0
    %2414 = vmatprep.subr.bf16.mxu0 %v2372
    %2415 = vmatpush1.bf16.msra.mxu0 %v2371
    %2416 = vmatprep.subr.bf16.mxu0 %v2376
    %2417 = vmatpush1.bf16.msra.mxu0 %v2375
    %2418 = vmatprep.subr.bf16.mxu0 %v2380
    %2419 = vmatpush1.bf16.msra.mxu0 %v2379
    %2420 = vmatprep.subr.bf16.mxu0 %v2406
    %2421 = vmatpush1.bf16.msra.mxu0 %v2403
    %2422 = vmatprep.subr.bf16.mxu0 0
    %2423 = vmatpush1.bf16.msra.mxu0 0
    %2424 = vmatprep.subr.bf16.mxu0 0
    %2425 = vmatpush1.bf16.msra.mxu0 0
    %2426 = vmatprep.subr.bf16.mxu0 0
    %2427 = vmatpush1.bf16.msra.mxu0 0
    %2428 = vmatprep.subr.bf16.mxu0 0
    %2429 = vmatpush1.bf16.msra.mxu0 0
    %2430 = vmatprep.subr.bf16.mxu0 0
    %2431 = vmatpush1.bf16.msra.mxu0 0
    %2432 = vmatprep.subr.bf16.mxu0 0
    %2433 = vmatpush1.bf16.msra.mxu0 0
    %2434 = vmatprep.subr.bf16.mxu0 0
    %2435 = vmatpush1.bf16.msra.mxu0 0
    %2436 = vmatprep.subr.bf16.mxu0 0
    %2437 = vmatpush1.bf16.msra.mxu0 0
    %2438 = vmatprep.subr.bf16.mxu0 0
    %2439 = vmatpush1.bf16.msra.mxu0 0
    %2440 = vmatprep.subr.bf16.mxu0 0
    %2441 = vmatpush1.bf16.msra.mxu0 0
    %2442 = vmatprep.subr.bf16.mxu0 0
    %2443 = vmatpush1.bf16.msra.mxu0 0
    %2444 = vmatprep.subr.bf16.mxu0 0
    %2445 = vmatpush1.bf16.msra.mxu0 0
    %2446 = vmatprep.mubr.bf16.mxu0 0
    %2447 = vmatmul.mubr.bf16.gmra.mrb[0].mxu0 %v2400
    %v2448 = vpop.f32.mrb[0].mxu0
    %v2449 = vadd.f32 0.0, %v2448
    %v2450 = vpop.f32.mrb[0].mxu0
    %v2451 = vadd.f32 0.0, %v2450
    %v2452 = vpop.f32.mrb[0].mxu0
    %v2453 = vpop.f32.mrb[0].mxu0
    %2454 = vdwg.mxu0
    %2455 = vmatprep.subr.bf16.mxu0 %v2374
    %2456 = vmatpush1.bf16.msra.mxu0 %v2373
    %2457 = vmatprep.subr.bf16.mxu0 %v2378
    %2458 = vmatpush1.bf16.msra.mxu0 %v2377
    %2459 = vmatprep.subr.bf16.mxu0 %v2382
    %2460 = vmatpush1.bf16.msra.mxu0 %v2381
    %2461 = vmatprep.subr.bf16.mxu0 %v2412
    %2462 = vmatpush1.bf16.msra.mxu0 %v2409
    %2463 = vmatprep.subr.bf16.mxu0 0
    %2464 = vmatpush1.bf16.msra.mxu0 0
    %2465 = vmatprep.subr.bf16.mxu0 0
    %2466 = vmatpush1.bf16.msra.mxu0 0
    %2467 = vmatprep.subr.bf16.mxu0 0
    %2468 = vmatpush1.bf16.msra.mxu0 0
    %2469 = vmatprep.subr.bf16.mxu0 0
    %2470 = vmatpush1.bf16.msra.mxu0 0
    %2471 = vmatprep.subr.bf16.mxu0 0
    %2472 = vmatpush1.bf16.msra.mxu0 0
    %2473 = vmatprep.subr.bf16.mxu0 0
    %2474 = vmatpush1.bf16.msra.mxu0 0
    %2475 = vmatprep.subr.bf16.mxu0 0
    %2476 = vmatpush1.bf16.msra.mxu0 0
    %2477 = vmatprep.subr.bf16.mxu0 0
    %2478 = vmatpush1.bf16.msra.mxu0 0
    %2479 = vmatprep.subr.bf16.mxu0 0
    %2480 = vmatpush1.bf16.msra.mxu0 0
    %2481 = vmatprep.subr.bf16.mxu0 0
    %2482 = vmatpush1.bf16.msra.mxu0 0
    %2483 = vmatprep.subr.bf16.mxu0 0
    %2484 = vmatpush1.bf16.msra.mxu0 0
    %2485 = vmatprep.subr.bf16.mxu0 0
    %2486 = vmatpush1.bf16.msra.mxu0 0
    %2487 = vmatprep.mubr.bf16.mxu0 0
    %2488 = vmatmul.mubr.bf16.gmra.mrb[0].mxu0 %v2400
    %v2489 = vpop.f32.mrb[0].mxu0
    %v2490 = vadd.f32 0.0, %v2489
    %v2491 = vpop.f32.mrb[0].mxu0
    %v2492 = vadd.f32 0.0, %v2491
    %v2493 = vpop.f32.mrb[0].mxu0
    %v2494 = vpop.f32.mrb[0].mxu0
    %2495 = vdwg.mxu0
    %v2496 = vadd.f32 %v2266, %v2449
    %v2497 = vadd.f32 %v2268, %v2451
    %v2498 = vadd.f32 %v2307, %v2490
    %v2499 = vadd.f32 %v2309, %v2492
    %v2500 = vpack.c.bf16 %v1933, %v1933
    %s2501 = scalar_lea.vmem %s6, 336
    %v2502 = vld [vmem:[%s2501] sm:$0xff]
    %v2503 = vld [vmem:[%s2501 + $0x8] sm:$0xff]
    %v2504 = vld [vmem:[%s2501 + $0x10] sm:$0xff]
    %v2505 = vld [vmem:[%s2501 + $0x18] sm:$0xff]
    %v2506 = vld [vmem:[%s2501 + $0x20] sm:$0xff]
    %v2507 = vld [vmem:[%s2501 + $0x28] sm:$0xff]
    %v2508 = vld [vmem:[%s2501 + $0x30] sm:$0xff]
    %v2509 = vld [vmem:[%s2501 + $0x38] sm:$0xff]
    %v2510 = vld [vmem:[%s2501 + $0x40] sm:$0xff]
    %v2511 = vld [vmem:[%s2501 + $0x48] sm:$0xff]
    %v2512 = vld [vmem:[%s2501 + $0x50] sm:$0xff]
    %v2513 = vld [vmem:[%s2501 + $0x58] sm:$0xff]
    %v2514 = vld [vmem:[%s2501 + $0x60] sm:$0x11]
    %v2515 = vld [vmem:[%s2501 + $0x68] sm:$0x11]
    %v2530 = vunpack.c.l.b16 %v2502
    %v2531 = vunpack.c.h.b16 %v2502
    %v2532 = vunpack.c.l.b16 %v2503
    %v2533 = vunpack.c.h.b16 %v2503
    %v2534 = vunpack.c.l.b16 %v2504
    %v2535 = vunpack.c.h.b16 %v2504
    %v2536 = vunpack.c.l.b16 %v2505
    %v2537 = vunpack.c.h.b16 %v2505
    %v2538 = vunpack.c.l.b16 %v2506
    %v2539 = vunpack.c.h.b16 %v2506
    %v2540 = vunpack.c.l.b16 %v2507
    %v2541 = vunpack.c.h.b16 %v2507
    %v2542 = vunpack.c.l.b16 %v2508
    %v2543 = vunpack.c.h.b16 %v2508
    %v2544 = vunpack.c.l.b16 %v2509
    %v2545 = vunpack.c.h.b16 %v2509
    %v2546 = vunpack.c.l.b16 %v2510
    %v2547 = vunpack.c.h.b16 %v2510
    %v2548 = vunpack.c.l.b16 %v2511
    %v2549 = vunpack.c.h.b16 %v2511
    %v2550 = vunpack.c.l.b16 %v2512
    %v2551 = vunpack.c.h.b16 %v2512
    %v2552 = vunpack.c.l.b16 %v2513
    %v2553 = vunpack.c.h.b16 %v2513
    %v2554 = vunpack.c.l.b16 %v2514
    %v2555 = vunpack.c.h.b16 %v2514
    %v2556 = vunpack.c.l.b16 %v2515
    %v2557 = vunpack.c.h.b16 %v2515
    %v2558 = vpack.c.b16 %v2534, %v2530
    %v2559 = vpack.c.b16 %v2535, %v2531
    %v2560 = vpack.c.b16 %v2536, %v2532
    %v2561 = vpack.c.b16 %v2537, %v2533
    %v2562 = vpack.c.b16 %v2542, %v2538
    %v2563 = vpack.c.b16 %v2543, %v2539
    %v2564 = vpack.c.b16 %v2544, %v2540
    %v2565 = vpack.c.b16 %v2545, %v2541
    %v2566 = vpack.c.b16 %v2550, %v2546
    %v2567 = vpack.c.b16 %v2551, %v2547
    %v2568 = vpack.c.b16 %v2552, %v2548
    %v2569 = vpack.c.b16 %v2553, %v2549
    %v2570 = vpack.c.b16 %v2554, %v2554
    %v2571 = vpack.c.b16 %v2555, %v2555
    %v2572 = vpack.c.b16 %v2556, %v2556
    %v2573 = vpack.c.b16 %v2557, %v2557
    %v2587 = vsel %vm2047, %v2500, 0
    %v2590 = vsel %vm2051, %v2570, 0
    %v2593 = vsel %vm2051, %v2571, 0
    %v2596 = vsel %vm2051, %v2572, 0
    %v2599 = vsel %vm2051, %v2573, 0
    %2601 = vmatprep.subr.bf16.mxu0 %v2559
    %2602 = vmatpush1.bf16.msra.mxu0 %v2558
    %2603 = vmatprep.subr.bf16.mxu0 %v2563
    %2604 = vmatpush1.bf16.msra.mxu0 %v2562
    %2605 = vmatprep.subr.bf16.mxu0 %v2567
    %2606 = vmatpush1.bf16.msra.mxu0 %v2566
    %2607 = vmatprep.subr.bf16.mxu0 %v2593
    %2608 = vmatpush1.bf16.msra.mxu0 %v2590
    %2609 = vmatprep.subr.bf16.mxu0 0
    %2610 = vmatpush1.bf16.msra.mxu0 0
    %2611 = vmatprep.subr.bf16.mxu0 0
    %2612 = vmatpush1.bf16.msra.mxu0 0
    %2613 = vmatprep.subr.bf16.mxu0 0
    %2614 = vmatpush1.bf16.msra.mxu0 0
    %2615 = vmatprep.subr.bf16.mxu0 0
    %2616 = vmatpush1.bf16.msra.mxu0 0
    %2617 = vmatprep.subr.bf16.mxu0 0
    %2618 = vmatpush1.bf16.msra.mxu0 0
    %2619 = vmatprep.subr.bf16.mxu0 0
    %2620 = vmatpush1.bf16.msra.mxu0 0
    %2621 = vmatprep.subr.bf16.mxu0 0
    %2622 = vmatpush1.bf16.msra.mxu0 0
    %2623 = vmatprep.subr.bf16.mxu0 0
    %2624 = vmatpush1.bf16.msra.mxu0 0
    %2625 = vmatprep.subr.bf16.mxu0 0
    %2626 = vmatpush1.bf16.msra.mxu0 0
    %2627 = vmatprep.subr.bf16.mxu0 0
    %2628 = vmatpush1.bf16.msra.mxu0 0
    %2629 = vmatprep.subr.bf16.mxu0 0
    %2630 = vmatpush1.bf16.msra.mxu0 0
    %2631 = vmatprep.subr.bf16.mxu0 0
    %2632 = vmatpush1.bf16.msra.mxu0 0
    %2633 = vmatprep.mubr.bf16.mxu0 0
    %2634 = vmatmul.mubr.bf16.gmra.mrb[0].mxu0 %v2587
    %v2635 = vpop.f32.mrb[0].mxu0
    %v2636 = vadd.f32 0.0, %v2635
    %v2637 = vpop.f32.mrb[0].mxu0
    %v2638 = vadd.f32 0.0, %v2637
    %v2639 = vpop.f32.mrb[0].mxu0
    %v2640 = vpop.f32.mrb[0].mxu0
    %2641 = vdwg.mxu0
    %2642 = vmatprep.subr.bf16.mxu0 %v2561
    %2643 = vmatpush1.bf16.msra.mxu0 %v2560
    %2644 = vmatprep.subr.bf16.mxu0 %v2565
    %2645 = vmatpush1.bf16.msra.mxu0 %v2564
    %2646 = vmatprep.subr.bf16.mxu0 %v2569
    %2647 = vmatpush1.bf16.msra.mxu0 %v2568
    %2648 = vmatprep.subr.bf16.mxu0 %v2599
    %2649 = vmatpush1.bf16.msra.mxu0 %v2596
    %2650 = vmatprep.subr.bf16.mxu0 0
    %2651 = vmatpush1.bf16.msra.mxu0 0
    %2652 = vmatprep.subr.bf16.mxu0 0
    %2653 = vmatpush1.bf16.msra.mxu0 0
    %2654 = vmatprep.subr.bf16.mxu0 0
    %2655 = vmatpush1.bf16.msra.mxu0 0
    %2656 = vmatprep.subr.bf16.mxu0 0
    %2657 = vmatpush1.bf16.msra.mxu0 0
    %2658 = vmatprep.subr.bf16.mxu0 0
    %2659 = vmatpush1.bf16.msra.mxu0 0
    %2660 = vmatprep.subr.bf16.mxu0 0
    %2661 = vmatpush1.bf16.msra.mxu0 0
    %2662 = vmatprep.subr.bf16.mxu0 0
    %2663 = vmatpush1.bf16.msra.mxu0 0
    %2664 = vmatprep.subr.bf16.mxu0 0
    %2665 = vmatpush1.bf16.msra.mxu0 0
    %2666 = vmatprep.subr.bf16.mxu0 0
    %2667 = vmatpush1.bf16.msra.mxu0 0
    %2668 = vmatprep.subr.bf16.mxu0 0
    %2669 = vmatpush1.bf16.msra.mxu0 0
    %2670 = vmatprep.subr.bf16.mxu0 0
    %2671 = vmatpush1.bf16.msra.mxu0 0
    %2672 = vmatprep.subr.bf16.mxu0 0
    %2673 = vmatpush1.bf16.msra.mxu0 0
    %2674 = vmatprep.mubr.bf16.mxu0 0
    %2675 = vmatmul.mubr.bf16.gmra.mrb[0].mxu0 %v2587
    %v2676 = vpop.f32.mrb[0].mxu0
    %v2677 = vadd.f32 0.0, %v2676
    %v2678 = vpop.f32.mrb[0].mxu0
    %v2679 = vadd.f32 0.0, %v2678
    %v2680 = vpop.f32.mrb[0].mxu0
    %v2681 = vpop.f32.mrb[0].mxu0
    %2682 = vdwg.mxu0
    %v2683 = vadd.f32 %v2496, %v2636
    %v2684 = vadd.f32 %v2497, %v2638
    %v2685 = vadd.f32 %v2498, %v2677
    %v2686 = vadd.f32 %v2499, %v2679
    %v2687 = vpack.c.bf16 %v1934, %v1934
    %s2688 = scalar_lea.vmem %s6, 448
    %v2689 = vld [vmem:[%s2688] sm:$0xff]
    %v2690 = vld [vmem:[%s2688 + $0x8] sm:$0xff]
    %v2691 = vld [vmem:[%s2688 + $0x10] sm:$0xff]
    %v2692 = vld [vmem:[%s2688 + $0x18] sm:$0xff]
    %v2693 = vld [vmem:[%s2688 + $0x20] sm:$0xff]
    %v2694 = vld [vmem:[%s2688 + $0x28] sm:$0xff]
    %v2695 = vld [vmem:[%s2688 + $0x30] sm:$0xff]
    %v2696 = vld [vmem:[%s2688 + $0x38] sm:$0xff]
    %v2697 = vld [vmem:[%s2688 + $0x40] sm:$0xff]
    %v2698 = vld [vmem:[%s2688 + $0x48] sm:$0xff]
    %v2699 = vld [vmem:[%s2688 + $0x50] sm:$0xff]
    %v2700 = vld [vmem:[%s2688 + $0x58] sm:$0xff]
    %v2701 = vld [vmem:[%s2688 + $0x60] sm:$0x11]
    %v2702 = vld [vmem:[%s2688 + $0x68] sm:$0x11]
    %v2717 = vunpack.c.l.b16 %v2689
    %v2718 = vunpack.c.h.b16 %v2689
    %v2719 = vunpack.c.l.b16 %v2690
    %v2720 = vunpack.c.h.b16 %v2690
    %v2721 = vunpack.c.l.b16 %v2691
    %v2722 = vunpack.c.h.b16 %v2691
    %v2723 = vunpack.c.l.b16 %v2692
    %v2724 = vunpack.c.h.b16 %v2692
    %v2725 = vunpack.c.l.b16 %v2693
    %v2726 = vunpack.c.h.b16 %v2693
    %v2727 = vunpack.c.l.b16 %v2694
    %v2728 = vunpack.c.h.b16 %v2694
    %v2729 = vunpack.c.l.b16 %v2695
    %v2730 = vunpack.c.h.b16 %v2695
    %v2731 = vunpack.c.l.b16 %v2696
    %v2732 = vunpack.c.h.b16 %v2696
    %v2733 = vunpack.c.l.b16 %v2697
    %v2734 = vunpack.c.h.b16 %v2697
    %v2735 = vunpack.c.l.b16 %v2698
    %v2736 = vunpack.c.h.b16 %v2698
    %v2737 = vunpack.c.l.b16 %v2699
    %v2738 = vunpack.c.h.b16 %v2699
    %v2739 = vunpack.c.l.b16 %v2700
    %v2740 = vunpack.c.h.b16 %v2700
    %v2741 = vunpack.c.l.b16 %v2701
    %v2742 = vunpack.c.h.b16 %v2701
    %v2743 = vunpack.c.l.b16 %v2702
    %v2744 = vunpack.c.h.b16 %v2702
    %v2745 = vpack.c.b16 %v2721, %v2717
    %v2746 = vpack.c.b16 %v2722, %v2718
    %v2747 = vpack.c.b16 %v2723, %v2719
    %v2748 = vpack.c.b16 %v2724, %v2720
    %v2749 = vpack.c.b16 %v2729, %v2725
    %v2750 = vpack.c.b16 %v2730, %v2726
    %v2751 = vpack.c.b16 %v2731, %v2727
    %v2752 = vpack.c.b16 %v2732, %v2728
    %v2753 = vpack.c.b16 %v2737, %v2733
    %v2754 = vpack.c.b16 %v2738, %v2734
    %v2755 = vpack.c.b16 %v2739, %v2735
    %v2756 = vpack.c.b16 %v2740, %v2736
    %v2757 = vpack.c.b16 %v2741, %v2741
    %v2758 = vpack.c.b16 %v2742, %v2742
    %v2759 = vpack.c.b16 %v2743, %v2743
    %v2760 = vpack.c.b16 %v2744, %v2744
    %v2774 = vsel %vm2047, %v2687, 0
    %v2777 = vsel %vm2051, %v2757, 0
    %v2780 = vsel %vm2051, %v2758, 0
    %v2783 = vsel %vm2051, %v2759, 0
    %v2786 = vsel %vm2051, %v2760, 0
    %2788 = vmatprep.subr.bf16.mxu0 %v2746
    %2789 = vmatpush1.bf16.msra.mxu0 %v2745
    %2790 = vmatprep.subr.bf16.mxu0 %v2750
    %2791 = vmatpush1.bf16.msra.mxu0 %v2749
    %2792 = vmatprep.subr.bf16.mxu0 %v2754
    %2793 = vmatpush1.bf16.msra.mxu0 %v2753
    %2794 = vmatprep.subr.bf16.mxu0 %v2780
    %2795 = vmatpush1.bf16.msra.mxu0 %v2777
    %2796 = vmatprep.subr.bf16.mxu0 0
    %2797 = vmatpush1.bf16.msra.mxu0 0
    %2798 = vmatprep.subr.bf16.mxu0 0
    %2799 = vmatpush1.bf16.msra.mxu0 0
    %2800 = vmatprep.subr.bf16.mxu0 0
    %2801 = vmatpush1.bf16.msra.mxu0 0
    %2802 = vmatprep.subr.bf16.mxu0 0
    %2803 = vmatpush1.bf16.msra.mxu0 0
    %2804 = vmatprep.subr.bf16.mxu0 0
    %2805 = vmatpush1.bf16.msra.mxu0 0
    %2806 = vmatprep.subr.bf16.mxu0 0
    %2807 = vmatpush1.bf16.msra.mxu0 0
    %2808 = vmatprep.subr.bf16.mxu0 0
    %2809 = vmatpush1.bf16.msra.mxu0 0
    %2810 = vmatprep.subr.bf16.mxu0 0
    %2811 = vmatpush1.bf16.msra.mxu0 0
    %2812 = vmatprep.subr.bf16.mxu0 0
    %2813 = vmatpush1.bf16.msra.mxu0 0
    %2814 = vmatprep.subr.bf16.mxu0 0
    %2815 = vmatpush1.bf16.msra.mxu0 0
    %2816 = vmatprep.subr.bf16.mxu0 0
    %2817 = vmatpush1.bf16.msra.mxu0 0
    %2818 = vmatprep.subr.bf16.mxu0 0
    %2819 = vmatpush1.bf16.msra.mxu0 0
    %2820 = vmatprep.mubr.bf16.mxu0 0
    %2821 = vmatmul.mubr.bf16.gmra.mrb[0].mxu0 %v2774
    %v2822 = vpop.f32.mrb[0].mxu0
    %v2823 = vadd.f32 0.0, %v2822
    %v2824 = vpop.f32.mrb[0].mxu0
    %v2825 = vadd.f32 0.0, %v2824
    %v2826 = vpop.f32.mrb[0].mxu0
    %v2827 = vpop.f32.mrb[0].mxu0
    %2828 = vdwg.mxu0
    %2829 = vmatprep.subr.bf16.mxu0 %v2748
    %2830 = vmatpush1.bf16.msra.mxu0 %v2747
    %2831 = vmatprep.subr.bf16.mxu0 %v2752
    %2832 = vmatpush1.bf16.msra.mxu0 %v2751
    %2833 = vmatprep.subr.bf16.mxu0 %v2756
    %2834 = vmatpush1.bf16.msra.mxu0 %v2755
    %2835 = vmatprep.subr.bf16.mxu0 %v2786
    %2836 = vmatpush1.bf16.msra.mxu0 %v2783
    %2837 = vmatprep.subr.bf16.mxu0 0
    %2838 = vmatpush1.bf16.msra.mxu0 0
    %2839 = vmatprep.subr.bf16.mxu0 0
    %2840 = vmatpush1.bf16.msra.mxu0 0
    %2841 = vmatprep.subr.bf16.mxu0 0
    %2842 = vmatpush1.bf16.msra.mxu0 0
    %2843 = vmatprep.subr.bf16.mxu0 0
    %2844 = vmatpush1.bf16.msra.mxu0 0
    %2845 = vmatprep.subr.bf16.mxu0 0
    %2846 = vmatpush1.bf16.msra.mxu0 0
    %2847 = vmatprep.subr.bf16.mxu0 0
    %2848 = vmatpush1.bf16.msra.mxu0 0
    %2849 = vmatprep.subr.bf16.mxu0 0
    %2850 = vmatpush1.bf16.msra.mxu0 0
    %2851 = vmatprep.subr.bf16.mxu0 0
    %2852 = vmatpush1.bf16.msra.mxu0 0
    %2853 = vmatprep.subr.bf16.mxu0 0
    %2854 = vmatpush1.bf16.msra.mxu0 0
    %2855 = vmatprep.subr.bf16.mxu0 0
    %2856 = vmatpush1.bf16.msra.mxu0 0
    %2857 = vmatprep.subr.bf16.mxu0 0
    %2858 = vmatpush1.bf16.msra.mxu0 0
    %2859 = vmatprep.subr.bf16.mxu0 0
    %2860 = vmatpush1.bf16.msra.mxu0 0
    %2861 = vmatprep.mubr.bf16.mxu0 0
    %2862 = vmatmul.mubr.bf16.gmra.mrb[0].mxu0 %v2774
    %v2863 = vpop.f32.mrb[0].mxu0
    %v2864 = vadd.f32 0.0, %v2863
    %v2865 = vpop.f32.mrb[0].mxu0
    %v2866 = vadd.f32 0.0, %v2865
    %v2867 = vpop.f32.mrb[0].mxu0
    %v2868 = vpop.f32.mrb[0].mxu0
    %2869 = vdwg.mxu0
    %v2870 = vadd.f32 %v2683, %v2823
    %v2871 = vadd.f32 %v2684, %v2825
    %v2872 = vadd.f32 %v2685, %v2864
    %v2873 = vadd.f32 %v2686, %v2866
    %v2874 = vpack.c.bf16 %v1935, %v1935
    %s2875 = scalar_lea.vmem %s6, 560
    %v2876 = vld [vmem:[%s2875] sm:$0xff]
    %v2877 = vld [vmem:[%s2875 + $0x8] sm:$0xff]
    %v2878 = vld [vmem:[%s2875 + $0x10] sm:$0xff]
    %v2879 = vld [vmem:[%s2875 + $0x18] sm:$0xff]
    %v2880 = vld [vmem:[%s2875 + $0x20] sm:$0xff]
    %v2881 = vld [vmem:[%s2875 + $0x28] sm:$0xff]
    %v2882 = vld [vmem:[%s2875 + $0x30] sm:$0xff]
    %v2883 = vld [vmem:[%s2875 + $0x38] sm:$0xff]
    %v2884 = vld [vmem:[%s2875 + $0x40] sm:$0xff]
    %v2885 = vld [vmem:[%s2875 + $0x48] sm:$0xff]
    %v2886 = vld [vmem:[%s2875 + $0x50] sm:$0xff]
    %v2887 = vld [vmem:[%s2875 + $0x58] sm:$0xff]
    %v2888 = vld [vmem:[%s2875 + $0x60] sm:$0x11]
    %v2889 = vld [vmem:[%s2875 + $0x68] sm:$0x11]
    %v2904 = vunpack.c.l.b16 %v2876
    %v2905 = vunpack.c.h.b16 %v2876
    %v2906 = vunpack.c.l.b16 %v2877
    %v2907 = vunpack.c.h.b16 %v2877
    %v2908 = vunpack.c.l.b16 %v2878
    %v2909 = vunpack.c.h.b16 %v2878
    %v2910 = vunpack.c.l.b16 %v2879
    %v2911 = vunpack.c.h.b16 %v2879
    %v2912 = vunpack.c.l.b16 %v2880
    %v2913 = vunpack.c.h.b16 %v2880
    %v2914 = vunpack.c.l.b16 %v2881
    %v2915 = vunpack.c.h.b16 %v2881
    %v2916 = vunpack.c.l.b16 %v2882
    %v2917 = vunpack.c.h.b16 %v2882
    %v2918 = vunpack.c.l.b16 %v2883
    %v2919 = vunpack.c.h.b16 %v2883
    %v2920 = vunpack.c.l.b16 %v2884
    %v2921 = vunpack.c.h.b16 %v2884
    %v2922 = vunpack.c.l.b16 %v2885
    %v2923 = vunpack.c.h.b16 %v2885
    %v2924 = vunpack.c.l.b16 %v2886
    %v2925 = vunpack.c.h.b16 %v2886
    %v2926 = vunpack.c.l.b16 %v2887
    %v2927 = vunpack.c.h.b16 %v2887
    %v2928 = vunpack.c.l.b16 %v2888
    %v2929 = vunpack.c.h.b16 %v2888
    %v2930 = vunpack.c.l.b16 %v2889
    %v2931 = vunpack.c.h.b16 %v2889
    %v2932 = vpack.c.b16 %v2908, %v2904
    %v2933 = vpack.c.b16 %v2909, %v2905
    %v2934 = vpack.c.b16 %v2910, %v2906
    %v2935 = vpack.c.b16 %v2911, %v2907
    %v2936 = vpack.c.b16 %v2916, %v2912
    %v2937 = vpack.c.b16 %v2917, %v2913
    %v2938 = vpack.c.b16 %v2918, %v2914
    %v2939 = vpack.c.b16 %v2919, %v2915
    %v2940 = vpack.c.b16 %v2924, %v2920
    %v2941 = vpack.c.b16 %v2925, %v2921
    %v2942 = vpack.c.b16 %v2926, %v2922
    %v2943 = vpack.c.b16 %v2927, %v2923
    %v2944 = vpack.c.b16 %v2928, %v2928
    %v2945 = vpack.c.b16 %v2929, %v2929
    %v2946 = vpack.c.b16 %v2930, %v2930
    %v2947 = vpack.c.b16 %v2931, %v2931
    %v2961 = vsel %vm2047, %v2874, 0
    %v2964 = vsel %vm2051, %v2944, 0
    %v2967 = vsel %vm2051, %v2945, 0
    %v2970 = vsel %vm2051, %v2946, 0
    %v2973 = vsel %vm2051, %v2947, 0
    %2975 = vmatprep.subr.bf16.mxu0 %v2933
    %2976 = vmatpush1.bf16.msra.mxu0 %v2932
    %2977 = vmatprep.subr.bf16.mxu0 %v2937
    %2978 = vmatpush1.bf16.msra.mxu0 %v2936
    %2979 = vmatprep.subr.bf16.mxu0 %v2941
    %2980 = vmatpush1.bf16.msra.mxu0 %v2940
    %2981 = vmatprep.subr.bf16.mxu0 %v2967
    %2982 = vmatpush1.bf16.msra.mxu0 %v2964
    %2983 = vmatprep.subr.bf16.mxu0 0
    %2984 = vmatpush1.bf16.msra.mxu0 0
    %2985 = vmatprep.subr.bf16.mxu0 0
    %2986 = vmatpush1.bf16.msra.mxu0 0
    %2987 = vmatprep.subr.bf16.mxu0 0
    %2988 = vmatpush1.bf16.msra.mxu0 0
    %2989 = vmatprep.subr.bf16.mxu0 0
    %2990 = vmatpush1.bf16.msra.mxu0 0
    %2991 = vmatprep.subr.bf16.mxu0 0
    %2992 = vmatpush1.bf16.msra.mxu0 0
    %2993 = vmatprep.subr.bf16.mxu0 0
    %2994 = vmatpush1.bf16.msra.mxu0 0
    %2995 = vmatprep.subr.bf16.mxu0 0
    %2996 = vmatpush1.bf16.msra.mxu0 0
    %2997 = vmatprep.subr.bf16.mxu0 0
    %2998 = vmatpush1.bf16.msra.mxu0 0
    %2999 = vmatprep.subr.bf16.mxu0 0
    %3000 = vmatpush1.bf16.msra.mxu0 0
    %3001 = vmatprep.subr.bf16.mxu0 0
    %3002 = vmatpush1.bf16.msra.mxu0 0
    %3003 = vmatprep.subr.bf16.mxu0 0
    %3004 = vmatpush1.bf16.msra.mxu0 0
    %3005 = vmatprep.subr.bf16.mxu0 0
    %3006 = vmatpush1.bf16.msra.mxu0 0
    %3007 = vmatprep.mubr.bf16.mxu0 0
    %3008 = vmatmul.mubr.bf16.gmra.mrb[0].mxu0 %v2961
    %v3009 = vpop.f32.mrb[0].mxu0
    %v3010 = vadd.f32 0.0, %v3009
    %v3011 = vpop.f32.mrb[0].mxu0
    %v3012 = vadd.f32 0.0, %v3011
    %v3013 = vpop.f32.mrb[0].mxu0
    %v3014 = vpop.f32.mrb[0].mxu0
    %3015 = vdwg.mxu0
    %3016 = vmatprep.subr.bf16.mxu0 %v2935
    %3017 = vmatpush1.bf16.msra.mxu0 %v2934
    %3018 = vmatprep.subr.bf16.mxu0 %v2939
    %3019 = vmatpush1.bf16.msra.mxu0 %v2938
    %3020 = vmatprep.subr.bf16.mxu0 %v2943
    %3021 = vmatpush1.bf16.msra.mxu0 %v2942
    %3022 = vmatprep.subr.bf16.mxu0 %v2973
    %3023 = vmatpush1.bf16.msra.mxu0 %v2970
    %3024 = vmatprep.subr.bf16.mxu0 0
    %3025 = vmatpush1.bf16.msra.mxu0 0
    %3026 = vmatprep.subr.bf16.mxu0 0
    %3027 = vmatpush1.bf16.msra.mxu0 0
    %3028 = vmatprep.subr.bf16.mxu0 0
    %3029 = vmatpush1.bf16.msra.mxu0 0
    %3030 = vmatprep.subr.bf16.mxu0 0
    %3031 = vmatpush1.bf16.msra.mxu0 0
    %3032 = vmatprep.subr.bf16.mxu0 0
    %3033 = vmatpush1.bf16.msra.mxu0 0
    %3034 = vmatprep.subr.bf16.mxu0 0
    %3035 = vmatpush1.bf16.msra.mxu0 0
    %3036 = vmatprep.subr.bf16.mxu0 0
    %3037 = vmatpush1.bf16.msra.mxu0 0
    %3038 = vmatprep.subr.bf16.mxu0 0
    %3039 = vmatpush1.bf16.msra.mxu0 0
    %3040 = vmatprep.subr.bf16.mxu0 0
    %3041 = vmatpush1.bf16.msra.mxu0 0
    %3042 = vmatprep.subr.bf16.mxu0 0
    %3043 = vmatpush1.bf16.msra.mxu0 0
    %3044 = vmatprep.subr.bf16.mxu0 0
    %3045 = vmatpush1.bf16.msra.mxu0 0
    %3046 = vmatprep.subr.bf16.mxu0 0
    %3047 = vmatpush1.bf16.msra.mxu0 0
    %3048 = vmatprep.mubr.bf16.mxu0 0
    %3049 = vmatmul.mubr.bf16.gmra.mrb[0].mxu0 %v2961
    %v3050 = vpop.f32.mrb[0].mxu0
    %v3051 = vadd.f32 0.0, %v3050
    %v3052 = vpop.f32.mrb[0].mxu0
    %v3053 = vadd.f32 0.0, %v3052
    %v3054 = vpop.f32.mrb[0].mxu0
    %v3055 = vpop.f32.mrb[0].mxu0
    %3056 = vdwg.mxu0
    %v3057 = vadd.f32 %v2870, %v3010
    %v3058 = vadd.f32 %v2871, %v3012
    %v3059 = vadd.f32 %v2872, %v3051
    %v3060 = vadd.f32 %v2873, %v3053
    %v3061 = vpack.c.bf16 %v1936, %v1936
    %s3062 = scalar_lea.vmem %s6, 672
    %v3063 = vld [vmem:[%s3062] sm:$0xff]
    %v3064 = vld [vmem:[%s3062 + $0x8] sm:$0xff]
    %v3065 = vld [vmem:[%s3062 + $0x10] sm:$0xff]
    %v3066 = vld [vmem:[%s3062 + $0x18] sm:$0xff]
    %v3067 = vld [vmem:[%s3062 + $0x20] sm:$0xff]
    %v3068 = vld [vmem:[%s3062 + $0x28] sm:$0xff]
    %v3069 = vld [vmem:[%s3062 + $0x30] sm:$0xff]
    %v3070 = vld [vmem:[%s3062 + $0x38] sm:$0xff]
    %v3071 = vld [vmem:[%s3062 + $0x40] sm:$0xff]
    %v3072 = vld [vmem:[%s3062 + $0x48] sm:$0xff]
    %v3073 = vld [vmem:[%s3062 + $0x50] sm:$0xff]
    %v3074 = vld [vmem:[%s3062 + $0x58] sm:$0xff]
    %v3075 = vld [vmem:[%s3062 + $0x60] sm:$0x11]
    %v3076 = vld [vmem:[%s3062 + $0x68] sm:$0x11]
    %v3091 = vunpack.c.l.b16 %v3063
    %v3092 = vunpack.c.h.b16 %v3063
    %v3093 = vunpack.c.l.b16 %v3064
    %v3094 = vunpack.c.h.b16 %v3064
    %v3095 = vunpack.c.l.b16 %v3065
    %v3096 = vunpack.c.h.b16 %v3065
    %v3097 = vunpack.c.l.b16 %v3066
    %v3098 = vunpack.c.h.b16 %v3066
    %v3099 = vunpack.c.l.b16 %v3067
    %v3100 = vunpack.c.h.b16 %v3067
    %v3101 = vunpack.c.l.b16 %v3068
    %v3102 = vunpack.c.h.b16 %v3068
    %v3103 = vunpack.c.l.b16 %v3069
    %v3104 = vunpack.c.h.b16 %v3069
    %v3105 = vunpack.c.l.b16 %v3070
    %v3106 = vunpack.c.h.b16 %v3070
    %v3107 = vunpack.c.l.b16 %v3071
    %v3108 = vunpack.c.h.b16 %v3071
    %v3109 = vunpack.c.l.b16 %v3072
    %v3110 = vunpack.c.h.b16 %v3072
    %v3111 = vunpack.c.l.b16 %v3073
    %v3112 = vunpack.c.h.b16 %v3073
    %v3113 = vunpack.c.l.b16 %v3074
    %v3114 = vunpack.c.h.b16 %v3074
    %v3115 = vunpack.c.l.b16 %v3075
    %v3116 = vunpack.c.h.b16 %v3075
    %v3117 = vunpack.c.l.b16 %v3076
    %v3118 = vunpack.c.h.b16 %v3076
    %v3119 = vpack.c.b16 %v3095, %v3091
    %v3120 = vpack.c.b16 %v3096, %v3092
    %v3121 = vpack.c.b16 %v3097, %v3093
    %v3122 = vpack.c.b16 %v3098, %v3094
    %v3123 = vpack.c.b16 %v3103, %v3099
    %v3124 = vpack.c.b16 %v3104, %v3100
    %v3125 = vpack.c.b16 %v3105, %v3101
    %v3126 = vpack.c.b16 %v3106, %v3102
    %v3127 = vpack.c.b16 %v3111, %v3107
    %v3128 = vpack.c.b16 %v3112, %v3108
    %v3129 = vpack.c.b16 %v3113, %v3109
    %v3130 = vpack.c.b16 %v3114, %v3110
    %v3131 = vpack.c.b16 %v3115, %v3115
    %v3132 = vpack.c.b16 %v3116, %v3116
    %v3133 = vpack.c.b16 %v3117, %v3117
    %v3134 = vpack.c.b16 %v3118, %v3118
    %v3148 = vsel %vm2047, %v3061, 0
    %v3151 = vsel %vm2051, %v3131, 0
    %v3154 = vsel %vm2051, %v3132, 0
    %v3157 = vsel %vm2051, %v3133, 0
    %v3160 = vsel %vm2051, %v3134, 0
    %3162 = vmatprep.subr.bf16.mxu0 %v3120
    %3163 = vmatpush1.bf16.msra.mxu0 %v3119
    %3164 = vmatprep.subr.bf16.mxu0 %v3124
    %3165 = vmatpush1.bf16.msra.mxu0 %v3123
    %3166 = vmatprep.subr.bf16.mxu0 %v3128
    %3167 = vmatpush1.bf16.msra.mxu0 %v3127
    %3168 = vmatprep.subr.bf16.mxu0 %v3154
    %3169 = vmatpush1.bf16.msra.mxu0 %v3151
    %3170 = vmatprep.subr.bf16.mxu0 0
    %3171 = vmatpush1.bf16.msra.mxu0 0
    %3172 = vmatprep.subr.bf16.mxu0 0
    %3173 = vmatpush1.bf16.msra.mxu0 0
    %3174 = vmatprep.subr.bf16.mxu0 0
    %3175 = vmatpush1.bf16.msra.mxu0 0
    %3176 = vmatprep.subr.bf16.mxu0 0
    %3177 = vmatpush1.bf16.msra.mxu0 0
    %3178 = vmatprep.subr.bf16.mxu0 0
    %3179 = vmatpush1.bf16.msra.mxu0 0
    %3180 = vmatprep.subr.bf16.mxu0 0
    %3181 = vmatpush1.bf16.msra.mxu0 0
    %3182 = vmatprep.subr.bf16.mxu0 0
    %3183 = vmatpush1.bf16.msra.mxu0 0
    %3184 = vmatprep.subr.bf16.mxu0 0
    %3185 = vmatpush1.bf16.msra.mxu0 0
    %3186 = vmatprep.subr.bf16.mxu0 0
    %3187 = vmatpush1.bf16.msra.mxu0 0
    %3188 = vmatprep.subr.bf16.mxu0 0
    %3189 = vmatpush1.bf16.msra.mxu0 0
    %3190 = vmatprep.subr.bf16.mxu0 0
    %3191 = vmatpush1.bf16.msra.mxu0 0
    %3192 = vmatprep.subr.bf16.mxu0 0
    %3193 = vmatpush1.bf16.msra.mxu0 0
    %3194 = vmatprep.mubr.bf16.mxu0 0
    %3195 = vmatmul.mubr.bf16.gmra.mrb[0].mxu0 %v3148
    %v3196 = vpop.f32.mrb[0].mxu0
    %v3197 = vadd.f32 0.0, %v3196
    %v3198 = vpop.f32.mrb[0].mxu0
    %v3199 = vadd.f32 0.0, %v3198
    %v3200 = vpop.f32.mrb[0].mxu0
    %v3201 = vpop.f32.mrb[0].mxu0
    %3202 = vdwg.mxu0
    %3203 = vmatprep.subr.bf16.mxu0 %v3122
    %3204 = vmatpush1.bf16.msra.mxu0 %v3121
    %3205 = vmatprep.subr.bf16.mxu0 %v3126
    %3206 = vmatpush1.bf16.msra.mxu0 %v3125
    %3207 = vmatprep.subr.bf16.mxu0 %v3130
    %3208 = vmatpush1.bf16.msra.mxu0 %v3129
    %3209 = vmatprep.subr.bf16.mxu0 %v3160
    %3210 = vmatpush1.bf16.msra.mxu0 %v3157
    %3211 = vmatprep.subr.bf16.mxu0 0
    %3212 = vmatpush1.bf16.msra.mxu0 0
    %3213 = vmatprep.subr.bf16.mxu0 0
    %3214 = vmatpush1.bf16.msra.mxu0 0
    %3215 = vmatprep.subr.bf16.mxu0 0
    %3216 = vmatpush1.bf16.msra.mxu0 0
    %3217 = vmatprep.subr.bf16.mxu0 0
    %3218 = vmatpush1.bf16.msra.mxu0 0
    %3219 = vmatprep.subr.bf16.mxu0 0
    %3220 = vmatpush1.bf16.msra.mxu0 0
    %3221 = vmatprep.subr.bf16.mxu0 0
    %3222 = vmatpush1.bf16.msra.mxu0 0
    %3223 = vmatprep.subr.bf16.mxu0 0
    %3224 = vmatpush1.bf16.msra.mxu0 0
    %3225 = vmatprep.subr.bf16.mxu0 0
    %3226 = vmatpush1.bf16.msra.mxu0 0
    %3227 = vmatprep.subr.bf16.mxu0 0
    %3228 = vmatpush1.bf16.msra.mxu0 0
    %3229 = vmatprep.subr.bf16.mxu0 0
    %3230 = vmatpush1.bf16.msra.mxu0 0
    %3231 = vmatprep.subr.bf16.mxu0 0
    %3232 = vmatpush1.bf16.msra.mxu0 0
    %3233 = vmatprep.subr.bf16.mxu0 0
    %3234 = vmatpush1.bf16.msra.mxu0 0
    %3235 = vmatprep.mubr.bf16.mxu0 0
    %3236 = vmatmul.mubr.bf16.gmra.mrb[0].mxu0 %v3148
    %v3237 = vpop.f32.mrb[0].mxu0
    %v3238 = vadd.f32 0.0, %v3237
    %v3239 = vpop.f32.mrb[0].mxu0
    %v3240 = vadd.f32 0.0, %v3239
    %v3241 = vpop.f32.mrb[0].mxu0
    %v3242 = vpop.f32.mrb[0].mxu0
    %3243 = vdwg.mxu0
    %v3244 = vadd.f32 %v3057, %v3197
    %v3245 = vadd.f32 %v3058, %v3199
    %v3246 = vadd.f32 %v3059, %v3238
    %v3247 = vadd.f32 %v3060, %v3240
    %v3248 = vpack.c.bf16 %v1937, %v1937
    %s3249 = scalar_lea.vmem %s6, 784
    %v3250 = vld [vmem:[%s3249] sm:$0xff]
    %v3251 = vld [vmem:[%s3249 + $0x8] sm:$0xff]
    %v3252 = vld [vmem:[%s3249 + $0x10] sm:$0xff]
    %v3253 = vld [vmem:[%s3249 + $0x18] sm:$0xff]
    %v3254 = vld [vmem:[%s3249 + $0x20] sm:$0xff]
    %v3255 = vld [vmem:[%s3249 + $0x28] sm:$0xff]
    %v3256 = vld [vmem:[%s3249 + $0x30] sm:$0xff]
    %v3257 = vld [vmem:[%s3249 + $0x38] sm:$0xff]
    %v3258 = vld [vmem:[%s3249 + $0x40] sm:$0xff]
    %v3259 = vld [vmem:[%s3249 + $0x48] sm:$0xff]
    %v3260 = vld [vmem:[%s3249 + $0x50] sm:$0xff]
    %v3261 = vld [vmem:[%s3249 + $0x58] sm:$0xff]
    %v3262 = vld [vmem:[%s3249 + $0x60] sm:$0x11]
    %v3263 = vld [vmem:[%s3249 + $0x68] sm:$0x11]
    %v3278 = vunpack.c.l.b16 %v3250
    %v3279 = vunpack.c.h.b16 %v3250
    %v3280 = vunpack.c.l.b16 %v3251
    %v3281 = vunpack.c.h.b16 %v3251
    %v3282 = vunpack.c.l.b16 %v3252
    %v3283 = vunpack.c.h.b16 %v3252
    %v3284 = vunpack.c.l.b16 %v3253
    %v3285 = vunpack.c.h.b16 %v3253
    %v3286 = vunpack.c.l.b16 %v3254
    %v3287 = vunpack.c.h.b16 %v3254
    %v3288 = vunpack.c.l.b16 %v3255
    %v3289 = vunpack.c.h.b16 %v3255
    %v3290 = vunpack.c.l.b16 %v3256
    %v3291 = vunpack.c.h.b16 %v3256
    %v3292 = vunpack.c.l.b16 %v3257
    %v3293 = vunpack.c.h.b16 %v3257
    %v3294 = vunpack.c.l.b16 %v3258
    %v3295 = vunpack.c.h.b16 %v3258
    %v3296 = vunpack.c.l.b16 %v3259
    %v3297 = vunpack.c.h.b16 %v3259
    %v3298 = vunpack.c.l.b16 %v3260
    %v3299 = vunpack.c.h.b16 %v3260
    %v3300 = vunpack.c.l.b16 %v3261
    %v3301 = vunpack.c.h.b16 %v3261
    %v3302 = vunpack.c.l.b16 %v3262
    %v3303 = vunpack.c.h.b16 %v3262
    %v3304 = vunpack.c.l.b16 %v3263
    %v3305 = vunpack.c.h.b16 %v3263
    %v3306 = vpack.c.b16 %v3282, %v3278
    %v3307 = vpack.c.b16 %v3283, %v3279
    %v3308 = vpack.c.b16 %v3284, %v3280
    %v3309 = vpack.c.b16 %v3285, %v3281
    %v3310 = vpack.c.b16 %v3290, %v3286
    %v3311 = vpack.c.b16 %v3291, %v3287
    %v3312 = vpack.c.b16 %v3292, %v3288
    %v3313 = vpack.c.b16 %v3293, %v3289
    %v3314 = vpack.c.b16 %v3298, %v3294
    %v3315 = vpack.c.b16 %v3299, %v3295
    %v3316 = vpack.c.b16 %v3300, %v3296
    %v3317 = vpack.c.b16 %v3301, %v3297
    %v3318 = vpack.c.b16 %v3302, %v3302
    %v3319 = vpack.c.b16 %v3303, %v3303
    %v3320 = vpack.c.b16 %v3304, %v3304
    %v3321 = vpack.c.b16 %v3305, %v3305
    %v3335 = vsel %vm2047, %v3248, 0
    %v3338 = vsel %vm2051, %v3318, 0
    %v3341 = vsel %vm2051, %v3319, 0
    %v3344 = vsel %vm2051, %v3320, 0
    %v3347 = vsel %vm2051, %v3321, 0
    %3349 = vmatprep.subr.bf16.mxu0 %v3307
    %3350 = vmatpush1.bf16.msra.mxu0 %v3306
    %3351 = vmatprep.subr.bf16.mxu0 %v3311
    %3352 = vmatpush1.bf16.msra.mxu0 %v3310
    %3353 = vmatprep.subr.bf16.mxu0 %v3315
    %3354 = vmatpush1.bf16.msra.mxu0 %v3314
    %3355 = vmatprep.subr.bf16.mxu0 %v3341
    %3356 = vmatpush1.bf16.msra.mxu0 %v3338
    %3357 = vmatprep.subr.bf16.mxu0 0
    %3358 = vmatpush1.bf16.msra.mxu0 0
    %3359 = vmatprep.subr.bf16.mxu0 0
    %3360 = vmatpush1.bf16.msra.mxu0 0
    %3361 = vmatprep.subr.bf16.mxu0 0
    %3362 = vmatpush1.bf16.msra.mxu0 0
    %3363 = vmatprep.subr.bf16.mxu0 0
    %3364 = vmatpush1.bf16.msra.mxu0 0
    %3365 = vmatprep.subr.bf16.mxu0 0
    %3366 = vmatpush1.bf16.msra.mxu0 0
    %3367 = vmatprep.subr.bf16.mxu0 0
    %3368 = vmatpush1.bf16.msra.mxu0 0
    %3369 = vmatprep.subr.bf16.mxu0 0
    %3370 = vmatpush1.bf16.msra.mxu0 0
    %3371 = vmatprep.subr.bf16.mxu0 0
    %3372 = vmatpush1.bf16.msra.mxu0 0
    %3373 = vmatprep.subr.bf16.mxu0 0
    %3374 = vmatpush1.bf16.msra.mxu0 0
    %3375 = vmatprep.subr.bf16.mxu0 0
    %3376 = vmatpush1.bf16.msra.mxu0 0
    %3377 = vmatprep.subr.bf16.mxu0 0
    %3378 = vmatpush1.bf16.msra.mxu0 0
    %3379 = vmatprep.subr.bf16.mxu0 0
    %3380 = vmatpush1.bf16.msra.mxu0 0
    %3381 = vmatprep.mubr.bf16.mxu0 0
    %3382 = vmatmul.mubr.bf16.gmra.mrb[0].mxu0 %v3335
    %v3383 = vpop.f32.mrb[0].mxu0
    %v3384 = vadd.f32 0.0, %v3383
    %v3385 = vpop.f32.mrb[0].mxu0
    %v3386 = vadd.f32 0.0, %v3385
    %v3387 = vpop.f32.mrb[0].mxu0
    %v3388 = vpop.f32.mrb[0].mxu0
    %3389 = vdwg.mxu0
    %3390 = vmatprep.subr.bf16.mxu0 %v3309
    %3391 = vmatpush1.bf16.msra.mxu0 %v3308
    %3392 = vmatprep.subr.bf16.mxu0 %v3313
    %3393 = vmatpush1.bf16.msra.mxu0 %v3312
    %3394 = vmatprep.subr.bf16.mxu0 %v3317
    %3395 = vmatpush1.bf16.msra.mxu0 %v3316
    %3396 = vmatprep.subr.bf16.mxu0 %v3347
    %3397 = vmatpush1.bf16.msra.mxu0 %v3344
    %3398 = vmatprep.subr.bf16.mxu0 0
    %3399 = vmatpush1.bf16.msra.mxu0 0
    %3400 = vmatprep.subr.bf16.mxu0 0
    %3401 = vmatpush1.bf16.msra.mxu0 0
    %3402 = vmatprep.subr.bf16.mxu0 0
    %3403 = vmatpush1.bf16.msra.mxu0 0
    %3404 = vmatprep.subr.bf16.mxu0 0
    %3405 = vmatpush1.bf16.msra.mxu0 0
    %3406 = vmatprep.subr.bf16.mxu0 0
    %3407 = vmatpush1.bf16.msra.mxu0 0
    %3408 = vmatprep.subr.bf16.mxu0 0
    %3409 = vmatpush1.bf16.msra.mxu0 0
    %3410 = vmatprep.subr.bf16.mxu0 0
    %3411 = vmatpush1.bf16.msra.mxu0 0
    %3412 = vmatprep.subr.bf16.mxu0 0
    %3413 = vmatpush1.bf16.msra.mxu0 0
    %3414 = vmatprep.subr.bf16.mxu0 0
    %3415 = vmatpush1.bf16.msra.mxu0 0
    %3416 = vmatprep.subr.bf16.mxu0 0
    %3417 = vmatpush1.bf16.msra.mxu0 0
    %3418 = vmatprep.subr.bf16.mxu0 0
    %3419 = vmatpush1.bf16.msra.mxu0 0
    %3420 = vmatprep.subr.bf16.mxu0 0
    %3421 = vmatpush1.bf16.msra.mxu0 0
    %3422 = vmatprep.mubr.bf16.mxu0 0
    %3423 = vmatmul.mubr.bf16.gmra.mrb[0].mxu0 %v3335
    %v3424 = vpop.f32.mrb[0].mxu0
    %v3425 = vadd.f32 0.0, %v3424
    %v3426 = vpop.f32.mrb[0].mxu0
    %v3427 = vadd.f32 0.0, %v3426
    %v3428 = vpop.f32.mrb[0].mxu0
    %v3429 = vpop.f32.mrb[0].mxu0
    %3430 = vdwg.mxu0
    %v3431 = vadd.f32 %v3244, %v3384
    %v3432 = vadd.f32 %v3245, %v3386
    %v3433 = vadd.f32 %v3246, %v3425
    %v3434 = vadd.f32 %v3247, %v3427
    %v3435 = vpack.c.bf16 %v1938, %v1938
    %s3436 = scalar_lea.vmem %s6, 896
    %v3437 = vld [vmem:[%s3436] sm:$0xff]
    %v3438 = vld [vmem:[%s3436 + $0x8] sm:$0xff]
    %v3439 = vld [vmem:[%s3436 + $0x10] sm:$0xff]
    %v3440 = vld [vmem:[%s3436 + $0x18] sm:$0xff]
    %v3441 = vld [vmem:[%s3436 + $0x20] sm:$0xff]
    %v3442 = vld [vmem:[%s3436 + $0x28] sm:$0xff]
    %v3443 = vld [vmem:[%s3436 + $0x30] sm:$0xff]
    %v3444 = vld [vmem:[%s3436 + $0x38] sm:$0xff]
    %v3445 = vld [vmem:[%s3436 + $0x40] sm:$0xff]
    %v3446 = vld [vmem:[%s3436 + $0x48] sm:$0xff]
    %v3447 = vld [vmem:[%s3436 + $0x50] sm:$0xff]
    %v3448 = vld [vmem:[%s3436 + $0x58] sm:$0xff]
    %v3449 = vld [vmem:[%s3436 + $0x60] sm:$0x11]
    %v3450 = vld [vmem:[%s3436 + $0x68] sm:$0x11]
    %v3465 = vunpack.c.l.b16 %v3437
    %v3466 = vunpack.c.h.b16 %v3437
    %v3467 = vunpack.c.l.b16 %v3438
    %v3468 = vunpack.c.h.b16 %v3438
    %v3469 = vunpack.c.l.b16 %v3439
    %v3470 = vunpack.c.h.b16 %v3439
    %v3471 = vunpack.c.l.b16 %v3440
    %v3472 = vunpack.c.h.b16 %v3440
    %v3473 = vunpack.c.l.b16 %v3441
    %v3474 = vunpack.c.h.b16 %v3441
    %v3475 = vunpack.c.l.b16 %v3442
    %v3476 = vunpack.c.h.b16 %v3442
    %v3477 = vunpack.c.l.b16 %v3443
    %v3478 = vunpack.c.h.b16 %v3443
    %v3479 = vunpack.c.l.b16 %v3444
    %v3480 = vunpack.c.h.b16 %v3444
    %v3481 = vunpack.c.l.b16 %v3445
    %v3482 = vunpack.c.h.b16 %v3445
    %v3483 = vunpack.c.l.b16 %v3446
    %v3484 = vunpack.c.h.b16 %v3446
    %v3485 = vunpack.c.l.b16 %v3447
    %v3486 = vunpack.c.h.b16 %v3447
    %v3487 = vunpack.c.l.b16 %v3448
    %v3488 = vunpack.c.h.b16 %v3448
    %v3489 = vunpack.c.l.b16 %v3449
    %v3490 = vunpack.c.h.b16 %v3449
    %v3491 = vunpack.c.l.b16 %v3450
    %v3492 = vunpack.c.h.b16 %v3450
    %v3493 = vpack.c.b16 %v3469, %v3465
    %v3494 = vpack.c.b16 %v3470, %v3466
    %v3495 = vpack.c.b16 %v3471, %v3467
    %v3496 = vpack.c.b16 %v3472, %v3468
    %v3497 = vpack.c.b16 %v3477, %v3473
    %v3498 = vpack.c.b16 %v3478, %v3474
    %v3499 = vpack.c.b16 %v3479, %v3475
    %v3500 = vpack.c.b16 %v3480, %v3476
    %v3501 = vpack.c.b16 %v3485, %v3481
    %v3502 = vpack.c.b16 %v3486, %v3482
    %v3503 = vpack.c.b16 %v3487, %v3483
    %v3504 = vpack.c.b16 %v3488, %v3484
    %v3505 = vpack.c.b16 %v3489, %v3489
    %v3506 = vpack.c.b16 %v3490, %v3490
    %v3507 = vpack.c.b16 %v3491, %v3491
    %v3508 = vpack.c.b16 %v3492, %v3492
    %v3522 = vsel %vm2047, %v3435, 0
    %v3525 = vsel %vm2051, %v3505, 0
    %v3528 = vsel %vm2051, %v3506, 0
    %v3531 = vsel %vm2051, %v3507, 0
    %v3534 = vsel %vm2051, %v3508, 0
    %3536 = vmatprep.subr.bf16.mxu0 %v3494
    %3537 = vmatpush1.bf16.msra.mxu0 %v3493
    %3538 = vmatprep.subr.bf16.mxu0 %v3498
    %3539 = vmatpush1.bf16.msra.mxu0 %v3497
    %3540 = vmatprep.subr.bf16.mxu0 %v3502
    %3541 = vmatpush1.bf16.msra.mxu0 %v3501
    %3542 = vmatprep.subr.bf16.mxu0 %v3528
    %3543 = vmatpush1.bf16.msra.mxu0 %v3525
    %3544 = vmatprep.subr.bf16.mxu0 0
    %3545 = vmatpush1.bf16.msra.mxu0 0
    %3546 = vmatprep.subr.bf16.mxu0 0
    %3547 = vmatpush1.bf16.msra.mxu0 0
    %3548 = vmatprep.subr.bf16.mxu0 0
    %3549 = vmatpush1.bf16.msra.mxu0 0
    %3550 = vmatprep.subr.bf16.mxu0 0
    %3551 = vmatpush1.bf16.msra.mxu0 0
    %3552 = vmatprep.subr.bf16.mxu0 0
    %3553 = vmatpush1.bf16.msra.mxu0 0
    %3554 = vmatprep.subr.bf16.mxu0 0
    %3555 = vmatpush1.bf16.msra.mxu0 0
    %3556 = vmatprep.subr.bf16.mxu0 0
    %3557 = vmatpush1.bf16.msra.mxu0 0
    %3558 = vmatprep.subr.bf16.mxu0 0
    %3559 = vmatpush1.bf16.msra.mxu0 0
    %3560 = vmatprep.subr.bf16.mxu0 0
    %3561 = vmatpush1.bf16.msra.mxu0 0
    %3562 = vmatprep.subr.bf16.mxu0 0
    %3563 = vmatpush1.bf16.msra.mxu0 0
    %3564 = vmatprep.subr.bf16.mxu0 0
    %3565 = vmatpush1.bf16.msra.mxu0 0
    %3566 = vmatprep.subr.bf16.mxu0 0
    %3567 = vmatpush1.bf16.msra.mxu0 0
    %3568 = vmatprep.mubr.bf16.mxu0 0
    %3569 = vmatmul.mubr.bf16.gmra.mrb[0].mxu0 %v3522
    %v3570 = vpop.f32.mrb[0].mxu0
    %v3571 = vadd.f32 0.0, %v3570
    %v3572 = vpop.f32.mrb[0].mxu0
    %v3573 = vadd.f32 0.0, %v3572
    %v3574 = vpop.f32.mrb[0].mxu0
    %v3575 = vpop.f32.mrb[0].mxu0
    %3576 = vdwg.mxu0
    %3577 = vmatprep.subr.bf16.mxu0 %v3496
    %3578 = vmatpush1.bf16.msra.mxu0 %v3495
    %3579 = vmatprep.subr.bf16.mxu0 %v3500
    %3580 = vmatpush1.bf16.msra.mxu0 %v3499
    %3581 = vmatprep.subr.bf16.mxu0 %v3504
    %3582 = vmatpush1.bf16.msra.mxu0 %v3503
    %3583 = vmatprep.subr.bf16.mxu0 %v3534
    %3584 = vmatpush1.bf16.msra.mxu0 %v3531
    %3585 = vmatprep.subr.bf16.mxu0 0
    %3586 = vmatpush1.bf16.msra.mxu0 0
    %3587 = vmatprep.subr.bf16.mxu0 0
    %3588 = vmatpush1.bf16.msra.mxu0 0
    %3589 = vmatprep.subr.bf16.mxu0 0
    %3590 = vmatpush1.bf16.msra.mxu0 0
    %3591 = vmatprep.subr.bf16.mxu0 0
    %3592 = vmatpush1.bf16.msra.mxu0 0
    %3593 = vmatprep.subr.bf16.mxu0 0
    %3594 = vmatpush1.bf16.msra.mxu0 0
    %3595 = vmatprep.subr.bf16.mxu0 0
    %3596 = vmatpush1.bf16.msra.mxu0 0
    %3597 = vmatprep.subr.bf16.mxu0 0
    %3598 = vmatpush1.bf16.msra.mxu0 0
    %3599 = vmatprep.subr.bf16.mxu0 0
    %3600 = vmatpush1.bf16.msra.mxu0 0
    %3601 = vmatprep.subr.bf16.mxu0 0
    %3602 = vmatpush1.bf16.msra.mxu0 0
    %3603 = vmatprep.subr.bf16.mxu0 0
    %3604 = vmatpush1.bf16.msra.mxu0 0
    %3605 = vmatprep.subr.bf16.mxu0 0
    %3606 = vmatpush1.bf16.msra.mxu0 0
    %3607 = vmatprep.subr.bf16.mxu0 0
    %3608 = vmatpush1.bf16.msra.mxu0 0
    %3609 = vmatprep.mubr.bf16.mxu0 0
    %3610 = vmatmul.mubr.bf16.gmra.mrb[0].mxu0 %v3522
    %v3611 = vpop.f32.mrb[0].mxu0
    %v3612 = vadd.f32 0.0, %v3611
    %v3613 = vpop.f32.mrb[0].mxu0
    %v3614 = vadd.f32 0.0, %v3613
    %v3615 = vpop.f32.mrb[0].mxu0
    %v3616 = vpop.f32.mrb[0].mxu0
    %3617 = vdwg.mxu0
    %v3618 = vadd.f32 %v3431, %v3571
    %v3619 = vadd.f32 %v3432, %v3573
    %v3620 = vadd.f32 %v3433, %v3612
    %v3621 = vadd.f32 %v3434, %v3614
    %v3622 = vpack.c.bf16 %v1939, %v1939
    %s3623 = scalar_lea.vmem %s6, 1008
    %v3624 = vld [vmem:[%s3623] sm:$0xff]
    %v3625 = vld [vmem:[%s3623 + $0x8] sm:$0xff]
    %v3626 = vld [vmem:[%s3623 + $0x10] sm:$0xff]
    %v3627 = vld [vmem:[%s3623 + $0x18] sm:$0xff]
    %v3628 = vld [vmem:[%s3623 + $0x20] sm:$0xff]
    %v3629 = vld [vmem:[%s3623 + $0x28] sm:$0xff]
    %v3630 = vld [vmem:[%s3623 + $0x30] sm:$0xff]
    %v3631 = vld [vmem:[%s3623 + $0x38] sm:$0xff]
    %v3632 = vld [vmem:[%s3623 + $0x40] sm:$0xff]
    %v3633 = vld [vmem:[%s3623 + $0x48] sm:$0xff]
    %v3634 = vld [vmem:[%s3623 + $0x50] sm:$0xff]
    %v3635 = vld [vmem:[%s3623 + $0x58] sm:$0xff]
    %v3636 = vld [vmem:[%s3623 + $0x60] sm:$0x11]
    %v3637 = vld [vmem:[%s3623 + $0x68] sm:$0x11]
    %v3652 = vunpack.c.l.b16 %v3624
    %v3653 = vunpack.c.h.b16 %v3624
    %v3654 = vunpack.c.l.b16 %v3625
    %v3655 = vunpack.c.h.b16 %v3625
    %v3656 = vunpack.c.l.b16 %v3626
    %v3657 = vunpack.c.h.b16 %v3626
    %v3658 = vunpack.c.l.b16 %v3627
    %v3659 = vunpack.c.h.b16 %v3627
    %v3660 = vunpack.c.l.b16 %v3628
    %v3661 = vunpack.c.h.b16 %v3628
    %v3662 = vunpack.c.l.b16 %v3629
    %v3663 = vunpack.c.h.b16 %v3629
    %v3664 = vunpack.c.l.b16 %v3630
    %v3665 = vunpack.c.h.b16 %v3630
    %v3666 = vunpack.c.l.b16 %v3631
    %v3667 = vunpack.c.h.b16 %v3631
    %v3668 = vunpack.c.l.b16 %v3632
    %v3669 = vunpack.c.h.b16 %v3632
    %v3670 = vunpack.c.l.b16 %v3633
    %v3671 = vunpack.c.h.b16 %v3633
    %v3672 = vunpack.c.l.b16 %v3634
    %v3673 = vunpack.c.h.b16 %v3634
    %v3674 = vunpack.c.l.b16 %v3635
    %v3675 = vunpack.c.h.b16 %v3635
    %v3676 = vunpack.c.l.b16 %v3636
    %v3677 = vunpack.c.h.b16 %v3636
    %v3678 = vunpack.c.l.b16 %v3637
    %v3679 = vunpack.c.h.b16 %v3637
    %v3680 = vpack.c.b16 %v3656, %v3652
    %v3681 = vpack.c.b16 %v3657, %v3653
    %v3682 = vpack.c.b16 %v3658, %v3654
    %v3683 = vpack.c.b16 %v3659, %v3655
    %v3684 = vpack.c.b16 %v3664, %v3660
    %v3685 = vpack.c.b16 %v3665, %v3661
    %v3686 = vpack.c.b16 %v3666, %v3662
    %v3687 = vpack.c.b16 %v3667, %v3663
    %v3688 = vpack.c.b16 %v3672, %v3668
    %v3689 = vpack.c.b16 %v3673, %v3669
    %v3690 = vpack.c.b16 %v3674, %v3670
    %v3691 = vpack.c.b16 %v3675, %v3671
    %v3692 = vpack.c.b16 %v3676, %v3676
    %v3693 = vpack.c.b16 %v3677, %v3677
    %v3694 = vpack.c.b16 %v3678, %v3678
    %v3695 = vpack.c.b16 %v3679, %v3679
    %v3709 = vsel %vm2047, %v3622, 0
    %v3712 = vsel %vm2051, %v3692, 0
    %v3715 = vsel %vm2051, %v3693, 0
    %v3718 = vsel %vm2051, %v3694, 0
    %v3721 = vsel %vm2051, %v3695, 0
    %3723 = vmatprep.subr.bf16.mxu0 %v3681
    %3724 = vmatpush1.bf16.msra.mxu0 %v3680
    %3725 = vmatprep.subr.bf16.mxu0 %v3685
    %3726 = vmatpush1.bf16.msra.mxu0 %v3684
    %3727 = vmatprep.subr.bf16.mxu0 %v3689
    %3728 = vmatpush1.bf16.msra.mxu0 %v3688
    %3729 = vmatprep.subr.bf16.mxu0 %v3715
    %3730 = vmatpush1.bf16.msra.mxu0 %v3712
    %3731 = vmatprep.subr.bf16.mxu0 0
    %3732 = vmatpush1.bf16.msra.mxu0 0
    %3733 = vmatprep.subr.bf16.mxu0 0
    %3734 = vmatpush1.bf16.msra.mxu0 0
    %3735 = vmatprep.subr.bf16.mxu0 0
    %3736 = vmatpush1.bf16.msra.mxu0 0
    %3737 = vmatprep.subr.bf16.mxu0 0
    %3738 = vmatpush1.bf16.msra.mxu0 0
    %3739 = vmatprep.subr.bf16.mxu0 0
    %3740 = vmatpush1.bf16.msra.mxu0 0
    %3741 = vmatprep.subr.bf16.mxu0 0
    %3742 = vmatpush1.bf16.msra.mxu0 0
    %3743 = vmatprep.subr.bf16.mxu0 0
    %3744 = vmatpush1.bf16.msra.mxu0 0
    %3745 = vmatprep.subr.bf16.mxu0 0
    %3746 = vmatpush1.bf16.msra.mxu0 0
    %3747 = vmatprep.subr.bf16.mxu0 0
    %3748 = vmatpush1.bf16.msra.mxu0 0
    %3749 = vmatprep.subr.bf16.mxu0 0
    %3750 = vmatpush1.bf16.msra.mxu0 0
    %3751 = vmatprep.subr.bf16.mxu0 0
    %3752 = vmatpush1.bf16.msra.mxu0 0
    %3753 = vmatprep.subr.bf16.mxu0 0
    %3754 = vmatpush1.bf16.msra.mxu0 0
    %3755 = vmatprep.mubr.bf16.mxu0 0
    %3756 = vmatmul.mubr.bf16.gmra.mrb[0].mxu0 %v3709
    %v3757 = vpop.f32.mrb[0].mxu0
    %v3758 = vadd.f32 0.0, %v3757
    %v3759 = vpop.f32.mrb[0].mxu0
    %v3760 = vadd.f32 0.0, %v3759
    %v3761 = vpop.f32.mrb[0].mxu0
    %v3762 = vpop.f32.mrb[0].mxu0
    %3763 = vdwg.mxu0
    %3764 = vmatprep.subr.bf16.mxu0 %v3683
    %3765 = vmatpush1.bf16.msra.mxu0 %v3682
    %3766 = vmatprep.subr.bf16.mxu0 %v3687
    %3767 = vmatpush1.bf16.msra.mxu0 %v3686
    %3768 = vmatprep.subr.bf16.mxu0 %v3691
    %3769 = vmatpush1.bf16.msra.mxu0 %v3690
    %3770 = vmatprep.subr.bf16.mxu0 %v3721
    %3771 = vmatpush1.bf16.msra.mxu0 %v3718
    %3772 = vmatprep.subr.bf16.mxu0 0
    %3773 = vmatpush1.bf16.msra.mxu0 0
    %3774 = vmatprep.subr.bf16.mxu0 0
    %3775 = vmatpush1.bf16.msra.mxu0 0
    %3776 = vmatprep.subr.bf16.mxu0 0
    %3777 = vmatpush1.bf16.msra.mxu0 0
    %3778 = vmatprep.subr.bf16.mxu0 0
    %3779 = vmatpush1.bf16.msra.mxu0 0
    %3780 = vmatprep.subr.bf16.mxu0 0
    %3781 = vmatpush1.bf16.msra.mxu0 0
    %3782 = vmatprep.subr.bf16.mxu0 0
    %3783 = vmatpush1.bf16.msra.mxu0 0
    %3784 = vmatprep.subr.bf16.mxu0 0
    %3785 = vmatpush1.bf16.msra.mxu0 0
    %3786 = vmatprep.subr.bf16.mxu0 0
    %3787 = vmatpush1.bf16.msra.mxu0 0
    %3788 = vmatprep.subr.bf16.mxu0 0
    %3789 = vmatpush1.bf16.msra.mxu0 0
    %3790 = vmatprep.subr.bf16.mxu0 0
    %3791 = vmatpush1.bf16.msra.mxu0 0
    %3792 = vmatprep.subr.bf16.mxu0 0
    %3793 = vmatpush1.bf16.msra.mxu0 0
    %3794 = vmatprep.subr.bf16.mxu0 0
    %3795 = vmatpush1.bf16.msra.mxu0 0
    %3796 = vmatprep.mubr.bf16.mxu0 0
    %3797 = vmatmul.mubr.bf16.gmra.mrb[0].mxu0 %v3709
    %v3798 = vpop.f32.mrb[0].mxu0
    %v3799 = vadd.f32 0.0, %v3798
    %v3800 = vpop.f32.mrb[0].mxu0
    %v3801 = vadd.f32 0.0, %v3800
    %v3802 = vpop.f32.mrb[0].mxu0
    %v3803 = vpop.f32.mrb[0].mxu0
    %3804 = vdwg.mxu0
    %v3805 = vadd.f32 %v3618, %v3758
    %v3806 = vadd.f32 %v3619, %v3760
    %v3807 = vadd.f32 %v3620, %v3799
    %v3808 = vadd.f32 %v3621, %v3801
    %v3809 = vpack.c.bf16 %v1940, %v1940
    %s3810 = scalar_lea.vmem %s6, 1120
    %v3811 = vld [vmem:[%s3810] sm:$0xff]
    %v3812 = vld [vmem:[%s3810 + $0x8] sm:$0xff]
    %v3813 = vld [vmem:[%s3810 + $0x10] sm:$0xff]
    %v3814 = vld [vmem:[%s3810 + $0x18] sm:$0xff]
    %v3815 = vld [vmem:[%s3810 + $0x20] sm:$0xff]
    %v3816 = vld [vmem:[%s3810 + $0x28] sm:$0xff]
    %v3817 = vld [vmem:[%s3810 + $0x30] sm:$0xff]
    %v3818 = vld [vmem:[%s3810 + $0x38] sm:$0xff]
    %v3819 = vld [vmem:[%s3810 + $0x40] sm:$0xff]
    %v3820 = vld [vmem:[%s3810 + $0x48] sm:$0xff]
    %v3821 = vld [vmem:[%s3810 + $0x50] sm:$0xff]
    %v3822 = vld [vmem:[%s3810 + $0x58] sm:$0xff]
    %v3823 = vld [vmem:[%s3810 + $0x60] sm:$0x11]
    %v3824 = vld [vmem:[%s3810 + $0x68] sm:$0x11]
    %v3839 = vunpack.c.l.b16 %v3811
    %v3840 = vunpack.c.h.b16 %v3811
    %v3841 = vunpack.c.l.b16 %v3812
    %v3842 = vunpack.c.h.b16 %v3812
    %v3843 = vunpack.c.l.b16 %v3813
    %v3844 = vunpack.c.h.b16 %v3813
    %v3845 = vunpack.c.l.b16 %v3814
    %v3846 = vunpack.c.h.b16 %v3814
    %v3847 = vunpack.c.l.b16 %v3815
    %v3848 = vunpack.c.h.b16 %v3815
    %v3849 = vunpack.c.l.b16 %v3816
    %v3850 = vunpack.c.h.b16 %v3816
    %v3851 = vunpack.c.l.b16 %v3817
    %v3852 = vunpack.c.h.b16 %v3817
    %v3853 = vunpack.c.l.b16 %v3818
    %v3854 = vunpack.c.h.b16 %v3818
    %v3855 = vunpack.c.l.b16 %v3819
    %v3856 = vunpack.c.h.b16 %v3819
    %v3857 = vunpack.c.l.b16 %v3820
    %v3858 = vunpack.c.h.b16 %v3820
    %v3859 = vunpack.c.l.b16 %v3821
    %v3860 = vunpack.c.h.b16 %v3821
    %v3861 = vunpack.c.l.b16 %v3822
    %v3862 = vunpack.c.h.b16 %v3822
    %v3863 = vunpack.c.l.b16 %v3823
    %v3864 = vunpack.c.h.b16 %v3823
    %v3865 = vunpack.c.l.b16 %v3824
    %v3866 = vunpack.c.h.b16 %v3824
    %v3867 = vpack.c.b16 %v3843, %v3839
    %v3868 = vpack.c.b16 %v3844, %v3840
    %v3869 = vpack.c.b16 %v3845, %v3841
    %v3870 = vpack.c.b16 %v3846, %v3842
    %v3871 = vpack.c.b16 %v3851, %v3847
    %v3872 = vpack.c.b16 %v3852, %v3848
    %v3873 = vpack.c.b16 %v3853, %v3849
    %v3874 = vpack.c.b16 %v3854, %v3850
    %v3875 = vpack.c.b16 %v3859, %v3855
    %v3876 = vpack.c.b16 %v3860, %v3856
    %v3877 = vpack.c.b16 %v3861, %v3857
    %v3878 = vpack.c.b16 %v3862, %v3858
    %v3879 = vpack.c.b16 %v3863, %v3863
    %v3880 = vpack.c.b16 %v3864, %v3864
    %v3881 = vpack.c.b16 %v3865, %v3865
    %v3882 = vpack.c.b16 %v3866, %v3866
    %v3896 = vsel %vm2047, %v3809, 0
    %v3899 = vsel %vm2051, %v3879, 0
    %v3902 = vsel %vm2051, %v3880, 0
    %v3905 = vsel %vm2051, %v3881, 0
    %v3908 = vsel %vm2051, %v3882, 0
    %3910 = vmatprep.subr.bf16.mxu0 %v3868
    %3911 = vmatpush1.bf16.msra.mxu0 %v3867
    %3912 = vmatprep.subr.bf16.mxu0 %v3872
    %3913 = vmatpush1.bf16.msra.mxu0 %v3871
    %3914 = vmatprep.subr.bf16.mxu0 %v3876
    %3915 = vmatpush1.bf16.msra.mxu0 %v3875
    %3916 = vmatprep.subr.bf16.mxu0 %v3902
    %3917 = vmatpush1.bf16.msra.mxu0 %v3899
    %3918 = vmatprep.subr.bf16.mxu0 0
    %3919 = vmatpush1.bf16.msra.mxu0 0
    %3920 = vmatprep.subr.bf16.mxu0 0
    %3921 = vmatpush1.bf16.msra.mxu0 0
    %3922 = vmatprep.subr.bf16.mxu0 0
    %3923 = vmatpush1.bf16.msra.mxu0 0
    %3924 = vmatprep.subr.bf16.mxu0 0
    %3925 = vmatpush1.bf16.msra.mxu0 0
    %3926 = vmatprep.subr.bf16.mxu0 0
    %3927 = vmatpush1.bf16.msra.mxu0 0
    %3928 = vmatprep.subr.bf16.mxu0 0
    %3929 = vmatpush1.bf16.msra.mxu0 0
    %3930 = vmatprep.subr.bf16.mxu0 0
    %3931 = vmatpush1.bf16.msra.mxu0 0
    %3932 = vmatprep.subr.bf16.mxu0 0
    %3933 = vmatpush1.bf16.msra.mxu0 0
    %3934 = vmatprep.subr.bf16.mxu0 0
    %3935 = vmatpush1.bf16.msra.mxu0 0
    %3936 = vmatprep.subr.bf16.mxu0 0
    %3937 = vmatpush1.bf16.msra.mxu0 0
    %3938 = vmatprep.subr.bf16.mxu0 0
    %3939 = vmatpush1.bf16.msra.mxu0 0
    %3940 = vmatprep.subr.bf16.mxu0 0
    %3941 = vmatpush1.bf16.msra.mxu0 0
    %3942 = vmatprep.mubr.bf16.mxu0 0
    %3943 = vmatmul.mubr.bf16.gmra.mrb[0].mxu0 %v3896
    %v3944 = vpop.f32.mrb[0].mxu0
    %v3945 = vadd.f32 0.0, %v3944
    %v3946 = vpop.f32.mrb[0].mxu0
    %v3947 = vadd.f32 0.0, %v3946
    %v3948 = vpop.f32.mrb[0].mxu0
    %v3949 = vpop.f32.mrb[0].mxu0
    %3950 = vdwg.mxu0
    %3951 = vmatprep.subr.bf16.mxu0 %v3870
    %3952 = vmatpush1.bf16.msra.mxu0 %v3869
    %3953 = vmatprep.subr.bf16.mxu0 %v3874
    %3954 = vmatpush1.bf16.msra.mxu0 %v3873
    %3955 = vmatprep.subr.bf16.mxu0 %v3878
    %3956 = vmatpush1.bf16.msra.mxu0 %v3877
    %3957 = vmatprep.subr.bf16.mxu0 %v3908
    %3958 = vmatpush1.bf16.msra.mxu0 %v3905
    %3959 = vmatprep.subr.bf16.mxu0 0
    %3960 = vmatpush1.bf16.msra.mxu0 0
    %3961 = vmatprep.subr.bf16.mxu0 0
    %3962 = vmatpush1.bf16.msra.mxu0 0
    %3963 = vmatprep.subr.bf16.mxu0 0
    %3964 = vmatpush1.bf16.msra.mxu0 0
    %3965 = vmatprep.subr.bf16.mxu0 0
    %3966 = vmatpush1.bf16.msra.mxu0 0
    %3967 = vmatprep.subr.bf16.mxu0 0
    %3968 = vmatpush1.bf16.msra.mxu0 0
    %3969 = vmatprep.subr.bf16.mxu0 0
    %3970 = vmatpush1.bf16.msra.mxu0 0
    %3971 = vmatprep.subr.bf16.mxu0 0
    %3972 = vmatpush1.bf16.msra.mxu0 0
    %3973 = vmatprep.subr.bf16.mxu0 0
    %3974 = vmatpush1.bf16.msra.mxu0 0
    %3975 = vmatprep.subr.bf16.mxu0 0
    %3976 = vmatpush1.bf16.msra.mxu0 0
    %3977 = vmatprep.subr.bf16.mxu0 0
    %3978 = vmatpush1.bf16.msra.mxu0 0
    %3979 = vmatprep.subr.bf16.mxu0 0
    %3980 = vmatpush1.bf16.msra.mxu0 0
    %3981 = vmatprep.subr.bf16.mxu0 0
    %3982 = vmatpush1.bf16.msra.mxu0 0
    %3983 = vmatprep.mubr.bf16.mxu0 0
    %3984 = vmatmul.mubr.bf16.gmra.mrb[0].mxu0 %v3896
    %v3985 = vpop.f32.mrb[0].mxu0
    %v3986 = vadd.f32 0.0, %v3985
    %v3987 = vpop.f32.mrb[0].mxu0
    %v3988 = vadd.f32 0.0, %v3987
    %v3989 = vpop.f32.mrb[0].mxu0
    %v3990 = vpop.f32.mrb[0].mxu0
    %3991 = vdwg.mxu0
    %v3992 = vadd.f32 %v3805, %v3945
    %v3993 = vadd.f32 %v3806, %v3947
    %v3994 = vadd.f32 %v3807, %v3986
    %v3995 = vadd.f32 %v3808, %v3988
    %v3996 = vpack.c.bf16 %v1941, %v1941
    %s3997 = scalar_lea.vmem %s6, 1232
    %v3998 = vld [vmem:[%s3997] sm:$0xff]
    %v3999 = vld [vmem:[%s3997 + $0x8] sm:$0xff]
    %v4000 = vld [vmem:[%s3997 + $0x10] sm:$0xff]
    %v4001 = vld [vmem:[%s3997 + $0x18] sm:$0xff]
    %v4002 = vld [vmem:[%s3997 + $0x20] sm:$0xff]
    %v4003 = vld [vmem:[%s3997 + $0x28] sm:$0xff]
    %v4004 = vld [vmem:[%s3997 + $0x30] sm:$0xff]
    %v4005 = vld [vmem:[%s3997 + $0x38] sm:$0xff]
    %v4006 = vld [vmem:[%s3997 + $0x40] sm:$0xff]
    %v4007 = vld [vmem:[%s3997 + $0x48] sm:$0xff]
    %v4008 = vld [vmem:[%s3997 + $0x50] sm:$0xff]
    %v4009 = vld [vmem:[%s3997 + $0x58] sm:$0xff]
    %v4010 = vld [vmem:[%s3997 + $0x60] sm:$0x11]
    %v4011 = vld [vmem:[%s3997 + $0x68] sm:$0x11]
    %v4026 = vunpack.c.l.b16 %v3998
    %v4027 = vunpack.c.h.b16 %v3998
    %v4028 = vunpack.c.l.b16 %v3999
    %v4029 = vunpack.c.h.b16 %v3999
    %v4030 = vunpack.c.l.b16 %v4000
    %v4031 = vunpack.c.h.b16 %v4000
    %v4032 = vunpack.c.l.b16 %v4001
    %v4033 = vunpack.c.h.b16 %v4001
    %v4034 = vunpack.c.l.b16 %v4002
    %v4035 = vunpack.c.h.b16 %v4002
    %v4036 = vunpack.c.l.b16 %v4003
    %v4037 = vunpack.c.h.b16 %v4003
    %v4038 = vunpack.c.l.b16 %v4004
    %v4039 = vunpack.c.h.b16 %v4004
    %v4040 = vunpack.c.l.b16 %v4005
    %v4041 = vunpack.c.h.b16 %v4005
    %v4042 = vunpack.c.l.b16 %v4006
    %v4043 = vunpack.c.h.b16 %v4006
    %v4044 = vunpack.c.l.b16 %v4007
    %v4045 = vunpack.c.h.b16 %v4007
    %v4046 = vunpack.c.l.b16 %v4008
    %v4047 = vunpack.c.h.b16 %v4008
    %v4048 = vunpack.c.l.b16 %v4009
    %v4049 = vunpack.c.h.b16 %v4009
    %v4050 = vunpack.c.l.b16 %v4010
    %v4051 = vunpack.c.h.b16 %v4010
    %v4052 = vunpack.c.l.b16 %v4011
    %v4053 = vunpack.c.h.b16 %v4011
    %v4054 = vpack.c.b16 %v4030, %v4026
    %v4055 = vpack.c.b16 %v4031, %v4027
    %v4056 = vpack.c.b16 %v4032, %v4028
    %v4057 = vpack.c.b16 %v4033, %v4029
    %v4058 = vpack.c.b16 %v4038, %v4034
    %v4059 = vpack.c.b16 %v4039, %v4035
    %v4060 = vpack.c.b16 %v4040, %v4036
    %v4061 = vpack.c.b16 %v4041, %v4037
    %v4062 = vpack.c.b16 %v4046, %v4042
    %v4063 = vpack.c.b16 %v4047, %v4043
    %v4064 = vpack.c.b16 %v4048, %v4044
    %v4065 = vpack.c.b16 %v4049, %v4045
    %v4066 = vpack.c.b16 %v4050, %v4050
    %v4067 = vpack.c.b16 %v4051, %v4051
    %v4068 = vpack.c.b16 %v4052, %v4052
    %v4069 = vpack.c.b16 %v4053, %v4053
    %v4083 = vsel %vm2047, %v3996, 0
    %v4086 = vsel %vm2051, %v4066, 0
    %v4089 = vsel %vm2051, %v4067, 0
    %v4092 = vsel %vm2051, %v4068, 0
    %v4095 = vsel %vm2051, %v4069, 0
    %4097 = vmatprep.subr.bf16.mxu0 %v4055
    %4098 = vmatpush1.bf16.msra.mxu0 %v4054
    %4099 = vmatprep.subr.bf16.mxu0 %v4059
    %4100 = vmatpush1.bf16.msra.mxu0 %v4058
    %4101 = vmatprep.subr.bf16.mxu0 %v4063
    %4102 = vmatpush1.bf16.msra.mxu0 %v4062
    %4103 = vmatprep.subr.bf16.mxu0 %v4089
    %4104 = vmatpush1.bf16.msra.mxu0 %v4086
    %4105 = vmatprep.subr.bf16.mxu0 0
    %4106 = vmatpush1.bf16.msra.mxu0 0
    %4107 = vmatprep.subr.bf16.mxu0 0
    %4108 = vmatpush1.bf16.msra.mxu0 0
    %4109 = vmatprep.subr.bf16.mxu0 0
    %4110 = vmatpush1.bf16.msra.mxu0 0
    %4111 = vmatprep.subr.bf16.mxu0 0
    %4112 = vmatpush1.bf16.msra.mxu0 0
    %4113 = vmatprep.subr.bf16.mxu0 0
    %4114 = vmatpush1.bf16.msra.mxu0 0
    %4115 = vmatprep.subr.bf16.mxu0 0
    %4116 = vmatpush1.bf16.msra.mxu0 0
    %4117 = vmatprep.subr.bf16.mxu0 0
    %4118 = vmatpush1.bf16.msra.mxu0 0
    %4119 = vmatprep.subr.bf16.mxu0 0
    %4120 = vmatpush1.bf16.msra.mxu0 0
    %4121 = vmatprep.subr.bf16.mxu0 0
    %4122 = vmatpush1.bf16.msra.mxu0 0
    %4123 = vmatprep.subr.bf16.mxu0 0
    %4124 = vmatpush1.bf16.msra.mxu0 0
    %4125 = vmatprep.subr.bf16.mxu0 0
    %4126 = vmatpush1.bf16.msra.mxu0 0
    %4127 = vmatprep.subr.bf16.mxu0 0
    %4128 = vmatpush1.bf16.msra.mxu0 0
    %4129 = vmatprep.mubr.bf16.mxu0 0
    %4130 = vmatmul.mubr.bf16.gmra.mrb[0].mxu0 %v4083
    %v4131 = vpop.f32.mrb[0].mxu0
    %v4132 = vadd.f32 0.0, %v4131
    %v4133 = vpop.f32.mrb[0].mxu0
    %v4134 = vadd.f32 0.0, %v4133
    %v4135 = vpop.f32.mrb[0].mxu0
    %v4136 = vpop.f32.mrb[0].mxu0
    %4137 = vdwg.mxu0
    %4138 = vmatprep.subr.bf16.mxu0 %v4057
    %4139 = vmatpush1.bf16.msra.mxu0 %v4056
    %4140 = vmatprep.subr.bf16.mxu0 %v4061
    %4141 = vmatpush1.bf16.msra.mxu0 %v4060
    %4142 = vmatprep.subr.bf16.mxu0 %v4065
    %4143 = vmatpush1.bf16.msra.mxu0 %v4064
    %4144 = vmatprep.subr.bf16.mxu0 %v4095
    %4145 = vmatpush1.bf16.msra.mxu0 %v4092
    %4146 = vmatprep.subr.bf16.mxu0 0
    %4147 = vmatpush1.bf16.msra.mxu0 0
    %4148 = vmatprep.subr.bf16.mxu0 0
    %4149 = vmatpush1.bf16.msra.mxu0 0
    %4150 = vmatprep.subr.bf16.mxu0 0
    %4151 = vmatpush1.bf16.msra.mxu0 0
    %4152 = vmatprep.subr.bf16.mxu0 0
    %4153 = vmatpush1.bf16.msra.mxu0 0
    %4154 = vmatprep.subr.bf16.mxu0 0
    %4155 = vmatpush1.bf16.msra.mxu0 0
    %4156 = vmatprep.subr.bf16.mxu0 0
    %4157 = vmatpush1.bf16.msra.mxu0 0
    %4158 = vmatprep.subr.bf16.mxu0 0
    %4159 = vmatpush1.bf16.msra.mxu0 0
    %4160 = vmatprep.subr.bf16.mxu0 0
    %4161 = vmatpush1.bf16.msra.mxu0 0
    %4162 = vmatprep.subr.bf16.mxu0 0
    %4163 = vmatpush1.bf16.msra.mxu0 0
    %4164 = vmatprep.subr.bf16.mxu0 0
    %4165 = vmatpush1.bf16.msra.mxu0 0
    %4166 = vmatprep.subr.bf16.mxu0 0
    %4167 = vmatpush1.bf16.msra.mxu0 0
    %4168 = vmatprep.subr.bf16.mxu0 0
    %4169 = vmatpush1.bf16.msra.mxu0 0
    %4170 = vmatprep.mubr.bf16.mxu0 0
    %4171 = vmatmul.mubr.bf16.gmra.mrb[0].mxu0 %v4083
    %v4172 = vpop.f32.mrb[0].mxu0
    %v4173 = vadd.f32 0.0, %v4172
    %v4174 = vpop.f32.mrb[0].mxu0
    %v4175 = vadd.f32 0.0, %v4174
    %v4176 = vpop.f32.mrb[0].mxu0
    %v4177 = vpop.f32.mrb[0].mxu0
    %4178 = vdwg.mxu0
    %v4179 = vadd.f32 %v3992, %v4132
    %v4180 = vadd.f32 %v3993, %v4134
    %v4181 = vadd.f32 %v3994, %v4173
    %v4182 = vadd.f32 %v3995, %v4175
    %v4183 = vpack.c.bf16 %v1942, %v1942
    %s4184 = scalar_lea.vmem %s6, 1344
    %v4185 = vld [vmem:[%s4184] sm:$0xff]
    %v4186 = vld [vmem:[%s4184 + $0x8] sm:$0xff]
    %v4187 = vld [vmem:[%s4184 + $0x10] sm:$0xff]
    %v4188 = vld [vmem:[%s4184 + $0x18] sm:$0xff]
    %v4189 = vld [vmem:[%s4184 + $0x20] sm:$0xff]
    %v4190 = vld [vmem:[%s4184 + $0x28] sm:$0xff]
    %v4191 = vld [vmem:[%s4184 + $0x30] sm:$0xff]
    %v4192 = vld [vmem:[%s4184 + $0x38] sm:$0xff]
    %v4193 = vld [vmem:[%s4184 + $0x40] sm:$0xff]
    %v4194 = vld [vmem:[%s4184 + $0x48] sm:$0xff]
    %v4195 = vld [vmem:[%s4184 + $0x50] sm:$0xff]
    %v4196 = vld [vmem:[%s4184 + $0x58] sm:$0xff]
    %v4197 = vld [vmem:[%s4184 + $0x60] sm:$0x11]
    %v4198 = vld [vmem:[%s4184 + $0x68] sm:$0x11]
    %v4213 = vunpack.c.l.b16 %v4185
    %v4214 = vunpack.c.h.b16 %v4185
    %v4215 = vunpack.c.l.b16 %v4186
    %v4216 = vunpack.c.h.b16 %v4186
    %v4217 = vunpack.c.l.b16 %v4187
    %v4218 = vunpack.c.h.b16 %v4187
    %v4219 = vunpack.c.l.b16 %v4188
    %v4220 = vunpack.c.h.b16 %v4188
    %v4221 = vunpack.c.l.b16 %v4189
    %v4222 = vunpack.c.h.b16 %v4189
    %v4223 = vunpack.c.l.b16 %v4190
    %v4224 = vunpack.c.h.b16 %v4190
    %v4225 = vunpack.c.l.b16 %v4191
    %v4226 = vunpack.c.h.b16 %v4191
    %v4227 = vunpack.c.l.b16 %v4192
    %v4228 = vunpack.c.h.b16 %v4192
    %v4229 = vunpack.c.l.b16 %v4193
    %v4230 = vunpack.c.h.b16 %v4193
    %v4231 = vunpack.c.l.b16 %v4194
    %v4232 = vunpack.c.h.b16 %v4194
    %v4233 = vunpack.c.l.b16 %v4195
    %v4234 = vunpack.c.h.b16 %v4195
    %v4235 = vunpack.c.l.b16 %v4196
    %v4236 = vunpack.c.h.b16 %v4196
    %v4237 = vunpack.c.l.b16 %v4197
    %v4238 = vunpack.c.h.b16 %v4197
    %v4239 = vunpack.c.l.b16 %v4198
    %v4240 = vunpack.c.h.b16 %v4198
    %v4241 = vpack.c.b16 %v4217, %v4213
    %v4242 = vpack.c.b16 %v4218, %v4214
    %v4243 = vpack.c.b16 %v4219, %v4215
    %v4244 = vpack.c.b16 %v4220, %v4216
    %v4245 = vpack.c.b16 %v4225, %v4221
    %v4246 = vpack.c.b16 %v4226, %v4222
    %v4247 = vpack.c.b16 %v4227, %v4223
    %v4248 = vpack.c.b16 %v4228, %v4224
    %v4249 = vpack.c.b16 %v4233, %v4229
    %v4250 = vpack.c.b16 %v4234, %v4230
    %v4251 = vpack.c.b16 %v4235, %v4231
    %v4252 = vpack.c.b16 %v4236, %v4232
    %v4253 = vpack.c.b16 %v4237, %v4237
    %v4254 = vpack.c.b16 %v4238, %v4238
    %v4255 = vpack.c.b16 %v4239, %v4239
    %v4256 = vpack.c.b16 %v4240, %v4240
    %v4270 = vsel %vm2047, %v4183, 0
    %v4273 = vsel %vm2051, %v4253, 0
    %v4276 = vsel %vm2051, %v4254, 0
    %v4279 = vsel %vm2051, %v4255, 0
    %v4282 = vsel %vm2051, %v4256, 0
    %4284 = vmatprep.subr.bf16.mxu0 %v4242
    %4285 = vmatpush1.bf16.msra.mxu0 %v4241
    %4286 = vmatprep.subr.bf16.mxu0 %v4246
    %4287 = vmatpush1.bf16.msra.mxu0 %v4245
    %4288 = vmatprep.subr.bf16.mxu0 %v4250
    %4289 = vmatpush1.bf16.msra.mxu0 %v4249
    %4290 = vmatprep.subr.bf16.mxu0 %v4276
    %4291 = vmatpush1.bf16.msra.mxu0 %v4273
    %4292 = vmatprep.subr.bf16.mxu0 0
    %4293 = vmatpush1.bf16.msra.mxu0 0
    %4294 = vmatprep.subr.bf16.mxu0 0
    %4295 = vmatpush1.bf16.msra.mxu0 0
    %4296 = vmatprep.subr.bf16.mxu0 0
    %4297 = vmatpush1.bf16.msra.mxu0 0
    %4298 = vmatprep.subr.bf16.mxu0 0
    %4299 = vmatpush1.bf16.msra.mxu0 0
    %4300 = vmatprep.subr.bf16.mxu0 0
    %4301 = vmatpush1.bf16.msra.mxu0 0
    %4302 = vmatprep.subr.bf16.mxu0 0
    %4303 = vmatpush1.bf16.msra.mxu0 0
    %4304 = vmatprep.subr.bf16.mxu0 0
    %4305 = vmatpush1.bf16.msra.mxu0 0
    %4306 = vmatprep.subr.bf16.mxu0 0
    %4307 = vmatpush1.bf16.msra.mxu0 0
    %4308 = vmatprep.subr.bf16.mxu0 0
    %4309 = vmatpush1.bf16.msra.mxu0 0
    %4310 = vmatprep.subr.bf16.mxu0 0
    %4311 = vmatpush1.bf16.msra.mxu0 0
    %4312 = vmatprep.subr.bf16.mxu0 0
    %4313 = vmatpush1.bf16.msra.mxu0 0
    %4314 = vmatprep.subr.bf16.mxu0 0
    %4315 = vmatpush1.bf16.msra.mxu0 0
    %4316 = vmatprep.mubr.bf16.mxu0 0
    %4317 = vmatmul.mubr.bf16.gmra.mrb[0].mxu0 %v4270
    %v4318 = vpop.f32.mrb[0].mxu0
    %v4319 = vadd.f32 0.0, %v4318
    %v4320 = vpop.f32.mrb[0].mxu0
    %v4321 = vadd.f32 0.0, %v4320
    %v4322 = vpop.f32.mrb[0].mxu0
    %v4323 = vpop.f32.mrb[0].mxu0
    %4324 = vdwg.mxu0
    %4325 = vmatprep.subr.bf16.mxu0 %v4244
    %4326 = vmatpush1.bf16.msra.mxu0 %v4243
    %4327 = vmatprep.subr.bf16.mxu0 %v4248
    %4328 = vmatpush1.bf16.msra.mxu0 %v4247
    %4329 = vmatprep.subr.bf16.mxu0 %v4252
    %4330 = vmatpush1.bf16.msra.mxu0 %v4251
    %4331 = vmatprep.subr.bf16.mxu0 %v4282
    %4332 = vmatpush1.bf16.msra.mxu0 %v4279
    %4333 = vmatprep.subr.bf16.mxu0 0
    %4334 = vmatpush1.bf16.msra.mxu0 0
    %4335 = vmatprep.subr.bf16.mxu0 0
    %4336 = vmatpush1.bf16.msra.mxu0 0
    %4337 = vmatprep.subr.bf16.mxu0 0
    %4338 = vmatpush1.bf16.msra.mxu0 0
    %4339 = vmatprep.subr.bf16.mxu0 0
    %4340 = vmatpush1.bf16.msra.mxu0 0
    %4341 = vmatprep.subr.bf16.mxu0 0
    %4342 = vmatpush1.bf16.msra.mxu0 0
    %4343 = vmatprep.subr.bf16.mxu0 0
    %4344 = vmatpush1.bf16.msra.mxu0 0
    %4345 = vmatprep.subr.bf16.mxu0 0
    %4346 = vmatpush1.bf16.msra.mxu0 0
    %4347 = vmatprep.subr.bf16.mxu0 0
    %4348 = vmatpush1.bf16.msra.mxu0 0
    %4349 = vmatprep.subr.bf16.mxu0 0
    %4350 = vmatpush1.bf16.msra.mxu0 0
    %4351 = vmatprep.subr.bf16.mxu0 0
    %4352 = vmatpush1.bf16.msra.mxu0 0
    %4353 = vmatprep.subr.bf16.mxu0 0
    %4354 = vmatpush1.bf16.msra.mxu0 0
    %4355 = vmatprep.subr.bf16.mxu0 0
    %4356 = vmatpush1.bf16.msra.mxu0 0
    %4357 = vmatprep.mubr.bf16.mxu0 0
    %4358 = vmatmul.mubr.bf16.gmra.mrb[0].mxu0 %v4270
    %v4359 = vpop.f32.mrb[0].mxu0
    %v4360 = vadd.f32 0.0, %v4359
    %v4361 = vpop.f32.mrb[0].mxu0
    %v4362 = vadd.f32 0.0, %v4361
    %v4363 = vpop.f32.mrb[0].mxu0
    %v4364 = vpop.f32.mrb[0].mxu0
    %4365 = vdwg.mxu0
    %v4366 = vadd.f32 %v4179, %v4319
    %v4367 = vadd.f32 %v4180, %v4321
    %v4368 = vadd.f32 %v4181, %v4360
    %v4369 = vadd.f32 %v4182, %v4362
    %v4370 = vpack.c.bf16 %v1943, %v1943
    %s4371 = scalar_lea.vmem %s6, 1456
    %v4372 = vld [vmem:[%s4371] sm:$0xff]
    %v4373 = vld [vmem:[%s4371 + $0x8] sm:$0xff]
    %v4374 = vld [vmem:[%s4371 + $0x10] sm:$0xff]
    %v4375 = vld [vmem:[%s4371 + $0x18] sm:$0xff]
    %v4376 = vld [vmem:[%s4371 + $0x20] sm:$0xff]
    %v4377 = vld [vmem:[%s4371 + $0x28] sm:$0xff]
    %v4378 = vld [vmem:[%s4371 + $0x30] sm:$0xff]
    %v4379 = vld [vmem:[%s4371 + $0x38] sm:$0xff]
    %v4380 = vld [vmem:[%s4371 + $0x40] sm:$0xff]
    %v4381 = vld [vmem:[%s4371 + $0x48] sm:$0xff]
    %v4382 = vld [vmem:[%s4371 + $0x50] sm:$0xff]
    %v4383 = vld [vmem:[%s4371 + $0x58] sm:$0xff]
    %v4384 = vld [vmem:[%s4371 + $0x60] sm:$0x11]
    %v4385 = vld [vmem:[%s4371 + $0x68] sm:$0x11]
    %v4400 = vunpack.c.l.b16 %v4372
    %v4401 = vunpack.c.h.b16 %v4372
    %v4402 = vunpack.c.l.b16 %v4373
    %v4403 = vunpack.c.h.b16 %v4373
    %v4404 = vunpack.c.l.b16 %v4374
    %v4405 = vunpack.c.h.b16 %v4374
    %v4406 = vunpack.c.l.b16 %v4375
    %v4407 = vunpack.c.h.b16 %v4375
    %v4408 = vunpack.c.l.b16 %v4376
    %v4409 = vunpack.c.h.b16 %v4376
    %v4410 = vunpack.c.l.b16 %v4377
    %v4411 = vunpack.c.h.b16 %v4377
    %v4412 = vunpack.c.l.b16 %v4378
    %v4413 = vunpack.c.h.b16 %v4378
    %v4414 = vunpack.c.l.b16 %v4379
    %v4415 = vunpack.c.h.b16 %v4379
    %v4416 = vunpack.c.l.b16 %v4380
    %v4417 = vunpack.c.h.b16 %v4380
    %v4418 = vunpack.c.l.b16 %v4381
    %v4419 = vunpack.c.h.b16 %v4381
    %v4420 = vunpack.c.l.b16 %v4382
    %v4421 = vunpack.c.h.b16 %v4382
    %v4422 = vunpack.c.l.b16 %v4383
    %v4423 = vunpack.c.h.b16 %v4383
    %v4424 = vunpack.c.l.b16 %v4384
    %v4425 = vunpack.c.h.b16 %v4384
    %v4426 = vunpack.c.l.b16 %v4385
    %v4427 = vunpack.c.h.b16 %v4385
    %v4428 = vpack.c.b16 %v4404, %v4400
    %v4429 = vpack.c.b16 %v4405, %v4401
    %v4430 = vpack.c.b16 %v4406, %v4402
    %v4431 = vpack.c.b16 %v4407, %v4403
    %v4432 = vpack.c.b16 %v4412, %v4408
    %v4433 = vpack.c.b16 %v4413, %v4409
    %v4434 = vpack.c.b16 %v4414, %v4410
    %v4435 = vpack.c.b16 %v4415, %v4411
    %v4436 = vpack.c.b16 %v4420, %v4416
    %v4437 = vpack.c.b16 %v4421, %v4417
    %v4438 = vpack.c.b16 %v4422, %v4418
    %v4439 = vpack.c.b16 %v4423, %v4419
    %v4440 = vpack.c.b16 %v4424, %v4424
    %v4441 = vpack.c.b16 %v4425, %v4425
    %v4442 = vpack.c.b16 %v4426, %v4426
    %v4443 = vpack.c.b16 %v4427, %v4427
    %v4457 = vsel %vm2047, %v4370, 0
    %v4460 = vsel %vm2051, %v4440, 0
    %v4463 = vsel %vm2051, %v4441, 0
    %v4466 = vsel %vm2051, %v4442, 0
    %v4469 = vsel %vm2051, %v4443, 0
    %4471 = vmatprep.subr.bf16.mxu0 %v4429
    %4472 = vmatpush1.bf16.msra.mxu0 %v4428
    %4473 = vmatprep.subr.bf16.mxu0 %v4433
    %4474 = vmatpush1.bf16.msra.mxu0 %v4432
    %4475 = vmatprep.subr.bf16.mxu0 %v4437
    %4476 = vmatpush1.bf16.msra.mxu0 %v4436
    %4477 = vmatprep.subr.bf16.mxu0 %v4463
    %4478 = vmatpush1.bf16.msra.mxu0 %v4460
    %4479 = vmatprep.subr.bf16.mxu0 0
    %4480 = vmatpush1.bf16.msra.mxu0 0
    %4481 = vmatprep.subr.bf16.mxu0 0
    %4482 = vmatpush1.bf16.msra.mxu0 0
    %4483 = vmatprep.subr.bf16.mxu0 0
    %4484 = vmatpush1.bf16.msra.mxu0 0
    %4485 = vmatprep.subr.bf16.mxu0 0
    %4486 = vmatpush1.bf16.msra.mxu0 0
    %4487 = vmatprep.subr.bf16.mxu0 0
    %4488 = vmatpush1.bf16.msra.mxu0 0
    %4489 = vmatprep.subr.bf16.mxu0 0
    %4490 = vmatpush1.bf16.msra.mxu0 0
    %4491 = vmatprep.subr.bf16.mxu0 0
    %4492 = vmatpush1.bf16.msra.mxu0 0
    %4493 = vmatprep.subr.bf16.mxu0 0
    %4494 = vmatpush1.bf16.msra.mxu0 0
    %4495 = vmatprep.subr.bf16.mxu0 0
    %4496 = vmatpush1.bf16.msra.mxu0 0
    %4497 = vmatprep.subr.bf16.mxu0 0
    %4498 = vmatpush1.bf16.msra.mxu0 0
    %4499 = vmatprep.subr.bf16.mxu0 0
    %4500 = vmatpush1.bf16.msra.mxu0 0
    %4501 = vmatprep.subr.bf16.mxu0 0
    %4502 = vmatpush1.bf16.msra.mxu0 0
    %4503 = vmatprep.mubr.bf16.mxu0 0
    %4504 = vmatmul.mubr.bf16.gmra.mrb[0].mxu0 %v4457
    %v4505 = vpop.f32.mrb[0].mxu0
    %v4506 = vadd.f32 0.0, %v4505
    %v4507 = vpop.f32.mrb[0].mxu0
    %v4508 = vadd.f32 0.0, %v4507
    %v4509 = vpop.f32.mrb[0].mxu0
    %v4510 = vpop.f32.mrb[0].mxu0
    %4511 = vdwg.mxu0
    %4512 = vmatprep.subr.bf16.mxu0 %v4431
    %4513 = vmatpush1.bf16.msra.mxu0 %v4430
    %4514 = vmatprep.subr.bf16.mxu0 %v4435
    %4515 = vmatpush1.bf16.msra.mxu0 %v4434
    %4516 = vmatprep.subr.bf16.mxu0 %v4439
    %4517 = vmatpush1.bf16.msra.mxu0 %v4438
    %4518 = vmatprep.subr.bf16.mxu0 %v4469
    %4519 = vmatpush1.bf16.msra.mxu0 %v4466
    %4520 = vmatprep.subr.bf16.mxu0 0
    %4521 = vmatpush1.bf16.msra.mxu0 0
    %4522 = vmatprep.subr.bf16.mxu0 0
    %4523 = vmatpush1.bf16.msra.mxu0 0
    %4524 = vmatprep.subr.bf16.mxu0 0
    %4525 = vmatpush1.bf16.msra.mxu0 0
    %4526 = vmatprep.subr.bf16.mxu0 0
    %4527 = vmatpush1.bf16.msra.mxu0 0
    %4528 = vmatprep.subr.bf16.mxu0 0
    %4529 = vmatpush1.bf16.msra.mxu0 0
    %4530 = vmatprep.subr.bf16.mxu0 0
    %4531 = vmatpush1.bf16.msra.mxu0 0
    %4532 = vmatprep.subr.bf16.mxu0 0
    %4533 = vmatpush1.bf16.msra.mxu0 0
    %4534 = vmatprep.subr.bf16.mxu0 0
    %4535 = vmatpush1.bf16.msra.mxu0 0
    %4536 = vmatprep.subr.bf16.mxu0 0
    %4537 = vmatpush1.bf16.msra.mxu0 0
    %4538 = vmatprep.subr.bf16.mxu0 0
    %4539 = vmatpush1.bf16.msra.mxu0 0
    %4540 = vmatprep.subr.bf16.mxu0 0
    %4541 = vmatpush1.bf16.msra.mxu0 0
    %4542 = vmatprep.subr.bf16.mxu0 0
    %4543 = vmatpush1.bf16.msra.mxu0 0
    %4544 = vmatprep.mubr.bf16.mxu0 0
    %4545 = vmatmul.mubr.bf16.gmra.mrb[0].mxu0 %v4457
    %v4546 = vpop.f32.mrb[0].mxu0
    %v4547 = vadd.f32 0.0, %v4546
    %v4548 = vpop.f32.mrb[0].mxu0
    %v4549 = vadd.f32 0.0, %v4548
    %v4550 = vpop.f32.mrb[0].mxu0
    %v4551 = vpop.f32.mrb[0].mxu0
    %4552 = vdwg.mxu0
    %v4553 = vadd.f32 %v4366, %v4506
    %v4554 = vadd.f32 %v4367, %v4508
    %v4555 = vadd.f32 %v4368, %v4547
    %v4556 = vadd.f32 %v4369, %v4549
    %v4557 = vpack.c.bf16 %v1944, %v1944
    %s4558 = scalar_lea.vmem %s6, 1568
    %v4559 = vld [vmem:[%s4558] sm:$0xff]
    %v4560 = vld [vmem:[%s4558 + $0x8] sm:$0xff]
    %v4561 = vld [vmem:[%s4558 + $0x10] sm:$0xff]
    %v4562 = vld [vmem:[%s4558 + $0x18] sm:$0xff]
    %v4563 = vld [vmem:[%s4558 + $0x20] sm:$0xff]
    %v4564 = vld [vmem:[%s4558 + $0x28] sm:$0xff]
    %v4565 = vld [vmem:[%s4558 + $0x30] sm:$0xff]
    %v4566 = vld [vmem:[%s4558 + $0x38] sm:$0xff]
    %v4567 = vld [vmem:[%s4558 + $0x40] sm:$0xff]
    %v4568 = vld [vmem:[%s4558 + $0x48] sm:$0xff]
    %v4569 = vld [vmem:[%s4558 + $0x50] sm:$0xff]
    %v4570 = vld [vmem:[%s4558 + $0x58] sm:$0xff]
    %v4571 = vld [vmem:[%s4558 + $0x60] sm:$0x11]
    %v4572 = vld [vmem:[%s4558 + $0x68] sm:$0x11]
    %v4587 = vunpack.c.l.b16 %v4559
    %v4588 = vunpack.c.h.b16 %v4559
    %v4589 = vunpack.c.l.b16 %v4560
    %v4590 = vunpack.c.h.b16 %v4560
    %v4591 = vunpack.c.l.b16 %v4561
    %v4592 = vunpack.c.h.b16 %v4561
    %v4593 = vunpack.c.l.b16 %v4562
    %v4594 = vunpack.c.h.b16 %v4562
    %v4595 = vunpack.c.l.b16 %v4563
    %v4596 = vunpack.c.h.b16 %v4563
    %v4597 = vunpack.c.l.b16 %v4564
    %v4598 = vunpack.c.h.b16 %v4564
    %v4599 = vunpack.c.l.b16 %v4565
    %v4600 = vunpack.c.h.b16 %v4565
    %v4601 = vunpack.c.l.b16 %v4566
    %v4602 = vunpack.c.h.b16 %v4566
    %v4603 = vunpack.c.l.b16 %v4567
    %v4604 = vunpack.c.h.b16 %v4567
    %v4605 = vunpack.c.l.b16 %v4568
    %v4606 = vunpack.c.h.b16 %v4568
    %v4607 = vunpack.c.l.b16 %v4569
    %v4608 = vunpack.c.h.b16 %v4569
    %v4609 = vunpack.c.l.b16 %v4570
    %v4610 = vunpack.c.h.b16 %v4570
    %v4611 = vunpack.c.l.b16 %v4571
    %v4612 = vunpack.c.h.b16 %v4571
    %v4613 = vunpack.c.l.b16 %v4572
    %v4614 = vunpack.c.h.b16 %v4572
    %v4615 = vpack.c.b16 %v4591, %v4587
    %v4616 = vpack.c.b16 %v4592, %v4588
    %v4617 = vpack.c.b16 %v4593, %v4589
    %v4618 = vpack.c.b16 %v4594, %v4590
    %v4619 = vpack.c.b16 %v4599, %v4595
    %v4620 = vpack.c.b16 %v4600, %v4596
    %v4621 = vpack.c.b16 %v4601, %v4597
    %v4622 = vpack.c.b16 %v4602, %v4598
    %v4623 = vpack.c.b16 %v4607, %v4603
    %v4624 = vpack.c.b16 %v4608, %v4604
    %v4625 = vpack.c.b16 %v4609, %v4605
    %v4626 = vpack.c.b16 %v4610, %v4606
    %v4627 = vpack.c.b16 %v4611, %v4611
    %v4628 = vpack.c.b16 %v4612, %v4612
    %v4629 = vpack.c.b16 %v4613, %v4613
    %v4630 = vpack.c.b16 %v4614, %v4614
    %v4644 = vsel %vm2047, %v4557, 0
    %v4647 = vsel %vm2051, %v4627, 0
    %v4650 = vsel %vm2051, %v4628, 0
    %v4653 = vsel %vm2051, %v4629, 0
    %v4656 = vsel %vm2051, %v4630, 0
    %4658 = vmatprep.subr.bf16.mxu0 %v4616
    %4659 = vmatpush1.bf16.msra.mxu0 %v4615
    %4660 = vmatprep.subr.bf16.mxu0 %v4620
    %4661 = vmatpush1.bf16.msra.mxu0 %v4619
    %4662 = vmatprep.subr.bf16.mxu0 %v4624
    %4663 = vmatpush1.bf16.msra.mxu0 %v4623
    %4664 = vmatprep.subr.bf16.mxu0 %v4650
    %4665 = vmatpush1.bf16.msra.mxu0 %v4647
    %4666 = vmatprep.subr.bf16.mxu0 0
    %4667 = vmatpush1.bf16.msra.mxu0 0
    %4668 = vmatprep.subr.bf16.mxu0 0
    %4669 = vmatpush1.bf16.msra.mxu0 0
    %4670 = vmatprep.subr.bf16.mxu0 0
    %4671 = vmatpush1.bf16.msra.mxu0 0
    %4672 = vmatprep.subr.bf16.mxu0 0
    %4673 = vmatpush1.bf16.msra.mxu0 0
    %4674 = vmatprep.subr.bf16.mxu0 0
    %4675 = vmatpush1.bf16.msra.mxu0 0
    %4676 = vmatprep.subr.bf16.mxu0 0
    %4677 = vmatpush1.bf16.msra.mxu0 0
    %4678 = vmatprep.subr.bf16.mxu0 0
    %4679 = vmatpush1.bf16.msra.mxu0 0
    %4680 = vmatprep.subr.bf16.mxu0 0
    %4681 = vmatpush1.bf16.msra.mxu0 0
    %4682 = vmatprep.subr.bf16.mxu0 0
    %4683 = vmatpush1.bf16.msra.mxu0 0
    %4684 = vmatprep.subr.bf16.mxu0 0
    %4685 = vmatpush1.bf16.msra.mxu0 0
    %4686 = vmatprep.subr.bf16.mxu0 0
    %4687 = vmatpush1.bf16.msra.mxu0 0
    %4688 = vmatprep.subr.bf16.mxu0 0
    %4689 = vmatpush1.bf16.msra.mxu0 0
    %4690 = vmatprep.mubr.bf16.mxu0 0
    %4691 = vmatmul.mubr.bf16.gmra.mrb[0].mxu0 %v4644
    %v4692 = vpop.f32.mrb[0].mxu0
    %v4693 = vadd.f32 0.0, %v4692
    %v4694 = vpop.f32.mrb[0].mxu0
    %v4695 = vadd.f32 0.0, %v4694
    %v4696 = vpop.f32.mrb[0].mxu0
    %v4697 = vpop.f32.mrb[0].mxu0
    %4698 = vdwg.mxu0
    %4699 = vmatprep.subr.bf16.mxu0 %v4618
    %4700 = vmatpush1.bf16.msra.mxu0 %v4617
    %4701 = vmatprep.subr.bf16.mxu0 %v4622
    %4702 = vmatpush1.bf16.msra.mxu0 %v4621
    %4703 = vmatprep.subr.bf16.mxu0 %v4626
    %4704 = vmatpush1.bf16.msra.mxu0 %v4625
    %4705 = vmatprep.subr.bf16.mxu0 %v4656
    %4706 = vmatpush1.bf16.msra.mxu0 %v4653
    %4707 = vmatprep.subr.bf16.mxu0 0
    %4708 = vmatpush1.bf16.msra.mxu0 0
    %4709 = vmatprep.subr.bf16.mxu0 0
    %4710 = vmatpush1.bf16.msra.mxu0 0
    %4711 = vmatprep.subr.bf16.mxu0 0
    %4712 = vmatpush1.bf16.msra.mxu0 0
    %4713 = vmatprep.subr.bf16.mxu0 0
    %4714 = vmatpush1.bf16.msra.mxu0 0
    %4715 = vmatprep.subr.bf16.mxu0 0
    %4716 = vmatpush1.bf16.msra.mxu0 0
    %4717 = vmatprep.subr.bf16.mxu0 0
    %4718 = vmatpush1.bf16.msra.mxu0 0
    %4719 = vmatprep.subr.bf16.mxu0 0
    %4720 = vmatpush1.bf16.msra.mxu0 0
    %4721 = vmatprep.subr.bf16.mxu0 0
    %4722 = vmatpush1.bf16.msra.mxu0 0
    %4723 = vmatprep.subr.bf16.mxu0 0
    %4724 = vmatpush1.bf16.msra.mxu0 0
    %4725 = vmatprep.subr.bf16.mxu0 0
    %4726 = vmatpush1.bf16.msra.mxu0 0
    %4727 = vmatprep.subr.bf16.mxu0 0
    %4728 = vmatpush1.bf16.msra.mxu0 0
    %4729 = vmatprep.subr.bf16.mxu0 0
    %4730 = vmatpush1.bf16.msra.mxu0 0
    %4731 = vmatprep.mubr.bf16.mxu0 0
    %4732 = vmatmul.mubr.bf16.gmra.mrb[0].mxu0 %v4644
    %v4733 = vpop.f32.mrb[0].mxu0
    %v4734 = vadd.f32 0.0, %v4733
    %v4735 = vpop.f32.mrb[0].mxu0
    %v4736 = vadd.f32 0.0, %v4735
    %v4737 = vpop.f32.mrb[0].mxu0
    %v4738 = vpop.f32.mrb[0].mxu0
    %4739 = vdwg.mxu0
    %v4740 = vadd.f32 %v4553, %v4693
    %v4741 = vadd.f32 %v4554, %v4695
    %v4742 = vadd.f32 %v4555, %v4734
    %v4743 = vadd.f32 %v4556, %v4736
    %v4744 = vpack.c.bf16 %v1945, %v1945
    %s4745 = scalar_lea.vmem %s6, 1680
    %v4746 = vld [vmem:[%s4745] sm:$0xff]
    %v4747 = vld [vmem:[%s4745 + $0x8] sm:$0xff]
    %v4748 = vld [vmem:[%s4745 + $0x10] sm:$0xff]
    %v4749 = vld [vmem:[%s4745 + $0x18] sm:$0xff]
    %v4750 = vld [vmem:[%s4745 + $0x20] sm:$0xff]
    %v4751 = vld [vmem:[%s4745 + $0x28] sm:$0xff]
    %v4752 = vld [vmem:[%s4745 + $0x30] sm:$0xff]
    %v4753 = vld [vmem:[%s4745 + $0x38] sm:$0xff]
    %v4754 = vld [vmem:[%s4745 + $0x40] sm:$0xff]
    %v4755 = vld [vmem:[%s4745 + $0x48] sm:$0xff]
    %v4756 = vld [vmem:[%s4745 + $0x50] sm:$0xff]
    %v4757 = vld [vmem:[%s4745 + $0x58] sm:$0xff]
    %v4758 = vld [vmem:[%s4745 + $0x60] sm:$0x11]
    %v4759 = vld [vmem:[%s4745 + $0x68] sm:$0x11]
    %v4774 = vunpack.c.l.b16 %v4746
    %v4775 = vunpack.c.h.b16 %v4746
    %v4776 = vunpack.c.l.b16 %v4747
    %v4777 = vunpack.c.h.b16 %v4747
    %v4778 = vunpack.c.l.b16 %v4748
    %v4779 = vunpack.c.h.b16 %v4748
    %v4780 = vunpack.c.l.b16 %v4749
    %v4781 = vunpack.c.h.b16 %v4749
    %v4782 = vunpack.c.l.b16 %v4750
    %v4783 = vunpack.c.h.b16 %v4750
    %v4784 = vunpack.c.l.b16 %v4751
    %v4785 = vunpack.c.h.b16 %v4751
    %v4786 = vunpack.c.l.b16 %v4752
    %v4787 = vunpack.c.h.b16 %v4752
    %v4788 = vunpack.c.l.b16 %v4753
    %v4789 = vunpack.c.h.b16 %v4753
    %v4790 = vunpack.c.l.b16 %v4754
    %v4791 = vunpack.c.h.b16 %v4754
    %v4792 = vunpack.c.l.b16 %v4755
    %v4793 = vunpack.c.h.b16 %v4755
    %v4794 = vunpack.c.l.b16 %v4756
    %v4795 = vunpack.c.h.b16 %v4756
    %v4796 = vunpack.c.l.b16 %v4757
    %v4797 = vunpack.c.h.b16 %v4757
    %v4798 = vunpack.c.l.b16 %v4758
    %v4799 = vunpack.c.h.b16 %v4758
    %v4800 = vunpack.c.l.b16 %v4759
    %v4801 = vunpack.c.h.b16 %v4759
    %v4802 = vpack.c.b16 %v4778, %v4774
    %v4803 = vpack.c.b16 %v4779, %v4775
    %v4804 = vpack.c.b16 %v4780, %v4776
    %v4805 = vpack.c.b16 %v4781, %v4777
    %v4806 = vpack.c.b16 %v4786, %v4782
    %v4807 = vpack.c.b16 %v4787, %v4783
    %v4808 = vpack.c.b16 %v4788, %v4784
    %v4809 = vpack.c.b16 %v4789, %v4785
    %v4810 = vpack.c.b16 %v4794, %v4790
    %v4811 = vpack.c.b16 %v4795, %v4791
    %v4812 = vpack.c.b16 %v4796, %v4792
    %v4813 = vpack.c.b16 %v4797, %v4793
    %v4814 = vpack.c.b16 %v4798, %v4798
    %v4815 = vpack.c.b16 %v4799, %v4799
    %v4816 = vpack.c.b16 %v4800, %v4800
    %v4817 = vpack.c.b16 %v4801, %v4801
    %v4831 = vsel %vm2047, %v4744, 0
    %v4834 = vsel %vm2051, %v4814, 0
    %v4837 = vsel %vm2051, %v4815, 0
    %v4840 = vsel %vm2051, %v4816, 0
    %v4843 = vsel %vm2051, %v4817, 0
    %4845 = vmatprep.subr.bf16.mxu0 %v4803
    %4846 = vmatpush1.bf16.msra.mxu0 %v4802
    %4847 = vmatprep.subr.bf16.mxu0 %v4807
    %4848 = vmatpush1.bf16.msra.mxu0 %v4806
    %4849 = vmatprep.subr.bf16.mxu0 %v4811
    %4850 = vmatpush1.bf16.msra.mxu0 %v4810
    %4851 = vmatprep.subr.bf16.mxu0 %v4837
    %4852 = vmatpush1.bf16.msra.mxu0 %v4834
    %4853 = vmatprep.subr.bf16.mxu0 0
    %4854 = vmatpush1.bf16.msra.mxu0 0
    %4855 = vmatprep.subr.bf16.mxu0 0
    %4856 = vmatpush1.bf16.msra.mxu0 0
    %4857 = vmatprep.subr.bf16.mxu0 0
    %4858 = vmatpush1.bf16.msra.mxu0 0
    %4859 = vmatprep.subr.bf16.mxu0 0
    %4860 = vmatpush1.bf16.msra.mxu0 0
    %4861 = vmatprep.subr.bf16.mxu0 0
    %4862 = vmatpush1.bf16.msra.mxu0 0
    %4863 = vmatprep.subr.bf16.mxu0 0
    %4864 = vmatpush1.bf16.msra.mxu0 0
    %4865 = vmatprep.subr.bf16.mxu0 0
    %4866 = vmatpush1.bf16.msra.mxu0 0
    %4867 = vmatprep.subr.bf16.mxu0 0
    %4868 = vmatpush1.bf16.msra.mxu0 0
    %4869 = vmatprep.subr.bf16.mxu0 0
    %4870 = vmatpush1.bf16.msra.mxu0 0
    %4871 = vmatprep.subr.bf16.mxu0 0
    %4872 = vmatpush1.bf16.msra.mxu0 0
    %4873 = vmatprep.subr.bf16.mxu0 0
    %4874 = vmatpush1.bf16.msra.mxu0 0
    %4875 = vmatprep.subr.bf16.mxu0 0
    %4876 = vmatpush1.bf16.msra.mxu0 0
    %4877 = vmatprep.mubr.bf16.mxu0 0
    %4878 = vmatmul.mubr.bf16.gmra.mrb[0].mxu0 %v4831
    %v4879 = vpop.f32.mrb[0].mxu0
    %v4880 = vadd.f32 0.0, %v4879
    %v4881 = vpop.f32.mrb[0].mxu0
    %v4882 = vadd.f32 0.0, %v4881
    %v4883 = vpop.f32.mrb[0].mxu0
    %v4884 = vpop.f32.mrb[0].mxu0
    %4885 = vdwg.mxu0
    %4886 = vmatprep.subr.bf16.mxu0 %v4805
    %4887 = vmatpush1.bf16.msra.mxu0 %v4804
    %4888 = vmatprep.subr.bf16.mxu0 %v4809
    %4889 = vmatpush1.bf16.msra.mxu0 %v4808
    %4890 = vmatprep.subr.bf16.mxu0 %v4813
    %4891 = vmatpush1.bf16.msra.mxu0 %v4812
    %4892 = vmatprep.subr.bf16.mxu0 %v4843
    %4893 = vmatpush1.bf16.msra.mxu0 %v4840
    %4894 = vmatprep.subr.bf16.mxu0 0
    %4895 = vmatpush1.bf16.msra.mxu0 0
    %4896 = vmatprep.subr.bf16.mxu0 0
    %4897 = vmatpush1.bf16.msra.mxu0 0
    %4898 = vmatprep.subr.bf16.mxu0 0
    %4899 = vmatpush1.bf16.msra.mxu0 0
    %4900 = vmatprep.subr.bf16.mxu0 0
    %4901 = vmatpush1.bf16.msra.mxu0 0
    %4902 = vmatprep.subr.bf16.mxu0 0
    %4903 = vmatpush1.bf16.msra.mxu0 0
    %4904 = vmatprep.subr.bf16.mxu0 0
    %4905 = vmatpush1.bf16.msra.mxu0 0
    %4906 = vmatprep.subr.bf16.mxu0 0
    %4907 = vmatpush1.bf16.msra.mxu0 0
    %4908 = vmatprep.subr.bf16.mxu0 0
    %4909 = vmatpush1.bf16.msra.mxu0 0
    %4910 = vmatprep.subr.bf16.mxu0 0
    %4911 = vmatpush1.bf16.msra.mxu0 0
    %4912 = vmatprep.subr.bf16.mxu0 0
    %4913 = vmatpush1.bf16.msra.mxu0 0
    %4914 = vmatprep.subr.bf16.mxu0 0
    %4915 = vmatpush1.bf16.msra.mxu0 0
    %4916 = vmatprep.subr.bf16.mxu0 0
    %4917 = vmatpush1.bf16.msra.mxu0 0
    %4918 = vmatprep.mubr.bf16.mxu0 0
    %4919 = vmatmul.mubr.bf16.gmra.mrb[0].mxu0 %v4831
    %v4920 = vpop.f32.mrb[0].mxu0
    %v4921 = vadd.f32 0.0, %v4920
    %v4922 = vpop.f32.mrb[0].mxu0
    %v4923 = vadd.f32 0.0, %v4922
    %v4924 = vpop.f32.mrb[0].mxu0
    %v4925 = vpop.f32.mrb[0].mxu0
    %4926 = vdwg.mxu0
    %v4927 = vadd.f32 %v4740, %v4880
    %v4928 = vadd.f32 %v4741, %v4882
    %v4929 = vadd.f32 %v4742, %v4921
    %v4930 = vadd.f32 %v4743, %v4923
    %v4931 = vld [vmem:[%s7] sm:$0xf]
    %v4933 = vlaneseq
    %v4934 = vshrl.u32 %v4933, 7
    %v4935 = vsub.s32 0, %v4934
    %v4936 = vrot.slane %v4931, %v4935
    %v4937 = vlaneseq
    %v4938 = vshrl.u32 %v4937, 7
    %v4939 = vsub.s32 1, %v4938
    %v4940 = vrot.slane %v4931, %v4939
    %v4941 = vlaneseq
    %v4942 = vshrl.u32 %v4941, 7
    %v4943 = vsub.s32 2, %v4942
    %v4944 = vrot.slane %v4931, %v4943
    %v4945 = vlaneseq
    %v4946 = vshrl.u32 %v4945, 7
    %v4947 = vsub.s32 3, %v4946
    %v4948 = vrot.slane %v4931, %v4947
    %v4953 = vadd.f32 %v4927, %v4936
    %v4954 = vadd.f32 %v4928, %v4940
    %v4955 = vadd.f32 %v4929, %v4944
    %v4956 = vadd.f32 %v4930, %v4948
    %v4957 = vmax.f32 %v4953, 0.0
    %v4958 = vmax.f32 %v4954, 0.0
    %v4959 = vmax.f32 %v4955, 0.0
    %v4960 = vmax.f32 %v4956, 0.0
    %v4961 = vld [vmem:[%s8] sm:$0xff]
    %v4962 = vld [vmem:[%s8 + $0x8] sm:$0xff]
    %v4963 = vld [vmem:[%s8 + $0x10] sm:$0xff]
    %v4964 = vld [vmem:[%s8 + $0x18] sm:$0xff]
    %v4965 = vld [vmem:[%s8 + $0x20] sm:$0xff]
    %v4966 = vld [vmem:[%s8 + $0x28] sm:$0xff]
    %v4967 = vld [vmem:[%s8 + $0x30] sm:$0xff]
    %v4968 = vld [vmem:[%s8 + $0x38] sm:$0xff]
    %v4969 = vld [vmem:[%s8 + $0x40] sm:$0xff]
    %v4970 = vld [vmem:[%s8 + $0x48] sm:$0xff]
    %v4971 = vld [vmem:[%s8 + $0x50] sm:$0xff]
    %v4972 = vld [vmem:[%s8 + $0x58] sm:$0xff]
    %v4973 = vld [vmem:[%s8 + $0x60] sm:$0xff]
    %v4974 = vld [vmem:[%s8 + $0x68] sm:$0xff]
    %v4975 = vld [vmem:[%s8 + $0x70] sm:$0xff]
    %v4976 = vld [vmem:[%s8 + $0x78] sm:$0xff]
    %v4977 = vld [vmem:[%s8 + $0x80] sm:$0xff]
    %v4978 = vld [vmem:[%s8 + $0x88] sm:$0xff]
    %v4979 = vld [vmem:[%s8 + $0x90] sm:$0xff]
    %v4980 = vld [vmem:[%s8 + $0x98] sm:$0xff]
    %v4981 = vld [vmem:[%s8 + $0xa0] sm:$0xff]
    %v4982 = vld [vmem:[%s8 + $0xa8] sm:$0xff]
    %v4983 = vld [vmem:[%s8 + $0xb0] sm:$0xff]
    %v4984 = vld [vmem:[%s8 + $0xb8] sm:$0xff]
    %v4985 = vld [vmem:[%s8 + $0xc0] sm:$0xff]
    %v4986 = vld [vmem:[%s8 + $0xc8] sm:$0xff]
    %v4987 = vld [vmem:[%s8 + $0xd0] sm:$0xff]
    %v4988 = vld [vmem:[%s8 + $0xd8] sm:$0xff]
    %v4989 = vld [vmem:[%s8 + $0xe0] sm:$0xff]
    %v4990 = vld [vmem:[%s8 + $0xe8] sm:$0xff]
    %v4991 = vld [vmem:[%s8 + $0xf0] sm:$0xff]
    %v4992 = vld [vmem:[%s8 + $0xf8] sm:$0xff]
    %v4993 = vld [vmem:[%s8 + $0x100] sm:$0xff]
    %v4994 = vld [vmem:[%s8 + $0x108] sm:$0xff]
    %v4995 = vld [vmem:[%s8 + $0x110] sm:$0xff]
    %v4996 = vld [vmem:[%s8 + $0x118] sm:$0xff]
    %v4997 = vld [vmem:[%s8 + $0x120] sm:$0xff]
    %v4998 = vld [vmem:[%s8 + $0x128] sm:$0xff]
    %v4999 = vld [vmem:[%s8 + $0x130] sm:$0xff]
    %v5000 = vld [vmem:[%s8 + $0x138] sm:$0xff]
    %v5001 = vld [vmem:[%s8 + $0x140] sm:$0xff]
    %v5002 = vld [vmem:[%s8 + $0x148] sm:$0xff]
    %v5003 = vld [vmem:[%s8 + $0x150] sm:$0xff]
    %v5004 = vld [vmem:[%s8 + $0x158] sm:$0xff]
    %v5005 = vld [vmem:[%s8 + $0x160] sm:$0xff]
    %v5006 = vld [vmem:[%s8 + $0x168] sm:$0xff]
    %v5007 = vld [vmem:[%s8 + $0x170] sm:$0xff]
    %v5008 = vld [vmem:[%s8 + $0x178] sm:$0xff]
    %v5009 = vld [vmem:[%s8 + $0x180] sm:$0xff]
    %v5010 = vld [vmem:[%s8 + $0x188] sm:$0xff]
    %v5011 = vld [vmem:[%s8 + $0x190] sm:$0xff]
    %v5012 = vld [vmem:[%s8 + $0x198] sm:$0xff]
    %v5013 = vld [vmem:[%s8 + $0x1a0] sm:$0xff]
    %v5014 = vld [vmem:[%s8 + $0x1a8] sm:$0xff]
    %v5015 = vld [vmem:[%s8 + $0x1b0] sm:$0xff]
    %v5016 = vld [vmem:[%s8 + $0x1b8] sm:$0xff]
    %v5017 = vld [vmem:[%s8 + $0x1c0] sm:$0xff]
    %v5018 = vld [vmem:[%s8 + $0x1c8] sm:$0xff]
    %v5019 = vld [vmem:[%s8 + $0x1d0] sm:$0xff]
    %v5020 = vld [vmem:[%s8 + $0x1d8] sm:$0xff]
    %v5021 = vld [vmem:[%s8 + $0x1e0] sm:$0xff]
    %v5022 = vld [vmem:[%s8 + $0x1e8] sm:$0xff]
    %v5023 = vld [vmem:[%s8 + $0x1f0] sm:$0xff]
    %v5024 = vld [vmem:[%s8 + $0x1f8] sm:$0xff]
    %v5025 = vld [vmem:[%s8 + $0x200] sm:$0xff]
    %v5026 = vld [vmem:[%s8 + $0x208] sm:$0xff]
    %v5027 = vld [vmem:[%s8 + $0x210] sm:$0xff]
    %v5028 = vld [vmem:[%s8 + $0x218] sm:$0xff]
    %v5029 = vld [vmem:[%s8 + $0x220] sm:$0xff]
    %v5030 = vld [vmem:[%s8 + $0x228] sm:$0xff]
    %v5031 = vld [vmem:[%s8 + $0x230] sm:$0xff]
    %v5032 = vld [vmem:[%s8 + $0x238] sm:$0xff]
    %v5033 = vld [vmem:[%s8 + $0x240] sm:$0xff]
    %v5034 = vld [vmem:[%s8 + $0x248] sm:$0xff]
    %v5035 = vld [vmem:[%s8 + $0x250] sm:$0xff]
    %v5036 = vld [vmem:[%s8 + $0x258] sm:$0xff]
    %v5037 = vld [vmem:[%s8 + $0x260] sm:$0xff]
    %v5038 = vld [vmem:[%s8 + $0x268] sm:$0xff]
    %v5039 = vld [vmem:[%s8 + $0x270] sm:$0xff]
    %v5040 = vld [vmem:[%s8 + $0x278] sm:$0xff]
    %v5041 = vld [vmem:[%s8 + $0x280] sm:$0xff]
    %v5042 = vld [vmem:[%s8 + $0x288] sm:$0xff]
    %v5043 = vld [vmem:[%s8 + $0x290] sm:$0xff]
    %v5044 = vld [vmem:[%s8 + $0x298] sm:$0xff]
    %v5045 = vld [vmem:[%s8 + $0x2a0] sm:$0xff]
    %v5046 = vld [vmem:[%s8 + $0x2a8] sm:$0xff]
    %v5047 = vld [vmem:[%s8 + $0x2b0] sm:$0xff]
    %v5048 = vld [vmem:[%s8 + $0x2b8] sm:$0xff]
    %v5049 = vld [vmem:[%s8 + $0x2c0] sm:$0xff]
    %v5050 = vld [vmem:[%s8 + $0x2c8] sm:$0xff]
    %v5051 = vld [vmem:[%s8 + $0x2d0] sm:$0xff]
    %v5052 = vld [vmem:[%s8 + $0x2d8] sm:$0xff]
    %v5053 = vld [vmem:[%s8 + $0x2e0] sm:$0xff]
    %v5054 = vld [vmem:[%s8 + $0x2e8] sm:$0xff]
    %v5055 = vld [vmem:[%s8 + $0x2f0] sm:$0xff]
    %v5056 = vld [vmem:[%s8 + $0x2f8] sm:$0xff]
    %v5057 = vld [vmem:[%s8 + $0x300] sm:$0xff]
    %v5058 = vld [vmem:[%s8 + $0x308] sm:$0xff]
    %v5059 = vld [vmem:[%s8 + $0x310] sm:$0xff]
    %v5060 = vld [vmem:[%s8 + $0x318] sm:$0xff]
    %v5061 = vld [vmem:[%s8 + $0x320] sm:$0xff]
    %v5062 = vld [vmem:[%s8 + $0x328] sm:$0xff]
    %v5063 = vld [vmem:[%s8 + $0x330] sm:$0xff]
    %v5064 = vld [vmem:[%s8 + $0x338] sm:$0xff]
    %v5065 = vld [vmem:[%s8 + $0x340] sm:$0xff]
    %v5066 = vld [vmem:[%s8 + $0x348] sm:$0xff]
    %v5067 = vld [vmem:[%s8 + $0x350] sm:$0xff]
    %v5068 = vld [vmem:[%s8 + $0x358] sm:$0xff]
    %v5069 = vld [vmem:[%s8 + $0x360] sm:$0xff]
    %v5070 = vld [vmem:[%s8 + $0x368] sm:$0xff]
    %v5071 = vld [vmem:[%s8 + $0x370] sm:$0xff]
    %v5072 = vld [vmem:[%s8 + $0x378] sm:$0xff]
    %v5073 = vld [vmem:[%s8 + $0x380] sm:$0xff]
    %v5074 = vld [vmem:[%s8 + $0x388] sm:$0xff]
    %v5075 = vld [vmem:[%s8 + $0x390] sm:$0xff]
    %v5076 = vld [vmem:[%s8 + $0x398] sm:$0xff]
    %v5077 = vld [vmem:[%s8 + $0x3a0] sm:$0xff]
    %v5078 = vld [vmem:[%s8 + $0x3a8] sm:$0xff]
    %v5079 = vld [vmem:[%s8 + $0x3b0] sm:$0xff]
    %v5080 = vld [vmem:[%s8 + $0x3b8] sm:$0xff]
    %v5081 = vld [vmem:[%s8 + $0x3c0] sm:$0xff]
    %v5082 = vld [vmem:[%s8 + $0x3c8] sm:$0xff]
    %v5083 = vld [vmem:[%s8 + $0x3d0] sm:$0xff]
    %v5084 = vld [vmem:[%s8 + $0x3d8] sm:$0xff]
    %v5085 = vld [vmem:[%s8 + $0x3e0] sm:$0xff]
    %v5086 = vld [vmem:[%s8 + $0x3e8] sm:$0xff]
    %v5087 = vld [vmem:[%s8 + $0x3f0] sm:$0xff]
    %v5088 = vld [vmem:[%s8 + $0x3f8] sm:$0xff]
    %v5089 = vld [vmem:[%s9] sm:$0x3]
    %v5091 = vlaneseq
    %v5092 = vshrl.u32 %v5091, 7
    %v5093 = vsub.s32 0, %v5092
    %v5094 = vrot.slane %v5089, %v5093
    %v5095 = vlaneseq
    %v5096 = vshrl.u32 %v5095, 7
    %v5097 = vsub.s32 1, %v5096
    %v5098 = vrot.slane %v5089, %v5097
    %5101 = vmatprep.subr.mxu0 %v4962
    %5102 = vmatpush1.msra.mxu0 %v4961
    %5103 = vmatprep.subr.mxu0 %v4964
    %5104 = vmatpush1.msra.mxu0 %v4963
    %5105 = vmatprep.subr.mxu0 %v4966
    %5106 = vmatpush1.msra.mxu0 %v4965
    %5107 = vmatprep.subr.mxu0 %v4968
    %5108 = vmatpush1.msra.mxu0 %v4967
    %5109 = vmatprep.subr.mxu0 %v4970
    %5110 = vmatpush1.msra.mxu0 %v4969
    %5111 = vmatprep.subr.mxu0 %v4972
    %5112 = vmatpush1.msra.mxu0 %v4971
    %5113 = vmatprep.subr.mxu0 %v4974
    %5114 = vmatpush1.msra.mxu0 %v4973
    %5115 = vmatprep.subr.mxu0 %v4976
    %5116 = vmatpush1.msra.mxu0 %v4975
    %5117 = vmatprep.subr.mxu0 %v4978
    %5118 = vmatpush1.msra.mxu0 %v4977
    %5119 = vmatprep.subr.mxu0 %v4980
    %5120 = vmatpush1.msra.mxu0 %v4979
    %5121 = vmatprep.subr.mxu0 %v4982
    %5122 = vmatpush1.msra.mxu0 %v4981
    %5123 = vmatprep.subr.mxu0 %v4984
    %5124 = vmatpush1.msra.mxu0 %v4983
    %5125 = vmatprep.subr.mxu0 %v4986
    %5126 = vmatpush1.msra.mxu0 %v4985
    %5127 = vmatprep.subr.mxu0 %v4988
    %5128 = vmatpush1.msra.mxu0 %v4987
    %5129 = vmatprep.subr.mxu0 %v4990
    %5130 = vmatpush1.msra.mxu0 %v4989
    %5131 = vmatprep.subr.mxu0 %v4992
    %5132 = vmatpush1.msra.mxu0 %v4991
    %5133 = vmatprep.subr.mxu0 %v4994
    %5134 = vmatpush1.msra.mxu0 %v4993
    %5135 = vmatprep.subr.mxu0 %v4996
    %5136 = vmatpush1.msra.mxu0 %v4995
    %5137 = vmatprep.subr.mxu0 %v4998
    %5138 = vmatpush1.msra.mxu0 %v4997
    %5139 = vmatprep.subr.mxu0 %v5000
    %5140 = vmatpush1.msra.mxu0 %v4999
    %5141 = vmatprep.subr.mxu0 %v5002
    %5142 = vmatpush1.msra.mxu0 %v5001
    %5143 = vmatprep.subr.mxu0 %v5004
    %5144 = vmatpush1.msra.mxu0 %v5003
    %5145 = vmatprep.subr.mxu0 %v5006
    %5146 = vmatpush1.msra.mxu0 %v5005
    %5147 = vmatprep.subr.mxu0 %v5008
    %5148 = vmatpush1.msra.mxu0 %v5007
    %5149 = vmatprep.subr.mxu0 %v5010
    %5150 = vmatpush1.msra.mxu0 %v5009
    %5151 = vmatprep.subr.mxu0 %v5012
    %5152 = vmatpush1.msra.mxu0 %v5011
    %5153 = vmatprep.subr.mxu0 %v5014
    %5154 = vmatpush1.msra.mxu0 %v5013
    %5155 = vmatprep.subr.mxu0 %v5016
    %5156 = vmatpush1.msra.mxu0 %v5015
    %5157 = vmatprep.subr.mxu0 %v5018
    %5158 = vmatpush1.msra.mxu0 %v5017
    %5159 = vmatprep.subr.mxu0 %v5020
    %5160 = vmatpush1.msra.mxu0 %v5019
    %5161 = vmatprep.subr.mxu0 %v5022
    %5162 = vmatpush1.msra.mxu0 %v5021
    %5163 = vmatprep.subr.mxu0 %v5024
    %5164 = vmatpush1.msra.mxu0 %v5023
    %5165 = vmatprep.mubr.f32.mxu0 %v4958
    %5166 = vmatmul.mubr.f32.gmra.mrb[0].mxu0 %v4957
    %v5167 = vpop.f32.mrb[0].mxu0
    %v5168 = vadd.f32 %v5094, %v5167
    %v5169 = vpop.f32.mrb[0].mxu0
    %v5170 = vadd.f32 %v5098, %v5169
    %5171 = vdwg.mxu0
    %5172 = vmatprep.subr.mxu0 %v5026
    %5173 = vmatpush1.msra.mxu0 %v5025
    %5174 = vmatprep.subr.mxu0 %v5028
    %5175 = vmatpush1.msra.mxu0 %v5027
    %5176 = vmatprep.subr.mxu0 %v5030
    %5177 = vmatpush1.msra.mxu0 %v5029
    %5178 = vmatprep.subr.mxu0 %v5032
    %5179 = vmatpush1.msra.mxu0 %v5031
    %5180 = vmatprep.subr.mxu0 %v5034
    %5181 = vmatpush1.msra.mxu0 %v5033
    %5182 = vmatprep.subr.mxu0 %v5036
    %5183 = vmatpush1.msra.mxu0 %v5035
    %5184 = vmatprep.subr.mxu0 %v5038
    %5185 = vmatpush1.msra.mxu0 %v5037
    %5186 = vmatprep.subr.mxu0 %v5040
    %5187 = vmatpush1.msra.mxu0 %v5039
    %5188 = vmatprep.subr.mxu0 %v5042
    %5189 = vmatpush1.msra.mxu0 %v5041
    %5190 = vmatprep.subr.mxu0 %v5044
    %5191 = vmatpush1.msra.mxu0 %v5043
    %5192 = vmatprep.subr.mxu0 %v5046
    %5193 = vmatpush1.msra.mxu0 %v5045
    %5194 = vmatprep.subr.mxu0 %v5048
    %5195 = vmatpush1.msra.mxu0 %v5047
    %5196 = vmatprep.subr.mxu0 %v5050
    %5197 = vmatpush1.msra.mxu0 %v5049
    %5198 = vmatprep.subr.mxu0 %v5052
    %5199 = vmatpush1.msra.mxu0 %v5051
    %5200 = vmatprep.subr.mxu0 %v5054
    %5201 = vmatpush1.msra.mxu0 %v5053
    %5202 = vmatprep.subr.mxu0 %v5056
    %5203 = vmatpush1.msra.mxu0 %v5055
    %5204 = vmatprep.subr.mxu0 %v5058
    %5205 = vmatpush1.msra.mxu0 %v5057
    %5206 = vmatprep.subr.mxu0 %v5060
    %5207 = vmatpush1.msra.mxu0 %v5059
    %5208 = vmatprep.subr.mxu0 %v5062
    %5209 = vmatpush1.msra.mxu0 %v5061
    %5210 = vmatprep.subr.mxu0 %v5064
    %5211 = vmatpush1.msra.mxu0 %v5063
    %5212 = vmatprep.subr.mxu0 %v5066
    %5213 = vmatpush1.msra.mxu0 %v5065
    %5214 = vmatprep.subr.mxu0 %v5068
    %5215 = vmatpush1.msra.mxu0 %v5067
    %5216 = vmatprep.subr.mxu0 %v5070
    %5217 = vmatpush1.msra.mxu0 %v5069
    %5218 = vmatprep.subr.mxu0 %v5072
    %5219 = vmatpush1.msra.mxu0 %v5071
    %5220 = vmatprep.subr.mxu0 %v5074
    %5221 = vmatpush1.msra.mxu0 %v5073
    %5222 = vmatprep.subr.mxu0 %v5076
    %5223 = vmatpush1.msra.mxu0 %v5075
    %5224 = vmatprep.subr.mxu0 %v5078
    %5225 = vmatpush1.msra.mxu0 %v5077
    %5226 = vmatprep.subr.mxu0 %v5080
    %5227 = vmatpush1.msra.mxu0 %v5079
    %5228 = vmatprep.subr.mxu0 %v5082
    %5229 = vmatpush1.msra.mxu0 %v5081
    %5230 = vmatprep.subr.mxu0 %v5084
    %5231 = vmatpush1.msra.mxu0 %v5083
    %5232 = vmatprep.subr.mxu0 %v5086
    %5233 = vmatpush1.msra.mxu0 %v5085
    %5234 = vmatprep.subr.mxu0 %v5088
    %5235 = vmatpush1.msra.mxu0 %v5087
    %5236 = vmatprep.mubr.f32.mxu0 %v4960
    %5237 = vmatmul.mubr.f32.gmra.mrb[0].mxu0 %v4959
    %v5238 = vpop.f32.mrb[0].mxu0
    %v5239 = vadd.f32 %v5168, %v5238
    %v5240 = vpop.f32.mrb[0].mxu0
    %v5241 = vadd.f32 %v5170, %v5240
    %5242 = vdwg.mxu0
    %v5243 = vtanh.pop %v5239
    %v5244 = vtanh.pop %v5241
    %v5245 = vld [vmem:[%s10] sm:$0xff]
    %v5246 = vld [vmem:[%s10 + $0x8] sm:$0xff]
    %v5247 = vld [vmem:[%s10 + $0x10] sm:$0xff]
    %v5248 = vld [vmem:[%s10 + $0x18] sm:$0xff]
    %v5249 = vld [vmem:[%s10 + $0x20] sm:$0xff]
    %v5250 = vld [vmem:[%s10 + $0x28] sm:$0xff]
    %v5251 = vld [vmem:[%s10 + $0x30] sm:$0xff]
    %v5252 = vld [vmem:[%s10 + $0x38] sm:$0xff]
    %v5253 = vld [vmem:[%s10 + $0x40] sm:$0xff]
    %v5254 = vld [vmem:[%s10 + $0x48] sm:$0xff]
    %v5255 = vld [vmem:[%s10 + $0x50] sm:$0xff]
    %v5256 = vld [vmem:[%s10 + $0x58] sm:$0xff]
    %v5257 = vld [vmem:[%s10 + $0x60] sm:$0xff]
    %v5258 = vld [vmem:[%s10 + $0x68] sm:$0xff]
    %v5259 = vld [vmem:[%s10 + $0x70] sm:$0xff]
    %v5260 = vld [vmem:[%s10 + $0x78] sm:$0xff]
    %v5261 = vld [vmem:[%s11] sm:$0x1]
    %v5263 = vlaneseq
    %v5264 = vshrl.u32 %v5263, 7
    %v5265 = vsub.s32 0, %v5264
    %v5266 = vrot.slane %v5261, %v5265
    %5268 = vmatprep.subr.mxu0 0.0
    %5269 = vmatpush1.msra.mxu0 %v5245
    %5270 = vmatprep.subr.mxu0 0.0
    %5271 = vmatpush1.msra.mxu0 %v5246
    %5272 = vmatprep.subr.mxu0 0.0
    %5273 = vmatpush1.msra.mxu0 %v5247
    %5274 = vmatprep.subr.mxu0 0.0
    %5275 = vmatpush1.msra.mxu0 %v5248
    %5276 = vmatprep.subr.mxu0 0.0
    %5277 = vmatpush1.msra.mxu0 %v5249
    %5278 = vmatprep.subr.mxu0 0.0
    %5279 = vmatpush1.msra.mxu0 %v5250
    %5280 = vmatprep.subr.mxu0 0.0
    %5281 = vmatpush1.msra.mxu0 %v5251
    %5282 = vmatprep.subr.mxu0 0.0
    %5283 = vmatpush1.msra.mxu0 %v5252
    %5284 = vmatprep.subr.mxu0 0.0
    %5285 = vmatpush1.msra.mxu0 %v5253
    %5286 = vmatprep.subr.mxu0 0.0
    %5287 = vmatpush1.msra.mxu0 %v5254
    %5288 = vmatprep.subr.mxu0 0.0
    %5289 = vmatpush1.msra.mxu0 %v5255
    %5290 = vmatprep.subr.mxu0 0.0
    %5291 = vmatpush1.msra.mxu0 %v5256
    %5292 = vmatprep.subr.mxu0 0.0
    %5293 = vmatpush1.msra.mxu0 %v5257
    %5294 = vmatprep.subr.mxu0 0.0
    %5295 = vmatpush1.msra.mxu0 %v5258
    %5296 = vmatprep.subr.mxu0 0.0
    %5297 = vmatpush1.msra.mxu0 %v5259
    %5298 = vmatprep.subr.mxu0 0.0
    %5299 = vmatpush1.msra.mxu0 %v5260
    %5300 = vmatprep.subr.mxu0 0.0
    %5301 = vmatpush1.msra.mxu0 0.0
    %5302 = vmatprep.subr.mxu0 0.0
    %5303 = vmatpush1.msra.mxu0 0.0
    %5304 = vmatprep.subr.mxu0 0.0
    %5305 = vmatpush1.msra.mxu0 0.0
    %5306 = vmatprep.subr.mxu0 0.0
    %5307 = vmatpush1.msra.mxu0 0.0
    %5308 = vmatprep.subr.mxu0 0.0
    %5309 = vmatpush1.msra.mxu0 0.0
    %5310 = vmatprep.subr.mxu0 0.0
    %5311 = vmatpush1.msra.mxu0 0.0
    %5312 = vmatprep.subr.mxu0 0.0
    %5313 = vmatpush1.msra.mxu0 0.0
    %5314 = vmatprep.subr.mxu0 0.0
    %5315 = vmatpush1.msra.mxu0 0.0
    %5316 = vmatprep.subr.mxu0 0.0
    %5317 = vmatpush1.msra.mxu0 0.0
    %5318 = vmatprep.subr.mxu0 0.0
    %5319 = vmatpush1.msra.mxu0 0.0
    %5320 = vmatprep.subr.mxu0 0.0
    %5321 = vmatpush1.msra.mxu0 0.0
    %5322 = vmatprep.subr.mxu0 0.0
    %5323 = vmatpush1.msra.mxu0 0.0
    %5324 = vmatprep.subr.mxu0 0.0
    %5325 = vmatpush1.msra.mxu0 0.0
    %5326 = vmatprep.subr.mxu0 0.0
    %5327 = vmatpush1.msra.mxu0 0.0
    %5328 = vmatprep.subr.mxu0 0.0
    %5329 = vmatpush1.msra.mxu0 0.0
    %5330 = vmatprep.subr.mxu0 0.0
    %5331 = vmatpush1.msra.mxu0 0.0
    %5332 = vmatprep.mubr.f32.mxu0 0.0
    %5333 = vmatmul.mubr.f32.gmra.mrb[0].mxu0 %v5243
    %v5334 = vpop.f32.mrb[0].mxu0
    %v5335 = vadd.f32 %v5266, %v5334
    %v5336 = vpop.f32.mrb[0].mxu0
    %5337 = vdwg.mxu0
    %v5338 = vld [vmem:[%s12] sm:$0xff]
    %v5339 = vld [vmem:[%s12 + $0x8] sm:$0xff]
    %v5340 = vld [vmem:[%s12 + $0x10] sm:$0xff]
    %v5341 = vld [vmem:[%s12 + $0x18] sm:$0xff]
    %v5342 = vld [vmem:[%s12 + $0x20] sm:$0xff]
    %v5343 = vld [vmem:[%s12 + $0x28] sm:$0xff]
    %v5344 = vld [vmem:[%s12 + $0x30] sm:$0xff]
    %v5345 = vld [vmem:[%s12 + $0x38] sm:$0xff]
    %v5346 = vld [vmem:[%s12 + $0x40] sm:$0xff]
    %v5347 = vld [vmem:[%s12 + $0x48] sm:$0xff]
    %v5348 = vld [vmem:[%s12 + $0x50] sm:$0xff]
    %v5349 = vld [vmem:[%s12 + $0x58] sm:$0xff]
    %v5350 = vld [vmem:[%s12 + $0x60] sm:$0xff]
    %v5351 = vld [vmem:[%s12 + $0x68] sm:$0xff]
    %v5352 = vld [vmem:[%s12 + $0x70] sm:$0xff]
    %v5353 = vld [vmem:[%s12 + $0x78] sm:$0xff]
    %v5354 = vld [vmem:[%s13] sm:$0x1]
    %v5356 = vlaneseq
    %v5357 = vshrl.u32 %v5356, 7
    %v5358 = vsub.s32 0, %v5357
    %v5359 = vrot.slane %v5354, %v5358
    %5361 = vmatprep.subr.mxu0 0.0
    %5362 = vmatpush1.msra.mxu0 %v5338
    %5363 = vmatprep.subr.mxu0 0.0
    %5364 = vmatpush1.msra.mxu0 %v5339
    %5365 = vmatprep.subr.mxu0 0.0
    %5366 = vmatpush1.msra.mxu0 %v5340
    %5367 = vmatprep.subr.mxu0 0.0
    %5368 = vmatpush1.msra.mxu0 %v5341
    %5369 = vmatprep.subr.mxu0 0.0
    %5370 = vmatpush1.msra.mxu0 %v5342
    %5371 = vmatprep.subr.mxu0 0.0
    %5372 = vmatpush1.msra.mxu0 %v5343
    %5373 = vmatprep.subr.mxu0 0.0
    %5374 = vmatpush1.msra.mxu0 %v5344
    %5375 = vmatprep.subr.mxu0 0.0
    %5376 = vmatpush1.msra.mxu0 %v5345
    %5377 = vmatprep.subr.mxu0 0.0
    %5378 = vmatpush1.msra.mxu0 %v5346
    %5379 = vmatprep.subr.mxu0 0.0
    %5380 = vmatpush1.msra.mxu0 %v5347
    %5381 = vmatprep.subr.mxu0 0.0
    %5382 = vmatpush1.msra.mxu0 %v5348
    %5383 = vmatprep.subr.mxu0 0.0
    %5384 = vmatpush1.msra.mxu0 %v5349
    %5385 = vmatprep.subr.mxu0 0.0
    %5386 = vmatpush1.msra.mxu0 %v5350
    %5387 = vmatprep.subr.mxu0 0.0
    %5388 = vmatpush1.msra.mxu0 %v5351
    %5389 = vmatprep.subr.mxu0 0.0
    %5390 = vmatpush1.msra.mxu0 %v5352
    %5391 = vmatprep.subr.mxu0 0.0
    %5392 = vmatpush1.msra.mxu0 %v5353
    %5393 = vmatprep.subr.mxu0 0.0
    %5394 = vmatpush1.msra.mxu0 0.0
    %5395 = vmatprep.subr.mxu0 0.0
    %5396 = vmatpush1.msra.mxu0 0.0
    %5397 = vmatprep.subr.mxu0 0.0
    %5398 = vmatpush1.msra.mxu0 0.0
    %5399 = vmatprep.subr.mxu0 0.0
    %5400 = vmatpush1.msra.mxu0 0.0
    %5401 = vmatprep.subr.mxu0 0.0
    %5402 = vmatpush1.msra.mxu0 0.0
    %5403 = vmatprep.subr.mxu0 0.0
    %5404 = vmatpush1.msra.mxu0 0.0
    %5405 = vmatprep.subr.mxu0 0.0
    %5406 = vmatpush1.msra.mxu0 0.0
    %5407 = vmatprep.subr.mxu0 0.0
    %5408 = vmatpush1.msra.mxu0 0.0
    %5409 = vmatprep.subr.mxu0 0.0
    %5410 = vmatpush1.msra.mxu0 0.0
    %5411 = vmatprep.subr.mxu0 0.0
    %5412 = vmatpush1.msra.mxu0 0.0
    %5413 = vmatprep.subr.mxu0 0.0
    %5414 = vmatpush1.msra.mxu0 0.0
    %5415 = vmatprep.subr.mxu0 0.0
    %5416 = vmatpush1.msra.mxu0 0.0
    %5417 = vmatprep.subr.mxu0 0.0
    %5418 = vmatpush1.msra.mxu0 0.0
    %5419 = vmatprep.subr.mxu0 0.0
    %5420 = vmatpush1.msra.mxu0 0.0
    %5421 = vmatprep.subr.mxu0 0.0
    %5422 = vmatpush1.msra.mxu0 0.0
    %5423 = vmatprep.subr.mxu0 0.0
    %5424 = vmatpush1.msra.mxu0 0.0
    %5425 = vmatprep.mubr.f32.mxu0 0.0
    %5426 = vmatmul.mubr.f32.gmra.mrb[0].mxu0 %v5244
    %v5427 = vpop.f32.mrb[0].mxu0
    %v5428 = vadd.f32 %v5359, %v5427
    %v5429 = vpop.f32.mrb[0].mxu0
    %5430 = vdwg.mxu0
    %vm5431 = vcmask 15360
    %v5432 = vsel %vm5431, %v5335, -inf
    %v5433 = vrot.slane %v5432, 4
    %v5434 = vmax.f32 %v5432, %v5433
    %v5435 = vrot.slane %v5434, 2
    %v5436 = vmax.f32 %v5434, %v5435
    %v5437 = vrot.slane %v5436, 1
    %v5438 = vmax.f32 %v5436, %v5437
    %v5439 = vsub.f32 %v5335, %v5438
    %v5440 = vmul.f32 %v5439, 1.442695
    %v5441 = vpow.pop %v5440
    %v5442 = vsel %vm5431, %v5441, 0.0
    %v5443 = vrot.slane %v5442, 4
    %v5444 = vadd.f32 %v5442, %v5443
    %v5445 = vrot.slane %v5444, 2
    %v5446 = vadd.f32 %v5444, %v5445
    %v5447 = vrot.slane %v5446, 1
    %v5448 = vadd.f32 %v5446, %v5447
    %v5449 = vrcp.pop %v5448
    %v5450 = vmul.f32 %v5441, %v5449
    %v5451 = vsel %vm5431, %v5428, -inf
    %5452 = vmax.xlane.f32.xlu0 %v5451
    %v5453 = vpop.xlane.xlu0 %5452
    %v5454 = vsub.f32 %v5428, %v5453
    %v5455 = vmul.f32 %v5454, 1.442695
    %v5456 = vpow.pop %v5455
    %v5457 = vsel %vm5431, %v5456, 0.0
    %5458 = vadd.xlane.f32.xlu0 %v5457
    %v5459 = vpop.xlane.xlu0 %5458
    %v5460 = vrcp.pop %v5459
    %v5461 = vmul.f32 %v5456, %v5460
    %v5462 = vmul.f32 %v5450, %v5461
    %v5463 = vsel %vm5431, %v5462, -inf
    %5464 = vmax.xlane.f32.xlu0 %v5463
    %v5465 = vpop.xlane.xlu0 %5464
    %v5466 = vmul.f32 %v5465, %v4957
    %v5467 = vmul.f32 %v5465, %v4958
    %v5468 = vmul.f32 %v5465, %v4959
    %v5469 = vmul.f32 %v5465, %v4960
    %v5470 = vrot.slane %v5466, 4
    %v5471 = vadd.f32 %v5466, %v5470
    %v5472 = vrot.slane %v5471, 2
    %v5473 = vadd.f32 %v5471, %v5472
    %v5474 = vrot.slane %v5473, 1
    %v5475 = vadd.f32 %v5473, %v5474
    %v5476 = vrot.slane %v5467, 4
    %v5477 = vadd.f32 %v5467, %v5476
    %v5478 = vrot.slane %v5477, 2
    %v5479 = vadd.f32 %v5477, %v5478
    %v5480 = vrot.slane %v5479, 1
    %v5481 = vadd.f32 %v5479, %v5480
    %v5482 = vrot.slane %v5468, 4
    %v5483 = vadd.f32 %v5468, %v5482
    %v5484 = vrot.slane %v5483, 2
    %v5485 = vadd.f32 %v5483, %v5484
    %v5486 = vrot.slane %v5485, 1
    %v5487 = vadd.f32 %v5485, %v5486
    %v5488 = vrot.slane %v5469, 4
    %v5489 = vadd.f32 %v5469, %v5488
    %v5490 = vrot.slane %v5489, 2
    %v5491 = vadd.f32 %v5489, %v5490
    %v5492 = vrot.slane %v5491, 1
    %v5493 = vadd.f32 %v5491, %v5492
    %v5494 = vld [vmem:[%s14] sm:$0xf]
    %v5496 = vlaneseq
    %v5497 = vshrl.u32 %v5496, 7
    %v5498 = vsub.s32 0, %v5497
    %v5499 = vrot.slane %v5494, %v5498
    %v5500 = vlaneseq
    %v5501 = vshrl.u32 %v5500, 7
    %v5502 = vsub.s32 1, %v5501
    %v5503 = vrot.slane %v5494, %v5502
    %v5504 = vlaneseq
    %v5505 = vshrl.u32 %v5504, 7
    %v5506 = vsub.s32 2, %v5505
    %v5507 = vrot.slane %v5494, %v5506
    %v5508 = vlaneseq
    %v5509 = vshrl.u32 %v5508, 7
    %v5510 = vsub.s32 3, %v5509
    %v5511 = vrot.slane %v5494, %v5510
    %v5516 = vmul.f32 %v5475, %v5499
    %v5517 = vmul.f32 %v5481, %v5503
    %v5518 = vmul.f32 %v5487, %v5507
    %v5519 = vmul.f32 %v5493, %v5511
    %v5520 = vsel %vm2051, %v5516, 0.0
    %v5521 = vsel %vm2051, %v5517, 0.0
    %v5522 = vadd.f32 %v5520, %v5521
    %v5523 = vsel %vm2051, %v5518, 0.0
    %v5524 = vadd.f32 %v5522, %v5523
    %v5525 = vsel %vm2051, %v5519, 0.0
    %v5526 = vadd.f32 %v5524, %v5525
    %5527 = vadd.xlane.f32.xlu0 %v5526
    %v5528 = vpop.xlane.xlu0 %5527
    %v5529 = vld [vmem:[#allocation2] sm:$0x1]
    %v5530 = vadd.f32 %v5528, %v5529
    %v5531 = vsub.f32 0.0, %v5530
    %v5532 = vmul.f32 %v5531, 1.442695
    %v5533 = vpow.pop %v5532
    %v5534 = vadd.f32 %v5533, 1.0
    %v5535 = vrcp.pop %v5534
    %vm5536 = vcmask 0
    %5537 = vst.msk [vmem:[#allocation3] sm:$0x1] %vm5536, %v5535
    %vm5538 = vcmask 7168
    %5539 = vst.msk [vmem:[%s17] sm:$0xff] %vm5538, %v5465
    // Predicated region
    $region66: #{ma_midn_forward.3} parent=1 // pred_check
      _
    $region67: #{ma_midn_forward.3} parent=1 // pred_check_branch
      %5541 = sbr.rel (0) target = $region69
    $region68: #{ma_midn_forward.3} parent=1 // pred_region
      %s5543 = ssub.s32 16, 16
      %5544 = vsyncadd [#allocation4], %s5543
      %s5546 = sshll.u32 [#allocation3], 4
      %s5547 = int_to_ptr.vmem [resolvable:$true] %s5546
      %5549 = dma.vmem_to_hbm [thread:$0]  %s5547, 16, %s16, [#allocation4]
    $region69: #{ma_midn_forward.3} parent=1 // pred_fallthru
      _
    // Predicated region
    $region70: #{ma_midn_forward.3} parent=1 // pred_check
      _
    $region71: #{ma_midn_forward.3} parent=1 // pred_check_branch
      %5551 = sbr.rel (0) target = $region73
    $region72: #{ma_midn_forward.3} parent=1 // pred_region
      _
    $region73: #{ma_midn_forward.3} parent=1 // pred_fallthru
      _
    // Predicated region
    $region74: #{ma_midn_forward.3} parent=1 // pred_check
      _
    $region75: #{ma_midn_forward.3} parent=1 // pred_check_branch
      %5553 = sbr.rel (0) target = $region77
    $region76: #{ma_midn_forward.3} parent=1 // pred_region
      %5554 = dma.done [#allocation4], 16
    $region77: #{ma_midn_forward.3} parent=1 // pred_fallthru
      _
    // Predicated region
    $region78: #{ma_midn_forward.3} parent=1 // pred_check
      _
    $region79: #{ma_midn_forward.3} parent=1 // pred_check_branch
      %5556 = sbr.rel (0) target = $region81
    $region80: #{ma_midn_forward.3} parent=1 // pred_region
      _
    $region81: #{ma_midn_forward.3} parent=1 // pred_fallthru
      _
    %5557 = vsyncpa [#allocation4], 1

</llo_original>
